<compile_context>
chip_gen: v7x
topology: tpu7x:2x2x1
jax: 0.10.0
libtpu: 0.0.40
codegen_flags: <defaults>
</compile_context>

<pallas_src>
import jax
import jax.numpy as jnp
from jax.experimental import pallas as pl
from jax.experimental.pallas import tpu as pltpu


# tap order matches a 3x3 kernel unrolled as (kh, kw) = (dh+1, dw+1)
_TAPS = tuple((dh, dw) for dh in (-1, 0, 1) for dw in (-1, 0, 1))


# ----------------------------------------------------------------------------
# Fused Pallas kernel: pooling+concat (per-node dots) + 3 x (conv3x3 + bias +
# LeakyReLU(0.1)) done as 9 accumulated per-tap dots on channel-major rows.
# ----------------------------------------------------------------------------
def _make_cmp_kernel(C, H, W, VB):
    N = H * W            # flattened spatial size per node
    LB = VB * N          # lanes handled by one grid step (VB nodes)

    def kernel(b_ref, g_ref, m_ref,
               w1_ref, b1_ref, w2_ref, b2_ref, w3_ref, b3_ref, o_ref):
        f32 = jnp.float32

        # ---- 1. graph message pooling + channel concat, channel-major output.
        #   x[t*C+c, v*N+n] = sum_{s,c'} B[v, t*C+c, s*C+c'] * g[s*C+c', n]
        # One small MXU dot per local node; lane-aligned concat -> (3C, LB).
        g = g_ref[...]                                            # (V*C, N)
        x = jnp.concatenate(
            [jnp.dot(b_ref[v], g, preferred_element_type=f32)
             for v in range(VB)],
            axis=1)                                               # (3C, LB)

        # ---- 2. conv3x3 (stride 1, pad 1) + bias + LeakyReLU(0.1) per layer,
        # as 9 accumulated per-tap dots on lane-rolled activations.  The
        # precomputed masks zero every rolled position whose source pixel is
        # outside the image (this also kills all cross-node / wrap bleed).
        def conv_layer(x, w_ref, bias_ref):
            acc = None
            for t, (dh, dw) in enumerate(_TAPS):
                s = dh * W + dw
                if s == 0:
                    xs = x                                        # centre tap
                else:
                    xs = pltpu.roll(x, (-s) % LB, axis=1) * m_ref[t:t + 1, :]
                y = jnp.dot(w_ref[t], xs, preferred_element_type=f32)
                acc = y if acc is None else acc + y
            acc = acc + bias_ref[...]                             # (cout, 1)
            return jnp.where(acc >= 0, acc, 0.1 * acc)            # LeakyReLU

        x = conv_layer(x, w1_ref, b1_ref)
        x = conv_layer(x, w2_ref, b2_ref)
        x = conv_layer(x, w3_ref, b3_ref)
        o_ref[...] = x.astype(o_ref.dtype)

    return kernel


# ----------------------------------------------------------------------------
# CMP forward (public API mirrors PyTorch NCHW)
# ----------------------------------------------------------------------------
def cmp_forward(feats, edges, params):
    """
    feats : (V, C, H, W) float32
    edges : (E, 3) int32, rows (src, sign, dst)
    params: list of 3 (w_hwio (3,3,Cin,Cout), bias (Cout,)) tuples.
    Returns (V, C, H, W).
    """
    V, C, H, W = feats.shape
    N = H * W
    dtype = feats.dtype

    n_blk = 2 if V % 2 == 0 else 1      # 2 lane-blocks -> both v7x TensorCores
    VB = V // n_blk
    LB = VB * N

    e = edges.reshape(-1, 3)
    src = e[:, 0].astype(jnp.int32)
    sign = e[:, 1]
    dst = e[:, 2].astype(jnp.int32)

    # Dense symmetric adjacency (exact scatter_add equivalent: duplicates
    # accumulate, self-loops counted twice, sign==0 edges contribute nothing).
    pos_w = (sign > 0).astype(dtype)
    neg_w = (sign < 0).astype(dtype)
    a_pos = jnp.zeros((V, V), dtype).at[dst, src].add(pos_w).at[src, dst].add(pos_w)
    a_neg = jnp.zeros((V, V), dtype).at[dst, src].add(neg_w).at[src, dst].add(neg_w)
    a_stack = jnp.stack([jnp.eye(V, dtype=dtype), a_pos, a_neg], axis=0)  # (3,V,V)

    # Per-output-node pooling matrices: B[v, t*C+c, s*C+c'] = A_t[v,s] * I[c,c']
    eye_c = jnp.eye(C, dtype=dtype)
    b_mat = (jnp.transpose(a_stack, (1, 0, 2))[:, :, None, :, None]
             * eye_c[None, None, :, None, :]).reshape(V, 3 * C, V * C)

    g = feats.reshape(V * C, N)          # free reshape of NCHW

    # Host-side tap validity masks for one lane-block (identical per block).
    p = jnp.arange(LB, dtype=jnp.int32)
    hh = (p % N) // W
    ww = p % W
    masks = jnp.stack(
        [((hh + dh >= 0) & (hh + dh < H) & (ww + dw >= 0) & (ww + dw < W)
          ).astype(dtype) for dh, dw in _TAPS], axis=0)            # (9, LB)

    # Per-tap weight matrices (9, Cout, Cin) and biases (Cout, 1).
    mats = []
    for w_hwio, b in params:
        cin, cout = int(w_hwio.shape[2]), int(w_hwio.shape[3])
        mats.append((jnp.transpose(w_hwio, (0, 1, 3, 2)).reshape(9, cout, cin),
                     b.reshape(cout, 1)))
    (w1, b1), (w2, b2), (w3, b3) = mats

    def full(shape):
        return pl.BlockSpec(tuple(shape), lambda i: (0,) * len(shape))

    out_cm = pl.pallas_call(
        _make_cmp_kernel(C, H, W, VB),
        out_shape=jax.ShapeDtypeStruct((C, V * N), dtype),
        grid=(n_blk,),
        in_specs=[
            pl.BlockSpec((VB, 3 * C, V * C), lambda i: (i, 0, 0)),  # B[v] block
            full(g.shape),                                          # feats flat
            full(masks.shape),                                      # tap masks
            full(w1.shape), full(b1.shape),
            full(w2.shape), full(b2.shape),
            full(w3.shape), full(b3.shape),
        ],
        out_specs=pl.BlockSpec((C, LB), lambda i: (0, i)),
        compiler_params=pltpu.CompilerParams(
            dimension_semantics=("parallel",)),
    )(b_mat, g, masks, w1, b1, w2, b2, w3, b3)

    # Channel-major (C, V*N) -> NCHW; tiny transpose done in XLA, not in-kernel.
    return out_cm.reshape(C, V, H, W).transpose(1, 0, 2, 3)


def init_params(key, in_channels):
    """Deterministic synthetic weights (HWIO) for the 3-layer encoder."""
    c = in_channels
    layer_io = [(3 * c, 2 * c), (2 * c, 2 * c), (2 * c, c)]
    params = []
    keys = jax.random.split(key, len(layer_io))
    for (ci, co), kk in zip(layer_io, keys):
        kw, kb = jax.random.split(kk)
        fan_in = 9.0 * ci
        w = jax.random.normal(kw, (3, 3, ci, co), jnp.float32) / jnp.sqrt(fan_in)
        b = jax.random.normal(kb, (co,), jnp.float32) * 0.01
        params.append((w, b))
    return params


# ----------------------------------------------------------------------------
# Pure-JAX reference (mirrors the PyTorch module) for a sanity check
# ----------------------------------------------------------------------------
def reference_forward(feats, edges, params):
    e = edges.reshape(-1, 3)
    src = e[:, 0].astype(jnp.int32)
    sign = e[:, 1]
    dst = e[:, 2].astype(jnp.int32)

    def pool(sel):
        w = sel.astype(feats.dtype)[:, None, None, None]
        p = jnp.zeros_like(feats)
        p = p.at[dst].add(feats[src] * w)
        p = p.at[src].add(feats[dst] * w)
        return p

    x = jnp.concatenate([feats, pool(sign > 0), pool(sign < 0)], axis=1)
    for w_hwio, b in params:
        x = jax.lax.conv_general_dilated(
            x, w_hwio, window_strides=(1, 1), padding=((1, 1), (1, 1)),
            dimension_numbers=("NCHW", "HWIO", "NCHW"),
            precision=jax.lax.Precision.HIGHEST)
        x = x + b[None, :, None, None]
        x = jnp.where(x >= 0, x, 0.1 * x)   # LeakyReLU(0.1), as in conv_block
    return x


# ----------------------------------------------------------------------------
if __name__ == "__main__":
    key = jax.random.PRNGKey(0)
    k_feat, k_src, k_dst, k_sign, k_param = jax.random.split(key, 5)

    V, C, H, W = 8, 4, 16, 16   # 8 nodes, 4 channels, 16x16 maps
    E = 10

    feats = jax.random.normal(k_feat, (V, C, H, W), jnp.float32)
    src = jax.random.randint(k_src, (E,), 0, V)
    dst = jax.random.randint(k_dst, (E,), 0, V)
    sign = jax.random.randint(k_sign, (E,), -1, 2)   # {-1, 0, 1}
    edges = jnp.stack([src, sign, dst], axis=1).astype(jnp.int32)

    params = init_params(k_param, C)

    out = jax.jit(cmp_forward)(feats, edges, params)
    out = jax.block_until_ready(out)
    assert out.shape == (V, C, H, W)
    assert bool(jnp.all(jnp.isfinite(out)))

    ref = reference_forward(feats, edges, params)
    max_err = float(jnp.max(jnp.abs(out - ref)))
    assert max_err < 5e-4, f"kernel/reference mismatch: max_err={max_err}"

    print("KERNEL_OK")
</pallas_src>

<mosaic_0001>
module attributes {stable_mosaic.version = 11 : i64} {
  func.func @kernel(%arg0: i32, %arg1: memref<4x12x32xf32, #tpu.memory_space<vmem>>, %arg2: memref<32x256xf32, #tpu.memory_space<vmem>>, %arg3: memref<9x1024xf32, #tpu.memory_space<vmem>>, %arg4: memref<9x8x12xf32, #tpu.memory_space<vmem>>, %arg5: memref<8x1xf32, #tpu.memory_space<vmem>>, %arg6: memref<9x8x8xf32, #tpu.memory_space<vmem>>, %arg7: memref<8x1xf32, #tpu.memory_space<vmem>>, %arg8: memref<9x4x8xf32, #tpu.memory_space<vmem>>, %arg9: memref<4x1xf32, #tpu.memory_space<vmem>>, %arg10: memref<4x1024xf32, #tpu.memory_space<vmem>>) attributes {dimension_semantics = [#tpu.dimension_semantics<parallel>], iteration_bounds = array<i64: 2>, scalar_prefetch = 0 : i64, scratch_operands = 0 : i64, tpu.core_type = #tpu.core_type<tc>, window_params = [{transform_indices = @transform_0, window_bounds = array<i64: 4, 12, 32>}, {pipeline_mode = #tpu.pipeline_mode<synchronous>, transform_indices = @transform_1, window_bounds = array<i64: 32, 256>}, {pipeline_mode = #tpu.pipeline_mode<synchronous>, transform_indices = @transform_2, window_bounds = array<i64: 9, 1024>}, {pipeline_mode = #tpu.pipeline_mode<synchronous>, transform_indices = @transform_3, window_bounds = array<i64: 9, 8, 12>}, {pipeline_mode = #tpu.pipeline_mode<synchronous>, transform_indices = @transform_4, window_bounds = array<i64: 8, 1>}, {pipeline_mode = #tpu.pipeline_mode<synchronous>, transform_indices = @transform_5, window_bounds = array<i64: 9, 8, 8>}, {pipeline_mode = #tpu.pipeline_mode<synchronous>, transform_indices = @transform_6, window_bounds = array<i64: 8, 1>}, {pipeline_mode = #tpu.pipeline_mode<synchronous>, transform_indices = @transform_7, window_bounds = array<i64: 9, 4, 8>}, {pipeline_mode = #tpu.pipeline_mode<synchronous>, transform_indices = @transform_8, window_bounds = array<i64: 4, 1>}, {transform_indices = @transform_9, window_bounds = array<i64: 4, 1024>}]} {
    %c0 = arith.constant 0 : index
    %c0_0 = arith.constant 0 : index
    %0 = vector.load %arg2[%c0, %c0_0] : memref<32x256xf32, #tpu.memory_space<vmem>>, vector<32x256xf32>
    %c0_1 = arith.constant 0 : index
    %c0_2 = arith.constant 0 : index
    %c0_3 = arith.constant 0 : index
    %1 = vector.load %arg1[%c0_1, %c0_2, %c0_3] : memref<4x12x32xf32, #tpu.memory_space<vmem>>, vector<1x12x32xf32>
    %2 = vector.shape_cast %1 : vector<1x12x32xf32> to vector<12x32xf32>
    %cst = arith.constant dense<0.000000e+00> : vector<12x256xf32>
    %3 = tpu.matmul %2, %0, %cst {dimension_numbers = #tpu.dot_dimension_numbers<[1], [0], [0], [1], [0, 0, 1, 1], [], []>} : vector<12x32xf32>, vector<32x256xf32>, vector<12x256xf32> -> vector<12x256xf32>
    %c1 = arith.constant 1 : index
    %c0_4 = arith.constant 0 : index
    %c0_5 = arith.constant 0 : index
    %4 = vector.load %arg1[%c1, %c0_4, %c0_5] : memref<4x12x32xf32, #tpu.memory_space<vmem>>, vector<1x12x32xf32>
    %5 = vector.shape_cast %4 : vector<1x12x32xf32> to vector<12x32xf32>
    %cst_6 = arith.constant dense<0.000000e+00> : vector<12x256xf32>
    %6 = tpu.matmul %5, %0, %cst_6 {dimension_numbers = #tpu.dot_dimension_numbers<[1], [0], [0], [1], [0, 0, 1, 1], [], []>} : vector<12x32xf32>, vector<32x256xf32>, vector<12x256xf32> -> vector<12x256xf32>
    %c2 = arith.constant 2 : index
    %c0_7 = arith.constant 0 : index
    %c0_8 = arith.constant 0 : index
    %7 = vector.load %arg1[%c2, %c0_7, %c0_8] : memref<4x12x32xf32, #tpu.memory_space<vmem>>, vector<1x12x32xf32>
    %8 = vector.shape_cast %7 : vector<1x12x32xf32> to vector<12x32xf32>
    %cst_9 = arith.constant dense<0.000000e+00> : vector<12x256xf32>
    %9 = tpu.matmul %8, %0, %cst_9 {dimension_numbers = #tpu.dot_dimension_numbers<[1], [0], [0], [1], [0, 0, 1, 1], [], []>} : vector<12x32xf32>, vector<32x256xf32>, vector<12x256xf32> -> vector<12x256xf32>
    %c3 = arith.constant 3 : index
    %c0_10 = arith.constant 0 : index
    %c0_11 = arith.constant 0 : index
    %10 = vector.load %arg1[%c3, %c0_10, %c0_11] : memref<4x12x32xf32, #tpu.memory_space<vmem>>, vector<1x12x32xf32>
    %11 = vector.shape_cast %10 : vector<1x12x32xf32> to vector<12x32xf32>
    %cst_12 = arith.constant dense<0.000000e+00> : vector<12x256xf32>
    %12 = tpu.matmul %11, %0, %cst_12 {dimension_numbers = #tpu.dot_dimension_numbers<[1], [0], [0], [1], [0, 0, 1, 1], [], []>} : vector<12x32xf32>, vector<32x256xf32>, vector<12x256xf32> -> vector<12x256xf32>
    %13 = tpu.concatenate %3, %6, %9, %12 in 1 : vector<12x256xf32>, vector<12x256xf32>, vector<12x256xf32>, vector<12x256xf32> -> vector<12x1024xf32>
    %c17_i32 = arith.constant 17 : i32
    %14 = tpu.dynamic_rotate %13 by %c17_i32 dim 1 : vector<12x1024xf32>, i32 -> vector<12x1024xf32>
    %c0_13 = arith.constant 0 : index
    %c0_14 = arith.constant 0 : index
    %15 = vector.load %arg3[%c0_13, %c0_14] : memref<9x1024xf32, #tpu.memory_space<vmem>>, vector<1x1024xf32>
    %16 = vector.broadcast %15 : vector<1x1024xf32> to vector<12x1024xf32>
    %17 = arith.mulf %14, %16 : vector<12x1024xf32>
    %c0_15 = arith.constant 0 : index
    %c0_16 = arith.constant 0 : index
    %c0_17 = arith.constant 0 : index
    %18 = vector.load %arg4[%c0_15, %c0_16, %c0_17] : memref<9x8x12xf32, #tpu.memory_space<vmem>>, vector<1x8x12xf32>
    %19 = vector.shape_cast %18 : vector<1x8x12xf32> to vector<8x12xf32>
    %cst_18 = arith.constant dense<0.000000e+00> : vector<8x1024xf32>
    %20 = tpu.matmul %19, %17, %cst_18 {dimension_numbers = #tpu.dot_dimension_numbers<[1], [0], [0], [1], [0, 0, 1, 1], [], []>} : vector<8x12xf32>, vector<12x1024xf32>, vector<8x1024xf32> -> vector<8x1024xf32>
    %c16_i32 = arith.constant 16 : i32
    %21 = tpu.dynamic_rotate %13 by %c16_i32 dim 1 : vector<12x1024xf32>, i32 -> vector<12x1024xf32>
    %c1_19 = arith.constant 1 : index
    %c0_20 = arith.constant 0 : index
    %22 = vector.load %arg3[%c1_19, %c0_20] : memref<9x1024xf32, #tpu.memory_space<vmem>>, vector<1x1024xf32>
    %23 = vector.broadcast %22 : vector<1x1024xf32> to vector<12x1024xf32>
    %24 = arith.mulf %21, %23 : vector<12x1024xf32>
    %c1_21 = arith.constant 1 : index
    %c0_22 = arith.constant 0 : index
    %c0_23 = arith.constant 0 : index
    %25 = vector.load %arg4[%c1_21, %c0_22, %c0_23] : memref<9x8x12xf32, #tpu.memory_space<vmem>>, vector<1x8x12xf32>
    %26 = vector.shape_cast %25 : vector<1x8x12xf32> to vector<8x12xf32>
    %cst_24 = arith.constant dense<0.000000e+00> : vector<8x1024xf32>
    %27 = tpu.matmul %26, %24, %cst_24 {dimension_numbers = #tpu.dot_dimension_numbers<[1], [0], [0], [1], [0, 0, 1, 1], [], []>} : vector<8x12xf32>, vector<12x1024xf32>, vector<8x1024xf32> -> vector<8x1024xf32>
    %28 = arith.addf %20, %27 : vector<8x1024xf32>
    %c15_i32 = arith.constant 15 : i32
    %29 = tpu.dynamic_rotate %13 by %c15_i32 dim 1 : vector<12x1024xf32>, i32 -> vector<12x1024xf32>
    %c2_25 = arith.constant 2 : index
    %c0_26 = arith.constant 0 : index
    %30 = vector.load %arg3[%c2_25, %c0_26] : memref<9x1024xf32, #tpu.memory_space<vmem>>, vector<1x1024xf32>
    %31 = vector.broadcast %30 : vector<1x1024xf32> to vector<12x1024xf32>
    %32 = arith.mulf %29, %31 : vector<12x1024xf32>
    %c2_27 = arith.constant 2 : index
    %c0_28 = arith.constant 0 : index
    %c0_29 = arith.constant 0 : index
    %33 = vector.load %arg4[%c2_27, %c0_28, %c0_29] : memref<9x8x12xf32, #tpu.memory_space<vmem>>, vector<1x8x12xf32>
    %34 = vector.shape_cast %33 : vector<1x8x12xf32> to vector<8x12xf32>
    %cst_30 = arith.constant dense<0.000000e+00> : vector<8x1024xf32>
    %35 = tpu.matmul %34, %32, %cst_30 {dimension_numbers = #tpu.dot_dimension_numbers<[1], [0], [0], [1], [0, 0, 1, 1], [], []>} : vector<8x12xf32>, vector<12x1024xf32>, vector<8x1024xf32> -> vector<8x1024xf32>
    %36 = arith.addf %28, %35 : vector<8x1024xf32>
    %c1_i32 = arith.constant 1 : i32
    %37 = tpu.dynamic_rotate %13 by %c1_i32 dim 1 : vector<12x1024xf32>, i32 -> vector<12x1024xf32>
    %c3_31 = arith.constant 3 : index
    %c0_32 = arith.constant 0 : index
    %38 = vector.load %arg3[%c3_31, %c0_32] : memref<9x1024xf32, #tpu.memory_space<vmem>>, vector<1x1024xf32>
    %39 = vector.broadcast %38 : vector<1x1024xf32> to vector<12x1024xf32>
    %40 = arith.mulf %37, %39 : vector<12x1024xf32>
    %c3_33 = arith.constant 3 : index
    %c0_34 = arith.constant 0 : index
    %c0_35 = arith.constant 0 : index
    %41 = vector.load %arg4[%c3_33, %c0_34, %c0_35] : memref<9x8x12xf32, #tpu.memory_space<vmem>>, vector<1x8x12xf32>
    %42 = vector.shape_cast %41 : vector<1x8x12xf32> to vector<8x12xf32>
    %cst_36 = arith.constant dense<0.000000e+00> : vector<8x1024xf32>
    %43 = tpu.matmul %42, %40, %cst_36 {dimension_numbers = #tpu.dot_dimension_numbers<[1], [0], [0], [1], [0, 0, 1, 1], [], []>} : vector<8x12xf32>, vector<12x1024xf32>, vector<8x1024xf32> -> vector<8x1024xf32>
    %44 = arith.addf %36, %43 : vector<8x1024xf32>
    %c4 = arith.constant 4 : index
    %c0_37 = arith.constant 0 : index
    %c0_38 = arith.constant 0 : index
    %45 = vector.load %arg4[%c4, %c0_37, %c0_38] : memref<9x8x12xf32, #tpu.memory_space<vmem>>, vector<1x8x12xf32>
    %46 = vector.shape_cast %45 : vector<1x8x12xf32> to vector<8x12xf32>
    %cst_39 = arith.constant dense<0.000000e+00> : vector<8x1024xf32>
    %47 = tpu.matmul %46, %13, %cst_39 {dimension_numbers = #tpu.dot_dimension_numbers<[1], [0], [0], [1], [0, 0, 1, 1], [], []>} : vector<8x12xf32>, vector<12x1024xf32>, vector<8x1024xf32> -> vector<8x1024xf32>
    %48 = arith.addf %44, %47 : vector<8x1024xf32>
    %c1023_i32 = arith.constant 1023 : i32
    %49 = tpu.dynamic_rotate %13 by %c1023_i32 dim 1 : vector<12x1024xf32>, i32 -> vector<12x1024xf32>
    %c5 = arith.constant 5 : index
    %c0_40 = arith.constant 0 : index
    %50 = vector.load %arg3[%c5, %c0_40] : memref<9x1024xf32, #tpu.memory_space<vmem>>, vector<1x1024xf32>
    %51 = vector.broadcast %50 : vector<1x1024xf32> to vector<12x1024xf32>
    %52 = arith.mulf %49, %51 : vector<12x1024xf32>
    %c5_41 = arith.constant 5 : index
    %c0_42 = arith.constant 0 : index
    %c0_43 = arith.constant 0 : index
    %53 = vector.load %arg4[%c5_41, %c0_42, %c0_43] : memref<9x8x12xf32, #tpu.memory_space<vmem>>, vector<1x8x12xf32>
    %54 = vector.shape_cast %53 : vector<1x8x12xf32> to vector<8x12xf32>
    %cst_44 = arith.constant dense<0.000000e+00> : vector<8x1024xf32>
    %55 = tpu.matmul %54, %52, %cst_44 {dimension_numbers = #tpu.dot_dimension_numbers<[1], [0], [0], [1], [0, 0, 1, 1], [], []>} : vector<8x12xf32>, vector<12x1024xf32>, vector<8x1024xf32> -> vector<8x1024xf32>
    %56 = arith.addf %48, %55 : vector<8x1024xf32>
    %c1009_i32 = arith.constant 1009 : i32
    %57 = tpu.dynamic_rotate %13 by %c1009_i32 dim 1 : vector<12x1024xf32>, i32 -> vector<12x1024xf32>
    %c6 = arith.constant 6 : index
    %c0_45 = arith.constant 0 : index
    %58 = vector.load %arg3[%c6, %c0_45] : memref<9x1024xf32, #tpu.memory_space<vmem>>, vector<1x1024xf32>
    %59 = vector.broadcast %58 : vector<1x1024xf32> to vector<12x1024xf32>
    %60 = arith.mulf %57, %59 : vector<12x1024xf32>
    %c6_46 = arith.constant 6 : index
    %c0_47 = arith.constant 0 : index
    %c0_48 = arith.constant 0 : index
    %61 = vector.load %arg4[%c6_46, %c0_47, %c0_48] : memref<9x8x12xf32, #tpu.memory_space<vmem>>, vector<1x8x12xf32>
    %62 = vector.shape_cast %61 : vector<1x8x12xf32> to vector<8x12xf32>
    %cst_49 = arith.constant dense<0.000000e+00> : vector<8x1024xf32>
    %63 = tpu.matmul %62, %60, %cst_49 {dimension_numbers = #tpu.dot_dimension_numbers<[1], [0], [0], [1], [0, 0, 1, 1], [], []>} : vector<8x12xf32>, vector<12x1024xf32>, vector<8x1024xf32> -> vector<8x1024xf32>
    %64 = arith.addf %56, %63 : vector<8x1024xf32>
    %c1008_i32 = arith.constant 1008 : i32
    %65 = tpu.dynamic_rotate %13 by %c1008_i32 dim 1 : vector<12x1024xf32>, i32 -> vector<12x1024xf32>
    %c7 = arith.constant 7 : index
    %c0_50 = arith.constant 0 : index
    %66 = vector.load %arg3[%c7, %c0_50] : memref<9x1024xf32, #tpu.memory_space<vmem>>, vector<1x1024xf32>
    %67 = vector.broadcast %66 : vector<1x1024xf32> to vector<12x1024xf32>
    %68 = arith.mulf %65, %67 : vector<12x1024xf32>
    %c7_51 = arith.constant 7 : index
    %c0_52 = arith.constant 0 : index
    %c0_53 = arith.constant 0 : index
    %69 = vector.load %arg4[%c7_51, %c0_52, %c0_53] : memref<9x8x12xf32, #tpu.memory_space<vmem>>, vector<1x8x12xf32>
    %70 = vector.shape_cast %69 : vector<1x8x12xf32> to vector<8x12xf32>
    %cst_54 = arith.constant dense<0.000000e+00> : vector<8x1024xf32>
    %71 = tpu.matmul %70, %68, %cst_54 {dimension_numbers = #tpu.dot_dimension_numbers<[1], [0], [0], [1], [0, 0, 1, 1], [], []>} : vector<8x12xf32>, vector<12x1024xf32>, vector<8x1024xf32> -> vector<8x1024xf32>
    %72 = arith.addf %64, %71 : vector<8x1024xf32>
    %c1007_i32 = arith.constant 1007 : i32
    %73 = tpu.dynamic_rotate %13 by %c1007_i32 dim 1 : vector<12x1024xf32>, i32 -> vector<12x1024xf32>
    %c8 = arith.constant 8 : index
    %c0_55 = arith.constant 0 : index
    %74 = vector.load %arg3[%c8, %c0_55] : memref<9x1024xf32, #tpu.memory_space<vmem>>, vector<1x1024xf32>
    %75 = vector.broadcast %74 : vector<1x1024xf32> to vector<12x1024xf32>
    %76 = arith.mulf %73, %75 : vector<12x1024xf32>
    %c8_56 = arith.constant 8 : index
    %c0_57 = arith.constant 0 : index
    %c0_58 = arith.constant 0 : index
    %77 = vector.load %arg4[%c8_56, %c0_57, %c0_58] : memref<9x8x12xf32, #tpu.memory_space<vmem>>, vector<1x8x12xf32>
    %78 = vector.shape_cast %77 : vector<1x8x12xf32> to vector<8x12xf32>
    %cst_59 = arith.constant dense<0.000000e+00> : vector<8x1024xf32>
    %79 = tpu.matmul %78, %76, %cst_59 {dimension_numbers = #tpu.dot_dimension_numbers<[1], [0], [0], [1], [0, 0, 1, 1], [], []>} : vector<8x12xf32>, vector<12x1024xf32>, vector<8x1024xf32> -> vector<8x1024xf32>
    %80 = arith.addf %72, %79 : vector<8x1024xf32>
    %c0_60 = arith.constant 0 : index
    %c0_61 = arith.constant 0 : index
    %81 = vector.load %arg5[%c0_60, %c0_61] : memref<8x1xf32, #tpu.memory_space<vmem>>, vector<8x1xf32>
    %82 = vector.broadcast %81 : vector<8x1xf32> to vector<8x1024xf32>
    %83 = arith.addf %80, %82 : vector<8x1024xf32>
    %cst_62 = arith.constant 0.000000e+00 : f32
    %84 = vector.broadcast %cst_62 : f32 to vector<8x1024xf32>
    %85 = arith.cmpf oge, %83, %84 : vector<8x1024xf32>
    %cst_63 = arith.constant 1.000000e-01 : f32
    %86 = vector.broadcast %cst_63 : f32 to vector<8x1024xf32>
    %87 = arith.mulf %86, %83 : vector<8x1024xf32>
    %88 = arith.select %85, %83, %87 : vector<8x1024xi1>, vector<8x1024xf32>
    %c17_i32_64 = arith.constant 17 : i32
    %89 = tpu.dynamic_rotate %88 by %c17_i32_64 dim 1 : vector<8x1024xf32>, i32 -> vector<8x1024xf32>
    %c0_65 = arith.constant 0 : index
    %c0_66 = arith.constant 0 : index
    %90 = vector.load %arg3[%c0_65, %c0_66] : memref<9x1024xf32, #tpu.memory_space<vmem>>, vector<1x1024xf32>
    %91 = vector.broadcast %90 : vector<1x1024xf32> to vector<8x1024xf32>
    %92 = arith.mulf %89, %91 : vector<8x1024xf32>
    %c0_67 = arith.constant 0 : index
    %c0_68 = arith.constant 0 : index
    %c0_69 = arith.constant 0 : index
    %93 = vector.load %arg6[%c0_67, %c0_68, %c0_69] : memref<9x8x8xf32, #tpu.memory_space<vmem>>, vector<1x8x8xf32>
    %94 = vector.shape_cast %93 : vector<1x8x8xf32> to vector<8x8xf32>
    %cst_70 = arith.constant dense<0.000000e+00> : vector<8x1024xf32>
    %95 = tpu.matmul %94, %92, %cst_70 {dimension_numbers = #tpu.dot_dimension_numbers<[1], [0], [0], [1], [0, 0, 1, 1], [], []>} : vector<8x8xf32>, vector<8x1024xf32>, vector<8x1024xf32> -> vector<8x1024xf32>
    %c16_i32_71 = arith.constant 16 : i32
    %96 = tpu.dynamic_rotate %88 by %c16_i32_71 dim 1 : vector<8x1024xf32>, i32 -> vector<8x1024xf32>
    %c1_72 = arith.constant 1 : index
    %c0_73 = arith.constant 0 : index
    %97 = vector.load %arg3[%c1_72, %c0_73] : memref<9x1024xf32, #tpu.memory_space<vmem>>, vector<1x1024xf32>
    %98 = vector.broadcast %97 : vector<1x1024xf32> to vector<8x1024xf32>
    %99 = arith.mulf %96, %98 : vector<8x1024xf32>
    %c1_74 = arith.constant 1 : index
    %c0_75 = arith.constant 0 : index
    %c0_76 = arith.constant 0 : index
    %100 = vector.load %arg6[%c1_74, %c0_75, %c0_76] : memref<9x8x8xf32, #tpu.memory_space<vmem>>, vector<1x8x8xf32>
    %101 = vector.shape_cast %100 : vector<1x8x8xf32> to vector<8x8xf32>
    %cst_77 = arith.constant dense<0.000000e+00> : vector<8x1024xf32>
    %102 = tpu.matmul %101, %99, %cst_77 {dimension_numbers = #tpu.dot_dimension_numbers<[1], [0], [0], [1], [0, 0, 1, 1], [], []>} : vector<8x8xf32>, vector<8x1024xf32>, vector<8x1024xf32> -> vector<8x1024xf32>
    %103 = arith.addf %95, %102 : vector<8x1024xf32>
    %c15_i32_78 = arith.constant 15 : i32
    %104 = tpu.dynamic_rotate %88 by %c15_i32_78 dim 1 : vector<8x1024xf32>, i32 -> vector<8x1024xf32>
    %c2_79 = arith.constant 2 : index
    %c0_80 = arith.constant 0 : index
    %105 = vector.load %arg3[%c2_79, %c0_80] : memref<9x1024xf32, #tpu.memory_space<vmem>>, vector<1x1024xf32>
    %106 = vector.broadcast %105 : vector<1x1024xf32> to vector<8x1024xf32>
    %107 = arith.mulf %104, %106 : vector<8x1024xf32>
    %c2_81 = arith.constant 2 : index
    %c0_82 = arith.constant 0 : index
    %c0_83 = arith.constant 0 : index
    %108 = vector.load %arg6[%c2_81, %c0_82, %c0_83] : memref<9x8x8xf32, #tpu.memory_space<vmem>>, vector<1x8x8xf32>
    %109 = vector.shape_cast %108 : vector<1x8x8xf32> to vector<8x8xf32>
    %cst_84 = arith.constant dense<0.000000e+00> : vector<8x1024xf32>
    %110 = tpu.matmul %109, %107, %cst_84 {dimension_numbers = #tpu.dot_dimension_numbers<[1], [0], [0], [1], [0, 0, 1, 1], [], []>} : vector<8x8xf32>, vector<8x1024xf32>, vector<8x1024xf32> -> vector<8x1024xf32>
    %111 = arith.addf %103, %110 : vector<8x1024xf32>
    %c1_i32_85 = arith.constant 1 : i32
    %112 = tpu.dynamic_rotate %88 by %c1_i32_85 dim 1 : vector<8x1024xf32>, i32 -> vector<8x1024xf32>
    %c3_86 = arith.constant 3 : index
    %c0_87 = arith.constant 0 : index
    %113 = vector.load %arg3[%c3_86, %c0_87] : memref<9x1024xf32, #tpu.memory_space<vmem>>, vector<1x1024xf32>
    %114 = vector.broadcast %113 : vector<1x1024xf32> to vector<8x1024xf32>
    %115 = arith.mulf %112, %114 : vector<8x1024xf32>
    %c3_88 = arith.constant 3 : index
    %c0_89 = arith.constant 0 : index
    %c0_90 = arith.constant 0 : index
    %116 = vector.load %arg6[%c3_88, %c0_89, %c0_90] : memref<9x8x8xf32, #tpu.memory_space<vmem>>, vector<1x8x8xf32>
    %117 = vector.shape_cast %116 : vector<1x8x8xf32> to vector<8x8xf32>
    %cst_91 = arith.constant dense<0.000000e+00> : vector<8x1024xf32>
    %118 = tpu.matmul %117, %115, %cst_91 {dimension_numbers = #tpu.dot_dimension_numbers<[1], [0], [0], [1], [0, 0, 1, 1], [], []>} : vector<8x8xf32>, vector<8x1024xf32>, vector<8x1024xf32> -> vector<8x1024xf32>
    %119 = arith.addf %111, %118 : vector<8x1024xf32>
    %c4_92 = arith.constant 4 : index
    %c0_93 = arith.constant 0 : index
    %c0_94 = arith.constant 0 : index
    %120 = vector.load %arg6[%c4_92, %c0_93, %c0_94] : memref<9x8x8xf32, #tpu.memory_space<vmem>>, vector<1x8x8xf32>
    %121 = vector.shape_cast %120 : vector<1x8x8xf32> to vector<8x8xf32>
    %cst_95 = arith.constant dense<0.000000e+00> : vector<8x1024xf32>
    %122 = tpu.matmul %121, %88, %cst_95 {dimension_numbers = #tpu.dot_dimension_numbers<[1], [0], [0], [1], [0, 0, 1, 1], [], []>} : vector<8x8xf32>, vector<8x1024xf32>, vector<8x1024xf32> -> vector<8x1024xf32>
    %123 = arith.addf %119, %122 : vector<8x1024xf32>
    %c1023_i32_96 = arith.constant 1023 : i32
    %124 = tpu.dynamic_rotate %88 by %c1023_i32_96 dim 1 : vector<8x1024xf32>, i32 -> vector<8x1024xf32>
    %c5_97 = arith.constant 5 : index
    %c0_98 = arith.constant 0 : index
    %125 = vector.load %arg3[%c5_97, %c0_98] : memref<9x1024xf32, #tpu.memory_space<vmem>>, vector<1x1024xf32>
    %126 = vector.broadcast %125 : vector<1x1024xf32> to vector<8x1024xf32>
    %127 = arith.mulf %124, %126 : vector<8x1024xf32>
    %c5_99 = arith.constant 5 : index
    %c0_100 = arith.constant 0 : index
    %c0_101 = arith.constant 0 : index
    %128 = vector.load %arg6[%c5_99, %c0_100, %c0_101] : memref<9x8x8xf32, #tpu.memory_space<vmem>>, vector<1x8x8xf32>
    %129 = vector.shape_cast %128 : vector<1x8x8xf32> to vector<8x8xf32>
    %cst_102 = arith.constant dense<0.000000e+00> : vector<8x1024xf32>
    %130 = tpu.matmul %129, %127, %cst_102 {dimension_numbers = #tpu.dot_dimension_numbers<[1], [0], [0], [1], [0, 0, 1, 1], [], []>} : vector<8x8xf32>, vector<8x1024xf32>, vector<8x1024xf32> -> vector<8x1024xf32>
    %131 = arith.addf %123, %130 : vector<8x1024xf32>
    %c1009_i32_103 = arith.constant 1009 : i32
    %132 = tpu.dynamic_rotate %88 by %c1009_i32_103 dim 1 : vector<8x1024xf32>, i32 -> vector<8x1024xf32>
    %c6_104 = arith.constant 6 : index
    %c0_105 = arith.constant 0 : index
    %133 = vector.load %arg3[%c6_104, %c0_105] : memref<9x1024xf32, #tpu.memory_space<vmem>>, vector<1x1024xf32>
    %134 = vector.broadcast %133 : vector<1x1024xf32> to vector<8x1024xf32>
    %135 = arith.mulf %132, %134 : vector<8x1024xf32>
    %c6_106 = arith.constant 6 : index
    %c0_107 = arith.constant 0 : index
    %c0_108 = arith.constant 0 : index
    %136 = vector.load %arg6[%c6_106, %c0_107, %c0_108] : memref<9x8x8xf32, #tpu.memory_space<vmem>>, vector<1x8x8xf32>
    %137 = vector.shape_cast %136 : vector<1x8x8xf32> to vector<8x8xf32>
    %cst_109 = arith.constant dense<0.000000e+00> : vector<8x1024xf32>
    %138 = tpu.matmul %137, %135, %cst_109 {dimension_numbers = #tpu.dot_dimension_numbers<[1], [0], [0], [1], [0, 0, 1, 1], [], []>} : vector<8x8xf32>, vector<8x1024xf32>, vector<8x1024xf32> -> vector<8x1024xf32>
    %139 = arith.addf %131, %138 : vector<8x1024xf32>
    %c1008_i32_110 = arith.constant 1008 : i32
    %140 = tpu.dynamic_rotate %88 by %c1008_i32_110 dim 1 : vector<8x1024xf32>, i32 -> vector<8x1024xf32>
    %c7_111 = arith.constant 7 : index
    %c0_112 = arith.constant 0 : index
    %141 = vector.load %arg3[%c7_111, %c0_112] : memref<9x1024xf32, #tpu.memory_space<vmem>>, vector<1x1024xf32>
    %142 = vector.broadcast %141 : vector<1x1024xf32> to vector<8x1024xf32>
    %143 = arith.mulf %140, %142 : vector<8x1024xf32>
    %c7_113 = arith.constant 7 : index
    %c0_114 = arith.constant 0 : index
    %c0_115 = arith.constant 0 : index
    %144 = vector.load %arg6[%c7_113, %c0_114, %c0_115] : memref<9x8x8xf32, #tpu.memory_space<vmem>>, vector<1x8x8xf32>
    %145 = vector.shape_cast %144 : vector<1x8x8xf32> to vector<8x8xf32>
    %cst_116 = arith.constant dense<0.000000e+00> : vector<8x1024xf32>
    %146 = tpu.matmul %145, %143, %cst_116 {dimension_numbers = #tpu.dot_dimension_numbers<[1], [0], [0], [1], [0, 0, 1, 1], [], []>} : vector<8x8xf32>, vector<8x1024xf32>, vector<8x1024xf32> -> vector<8x1024xf32>
    %147 = arith.addf %139, %146 : vector<8x1024xf32>
    %c1007_i32_117 = arith.constant 1007 : i32
    %148 = tpu.dynamic_rotate %88 by %c1007_i32_117 dim 1 : vector<8x1024xf32>, i32 -> vector<8x1024xf32>
    %c8_118 = arith.constant 8 : index
    %c0_119 = arith.constant 0 : index
    %149 = vector.load %arg3[%c8_118, %c0_119] : memref<9x1024xf32, #tpu.memory_space<vmem>>, vector<1x1024xf32>
    %150 = vector.broadcast %149 : vector<1x1024xf32> to vector<8x1024xf32>
    %151 = arith.mulf %148, %150 : vector<8x1024xf32>
    %c8_120 = arith.constant 8 : index
    %c0_121 = arith.constant 0 : index
    %c0_122 = arith.constant 0 : index
    %152 = vector.load %arg6[%c8_120, %c0_121, %c0_122] : memref<9x8x8xf32, #tpu.memory_space<vmem>>, vector<1x8x8xf32>
    %153 = vector.shape_cast %152 : vector<1x8x8xf32> to vector<8x8xf32>
    %cst_123 = arith.constant dense<0.000000e+00> : vector<8x1024xf32>
    %154 = tpu.matmul %153, %151, %cst_123 {dimension_numbers = #tpu.dot_dimension_numbers<[1], [0], [0], [1], [0, 0, 1, 1], [], []>} : vector<8x8xf32>, vector<8x1024xf32>, vector<8x1024xf32> -> vector<8x1024xf32>
    %155 = arith.addf %147, %154 : vector<8x1024xf32>
    %c0_124 = arith.constant 0 : index
    %c0_125 = arith.constant 0 : index
    %156 = vector.load %arg7[%c0_124, %c0_125] : memref<8x1xf32, #tpu.memory_space<vmem>>, vector<8x1xf32>
    %157 = vector.broadcast %156 : vector<8x1xf32> to vector<8x1024xf32>
    %158 = arith.addf %155, %157 : vector<8x1024xf32>
    %cst_126 = arith.constant 0.000000e+00 : f32
    %159 = vector.broadcast %cst_126 : f32 to vector<8x1024xf32>
    %160 = arith.cmpf oge, %158, %159 : vector<8x1024xf32>
    %cst_127 = arith.constant 1.000000e-01 : f32
    %161 = vector.broadcast %cst_127 : f32 to vector<8x1024xf32>
    %162 = arith.mulf %161, %158 : vector<8x1024xf32>
    %163 = arith.select %160, %158, %162 : vector<8x1024xi1>, vector<8x1024xf32>
    %c17_i32_128 = arith.constant 17 : i32
    %164 = tpu.dynamic_rotate %163 by %c17_i32_128 dim 1 : vector<8x1024xf32>, i32 -> vector<8x1024xf32>
    %c0_129 = arith.constant 0 : index
    %c0_130 = arith.constant 0 : index
    %165 = vector.load %arg3[%c0_129, %c0_130] : memref<9x1024xf32, #tpu.memory_space<vmem>>, vector<1x1024xf32>
    %166 = vector.broadcast %165 : vector<1x1024xf32> to vector<8x1024xf32>
    %167 = arith.mulf %164, %166 : vector<8x1024xf32>
    %c0_131 = arith.constant 0 : index
    %c0_132 = arith.constant 0 : index
    %c0_133 = arith.constant 0 : index
    %168 = vector.load %arg8[%c0_131, %c0_132, %c0_133] : memref<9x4x8xf32, #tpu.memory_space<vmem>>, vector<1x4x8xf32>
    %169 = vector.shape_cast %168 : vector<1x4x8xf32> to vector<4x8xf32>
    %cst_134 = arith.constant dense<0.000000e+00> : vector<4x1024xf32>
    %170 = tpu.matmul %169, %167, %cst_134 {dimension_numbers = #tpu.dot_dimension_numbers<[1], [0], [0], [1], [0, 0, 1, 1], [], []>} : vector<4x8xf32>, vector<8x1024xf32>, vector<4x1024xf32> -> vector<4x1024xf32>
    %c16_i32_135 = arith.constant 16 : i32
    %171 = tpu.dynamic_rotate %163 by %c16_i32_135 dim 1 : vector<8x1024xf32>, i32 -> vector<8x1024xf32>
    %c1_136 = arith.constant 1 : index
    %c0_137 = arith.constant 0 : index
    %172 = vector.load %arg3[%c1_136, %c0_137] : memref<9x1024xf32, #tpu.memory_space<vmem>>, vector<1x1024xf32>
    %173 = vector.broadcast %172 : vector<1x1024xf32> to vector<8x1024xf32>
    %174 = arith.mulf %171, %173 : vector<8x1024xf32>
    %c1_138 = arith.constant 1 : index
    %c0_139 = arith.constant 0 : index
    %c0_140 = arith.constant 0 : index
    %175 = vector.load %arg8[%c1_138, %c0_139, %c0_140] : memref<9x4x8xf32, #tpu.memory_space<vmem>>, vector<1x4x8xf32>
    %176 = vector.shape_cast %175 : vector<1x4x8xf32> to vector<4x8xf32>
    %cst_141 = arith.constant dense<0.000000e+00> : vector<4x1024xf32>
    %177 = tpu.matmul %176, %174, %cst_141 {dimension_numbers = #tpu.dot_dimension_numbers<[1], [0], [0], [1], [0, 0, 1, 1], [], []>} : vector<4x8xf32>, vector<8x1024xf32>, vector<4x1024xf32> -> vector<4x1024xf32>
    %178 = arith.addf %170, %177 : vector<4x1024xf32>
    %c15_i32_142 = arith.constant 15 : i32
    %179 = tpu.dynamic_rotate %163 by %c15_i32_142 dim 1 : vector<8x1024xf32>, i32 -> vector<8x1024xf32>
    %c2_143 = arith.constant 2 : index
    %c0_144 = arith.constant 0 : index
    %180 = vector.load %arg3[%c2_143, %c0_144] : memref<9x1024xf32, #tpu.memory_space<vmem>>, vector<1x1024xf32>
    %181 = vector.broadcast %180 : vector<1x1024xf32> to vector<8x1024xf32>
    %182 = arith.mulf %179, %181 : vector<8x1024xf32>
    %c2_145 = arith.constant 2 : index
    %c0_146 = arith.constant 0 : index
    %c0_147 = arith.constant 0 : index
    %183 = vector.load %arg8[%c2_145, %c0_146, %c0_147] : memref<9x4x8xf32, #tpu.memory_space<vmem>>, vector<1x4x8xf32>
    %184 = vector.shape_cast %183 : vector<1x4x8xf32> to vector<4x8xf32>
    %cst_148 = arith.constant dense<0.000000e+00> : vector<4x1024xf32>
    %185 = tpu.matmul %184, %182, %cst_148 {dimension_numbers = #tpu.dot_dimension_numbers<[1], [0], [0], [1], [0, 0, 1, 1], [], []>} : vector<4x8xf32>, vector<8x1024xf32>, vector<4x1024xf32> -> vector<4x1024xf32>
    %186 = arith.addf %178, %185 : vector<4x1024xf32>
    %c1_i32_149 = arith.constant 1 : i32
    %187 = tpu.dynamic_rotate %163 by %c1_i32_149 dim 1 : vector<8x1024xf32>, i32 -> vector<8x1024xf32>
    %c3_150 = arith.constant 3 : index
    %c0_151 = arith.constant 0 : index
    %188 = vector.load %arg3[%c3_150, %c0_151] : memref<9x1024xf32, #tpu.memory_space<vmem>>, vector<1x1024xf32>
    %189 = vector.broadcast %188 : vector<1x1024xf32> to vector<8x1024xf32>
    %190 = arith.mulf %187, %189 : vector<8x1024xf32>
    %c3_152 = arith.constant 3 : index
    %c0_153 = arith.constant 0 : index
    %c0_154 = arith.constant 0 : index
    %191 = vector.load %arg8[%c3_152, %c0_153, %c0_154] : memref<9x4x8xf32, #tpu.memory_space<vmem>>, vector<1x4x8xf32>
    %192 = vector.shape_cast %191 : vector<1x4x8xf32> to vector<4x8xf32>
    %cst_155 = arith.constant dense<0.000000e+00> : vector<4x1024xf32>
    %193 = tpu.matmul %192, %190, %cst_155 {dimension_numbers = #tpu.dot_dimension_numbers<[1], [0], [0], [1], [0, 0, 1, 1], [], []>} : vector<4x8xf32>, vector<8x1024xf32>, vector<4x1024xf32> -> vector<4x1024xf32>
    %194 = arith.addf %186, %193 : vector<4x1024xf32>
    %c4_156 = arith.constant 4 : index
    %c0_157 = arith.constant 0 : index
    %c0_158 = arith.constant 0 : index
    %195 = vector.load %arg8[%c4_156, %c0_157, %c0_158] : memref<9x4x8xf32, #tpu.memory_space<vmem>>, vector<1x4x8xf32>
    %196 = vector.shape_cast %195 : vector<1x4x8xf32> to vector<4x8xf32>
    %cst_159 = arith.constant dense<0.000000e+00> : vector<4x1024xf32>
    %197 = tpu.matmul %196, %163, %cst_159 {dimension_numbers = #tpu.dot_dimension_numbers<[1], [0], [0], [1], [0, 0, 1, 1], [], []>} : vector<4x8xf32>, vector<8x1024xf32>, vector<4x1024xf32> -> vector<4x1024xf32>
    %198 = arith.addf %194, %197 : vector<4x1024xf32>
    %c1023_i32_160 = arith.constant 1023 : i32
    %199 = tpu.dynamic_rotate %163 by %c1023_i32_160 dim 1 : vector<8x1024xf32>, i32 -> vector<8x1024xf32>
    %c5_161 = arith.constant 5 : index
    %c0_162 = arith.constant 0 : index
    %200 = vector.load %arg3[%c5_161, %c0_162] : memref<9x1024xf32, #tpu.memory_space<vmem>>, vector<1x1024xf32>
    %201 = vector.broadcast %200 : vector<1x1024xf32> to vector<8x1024xf32>
    %202 = arith.mulf %199, %201 : vector<8x1024xf32>
    %c5_163 = arith.constant 5 : index
    %c0_164 = arith.constant 0 : index
    %c0_165 = arith.constant 0 : index
    %203 = vector.load %arg8[%c5_163, %c0_164, %c0_165] : memref<9x4x8xf32, #tpu.memory_space<vmem>>, vector<1x4x8xf32>
    %204 = vector.shape_cast %203 : vector<1x4x8xf32> to vector<4x8xf32>
    %cst_166 = arith.constant dense<0.000000e+00> : vector<4x1024xf32>
    %205 = tpu.matmul %204, %202, %cst_166 {dimension_numbers = #tpu.dot_dimension_numbers<[1], [0], [0], [1], [0, 0, 1, 1], [], []>} : vector<4x8xf32>, vector<8x1024xf32>, vector<4x1024xf32> -> vector<4x1024xf32>
    %206 = arith.addf %198, %205 : vector<4x1024xf32>
    %c1009_i32_167 = arith.constant 1009 : i32
    %207 = tpu.dynamic_rotate %163 by %c1009_i32_167 dim 1 : vector<8x1024xf32>, i32 -> vector<8x1024xf32>
    %c6_168 = arith.constant 6 : index
    %c0_169 = arith.constant 0 : index
    %208 = vector.load %arg3[%c6_168, %c0_169] : memref<9x1024xf32, #tpu.memory_space<vmem>>, vector<1x1024xf32>
    %209 = vector.broadcast %208 : vector<1x1024xf32> to vector<8x1024xf32>
    %210 = arith.mulf %207, %209 : vector<8x1024xf32>
    %c6_170 = arith.constant 6 : index
    %c0_171 = arith.constant 0 : index
    %c0_172 = arith.constant 0 : index
    %211 = vector.load %arg8[%c6_170, %c0_171, %c0_172] : memref<9x4x8xf32, #tpu.memory_space<vmem>>, vector<1x4x8xf32>
    %212 = vector.shape_cast %211 : vector<1x4x8xf32> to vector<4x8xf32>
    %cst_173 = arith.constant dense<0.000000e+00> : vector<4x1024xf32>
    %213 = tpu.matmul %212, %210, %cst_173 {dimension_numbers = #tpu.dot_dimension_numbers<[1], [0], [0], [1], [0, 0, 1, 1], [], []>} : vector<4x8xf32>, vector<8x1024xf32>, vector<4x1024xf32> -> vector<4x1024xf32>
    %214 = arith.addf %206, %213 : vector<4x1024xf32>
    %c1008_i32_174 = arith.constant 1008 : i32
    %215 = tpu.dynamic_rotate %163 by %c1008_i32_174 dim 1 : vector<8x1024xf32>, i32 -> vector<8x1024xf32>
    %c7_175 = arith.constant 7 : index
    %c0_176 = arith.constant 0 : index
    %216 = vector.load %arg3[%c7_175, %c0_176] : memref<9x1024xf32, #tpu.memory_space<vmem>>, vector<1x1024xf32>
    %217 = vector.broadcast %216 : vector<1x1024xf32> to vector<8x1024xf32>
    %218 = arith.mulf %215, %217 : vector<8x1024xf32>
    %c7_177 = arith.constant 7 : index
    %c0_178 = arith.constant 0 : index
    %c0_179 = arith.constant 0 : index
    %219 = vector.load %arg8[%c7_177, %c0_178, %c0_179] : memref<9x4x8xf32, #tpu.memory_space<vmem>>, vector<1x4x8xf32>
    %220 = vector.shape_cast %219 : vector<1x4x8xf32> to vector<4x8xf32>
    %cst_180 = arith.constant dense<0.000000e+00> : vector<4x1024xf32>
    %221 = tpu.matmul %220, %218, %cst_180 {dimension_numbers = #tpu.dot_dimension_numbers<[1], [0], [0], [1], [0, 0, 1, 1], [], []>} : vector<4x8xf32>, vector<8x1024xf32>, vector<4x1024xf32> -> vector<4x1024xf32>
    %222 = arith.addf %214, %221 : vector<4x1024xf32>
    %c1007_i32_181 = arith.constant 1007 : i32
    %223 = tpu.dynamic_rotate %163 by %c1007_i32_181 dim 1 : vector<8x1024xf32>, i32 -> vector<8x1024xf32>
    %c8_182 = arith.constant 8 : index
    %c0_183 = arith.constant 0 : index
    %224 = vector.load %arg3[%c8_182, %c0_183] : memref<9x1024xf32, #tpu.memory_space<vmem>>, vector<1x1024xf32>
    %225 = vector.broadcast %224 : vector<1x1024xf32> to vector<8x1024xf32>
    %226 = arith.mulf %223, %225 : vector<8x1024xf32>
    %c8_184 = arith.constant 8 : index
    %c0_185 = arith.constant 0 : index
    %c0_186 = arith.constant 0 : index
    %227 = vector.load %arg8[%c8_184, %c0_185, %c0_186] : memref<9x4x8xf32, #tpu.memory_space<vmem>>, vector<1x4x8xf32>
    %228 = vector.shape_cast %227 : vector<1x4x8xf32> to vector<4x8xf32>
    %cst_187 = arith.constant dense<0.000000e+00> : vector<4x1024xf32>
    %229 = tpu.matmul %228, %226, %cst_187 {dimension_numbers = #tpu.dot_dimension_numbers<[1], [0], [0], [1], [0, 0, 1, 1], [], []>} : vector<4x8xf32>, vector<8x1024xf32>, vector<4x1024xf32> -> vector<4x1024xf32>
    %230 = arith.addf %222, %229 : vector<4x1024xf32>
    %c0_188 = arith.constant 0 : index
    %c0_189 = arith.constant 0 : index
    %231 = vector.load %arg9[%c0_188, %c0_189] : memref<4x1xf32, #tpu.memory_space<vmem>>, vector<4x1xf32>
    %232 = vector.broadcast %231 : vector<4x1xf32> to vector<4x1024xf32>
    %233 = arith.addf %230, %232 : vector<4x1024xf32>
    %cst_190 = arith.constant 0.000000e+00 : f32
    %234 = vector.broadcast %cst_190 : f32 to vector<4x1024xf32>
    %235 = arith.cmpf oge, %233, %234 : vector<4x1024xf32>
    %cst_191 = arith.constant 1.000000e-01 : f32
    %236 = vector.broadcast %cst_191 : f32 to vector<4x1024xf32>
    %237 = arith.mulf %236, %233 : vector<4x1024xf32>
    %238 = arith.select %235, %233, %237 : vector<4x1024xi1>, vector<4x1024xf32>
    %c0_192 = arith.constant 0 : index
    %c0_193 = arith.constant 0 : index
    %239 = vector.load %arg10[%c0_192, %c0_193] : memref<4x1024xf32, #tpu.memory_space<vmem>>, vector<4x1024xf32>
    tpu.vector_store %arg10[%c0_192, %c0_193], %238 {strides = array<i32>} : memref<4x1024xf32, #tpu.memory_space<vmem>>, vector<4x1024xf32>,
    return
  }
  func.func @transform_0(%arg0: i32) -> (i32, i32, i32) {
    %c0_i32 = arith.constant 0 : i32
    %c0_i32_0 = arith.constant 0 : i32
    %c0_i32_1 = arith.constant 0 : i32
    return %arg0, %c0_i32, %c0_i32_0 : i32, i32, i32
  }
  func.func @transform_1(%arg0: i32) -> (i32, i32) {
    %c0_i32 = arith.constant 0 : i32
    %c0_i32_0 = arith.constant 0 : i32
    %c0_i32_1 = arith.constant 0 : i32
    return %c0_i32, %c0_i32_0 : i32, i32
  }
  func.func @transform_2(%arg0: i32) -> (i32, i32) {
    %c0_i32 = arith.constant 0 : i32
    %c0_i32_0 = arith.constant 0 : i32
    %c0_i32_1 = arith.constant 0 : i32
    return %c0_i32, %c0_i32_0 : i32, i32
  }
  func.func @transform_3(%arg0: i32) -> (i32, i32, i32) {
    %c0_i32 = arith.constant 0 : i32
    %c0_i32_0 = arith.constant 0 : i32
    %c0_i32_1 = arith.constant 0 : i32
    %c0_i32_2 = arith.constant 0 : i32
    return %c0_i32, %c0_i32_0, %c0_i32_1 : i32, i32, i32
  }
  func.func @transform_4(%arg0: i32) -> (i32, i32) {
    %c0_i32 = arith.constant 0 : i32
    %c0_i32_0 = arith.constant 0 : i32
    %c0_i32_1 = arith.constant 0 : i32
    return %c0_i32, %c0_i32_0 : i32, i32
  }
  func.func @transform_5(%arg0: i32) -> (i32, i32, i32) {
    %c0_i32 = arith.constant 0 : i32
    %c0_i32_0 = arith.constant 0 : i32
    %c0_i32_1 = arith.constant 0 : i32
    %c0_i32_2 = arith.constant 0 : i32
    return %c0_i32, %c0_i32_0, %c0_i32_1 : i32, i32, i32
  }
  func.func @transform_6(%arg0: i32) -> (i32, i32) {
    %c0_i32 = arith.constant 0 : i32
    %c0_i32_0 = arith.constant 0 : i32
    %c0_i32_1 = arith.constant 0 : i32
    return %c0_i32, %c0_i32_0 : i32, i32
  }
  func.func @transform_7(%arg0: i32) -> (i32, i32, i32) {
    %c0_i32 = arith.constant 0 : i32
    %c0_i32_0 = arith.constant 0 : i32
    %c0_i32_1 = arith.constant 0 : i32
    %c0_i32_2 = arith.constant 0 : i32
    return %c0_i32, %c0_i32_0, %c0_i32_1 : i32, i32, i32
  }
  func.func @transform_8(%arg0: i32) -> (i32, i32) {
    %c0_i32 = arith.constant 0 : i32
    %c0_i32_0 = arith.constant 0 : i32
    %c0_i32_1 = arith.constant 0 : i32
    return %c0_i32, %c0_i32_0 : i32, i32
  }
  func.func @transform_9(%arg0: i32) -> (i32, i32) {
    %c0_i32 = arith.constant 0 : i32
    %c0_i32_0 = arith.constant 0 : i32
    return %c0_i32, %arg0 : i32, i32
  }
}

</mosaic_0001>

<llo_original>
// kernel: cmp_forward.1
$region0: #{cmp_forward.1}
  #allocation0 [shape = 'u32[]', space=smem, size = 0x4, offset = 0x4, fixed_abs, tag = 'smem constant byte address 0x4 - core index']
  #allocation1 [shape = 'u32[144,128]{1,0:T(1,128)}', space=vmem, size = 0x12000, scoped, tag = 'internal scratch']
  %s0 = inlined_call_operand.vmem [shape: f32[8,12,32], index: 0, kind: input, shape index: {}]
  %s1 = inlined_call_operand.vmem [shape: f32[32,256], index: 1, kind: input, shape index: {}]
  %s2 = inlined_call_operand.vmem [shape: f32[9,1024], index: 2, kind: input, shape index: {}]
  %s3 = inlined_call_operand.vmem [shape: f32[9,8,12], index: 3, kind: input, shape index: {}]
  %s4 = inlined_call_operand.vmem [shape: f32[8,1], index: 4, kind: input, shape index: {}]
  %s5 = inlined_call_operand.vmem [shape: f32[9,8,8], index: 5, kind: input, shape index: {}]
  %s6 = inlined_call_operand.vmem [shape: f32[8,1], index: 6, kind: input, shape index: {}]
  %s7 = inlined_call_operand.vmem [shape: f32[9,4,8], index: 7, kind: input, shape index: {}]
  %s8 = inlined_call_operand.vmem [shape: f32[4,1], index: 8, kind: input, shape index: {}]
  %s9 = inlined_call_operand.vmem [shape: f32[4,2048], index: 9, kind: output, shape index: {}]
  %s10 = sld [smem:[#allocation0]]
  $region69: #{cmp_forward.1} parent=0
    _
  %s12 = ssub.s32 1, %s10
  %s13 = scalar_select 0, %s12, %s10
  loop: start=0, step=1, limit=4
  $region2: #{cmp_forward.1} parent=0 // loop_pre_header
    _
  $region3: #{cmp_forward.1} parent=0 // loop_header
    %s15 = sphi 0, %s19
    %p16 = scmp.ge.s32.totalorder %s15, 4
    %s25 = sphi 0, %s27
    %s28 = sphi 0, %s25
    %s29 = sphi 0, %s28
    %s45 = sphi 0, %s29
    %s49 = sphi 0, %s49
    %s51 = sphi 0, %s49
    %s52 = sphi 0, %s51
    %s66 = sphi 0, %s52
    %s70 = sphi 0, %s70
    %s72 = sphi 0, %s70
    %s73 = sphi 0, %s72
    %s87 = sphi 0, %s73
    %s91 = sphi 0, %s91
    %s93 = sphi 0, %s91
    %s94 = sphi 0, %s93
    %s108 = sphi 0, %s94
    %s112 = sphi 0, %s112
    %s114 = sphi 0, %s112
    %s115 = sphi 0, %s114
    %s129 = sphi 0, %s115
    %s133 = sphi 0, %s133
    %s135 = sphi 0, %s133
    %s136 = sphi 0, %s135
    %s150 = sphi 0, %s136
    %s154 = sphi 0, %s154
    %s156 = sphi 0, %s154
    %s157 = sphi 0, %s156
    %s171 = sphi 0, %s157
    %s175 = sphi 0, %s175
    %s177 = sphi 0, %s175
    %s178 = sphi 0, %s177
    %s192 = sphi 0, %s178
    %s196 = sphi 0, %s196
    %s198 = sphi 0, %s196
    %s199 = sphi 0, %s198
    %s213 = sphi 0, %s199
    %s219 = sphi 0, %s221
    %s222 = sphi 0, %s219
    %s223 = sphi 0, %s222
    %s239 = sphi 0, %s223
  $region4: #{cmp_forward.1} parent=0 // loop_header_branch
    %18 = sbr.rel (%p16) target = $region8
  $region5: #{cmp_forward.1} parent=0 // loop_body
    %s20 = ssub.s32 %s15, 1
    %s21 = ssub.s32 %s15, 2
    %s22 = sadd.s32 %s15, 1
    %s23 = ssub.s32 %s15, %s22
    %p24 = scmp.eq.s32.totalorder %s23, 0
    %s26 = sadd.s32 %s25, 1
    %s27 = scalar_select %p24, %s25, %s26
    %p30 = pneg %p24
    %p31 = scmp.eq.s32.totalorder %s15, 1
    %p32 = por %p30, %p31
    %p33 = scmp.ne.s32.totalorder %s25, %s28
    %p34 = scmp.eq.s32.totalorder %s15, 0
    %p35 = por %p33, %p34
    %p36 = scmp.ne.s32.totalorder %s25, %s28
    %p37 = scmp.eq.s32.totalorder %s20, 1
    %p38 = por %p36, %p37
    %p39 = scmp.ne.s32.totalorder %s28, %s29
    %p40 = scmp.eq.s32.totalorder %s20, 0
    %p41 = por %p39, %p40
    %p42 = scmp.ne.s32.totalorder %s28, %s29
    %p43 = scmp.eq.s32.totalorder %s21, 1
    %p44 = por %p42, %p43
    %p46 = scmp.ne.s32.totalorder %s29, %s45
    %p47 = scmp.eq.s32.totalorder %s21, 0
    %p48 = por %p46, %p47
    %s50 = sadd.s32 %s49, 1
    %p53 = scmp.eq.s32.totalorder %s15, 1
    %p54 = scmp.ne.s32.totalorder %s49, %s51
    %p55 = scmp.eq.s32.totalorder %s15, 0
    %p56 = por %p54, %p55
    %p57 = scmp.ne.s32.totalorder %s49, %s51
    %p58 = scmp.eq.s32.totalorder %s20, 1
    %p59 = por %p57, %p58
    %p60 = scmp.ne.s32.totalorder %s51, %s52
    %p61 = scmp.eq.s32.totalorder %s20, 0
    %p62 = por %p60, %p61
    %p63 = scmp.ne.s32.totalorder %s51, %s52
    %p64 = scmp.eq.s32.totalorder %s21, 1
    %p65 = por %p63, %p64
    %p67 = scmp.ne.s32.totalorder %s52, %s66
    %p68 = scmp.eq.s32.totalorder %s21, 0
    %p69 = por %p67, %p68
    %s71 = sadd.s32 %s70, 1
    %p74 = scmp.eq.s32.totalorder %s15, 1
    %p75 = scmp.ne.s32.totalorder %s70, %s72
    %p76 = scmp.eq.s32.totalorder %s15, 0
    %p77 = por %p75, %p76
    %p78 = scmp.ne.s32.totalorder %s70, %s72
    %p79 = scmp.eq.s32.totalorder %s20, 1
    %p80 = por %p78, %p79
    %p81 = scmp.ne.s32.totalorder %s72, %s73
    %p82 = scmp.eq.s32.totalorder %s20, 0
    %p83 = por %p81, %p82
    %p84 = scmp.ne.s32.totalorder %s72, %s73
    %p85 = scmp.eq.s32.totalorder %s21, 1
    %p86 = por %p84, %p85
    %p88 = scmp.ne.s32.totalorder %s73, %s87
    %p89 = scmp.eq.s32.totalorder %s21, 0
    %p90 = por %p88, %p89
    %s92 = sadd.s32 %s91, 1
    %p95 = scmp.eq.s32.totalorder %s15, 1
    %p96 = scmp.ne.s32.totalorder %s91, %s93
    %p97 = scmp.eq.s32.totalorder %s15, 0
    %p98 = por %p96, %p97
    %p99 = scmp.ne.s32.totalorder %s91, %s93
    %p100 = scmp.eq.s32.totalorder %s20, 1
    %p101 = por %p99, %p100
    %p102 = scmp.ne.s32.totalorder %s93, %s94
    %p103 = scmp.eq.s32.totalorder %s20, 0
    %p104 = por %p102, %p103
    %p105 = scmp.ne.s32.totalorder %s93, %s94
    %p106 = scmp.eq.s32.totalorder %s21, 1
    %p107 = por %p105, %p106
    %p109 = scmp.ne.s32.totalorder %s94, %s108
    %p110 = scmp.eq.s32.totalorder %s21, 0
    %p111 = por %p109, %p110
    %s113 = sadd.s32 %s112, 1
    %p116 = scmp.eq.s32.totalorder %s15, 1
    %p117 = scmp.ne.s32.totalorder %s112, %s114
    %p118 = scmp.eq.s32.totalorder %s15, 0
    %p119 = por %p117, %p118
    %p120 = scmp.ne.s32.totalorder %s112, %s114
    %p121 = scmp.eq.s32.totalorder %s20, 1
    %p122 = por %p120, %p121
    %p123 = scmp.ne.s32.totalorder %s114, %s115
    %p124 = scmp.eq.s32.totalorder %s20, 0
    %p125 = por %p123, %p124
    %p126 = scmp.ne.s32.totalorder %s114, %s115
    %p127 = scmp.eq.s32.totalorder %s21, 1
    %p128 = por %p126, %p127
    %p130 = scmp.ne.s32.totalorder %s115, %s129
    %p131 = scmp.eq.s32.totalorder %s21, 0
    %p132 = por %p130, %p131
    %s134 = sadd.s32 %s133, 1
    %p137 = scmp.eq.s32.totalorder %s15, 1
    %p138 = scmp.ne.s32.totalorder %s133, %s135
    %p139 = scmp.eq.s32.totalorder %s15, 0
    %p140 = por %p138, %p139
    %p141 = scmp.ne.s32.totalorder %s133, %s135
    %p142 = scmp.eq.s32.totalorder %s20, 1
    %p143 = por %p141, %p142
    %p144 = scmp.ne.s32.totalorder %s135, %s136
    %p145 = scmp.eq.s32.totalorder %s20, 0
    %p146 = por %p144, %p145
    %p147 = scmp.ne.s32.totalorder %s135, %s136
    %p148 = scmp.eq.s32.totalorder %s21, 1
    %p149 = por %p147, %p148
    %p151 = scmp.ne.s32.totalorder %s136, %s150
    %p152 = scmp.eq.s32.totalorder %s21, 0
    %p153 = por %p151, %p152
    %s155 = sadd.s32 %s154, 1
    %p158 = scmp.eq.s32.totalorder %s15, 1
    %p159 = scmp.ne.s32.totalorder %s154, %s156
    %p160 = scmp.eq.s32.totalorder %s15, 0
    %p161 = por %p159, %p160
    %p162 = scmp.ne.s32.totalorder %s154, %s156
    %p163 = scmp.eq.s32.totalorder %s20, 1
    %p164 = por %p162, %p163
    %p165 = scmp.ne.s32.totalorder %s156, %s157
    %p166 = scmp.eq.s32.totalorder %s20, 0
    %p167 = por %p165, %p166
    %p168 = scmp.ne.s32.totalorder %s156, %s157
    %p169 = scmp.eq.s32.totalorder %s21, 1
    %p170 = por %p168, %p169
    %p172 = scmp.ne.s32.totalorder %s157, %s171
    %p173 = scmp.eq.s32.totalorder %s21, 0
    %p174 = por %p172, %p173
    %s176 = sadd.s32 %s175, 1
    %p179 = scmp.eq.s32.totalorder %s15, 1
    %p180 = scmp.ne.s32.totalorder %s175, %s177
    %p181 = scmp.eq.s32.totalorder %s15, 0
    %p182 = por %p180, %p181
    %p183 = scmp.ne.s32.totalorder %s175, %s177
    %p184 = scmp.eq.s32.totalorder %s20, 1
    %p185 = por %p183, %p184
    %p186 = scmp.ne.s32.totalorder %s177, %s178
    %p187 = scmp.eq.s32.totalorder %s20, 0
    %p188 = por %p186, %p187
    %p189 = scmp.ne.s32.totalorder %s177, %s178
    %p190 = scmp.eq.s32.totalorder %s21, 1
    %p191 = por %p189, %p190
    %p193 = scmp.ne.s32.totalorder %s178, %s192
    %p194 = scmp.eq.s32.totalorder %s21, 0
    %p195 = por %p193, %p194
    %s197 = sadd.s32 %s196, 1
    %p200 = scmp.eq.s32.totalorder %s15, 1
    %p201 = scmp.ne.s32.totalorder %s196, %s198
    %p202 = scmp.eq.s32.totalorder %s15, 0
    %p203 = por %p201, %p202
    %p204 = scmp.ne.s32.totalorder %s196, %s198
    %p205 = scmp.eq.s32.totalorder %s20, 1
    %p206 = por %p204, %p205
    %p207 = scmp.ne.s32.totalorder %s198, %s199
    %p208 = scmp.eq.s32.totalorder %s20, 0
    %p209 = por %p207, %p208
    %p210 = scmp.ne.s32.totalorder %s198, %s199
    %p211 = scmp.eq.s32.totalorder %s21, 1
    %p212 = por %p210, %p211
    %p214 = scmp.ne.s32.totalorder %s199, %s213
    %p215 = scmp.eq.s32.totalorder %s21, 0
    %p216 = por %p214, %p215
    %s217 = ssub.s32 %s15, %s22
    %p218 = scmp.eq.s32.totalorder %s217, 0
    %s220 = sadd.s32 %s219, 1
    %s221 = scalar_select %p218, %s219, %s220
    %p224 = pneg %p218
    %p225 = scmp.eq.s32.totalorder %s15, 1
    %p226 = por %p224, %p225
    %p227 = scmp.ne.s32.totalorder %s219, %s222
    %p228 = scmp.eq.s32.totalorder %s15, 0
    %p229 = por %p227, %p228
    %p230 = scmp.ne.s32.totalorder %s219, %s222
    %p231 = scmp.eq.s32.totalorder %s20, 1
    %p232 = por %p230, %p231
    %p233 = scmp.ne.s32.totalorder %s222, %s223
    %p234 = scmp.eq.s32.totalorder %s20, 0
    %p235 = por %p233, %p234
    %p236 = scmp.ne.s32.totalorder %s222, %s223
    %p237 = scmp.eq.s32.totalorder %s21, 1
    %p238 = por %p236, %p237
    %p240 = scmp.ne.s32.totalorder %s223, %s239
    %p241 = scmp.eq.s32.totalorder %s21, 0
    %p242 = por %p240, %p241
    %p243 = scmp.le.s32.totalorder 1, %s15
    %p244 = scmp.lt.s32.totalorder %s15, 3
    %p245 = pnand %p243, %p244
    %p246 = pneg %p245
    // Predicated region
    $region9: #{cmp_forward.1} parent=5 // pred_check
      _
    $region10: #{cmp_forward.1} parent=5 // pred_check_branch
      %248 = sbr.rel (%p245) target = $region12
    $region11: #{cmp_forward.1} parent=5 // pred_region
      %s249 = ssub.s32 %s15, 1
      // Predicated region
      $region13: #{cmp_forward.1} parent=11 // pred_check
        %p250 = pneg %p62
      $region14: #{cmp_forward.1} parent=11 // pred_check_branch
        %252 = sbr.rel (%p250) target = $region16
      $region15: #{cmp_forward.1} parent=11 // pred_region
        _
      $region16: #{cmp_forward.1} parent=11 // pred_fallthru
        _
      // Predicated region
      $region17: #{cmp_forward.1} parent=11 // pred_check
        %p253 = pneg %p83
      $region18: #{cmp_forward.1} parent=11 // pred_check_branch
        %255 = sbr.rel (%p253) target = $region20
      $region19: #{cmp_forward.1} parent=11 // pred_region
        _
      $region20: #{cmp_forward.1} parent=11 // pred_fallthru
        _
      // Predicated region
      $region21: #{cmp_forward.1} parent=11 // pred_check
        %p256 = pneg %p104
      $region22: #{cmp_forward.1} parent=11 // pred_check_branch
        %258 = sbr.rel (%p256) target = $region24
      $region23: #{cmp_forward.1} parent=11 // pred_region
        _
      $region24: #{cmp_forward.1} parent=11 // pred_fallthru
        _
      // Predicated region
      $region25: #{cmp_forward.1} parent=11 // pred_check
        %p259 = pneg %p125
      $region26: #{cmp_forward.1} parent=11 // pred_check_branch
        %261 = sbr.rel (%p259) target = $region28
      $region27: #{cmp_forward.1} parent=11 // pred_region
        _
      $region28: #{cmp_forward.1} parent=11 // pred_fallthru
        _
      // Predicated region
      $region29: #{cmp_forward.1} parent=11 // pred_check
        %p262 = pneg %p146
      $region30: #{cmp_forward.1} parent=11 // pred_check_branch
        %264 = sbr.rel (%p262) target = $region32
      $region31: #{cmp_forward.1} parent=11 // pred_region
        _
      $region32: #{cmp_forward.1} parent=11 // pred_fallthru
        _
      // Predicated region
      $region33: #{cmp_forward.1} parent=11 // pred_check
        %p265 = pneg %p167
      $region34: #{cmp_forward.1} parent=11 // pred_check_branch
        %267 = sbr.rel (%p265) target = $region36
      $region35: #{cmp_forward.1} parent=11 // pred_region
        _
      $region36: #{cmp_forward.1} parent=11 // pred_fallthru
        _
      // Predicated region
      $region37: #{cmp_forward.1} parent=11 // pred_check
        %p268 = pneg %p188
      $region38: #{cmp_forward.1} parent=11 // pred_check_branch
        %270 = sbr.rel (%p268) target = $region40
      $region39: #{cmp_forward.1} parent=11 // pred_region
        _
      $region40: #{cmp_forward.1} parent=11 // pred_fallthru
        _
      // Predicated region
      $region41: #{cmp_forward.1} parent=11 // pred_check
        %p271 = pneg %p209
      $region42: #{cmp_forward.1} parent=11 // pred_check_branch
        %273 = sbr.rel (%p271) target = $region44
      $region43: #{cmp_forward.1} parent=11 // pred_region
        _
      $region44: #{cmp_forward.1} parent=11 // pred_fallthru
        _
    $region12: #{cmp_forward.1} parent=5 // pred_fallthru
      _
    %p274 = scmp.lt.s32.totalorder %s15, 2
    // Predicated region
    $region45: #{cmp_forward.1} parent=5 // pred_check
      %p275 = pneg %p274
    $region46: #{cmp_forward.1} parent=5 // pred_check_branch
      %277 = sbr.rel (%p275) target = $region48
    $region47: #{cmp_forward.1} parent=5 // pred_region
      // Predicated region
      $region49: #{cmp_forward.1} parent=47 // pred_check
        %p278 = pneg %p35
      $region50: #{cmp_forward.1} parent=47 // pred_check_branch
        %280 = sbr.rel (%p278) target = $region52
      $region51: #{cmp_forward.1} parent=47 // pred_region
        %s281 = smul.u32 4, %s15
        %p282 = scmp.lt.s32.totalorder %s281, 7
        %s283 = scalar_select %p282, %s281, 7
        %s284 = smul.addr %s283, 2
        %s285 = smul.addr %s284, 8
        %s286 = scalar_lea.vmem %s0, %s285
        %s287 = smul.u32 4, %s15
      $region52: #{cmp_forward.1} parent=47 // pred_fallthru
        _
    $region48: #{cmp_forward.1} parent=5 // pred_fallthru
      _
    %p288 = scmp.le.s32.totalorder 1, %s15
    %p289 = scmp.lt.s32.totalorder %s15, 3
    %p290 = pnand %p288, %p289
    %p291 = pneg %p290
    // Predicated region
    $region53: #{cmp_forward.1} parent=5 // pred_check
      _
    $region54: #{cmp_forward.1} parent=5 // pred_check_branch
      %293 = sbr.rel (%p290) target = $region56
    $region55: #{cmp_forward.1} parent=5 // pred_region
      %s294 = ssub.s32 %s15, 1
      %s295 = smul.u32 4, %s20
      %p296 = scmp.lt.s32.totalorder %s295, 7
      %s297 = scalar_select %p296, %s295, 7
      %s298 = smul.addr %s297, 2
      %s299 = smul.addr %s298, 8
      %s300 = scalar_lea.vmem %s0, %s299
      %p301 = pneg %p41
      %p302 = pneg %p38
      %p303 = pneg %p62
      %p304 = pneg %p59
      %p305 = pneg %p83
      %p306 = pneg %p80
      %p307 = pneg %p104
      %p308 = pneg %p101
      %p309 = pneg %p125
      %p310 = pneg %p122
      %p311 = pneg %p146
      %p312 = pneg %p143
      %p313 = pneg %p167
      %p314 = pneg %p164
      %p315 = pneg %p188
      %p316 = pneg %p185
      %p317 = pneg %p209
      %p318 = pneg %p206
      %p319 = pneg %p235
      %p320 = pneg %p232
      %s321 = smul.u32 8, %s20
      %p322 = scmp.lt.s32.totalorder %s321, 15
      %s323 = scalar_select %p322, %s321, 15
      %s324 = smul.addr %s323, 4
      %s325 = scalar_lea.vmem %s9, %s324
      %s326 = smul.u32 4, %s20
      %p327 = scmp.lt.s32.totalorder %s326, 7
      %s328 = scalar_select %p327, %s326, 7
      %s329 = smul.addr %s328, 2
      %s330 = smul.addr %s329, 8
      %s331 = scalar_lea.vmem %s0, %s330
      %s332 = smul.u32 4, %s20
      %s333 = smul.u32 8, %s20
      %p334 = scmp.lt.s32.totalorder %s333, 15
      %s335 = scalar_select %p334, %s333, 15
      %s336 = smul.addr %s335, 4
      %s337 = scalar_lea.vmem %s9, %s336
      %s338 = smul.u32 8, %s20
      %v339 = vld [vmem:[%s1] sm:$0xff]
      %v340 = vld [vmem:[%s1 + $0x8] sm:$0xff]
      %v341 = vld [vmem:[%s1 + $0x10] sm:$0xff]
      %v342 = vld [vmem:[%s1 + $0x18] sm:$0xff]
      %v343 = vld [vmem:[%s1 + $0x20] sm:$0xff]
      %v344 = vld [vmem:[%s1 + $0x28] sm:$0xff]
      %v345 = vld [vmem:[%s1 + $0x30] sm:$0xff]
      %v346 = vld [vmem:[%s1 + $0x38] sm:$0xff]
      %v347 = vld [vmem:[%s331] sm:$0xff]
      %v348 = vld [vmem:[%s331 + $0x8] sm:$0xf]
      %vm349 = vcmask 261120
      %v351 = vsel %vm349, %v347, 0
      %v354 = vsel %vm349, %v348, 0
      %356 = vmatprep.subr.mxu0 %v340
      %357 = vmatpush1.msra.mxu0 %v339
      %358 = vmatprep.subr.mxu0 %v342
      %359 = vmatpush1.msra.mxu0 %v341
      %360 = vmatprep.subr.mxu0 %v344
      %361 = vmatpush1.msra.mxu0 %v343
      %362 = vmatprep.subr.mxu0 %v346
      %363 = vmatpush1.msra.mxu0 %v345
      %364 = vmatprep.subr.mxu0 0.0
      %365 = vmatpush1.msra.mxu0 0.0
      %366 = vmatprep.subr.mxu0 0.0
      %367 = vmatpush1.msra.mxu0 0.0
      %368 = vmatprep.subr.mxu0 0.0
      %369 = vmatpush1.msra.mxu0 0.0
      %370 = vmatprep.subr.mxu0 0.0
      %371 = vmatpush1.msra.mxu0 0.0
      %372 = vmatprep.subr.mxu0 0.0
      %373 = vmatpush1.msra.mxu0 0.0
      %374 = vmatprep.subr.mxu0 0.0
      %375 = vmatpush1.msra.mxu0 0.0
      %376 = vmatprep.subr.mxu0 0.0
      %377 = vmatpush1.msra.mxu0 0.0
      %378 = vmatprep.subr.mxu0 0.0
      %379 = vmatpush1.msra.mxu0 0.0
      %380 = vmatprep.subr.mxu0 0.0
      %381 = vmatpush1.msra.mxu0 0.0
      %382 = vmatprep.subr.mxu0 0.0
      %383 = vmatpush1.msra.mxu0 0.0
      %384 = vmatprep.subr.mxu0 0.0
      %385 = vmatpush1.msra.mxu0 0.0
      %386 = vmatprep.subr.mxu0 0.0
      %387 = vmatpush1.msra.mxu0 0.0
      %388 = vmatprep.subr.mxu0 0.0
      %389 = vmatpush1.msra.mxu0 0.0
      %390 = vmatprep.subr.mxu0 0.0
      %391 = vmatpush1.msra.mxu0 0.0
      %392 = vmatprep.subr.mxu0 0.0
      %393 = vmatpush1.msra.mxu0 0.0
      %394 = vmatprep.subr.mxu0 0.0
      %395 = vmatpush1.msra.mxu0 0.0
      %396 = vmatprep.subr.mxu0 0.0
      %397 = vmatpush1.msra.mxu0 0.0
      %398 = vmatprep.subr.mxu0 0.0
      %399 = vmatpush1.msra.mxu0 0.0
      %400 = vmatprep.subr.mxu0 0.0
      %401 = vmatpush1.msra.mxu0 0.0
      %402 = vmatprep.subr.mxu0 0.0
      %403 = vmatpush1.msra.mxu0 0.0
      %404 = vmatprep.subr.mxu0 0.0
      %405 = vmatpush1.msra.mxu0 0.0
      %406 = vmatprep.subr.mxu0 0.0
      %407 = vmatpush1.msra.mxu0 0.0
      %408 = vmatprep.subr.mxu0 0.0
      %409 = vmatpush1.msra.mxu0 0.0
      %410 = vmatprep.subr.mxu0 0.0
      %411 = vmatpush1.msra.mxu0 0.0
      %412 = vmatprep.subr.mxu0 0.0
      %413 = vmatpush1.msra.mxu0 0.0
      %414 = vmatprep.subr.mxu0 0.0
      %415 = vmatpush1.msra.mxu0 0.0
      %416 = vmatprep.subr.mxu0 0.0
      %417 = vmatpush1.msra.mxu0 0.0
      %418 = vmatprep.subr.mxu0 0.0
      %419 = vmatpush1.msra.mxu0 0.0
      %420 = vmatprep.mubr.f32.mxu0 0.0
      %421 = vmatmul.mubr.f32.gmra.mrb[0].mxu0 %v351
      %v422 = vpop.f32.mrb[0].mxu0
      %v423 = vadd.f32 0.0, %v422
      %v424 = vpop.f32.mrb[0].mxu0
      %v425 = vadd.f32 0.0, %v424
      %426 = vmatprep.mubr.f32.mxu0 0.0
      %427 = vmatmul.mubr.f32.gmra.mrb[0].mxu0 %v354
      %v428 = vpop.f32.mrb[0].mxu0
      %v429 = vadd.f32 0.0, %v428
      %v430 = vpop.f32.mrb[0].mxu0
      %v431 = vadd.f32 0.0, %v430
      %432 = vdwg.mxu0
      %s433 = scalar_lea.vmem %s331, 16
      %v434 = vld [vmem:[%s433] sm:$0xff]
      %v435 = vld [vmem:[%s433 + $0x8] sm:$0xf]
      %v437 = vsel %vm349, %v434, 0
      %v440 = vsel %vm349, %v435, 0
      %442 = vmatprep.subr.mxu0 %v340
      %443 = vmatpush1.msra.mxu0 %v339
      %444 = vmatprep.subr.mxu0 %v342
      %445 = vmatpush1.msra.mxu0 %v341
      %446 = vmatprep.subr.mxu0 %v344
      %447 = vmatpush1.msra.mxu0 %v343
      %448 = vmatprep.subr.mxu0 %v346
      %449 = vmatpush1.msra.mxu0 %v345
      %450 = vmatprep.subr.mxu0 0.0
      %451 = vmatpush1.msra.mxu0 0.0
      %452 = vmatprep.subr.mxu0 0.0
      %453 = vmatpush1.msra.mxu0 0.0
      %454 = vmatprep.subr.mxu0 0.0
      %455 = vmatpush1.msra.mxu0 0.0
      %456 = vmatprep.subr.mxu0 0.0
      %457 = vmatpush1.msra.mxu0 0.0
      %458 = vmatprep.subr.mxu0 0.0
      %459 = vmatpush1.msra.mxu0 0.0
      %460 = vmatprep.subr.mxu0 0.0
      %461 = vmatpush1.msra.mxu0 0.0
      %462 = vmatprep.subr.mxu0 0.0
      %463 = vmatpush1.msra.mxu0 0.0
      %464 = vmatprep.subr.mxu0 0.0
      %465 = vmatpush1.msra.mxu0 0.0
      %466 = vmatprep.subr.mxu0 0.0
      %467 = vmatpush1.msra.mxu0 0.0
      %468 = vmatprep.subr.mxu0 0.0
      %469 = vmatpush1.msra.mxu0 0.0
      %470 = vmatprep.subr.mxu0 0.0
      %471 = vmatpush1.msra.mxu0 0.0
      %472 = vmatprep.subr.mxu0 0.0
      %473 = vmatpush1.msra.mxu0 0.0
      %474 = vmatprep.subr.mxu0 0.0
      %475 = vmatpush1.msra.mxu0 0.0
      %476 = vmatprep.subr.mxu0 0.0
      %477 = vmatpush1.msra.mxu0 0.0
      %478 = vmatprep.subr.mxu0 0.0
      %479 = vmatpush1.msra.mxu0 0.0
      %480 = vmatprep.subr.mxu0 0.0
      %481 = vmatpush1.msra.mxu0 0.0
      %482 = vmatprep.subr.mxu0 0.0
      %483 = vmatpush1.msra.mxu0 0.0
      %484 = vmatprep.subr.mxu0 0.0
      %485 = vmatpush1.msra.mxu0 0.0
      %486 = vmatprep.subr.mxu0 0.0
      %487 = vmatpush1.msra.mxu0 0.0
      %488 = vmatprep.subr.mxu0 0.0
      %489 = vmatpush1.msra.mxu0 0.0
      %490 = vmatprep.subr.mxu0 0.0
      %491 = vmatpush1.msra.mxu0 0.0
      %492 = vmatprep.subr.mxu0 0.0
      %493 = vmatpush1.msra.mxu0 0.0
      %494 = vmatprep.subr.mxu0 0.0
      %495 = vmatpush1.msra.mxu0 0.0
      %496 = vmatprep.subr.mxu0 0.0
      %497 = vmatpush1.msra.mxu0 0.0
      %498 = vmatprep.subr.mxu0 0.0
      %499 = vmatpush1.msra.mxu0 0.0
      %500 = vmatprep.subr.mxu0 0.0
      %501 = vmatpush1.msra.mxu0 0.0
      %502 = vmatprep.subr.mxu0 0.0
      %503 = vmatpush1.msra.mxu0 0.0
      %504 = vmatprep.subr.mxu0 0.0
      %505 = vmatpush1.msra.mxu0 0.0
      %506 = vmatprep.mubr.f32.mxu0 0.0
      %507 = vmatmul.mubr.f32.gmra.mrb[0].mxu0 %v437
      %v508 = vpop.f32.mrb[0].mxu0
      %v509 = vadd.f32 0.0, %v508
      %v510 = vpop.f32.mrb[0].mxu0
      %v511 = vadd.f32 0.0, %v510
      %512 = vmatprep.mubr.f32.mxu0 0.0
      %513 = vmatmul.mubr.f32.gmra.mrb[0].mxu0 %v440
      %v514 = vpop.f32.mrb[0].mxu0
      %v515 = vadd.f32 0.0, %v514
      %v516 = vpop.f32.mrb[0].mxu0
      %v517 = vadd.f32 0.0, %v516
      %518 = vdwg.mxu0
      %s519 = scalar_lea.vmem %s331, 32
      %v520 = vld [vmem:[%s519] sm:$0xff]
      %v521 = vld [vmem:[%s519 + $0x8] sm:$0xf]
      %v523 = vsel %vm349, %v520, 0
      %v526 = vsel %vm349, %v521, 0
      %528 = vmatprep.subr.mxu0 %v340
      %529 = vmatpush1.msra.mxu0 %v339
      %530 = vmatprep.subr.mxu0 %v342
      %531 = vmatpush1.msra.mxu0 %v341
      %532 = vmatprep.subr.mxu0 %v344
      %533 = vmatpush1.msra.mxu0 %v343
      %534 = vmatprep.subr.mxu0 %v346
      %535 = vmatpush1.msra.mxu0 %v345
      %536 = vmatprep.subr.mxu0 0.0
      %537 = vmatpush1.msra.mxu0 0.0
      %538 = vmatprep.subr.mxu0 0.0
      %539 = vmatpush1.msra.mxu0 0.0
      %540 = vmatprep.subr.mxu0 0.0
      %541 = vmatpush1.msra.mxu0 0.0
      %542 = vmatprep.subr.mxu0 0.0
      %543 = vmatpush1.msra.mxu0 0.0
      %544 = vmatprep.subr.mxu0 0.0
      %545 = vmatpush1.msra.mxu0 0.0
      %546 = vmatprep.subr.mxu0 0.0
      %547 = vmatpush1.msra.mxu0 0.0
      %548 = vmatprep.subr.mxu0 0.0
      %549 = vmatpush1.msra.mxu0 0.0
      %550 = vmatprep.subr.mxu0 0.0
      %551 = vmatpush1.msra.mxu0 0.0
      %552 = vmatprep.subr.mxu0 0.0
      %553 = vmatpush1.msra.mxu0 0.0
      %554 = vmatprep.subr.mxu0 0.0
      %555 = vmatpush1.msra.mxu0 0.0
      %556 = vmatprep.subr.mxu0 0.0
      %557 = vmatpush1.msra.mxu0 0.0
      %558 = vmatprep.subr.mxu0 0.0
      %559 = vmatpush1.msra.mxu0 0.0
      %560 = vmatprep.subr.mxu0 0.0
      %561 = vmatpush1.msra.mxu0 0.0
      %562 = vmatprep.subr.mxu0 0.0
      %563 = vmatpush1.msra.mxu0 0.0
      %564 = vmatprep.subr.mxu0 0.0
      %565 = vmatpush1.msra.mxu0 0.0
      %566 = vmatprep.subr.mxu0 0.0
      %567 = vmatpush1.msra.mxu0 0.0
      %568 = vmatprep.subr.mxu0 0.0
      %569 = vmatpush1.msra.mxu0 0.0
      %570 = vmatprep.subr.mxu0 0.0
      %571 = vmatpush1.msra.mxu0 0.0
      %572 = vmatprep.subr.mxu0 0.0
      %573 = vmatpush1.msra.mxu0 0.0
      %574 = vmatprep.subr.mxu0 0.0
      %575 = vmatpush1.msra.mxu0 0.0
      %576 = vmatprep.subr.mxu0 0.0
      %577 = vmatpush1.msra.mxu0 0.0
      %578 = vmatprep.subr.mxu0 0.0
      %579 = vmatpush1.msra.mxu0 0.0
      %580 = vmatprep.subr.mxu0 0.0
      %581 = vmatpush1.msra.mxu0 0.0
      %582 = vmatprep.subr.mxu0 0.0
      %583 = vmatpush1.msra.mxu0 0.0
      %584 = vmatprep.subr.mxu0 0.0
      %585 = vmatpush1.msra.mxu0 0.0
      %586 = vmatprep.subr.mxu0 0.0
      %587 = vmatpush1.msra.mxu0 0.0
      %588 = vmatprep.subr.mxu0 0.0
      %589 = vmatpush1.msra.mxu0 0.0
      %590 = vmatprep.subr.mxu0 0.0
      %591 = vmatpush1.msra.mxu0 0.0
      %592 = vmatprep.mubr.f32.mxu0 0.0
      %593 = vmatmul.mubr.f32.gmra.mrb[0].mxu0 %v523
      %v594 = vpop.f32.mrb[0].mxu0
      %v595 = vadd.f32 0.0, %v594
      %v596 = vpop.f32.mrb[0].mxu0
      %v597 = vadd.f32 0.0, %v596
      %598 = vmatprep.mubr.f32.mxu0 0.0
      %599 = vmatmul.mubr.f32.gmra.mrb[0].mxu0 %v526
      %v600 = vpop.f32.mrb[0].mxu0
      %v601 = vadd.f32 0.0, %v600
      %v602 = vpop.f32.mrb[0].mxu0
      %v603 = vadd.f32 0.0, %v602
      %604 = vdwg.mxu0
      %s605 = scalar_lea.vmem %s331, 48
      %v606 = vld [vmem:[%s605] sm:$0xff]
      %v607 = vld [vmem:[%s605 + $0x8] sm:$0xf]
      %v609 = vsel %vm349, %v606, 0
      %v612 = vsel %vm349, %v607, 0
      %614 = vmatprep.subr.mxu0 %v340
      %615 = vmatpush1.msra.mxu0 %v339
      %616 = vmatprep.subr.mxu0 %v342
      %617 = vmatpush1.msra.mxu0 %v341
      %618 = vmatprep.subr.mxu0 %v344
      %619 = vmatpush1.msra.mxu0 %v343
      %620 = vmatprep.subr.mxu0 %v346
      %621 = vmatpush1.msra.mxu0 %v345
      %622 = vmatprep.subr.mxu0 0.0
      %623 = vmatpush1.msra.mxu0 0.0
      %624 = vmatprep.subr.mxu0 0.0
      %625 = vmatpush1.msra.mxu0 0.0
      %626 = vmatprep.subr.mxu0 0.0
      %627 = vmatpush1.msra.mxu0 0.0
      %628 = vmatprep.subr.mxu0 0.0
      %629 = vmatpush1.msra.mxu0 0.0
      %630 = vmatprep.subr.mxu0 0.0
      %631 = vmatpush1.msra.mxu0 0.0
      %632 = vmatprep.subr.mxu0 0.0
      %633 = vmatpush1.msra.mxu0 0.0
      %634 = vmatprep.subr.mxu0 0.0
      %635 = vmatpush1.msra.mxu0 0.0
      %636 = vmatprep.subr.mxu0 0.0
      %637 = vmatpush1.msra.mxu0 0.0
      %638 = vmatprep.subr.mxu0 0.0
      %639 = vmatpush1.msra.mxu0 0.0
      %640 = vmatprep.subr.mxu0 0.0
      %641 = vmatpush1.msra.mxu0 0.0
      %642 = vmatprep.subr.mxu0 0.0
      %643 = vmatpush1.msra.mxu0 0.0
      %644 = vmatprep.subr.mxu0 0.0
      %645 = vmatpush1.msra.mxu0 0.0
      %646 = vmatprep.subr.mxu0 0.0
      %647 = vmatpush1.msra.mxu0 0.0
      %648 = vmatprep.subr.mxu0 0.0
      %649 = vmatpush1.msra.mxu0 0.0
      %650 = vmatprep.subr.mxu0 0.0
      %651 = vmatpush1.msra.mxu0 0.0
      %652 = vmatprep.subr.mxu0 0.0
      %653 = vmatpush1.msra.mxu0 0.0
      %654 = vmatprep.subr.mxu0 0.0
      %655 = vmatpush1.msra.mxu0 0.0
      %656 = vmatprep.subr.mxu0 0.0
      %657 = vmatpush1.msra.mxu0 0.0
      %658 = vmatprep.subr.mxu0 0.0
      %659 = vmatpush1.msra.mxu0 0.0
      %660 = vmatprep.subr.mxu0 0.0
      %661 = vmatpush1.msra.mxu0 0.0
      %662 = vmatprep.subr.mxu0 0.0
      %663 = vmatpush1.msra.mxu0 0.0
      %664 = vmatprep.subr.mxu0 0.0
      %665 = vmatpush1.msra.mxu0 0.0
      %666 = vmatprep.subr.mxu0 0.0
      %667 = vmatpush1.msra.mxu0 0.0
      %668 = vmatprep.subr.mxu0 0.0
      %669 = vmatpush1.msra.mxu0 0.0
      %670 = vmatprep.subr.mxu0 0.0
      %671 = vmatpush1.msra.mxu0 0.0
      %672 = vmatprep.subr.mxu0 0.0
      %673 = vmatpush1.msra.mxu0 0.0
      %674 = vmatprep.subr.mxu0 0.0
      %675 = vmatpush1.msra.mxu0 0.0
      %676 = vmatprep.subr.mxu0 0.0
      %677 = vmatpush1.msra.mxu0 0.0
      %678 = vmatprep.mubr.f32.mxu0 0.0
      %679 = vmatmul.mubr.f32.gmra.mrb[0].mxu0 %v609
      %v680 = vpop.f32.mrb[0].mxu0
      %v681 = vadd.f32 0.0, %v680
      %v682 = vpop.f32.mrb[0].mxu0
      %v683 = vadd.f32 0.0, %v682
      %684 = vmatprep.mubr.f32.mxu0 0.0
      %685 = vmatmul.mubr.f32.gmra.mrb[0].mxu0 %v612
      %v686 = vpop.f32.mrb[0].mxu0
      %v687 = vadd.f32 0.0, %v686
      %v688 = vpop.f32.mrb[0].mxu0
      %v689 = vadd.f32 0.0, %v688
      %690 = vdwg.mxu0
      %691 = vrot.lane.b32.xlu0 %v423, 17
      %v692 = vpop.permute.xlu0 %691
      %693 = vrot.lane.b32.xlu0 %v429, 17
      %v694 = vpop.permute.xlu0 %693
      %695 = vrot.lane.b32.xlu0 %v425, 17
      %v696 = vpop.permute.xlu0 %695
      %697 = vrot.lane.b32.xlu0 %v431, 17
      %v698 = vpop.permute.xlu0 %697
      %699 = vrot.lane.b32.xlu0 %v509, 17
      %v700 = vpop.permute.xlu0 %699
      %701 = vrot.lane.b32.xlu0 %v515, 17
      %v702 = vpop.permute.xlu0 %701
      %703 = vrot.lane.b32.xlu0 %v511, 17
      %v704 = vpop.permute.xlu0 %703
      %705 = vrot.lane.b32.xlu0 %v517, 17
      %v706 = vpop.permute.xlu0 %705
      %707 = vrot.lane.b32.xlu0 %v595, 17
      %v708 = vpop.permute.xlu0 %707
      %709 = vrot.lane.b32.xlu0 %v601, 17
      %v710 = vpop.permute.xlu0 %709
      %711 = vrot.lane.b32.xlu0 %v597, 17
      %v712 = vpop.permute.xlu0 %711
      %713 = vrot.lane.b32.xlu0 %v603, 17
      %v714 = vpop.permute.xlu0 %713
      %715 = vrot.lane.b32.xlu0 %v681, 17
      %v716 = vpop.permute.xlu0 %715
      %717 = vrot.lane.b32.xlu0 %v687, 17
      %v718 = vpop.permute.xlu0 %717
      %719 = vrot.lane.b32.xlu0 %v683, 17
      %v720 = vpop.permute.xlu0 %719
      %721 = vrot.lane.b32.xlu0 %v689, 17
      %v722 = vpop.permute.xlu0 %721
      %v723 = vlaneseq
      %v724 = vand.u32 %v723, 127
      %vm725 = vcmp.lt.s32.totalorder %v724, 17
      %v726 = vsel %vm725, %v716, %v720
      %v727 = vsel %vm725, %v718, %v722
      %v728 = vsel %vm725, %v712, %v716
      %v729 = vsel %vm725, %v714, %v718
      %v730 = vsel %vm725, %v708, %v712
      %v731 = vsel %vm725, %v710, %v714
      %v732 = vsel %vm725, %v704, %v708
      %v733 = vsel %vm725, %v706, %v710
      %v734 = vsel %vm725, %v700, %v704
      %v735 = vsel %vm725, %v702, %v706
      %v736 = vsel %vm725, %v696, %v700
      %v737 = vsel %vm725, %v698, %v702
      %v738 = vsel %vm725, %v692, %v696
      %v739 = vsel %vm725, %v694, %v698
      %v740 = vsel %vm725, %v720, %v692
      %v741 = vsel %vm725, %v722, %v694
      %v742 = vld [vmem:[%s2] ss:$8 sm:$0xf]
      %v743 = vld [vmem:[%s2] ss:$8 sm:$0xf0]
      %v744 = vor.u32 %v742, %v743
      %v746 = vlaneseq
      %v747 = vshrl.u32 %v746, 7
      %v748 = vsub.s32 0, %v747
      %v749 = vrot.slane %v744, %v748
      %v750 = vlaneseq
      %v751 = vshrl.u32 %v750, 7
      %v752 = vsub.s32 1, %v751
      %v753 = vrot.slane %v744, %v752
      %v754 = vlaneseq
      %v755 = vshrl.u32 %v754, 7
      %v756 = vsub.s32 2, %v755
      %v757 = vrot.slane %v744, %v756
      %v758 = vlaneseq
      %v759 = vshrl.u32 %v758, 7
      %v760 = vsub.s32 3, %v759
      %v761 = vrot.slane %v744, %v760
      %v762 = vlaneseq
      %v763 = vshrl.u32 %v762, 7
      %v764 = vsub.s32 4, %v763
      %v765 = vrot.slane %v744, %v764
      %v766 = vlaneseq
      %v767 = vshrl.u32 %v766, 7
      %v768 = vsub.s32 5, %v767
      %v769 = vrot.slane %v744, %v768
      %v770 = vlaneseq
      %v771 = vshrl.u32 %v770, 7
      %v772 = vsub.s32 6, %v771
      %v773 = vrot.slane %v744, %v772
      %v774 = vlaneseq
      %v775 = vshrl.u32 %v774, 7
      %v776 = vsub.s32 7, %v775
      %v777 = vrot.slane %v744, %v776
      %v786 = vmul.f32 %v740, %v749
      %v787 = vmul.f32 %v738, %v753
      %v788 = vmul.f32 %v736, %v757
      %v789 = vmul.f32 %v734, %v761
      %v790 = vmul.f32 %v732, %v765
      %v791 = vmul.f32 %v730, %v769
      %v792 = vmul.f32 %v728, %v773
      %v793 = vmul.f32 %v726, %v777
      %v794 = vmul.f32 %v741, %v749
      %v795 = vmul.f32 %v739, %v753
      %v796 = vmul.f32 %v737, %v757
      %v797 = vmul.f32 %v735, %v761
      %v798 = vmul.f32 %v733, %v765
      %v799 = vmul.f32 %v731, %v769
      %v800 = vmul.f32 %v729, %v773
      %v801 = vmul.f32 %v727, %v777
      %v802 = vld [vmem:[%s3] sm:$0xff]
      %803 = vrot.lane.b32.xlu0 %v423, 16
      %v804 = vpop.permute.xlu0 %803
      %805 = vrot.lane.b32.xlu0 %v429, 16
      %v806 = vpop.permute.xlu0 %805
      %807 = vrot.lane.b32.xlu0 %v425, 16
      %v808 = vpop.permute.xlu0 %807
      %809 = vrot.lane.b32.xlu0 %v431, 16
      %v810 = vpop.permute.xlu0 %809
      %811 = vrot.lane.b32.xlu0 %v509, 16
      %v812 = vpop.permute.xlu0 %811
      %813 = vrot.lane.b32.xlu0 %v515, 16
      %v814 = vpop.permute.xlu0 %813
      %815 = vrot.lane.b32.xlu0 %v511, 16
      %v816 = vpop.permute.xlu0 %815
      %817 = vrot.lane.b32.xlu0 %v517, 16
      %v818 = vpop.permute.xlu0 %817
      %819 = vrot.lane.b32.xlu0 %v595, 16
      %v820 = vpop.permute.xlu0 %819
      %821 = vrot.lane.b32.xlu0 %v601, 16
      %v822 = vpop.permute.xlu0 %821
      %823 = vrot.lane.b32.xlu0 %v597, 16
      %v824 = vpop.permute.xlu0 %823
      %825 = vrot.lane.b32.xlu0 %v603, 16
      %v826 = vpop.permute.xlu0 %825
      %827 = vrot.lane.b32.xlu0 %v681, 16
      %v828 = vpop.permute.xlu0 %827
      %829 = vrot.lane.b32.xlu0 %v687, 16
      %v830 = vpop.permute.xlu0 %829
      %831 = vrot.lane.b32.xlu0 %v683, 16
      %v832 = vpop.permute.xlu0 %831
      %833 = vrot.lane.b32.xlu0 %v689, 16
      %v834 = vpop.permute.xlu0 %833
      %vm835 = vcmp.lt.s32.totalorder %v724, 16
      %v836 = vsel %vm835, %v828, %v832
      %v837 = vsel %vm835, %v830, %v834
      %v838 = vsel %vm835, %v824, %v828
      %v839 = vsel %vm835, %v826, %v830
      %v840 = vsel %vm835, %v820, %v824
      %v841 = vsel %vm835, %v822, %v826
      %v842 = vsel %vm835, %v816, %v820
      %v843 = vsel %vm835, %v818, %v822
      %v844 = vsel %vm835, %v812, %v816
      %v845 = vsel %vm835, %v814, %v818
      %v846 = vsel %vm835, %v808, %v812
      %v847 = vsel %vm835, %v810, %v814
      %v848 = vsel %vm835, %v804, %v808
      %v849 = vsel %vm835, %v806, %v810
      %v850 = vsel %vm835, %v832, %v804
      %v851 = vsel %vm835, %v834, %v806
      %s852 = scalar_lea.vmem %s2, 1
      %v853 = vld [vmem:[%s852] ss:$8 sm:$0xf]
      %v854 = vld [vmem:[%s852] ss:$8 sm:$0xf0]
      %v855 = vor.u32 %v853, %v854
      %v857 = vlaneseq
      %v858 = vshrl.u32 %v857, 7
      %v859 = vsub.s32 0, %v858
      %v860 = vrot.slane %v855, %v859
      %v861 = vlaneseq
      %v862 = vshrl.u32 %v861, 7
      %v863 = vsub.s32 1, %v862
      %v864 = vrot.slane %v855, %v863
      %v865 = vlaneseq
      %v866 = vshrl.u32 %v865, 7
      %v867 = vsub.s32 2, %v866
      %v868 = vrot.slane %v855, %v867
      %v869 = vlaneseq
      %v870 = vshrl.u32 %v869, 7
      %v871 = vsub.s32 3, %v870
      %v872 = vrot.slane %v855, %v871
      %v873 = vlaneseq
      %v874 = vshrl.u32 %v873, 7
      %v875 = vsub.s32 4, %v874
      %v876 = vrot.slane %v855, %v875
      %v877 = vlaneseq
      %v878 = vshrl.u32 %v877, 7
      %v879 = vsub.s32 5, %v878
      %v880 = vrot.slane %v855, %v879
      %v881 = vlaneseq
      %v882 = vshrl.u32 %v881, 7
      %v883 = vsub.s32 6, %v882
      %v884 = vrot.slane %v855, %v883
      %v885 = vlaneseq
      %v886 = vshrl.u32 %v885, 7
      %v887 = vsub.s32 7, %v886
      %v888 = vrot.slane %v855, %v887
      %v897 = vmul.f32 %v850, %v860
      %v898 = vmul.f32 %v848, %v864
      %v899 = vmul.f32 %v846, %v868
      %v900 = vmul.f32 %v844, %v872
      %v901 = vmul.f32 %v842, %v876
      %v902 = vmul.f32 %v840, %v880
      %v903 = vmul.f32 %v838, %v884
      %v904 = vmul.f32 %v836, %v888
      %v905 = vmul.f32 %v851, %v860
      %v906 = vmul.f32 %v849, %v864
      %v907 = vmul.f32 %v847, %v868
      %v908 = vmul.f32 %v845, %v872
      %v909 = vmul.f32 %v843, %v876
      %v910 = vmul.f32 %v841, %v880
      %v911 = vmul.f32 %v839, %v884
      %v912 = vmul.f32 %v837, %v888
      %s913 = scalar_lea.vmem %s3, 8
      %v914 = vld [vmem:[%s913] sm:$0xff]
      %vm915 = vcmask 97280
      %v917 = vsel %vm915, %v914, 0
      %vm919 = vcmask 1043456
      %v921 = vsel %vm919, %v905, 0
      %v924 = vsel %vm919, %v906, 0
      %v927 = vsel %vm919, %v907, 0
      %v930 = vsel %vm919, %v908, 0
      %v933 = vsel %vm919, %v909, 0
      %v936 = vsel %vm919, %v910, 0
      %v939 = vsel %vm919, %v911, 0
      %v942 = vsel %vm919, %v912, 0
      %944 = vmatprep.subr.mxu0 %v898
      %945 = vmatpush1.msra.mxu0 %v897
      %946 = vmatprep.subr.mxu0 %v924
      %947 = vmatpush1.msra.mxu0 %v921
      %948 = vmatprep.subr.mxu0 0.0
      %949 = vmatpush1.msra.mxu0 0.0
      %950 = vmatprep.subr.mxu0 0.0
      %951 = vmatpush1.msra.mxu0 0.0
      %952 = vmatprep.subr.mxu0 0.0
      %953 = vmatpush1.msra.mxu0 0.0
      %954 = vmatprep.subr.mxu0 0.0
      %955 = vmatpush1.msra.mxu0 0.0
      %956 = vmatprep.subr.mxu0 0.0
      %957 = vmatpush1.msra.mxu0 0.0
      %958 = vmatprep.subr.mxu0 0.0
      %959 = vmatpush1.msra.mxu0 0.0
      %960 = vmatprep.subr.mxu0 0.0
      %961 = vmatpush1.msra.mxu0 0.0
      %962 = vmatprep.subr.mxu0 0.0
      %963 = vmatpush1.msra.mxu0 0.0
      %964 = vmatprep.subr.mxu0 0.0
      %965 = vmatpush1.msra.mxu0 0.0
      %966 = vmatprep.subr.mxu0 0.0
      %967 = vmatpush1.msra.mxu0 0.0
      %968 = vmatprep.subr.mxu0 0.0
      %969 = vmatpush1.msra.mxu0 0.0
      %970 = vmatprep.subr.mxu0 0.0
      %971 = vmatpush1.msra.mxu0 0.0
      %972 = vmatprep.subr.mxu0 0.0
      %973 = vmatpush1.msra.mxu0 0.0
      %974 = vmatprep.subr.mxu0 0.0
      %975 = vmatpush1.msra.mxu0 0.0
      %976 = vmatprep.subr.mxu0 0.0
      %977 = vmatpush1.msra.mxu0 0.0
      %978 = vmatprep.subr.mxu0 0.0
      %979 = vmatpush1.msra.mxu0 0.0
      %980 = vmatprep.subr.mxu0 0.0
      %981 = vmatpush1.msra.mxu0 0.0
      %982 = vmatprep.subr.mxu0 0.0
      %983 = vmatpush1.msra.mxu0 0.0
      %984 = vmatprep.subr.mxu0 0.0
      %985 = vmatpush1.msra.mxu0 0.0
      %986 = vmatprep.subr.mxu0 0.0
      %987 = vmatpush1.msra.mxu0 0.0
      %988 = vmatprep.subr.mxu0 0.0
      %989 = vmatpush1.msra.mxu0 0.0
      %990 = vmatprep.subr.mxu0 0.0
      %991 = vmatpush1.msra.mxu0 0.0
      %992 = vmatprep.subr.mxu0 0.0
      %993 = vmatpush1.msra.mxu0 0.0
      %994 = vmatprep.subr.mxu0 0.0
      %995 = vmatpush1.msra.mxu0 0.0
      %996 = vmatprep.subr.mxu0 0.0
      %997 = vmatpush1.msra.mxu0 0.0
      %998 = vmatprep.subr.mxu0 0.0
      %999 = vmatpush1.msra.mxu0 0.0
      %1000 = vmatprep.subr.mxu0 0.0
      %1001 = vmatpush1.msra.mxu0 0.0
      %1002 = vmatprep.subr.mxu0 0.0
      %1003 = vmatpush1.msra.mxu0 0.0
      %1004 = vmatprep.subr.mxu0 0.0
      %1005 = vmatpush1.msra.mxu0 0.0
      %1006 = vmatprep.subr.mxu0 0.0
      %1007 = vmatpush1.msra.mxu0 0.0
      %1008 = vmatprep.mubr.f32.mxu0 0.0
      %1009 = vmatmul.mubr.f32.gmra.mrb[0].mxu0 %v917
      %v1010 = vpop.f32.mrb[0].mxu0
      %v1011 = vadd.f32 0.0, %v1010
      %v1012 = vpop.f32.mrb[0].mxu0
      %v1013 = vadd.f32 0.0, %v1012
      %1014 = vdwg.mxu0
      %1015 = vmatprep.subr.mxu0 %v900
      %1016 = vmatpush1.msra.mxu0 %v899
      %1017 = vmatprep.subr.mxu0 %v930
      %1018 = vmatpush1.msra.mxu0 %v927
      %1019 = vmatprep.subr.mxu0 0.0
      %1020 = vmatpush1.msra.mxu0 0.0
      %1021 = vmatprep.subr.mxu0 0.0
      %1022 = vmatpush1.msra.mxu0 0.0
      %1023 = vmatprep.subr.mxu0 0.0
      %1024 = vmatpush1.msra.mxu0 0.0
      %1025 = vmatprep.subr.mxu0 0.0
      %1026 = vmatpush1.msra.mxu0 0.0
      %1027 = vmatprep.subr.mxu0 0.0
      %1028 = vmatpush1.msra.mxu0 0.0
      %1029 = vmatprep.subr.mxu0 0.0
      %1030 = vmatpush1.msra.mxu0 0.0
      %1031 = vmatprep.subr.mxu0 0.0
      %1032 = vmatpush1.msra.mxu0 0.0
      %1033 = vmatprep.subr.mxu0 0.0
      %1034 = vmatpush1.msra.mxu0 0.0
      %1035 = vmatprep.subr.mxu0 0.0
      %1036 = vmatpush1.msra.mxu0 0.0
      %1037 = vmatprep.subr.mxu0 0.0
      %1038 = vmatpush1.msra.mxu0 0.0
      %1039 = vmatprep.subr.mxu0 0.0
      %1040 = vmatpush1.msra.mxu0 0.0
      %1041 = vmatprep.subr.mxu0 0.0
      %1042 = vmatpush1.msra.mxu0 0.0
      %1043 = vmatprep.subr.mxu0 0.0
      %1044 = vmatpush1.msra.mxu0 0.0
      %1045 = vmatprep.subr.mxu0 0.0
      %1046 = vmatpush1.msra.mxu0 0.0
      %1047 = vmatprep.subr.mxu0 0.0
      %1048 = vmatpush1.msra.mxu0 0.0
      %1049 = vmatprep.subr.mxu0 0.0
      %1050 = vmatpush1.msra.mxu0 0.0
      %1051 = vmatprep.subr.mxu0 0.0
      %1052 = vmatpush1.msra.mxu0 0.0
      %1053 = vmatprep.subr.mxu0 0.0
      %1054 = vmatpush1.msra.mxu0 0.0
      %1055 = vmatprep.subr.mxu0 0.0
      %1056 = vmatpush1.msra.mxu0 0.0
      %1057 = vmatprep.subr.mxu0 0.0
      %1058 = vmatpush1.msra.mxu0 0.0
      %1059 = vmatprep.subr.mxu0 0.0
      %1060 = vmatpush1.msra.mxu0 0.0
      %1061 = vmatprep.subr.mxu0 0.0
      %1062 = vmatpush1.msra.mxu0 0.0
      %1063 = vmatprep.subr.mxu0 0.0
      %1064 = vmatpush1.msra.mxu0 0.0
      %1065 = vmatprep.subr.mxu0 0.0
      %1066 = vmatpush1.msra.mxu0 0.0
      %1067 = vmatprep.subr.mxu0 0.0
      %1068 = vmatpush1.msra.mxu0 0.0
      %1069 = vmatprep.subr.mxu0 0.0
      %1070 = vmatpush1.msra.mxu0 0.0
      %1071 = vmatprep.subr.mxu0 0.0
      %1072 = vmatpush1.msra.mxu0 0.0
      %1073 = vmatprep.subr.mxu0 0.0
      %1074 = vmatpush1.msra.mxu0 0.0
      %1075 = vmatprep.subr.mxu0 0.0
      %1076 = vmatpush1.msra.mxu0 0.0
      %1077 = vmatprep.subr.mxu0 0.0
      %1078 = vmatpush1.msra.mxu0 0.0
      %1079 = vmatprep.mubr.f32.mxu0 0.0
      %1080 = vmatmul.mubr.f32.gmra.mrb[0].mxu0 %v917
      %v1081 = vpop.f32.mrb[0].mxu0
      %v1082 = vadd.f32 0.0, %v1081
      %v1083 = vpop.f32.mrb[0].mxu0
      %v1084 = vadd.f32 0.0, %v1083
      %1085 = vdwg.mxu0
      %1086 = vmatprep.subr.mxu0 %v902
      %1087 = vmatpush1.msra.mxu0 %v901
      %1088 = vmatprep.subr.mxu0 %v936
      %1089 = vmatpush1.msra.mxu0 %v933
      %1090 = vmatprep.subr.mxu0 0.0
      %1091 = vmatpush1.msra.mxu0 0.0
      %1092 = vmatprep.subr.mxu0 0.0
      %1093 = vmatpush1.msra.mxu0 0.0
      %1094 = vmatprep.subr.mxu0 0.0
      %1095 = vmatpush1.msra.mxu0 0.0
      %1096 = vmatprep.subr.mxu0 0.0
      %1097 = vmatpush1.msra.mxu0 0.0
      %1098 = vmatprep.subr.mxu0 0.0
      %1099 = vmatpush1.msra.mxu0 0.0
      %1100 = vmatprep.subr.mxu0 0.0
      %1101 = vmatpush1.msra.mxu0 0.0
      %1102 = vmatprep.subr.mxu0 0.0
      %1103 = vmatpush1.msra.mxu0 0.0
      %1104 = vmatprep.subr.mxu0 0.0
      %1105 = vmatpush1.msra.mxu0 0.0
      %1106 = vmatprep.subr.mxu0 0.0
      %1107 = vmatpush1.msra.mxu0 0.0
      %1108 = vmatprep.subr.mxu0 0.0
      %1109 = vmatpush1.msra.mxu0 0.0
      %1110 = vmatprep.subr.mxu0 0.0
      %1111 = vmatpush1.msra.mxu0 0.0
      %1112 = vmatprep.subr.mxu0 0.0
      %1113 = vmatpush1.msra.mxu0 0.0
      %1114 = vmatprep.subr.mxu0 0.0
      %1115 = vmatpush1.msra.mxu0 0.0
      %1116 = vmatprep.subr.mxu0 0.0
      %1117 = vmatpush1.msra.mxu0 0.0
      %1118 = vmatprep.subr.mxu0 0.0
      %1119 = vmatpush1.msra.mxu0 0.0
      %1120 = vmatprep.subr.mxu0 0.0
      %1121 = vmatpush1.msra.mxu0 0.0
      %1122 = vmatprep.subr.mxu0 0.0
      %1123 = vmatpush1.msra.mxu0 0.0
      %1124 = vmatprep.subr.mxu0 0.0
      %1125 = vmatpush1.msra.mxu0 0.0
      %1126 = vmatprep.subr.mxu0 0.0
      %1127 = vmatpush1.msra.mxu0 0.0
      %1128 = vmatprep.subr.mxu0 0.0
      %1129 = vmatpush1.msra.mxu0 0.0
      %1130 = vmatprep.subr.mxu0 0.0
      %1131 = vmatpush1.msra.mxu0 0.0
      %1132 = vmatprep.subr.mxu0 0.0
      %1133 = vmatpush1.msra.mxu0 0.0
      %1134 = vmatprep.subr.mxu0 0.0
      %1135 = vmatpush1.msra.mxu0 0.0
      %1136 = vmatprep.subr.mxu0 0.0
      %1137 = vmatpush1.msra.mxu0 0.0
      %1138 = vmatprep.subr.mxu0 0.0
      %1139 = vmatpush1.msra.mxu0 0.0
      %1140 = vmatprep.subr.mxu0 0.0
      %1141 = vmatpush1.msra.mxu0 0.0
      %1142 = vmatprep.subr.mxu0 0.0
      %1143 = vmatpush1.msra.mxu0 0.0
      %1144 = vmatprep.subr.mxu0 0.0
      %1145 = vmatpush1.msra.mxu0 0.0
      %1146 = vmatprep.subr.mxu0 0.0
      %1147 = vmatpush1.msra.mxu0 0.0
      %1148 = vmatprep.subr.mxu0 0.0
      %1149 = vmatpush1.msra.mxu0 0.0
      %1150 = vmatprep.mubr.f32.mxu0 0.0
      %1151 = vmatmul.mubr.f32.gmra.mrb[0].mxu0 %v917
      %v1152 = vpop.f32.mrb[0].mxu0
      %v1153 = vadd.f32 0.0, %v1152
      %v1154 = vpop.f32.mrb[0].mxu0
      %v1155 = vadd.f32 0.0, %v1154
      %1156 = vdwg.mxu0
      %1157 = vmatprep.subr.mxu0 %v904
      %1158 = vmatpush1.msra.mxu0 %v903
      %1159 = vmatprep.subr.mxu0 %v942
      %1160 = vmatpush1.msra.mxu0 %v939
      %1161 = vmatprep.subr.mxu0 0.0
      %1162 = vmatpush1.msra.mxu0 0.0
      %1163 = vmatprep.subr.mxu0 0.0
      %1164 = vmatpush1.msra.mxu0 0.0
      %1165 = vmatprep.subr.mxu0 0.0
      %1166 = vmatpush1.msra.mxu0 0.0
      %1167 = vmatprep.subr.mxu0 0.0
      %1168 = vmatpush1.msra.mxu0 0.0
      %1169 = vmatprep.subr.mxu0 0.0
      %1170 = vmatpush1.msra.mxu0 0.0
      %1171 = vmatprep.subr.mxu0 0.0
      %1172 = vmatpush1.msra.mxu0 0.0
      %1173 = vmatprep.subr.mxu0 0.0
      %1174 = vmatpush1.msra.mxu0 0.0
      %1175 = vmatprep.subr.mxu0 0.0
      %1176 = vmatpush1.msra.mxu0 0.0
      %1177 = vmatprep.subr.mxu0 0.0
      %1178 = vmatpush1.msra.mxu0 0.0
      %1179 = vmatprep.subr.mxu0 0.0
      %1180 = vmatpush1.msra.mxu0 0.0
      %1181 = vmatprep.subr.mxu0 0.0
      %1182 = vmatpush1.msra.mxu0 0.0
      %1183 = vmatprep.subr.mxu0 0.0
      %1184 = vmatpush1.msra.mxu0 0.0
      %1185 = vmatprep.subr.mxu0 0.0
      %1186 = vmatpush1.msra.mxu0 0.0
      %1187 = vmatprep.subr.mxu0 0.0
      %1188 = vmatpush1.msra.mxu0 0.0
      %1189 = vmatprep.subr.mxu0 0.0
      %1190 = vmatpush1.msra.mxu0 0.0
      %1191 = vmatprep.subr.mxu0 0.0
      %1192 = vmatpush1.msra.mxu0 0.0
      %1193 = vmatprep.subr.mxu0 0.0
      %1194 = vmatpush1.msra.mxu0 0.0
      %1195 = vmatprep.subr.mxu0 0.0
      %1196 = vmatpush1.msra.mxu0 0.0
      %1197 = vmatprep.subr.mxu0 0.0
      %1198 = vmatpush1.msra.mxu0 0.0
      %1199 = vmatprep.subr.mxu0 0.0
      %1200 = vmatpush1.msra.mxu0 0.0
      %1201 = vmatprep.subr.mxu0 0.0
      %1202 = vmatpush1.msra.mxu0 0.0
      %1203 = vmatprep.subr.mxu0 0.0
      %1204 = vmatpush1.msra.mxu0 0.0
      %1205 = vmatprep.subr.mxu0 0.0
      %1206 = vmatpush1.msra.mxu0 0.0
      %1207 = vmatprep.subr.mxu0 0.0
      %1208 = vmatpush1.msra.mxu0 0.0
      %1209 = vmatprep.subr.mxu0 0.0
      %1210 = vmatpush1.msra.mxu0 0.0
      %1211 = vmatprep.subr.mxu0 0.0
      %1212 = vmatpush1.msra.mxu0 0.0
      %1213 = vmatprep.subr.mxu0 0.0
      %1214 = vmatpush1.msra.mxu0 0.0
      %1215 = vmatprep.subr.mxu0 0.0
      %1216 = vmatpush1.msra.mxu0 0.0
      %1217 = vmatprep.subr.mxu0 0.0
      %1218 = vmatpush1.msra.mxu0 0.0
      %1219 = vmatprep.subr.mxu0 0.0
      %1220 = vmatpush1.msra.mxu0 0.0
      %1221 = vmatprep.mubr.f32.mxu0 0.0
      %1222 = vmatmul.mubr.f32.gmra.mrb[0].mxu0 %v917
      %v1223 = vpop.f32.mrb[0].mxu0
      %v1224 = vadd.f32 0.0, %v1223
      %v1225 = vpop.f32.mrb[0].mxu0
      %v1226 = vadd.f32 0.0, %v1225
      %1227 = vdwg.mxu0
      %v1229 = vsel %vm915, %v802, 0
      %v1232 = vsel %vm919, %v794, 0
      %v1235 = vsel %vm919, %v795, 0
      %v1238 = vsel %vm919, %v796, 0
      %v1241 = vsel %vm919, %v797, 0
      %v1244 = vsel %vm919, %v798, 0
      %v1247 = vsel %vm919, %v799, 0
      %v1250 = vsel %vm919, %v800, 0
      %v1253 = vsel %vm919, %v801, 0
      %1255 = vmatprep.subr.mxu0 %v787
      %1256 = vmatpush1.msra.mxu0 %v786
      %1257 = vmatprep.subr.mxu0 %v1235
      %1258 = vmatpush1.msra.mxu0 %v1232
      %1259 = vmatprep.subr.mxu0 0.0
      %1260 = vmatpush1.msra.mxu0 0.0
      %1261 = vmatprep.subr.mxu0 0.0
      %1262 = vmatpush1.msra.mxu0 0.0
      %1263 = vmatprep.subr.mxu0 0.0
      %1264 = vmatpush1.msra.mxu0 0.0
      %1265 = vmatprep.subr.mxu0 0.0
      %1266 = vmatpush1.msra.mxu0 0.0
      %1267 = vmatprep.subr.mxu0 0.0
      %1268 = vmatpush1.msra.mxu0 0.0
      %1269 = vmatprep.subr.mxu0 0.0
      %1270 = vmatpush1.msra.mxu0 0.0
      %1271 = vmatprep.subr.mxu0 0.0
      %1272 = vmatpush1.msra.mxu0 0.0
      %1273 = vmatprep.subr.mxu0 0.0
      %1274 = vmatpush1.msra.mxu0 0.0
      %1275 = vmatprep.subr.mxu0 0.0
      %1276 = vmatpush1.msra.mxu0 0.0
      %1277 = vmatprep.subr.mxu0 0.0
      %1278 = vmatpush1.msra.mxu0 0.0
      %1279 = vmatprep.subr.mxu0 0.0
      %1280 = vmatpush1.msra.mxu0 0.0
      %1281 = vmatprep.subr.mxu0 0.0
      %1282 = vmatpush1.msra.mxu0 0.0
      %1283 = vmatprep.subr.mxu0 0.0
      %1284 = vmatpush1.msra.mxu0 0.0
      %1285 = vmatprep.subr.mxu0 0.0
      %1286 = vmatpush1.msra.mxu0 0.0
      %1287 = vmatprep.subr.mxu0 0.0
      %1288 = vmatpush1.msra.mxu0 0.0
      %1289 = vmatprep.subr.mxu0 0.0
      %1290 = vmatpush1.msra.mxu0 0.0
      %1291 = vmatprep.subr.mxu0 0.0
      %1292 = vmatpush1.msra.mxu0 0.0
      %1293 = vmatprep.subr.mxu0 0.0
      %1294 = vmatpush1.msra.mxu0 0.0
      %1295 = vmatprep.subr.mxu0 0.0
      %1296 = vmatpush1.msra.mxu0 0.0
      %1297 = vmatprep.subr.mxu0 0.0
      %1298 = vmatpush1.msra.mxu0 0.0
      %1299 = vmatprep.subr.mxu0 0.0
      %1300 = vmatpush1.msra.mxu0 0.0
      %1301 = vmatprep.subr.mxu0 0.0
      %1302 = vmatpush1.msra.mxu0 0.0
      %1303 = vmatprep.subr.mxu0 0.0
      %1304 = vmatpush1.msra.mxu0 0.0
      %1305 = vmatprep.subr.mxu0 0.0
      %1306 = vmatpush1.msra.mxu0 0.0
      %1307 = vmatprep.subr.mxu0 0.0
      %1308 = vmatpush1.msra.mxu0 0.0
      %1309 = vmatprep.subr.mxu0 0.0
      %1310 = vmatpush1.msra.mxu0 0.0
      %1311 = vmatprep.subr.mxu0 0.0
      %1312 = vmatpush1.msra.mxu0 0.0
      %1313 = vmatprep.subr.mxu0 0.0
      %1314 = vmatpush1.msra.mxu0 0.0
      %1315 = vmatprep.subr.mxu0 0.0
      %1316 = vmatpush1.msra.mxu0 0.0
      %1317 = vmatprep.subr.mxu0 0.0
      %1318 = vmatpush1.msra.mxu0 0.0
      %1319 = vmatprep.mubr.f32.mxu0 0.0
      %1320 = vmatmul.mubr.f32.gmra.mrb[0].mxu0 %v1229
      %v1321 = vpop.f32.mrb[0].mxu0
      %v1322 = vadd.f32 %v1011, %v1321
      %v1323 = vpop.f32.mrb[0].mxu0
      %v1324 = vadd.f32 %v1013, %v1323
      %1325 = vdwg.mxu0
      %1326 = vmatprep.subr.mxu0 %v789
      %1327 = vmatpush1.msra.mxu0 %v788
      %1328 = vmatprep.subr.mxu0 %v1241
      %1329 = vmatpush1.msra.mxu0 %v1238
      %1330 = vmatprep.subr.mxu0 0.0
      %1331 = vmatpush1.msra.mxu0 0.0
      %1332 = vmatprep.subr.mxu0 0.0
      %1333 = vmatpush1.msra.mxu0 0.0
      %1334 = vmatprep.subr.mxu0 0.0
      %1335 = vmatpush1.msra.mxu0 0.0
      %1336 = vmatprep.subr.mxu0 0.0
      %1337 = vmatpush1.msra.mxu0 0.0
      %1338 = vmatprep.subr.mxu0 0.0
      %1339 = vmatpush1.msra.mxu0 0.0
      %1340 = vmatprep.subr.mxu0 0.0
      %1341 = vmatpush1.msra.mxu0 0.0
      %1342 = vmatprep.subr.mxu0 0.0
      %1343 = vmatpush1.msra.mxu0 0.0
      %1344 = vmatprep.subr.mxu0 0.0
      %1345 = vmatpush1.msra.mxu0 0.0
      %1346 = vmatprep.subr.mxu0 0.0
      %1347 = vmatpush1.msra.mxu0 0.0
      %1348 = vmatprep.subr.mxu0 0.0
      %1349 = vmatpush1.msra.mxu0 0.0
      %1350 = vmatprep.subr.mxu0 0.0
      %1351 = vmatpush1.msra.mxu0 0.0
      %1352 = vmatprep.subr.mxu0 0.0
      %1353 = vmatpush1.msra.mxu0 0.0
      %1354 = vmatprep.subr.mxu0 0.0
      %1355 = vmatpush1.msra.mxu0 0.0
      %1356 = vmatprep.subr.mxu0 0.0
      %1357 = vmatpush1.msra.mxu0 0.0
      %1358 = vmatprep.subr.mxu0 0.0
      %1359 = vmatpush1.msra.mxu0 0.0
      %1360 = vmatprep.subr.mxu0 0.0
      %1361 = vmatpush1.msra.mxu0 0.0
      %1362 = vmatprep.subr.mxu0 0.0
      %1363 = vmatpush1.msra.mxu0 0.0
      %1364 = vmatprep.subr.mxu0 0.0
      %1365 = vmatpush1.msra.mxu0 0.0
      %1366 = vmatprep.subr.mxu0 0.0
      %1367 = vmatpush1.msra.mxu0 0.0
      %1368 = vmatprep.subr.mxu0 0.0
      %1369 = vmatpush1.msra.mxu0 0.0
      %1370 = vmatprep.subr.mxu0 0.0
      %1371 = vmatpush1.msra.mxu0 0.0
      %1372 = vmatprep.subr.mxu0 0.0
      %1373 = vmatpush1.msra.mxu0 0.0
      %1374 = vmatprep.subr.mxu0 0.0
      %1375 = vmatpush1.msra.mxu0 0.0
      %1376 = vmatprep.subr.mxu0 0.0
      %1377 = vmatpush1.msra.mxu0 0.0
      %1378 = vmatprep.subr.mxu0 0.0
      %1379 = vmatpush1.msra.mxu0 0.0
      %1380 = vmatprep.subr.mxu0 0.0
      %1381 = vmatpush1.msra.mxu0 0.0
      %1382 = vmatprep.subr.mxu0 0.0
      %1383 = vmatpush1.msra.mxu0 0.0
      %1384 = vmatprep.subr.mxu0 0.0
      %1385 = vmatpush1.msra.mxu0 0.0
      %1386 = vmatprep.subr.mxu0 0.0
      %1387 = vmatpush1.msra.mxu0 0.0
      %1388 = vmatprep.subr.mxu0 0.0
      %1389 = vmatpush1.msra.mxu0 0.0
      %1390 = vmatprep.mubr.f32.mxu0 0.0
      %1391 = vmatmul.mubr.f32.gmra.mrb[0].mxu0 %v1229
      %v1392 = vpop.f32.mrb[0].mxu0
      %v1393 = vadd.f32 %v1082, %v1392
      %v1394 = vpop.f32.mrb[0].mxu0
      %v1395 = vadd.f32 %v1084, %v1394
      %1396 = vdwg.mxu0
      %1397 = vmatprep.subr.mxu0 %v791
      %1398 = vmatpush1.msra.mxu0 %v790
      %1399 = vmatprep.subr.mxu0 %v1247
      %1400 = vmatpush1.msra.mxu0 %v1244
      %1401 = vmatprep.subr.mxu0 0.0
      %1402 = vmatpush1.msra.mxu0 0.0
      %1403 = vmatprep.subr.mxu0 0.0
      %1404 = vmatpush1.msra.mxu0 0.0
      %1405 = vmatprep.subr.mxu0 0.0
      %1406 = vmatpush1.msra.mxu0 0.0
      %1407 = vmatprep.subr.mxu0 0.0
      %1408 = vmatpush1.msra.mxu0 0.0
      %1409 = vmatprep.subr.mxu0 0.0
      %1410 = vmatpush1.msra.mxu0 0.0
      %1411 = vmatprep.subr.mxu0 0.0
      %1412 = vmatpush1.msra.mxu0 0.0
      %1413 = vmatprep.subr.mxu0 0.0
      %1414 = vmatpush1.msra.mxu0 0.0
      %1415 = vmatprep.subr.mxu0 0.0
      %1416 = vmatpush1.msra.mxu0 0.0
      %1417 = vmatprep.subr.mxu0 0.0
      %1418 = vmatpush1.msra.mxu0 0.0
      %1419 = vmatprep.subr.mxu0 0.0
      %1420 = vmatpush1.msra.mxu0 0.0
      %1421 = vmatprep.subr.mxu0 0.0
      %1422 = vmatpush1.msra.mxu0 0.0
      %1423 = vmatprep.subr.mxu0 0.0
      %1424 = vmatpush1.msra.mxu0 0.0
      %1425 = vmatprep.subr.mxu0 0.0
      %1426 = vmatpush1.msra.mxu0 0.0
      %1427 = vmatprep.subr.mxu0 0.0
      %1428 = vmatpush1.msra.mxu0 0.0
      %1429 = vmatprep.subr.mxu0 0.0
      %1430 = vmatpush1.msra.mxu0 0.0
      %1431 = vmatprep.subr.mxu0 0.0
      %1432 = vmatpush1.msra.mxu0 0.0
      %1433 = vmatprep.subr.mxu0 0.0
      %1434 = vmatpush1.msra.mxu0 0.0
      %1435 = vmatprep.subr.mxu0 0.0
      %1436 = vmatpush1.msra.mxu0 0.0
      %1437 = vmatprep.subr.mxu0 0.0
      %1438 = vmatpush1.msra.mxu0 0.0
      %1439 = vmatprep.subr.mxu0 0.0
      %1440 = vmatpush1.msra.mxu0 0.0
      %1441 = vmatprep.subr.mxu0 0.0
      %1442 = vmatpush1.msra.mxu0 0.0
      %1443 = vmatprep.subr.mxu0 0.0
      %1444 = vmatpush1.msra.mxu0 0.0
      %1445 = vmatprep.subr.mxu0 0.0
      %1446 = vmatpush1.msra.mxu0 0.0
      %1447 = vmatprep.subr.mxu0 0.0
      %1448 = vmatpush1.msra.mxu0 0.0
      %1449 = vmatprep.subr.mxu0 0.0
      %1450 = vmatpush1.msra.mxu0 0.0
      %1451 = vmatprep.subr.mxu0 0.0
      %1452 = vmatpush1.msra.mxu0 0.0
      %1453 = vmatprep.subr.mxu0 0.0
      %1454 = vmatpush1.msra.mxu0 0.0
      %1455 = vmatprep.subr.mxu0 0.0
      %1456 = vmatpush1.msra.mxu0 0.0
      %1457 = vmatprep.subr.mxu0 0.0
      %1458 = vmatpush1.msra.mxu0 0.0
      %1459 = vmatprep.subr.mxu0 0.0
      %1460 = vmatpush1.msra.mxu0 0.0
      %1461 = vmatprep.mubr.f32.mxu0 0.0
      %1462 = vmatmul.mubr.f32.gmra.mrb[0].mxu0 %v1229
      %v1463 = vpop.f32.mrb[0].mxu0
      %v1464 = vadd.f32 %v1153, %v1463
      %v1465 = vpop.f32.mrb[0].mxu0
      %v1466 = vadd.f32 %v1155, %v1465
      %1467 = vdwg.mxu0
      %1468 = vmatprep.subr.mxu0 %v793
      %1469 = vmatpush1.msra.mxu0 %v792
      %1470 = vmatprep.subr.mxu0 %v1253
      %1471 = vmatpush1.msra.mxu0 %v1250
      %1472 = vmatprep.subr.mxu0 0.0
      %1473 = vmatpush1.msra.mxu0 0.0
      %1474 = vmatprep.subr.mxu0 0.0
      %1475 = vmatpush1.msra.mxu0 0.0
      %1476 = vmatprep.subr.mxu0 0.0
      %1477 = vmatpush1.msra.mxu0 0.0
      %1478 = vmatprep.subr.mxu0 0.0
      %1479 = vmatpush1.msra.mxu0 0.0
      %1480 = vmatprep.subr.mxu0 0.0
      %1481 = vmatpush1.msra.mxu0 0.0
      %1482 = vmatprep.subr.mxu0 0.0
      %1483 = vmatpush1.msra.mxu0 0.0
      %1484 = vmatprep.subr.mxu0 0.0
      %1485 = vmatpush1.msra.mxu0 0.0
      %1486 = vmatprep.subr.mxu0 0.0
      %1487 = vmatpush1.msra.mxu0 0.0
      %1488 = vmatprep.subr.mxu0 0.0
      %1489 = vmatpush1.msra.mxu0 0.0
      %1490 = vmatprep.subr.mxu0 0.0
      %1491 = vmatpush1.msra.mxu0 0.0
      %1492 = vmatprep.subr.mxu0 0.0
      %1493 = vmatpush1.msra.mxu0 0.0
      %1494 = vmatprep.subr.mxu0 0.0
      %1495 = vmatpush1.msra.mxu0 0.0
      %1496 = vmatprep.subr.mxu0 0.0
      %1497 = vmatpush1.msra.mxu0 0.0
      %1498 = vmatprep.subr.mxu0 0.0
      %1499 = vmatpush1.msra.mxu0 0.0
      %1500 = vmatprep.subr.mxu0 0.0
      %1501 = vmatpush1.msra.mxu0 0.0
      %1502 = vmatprep.subr.mxu0 0.0
      %1503 = vmatpush1.msra.mxu0 0.0
      %1504 = vmatprep.subr.mxu0 0.0
      %1505 = vmatpush1.msra.mxu0 0.0
      %1506 = vmatprep.subr.mxu0 0.0
      %1507 = vmatpush1.msra.mxu0 0.0
      %1508 = vmatprep.subr.mxu0 0.0
      %1509 = vmatpush1.msra.mxu0 0.0
      %1510 = vmatprep.subr.mxu0 0.0
      %1511 = vmatpush1.msra.mxu0 0.0
      %1512 = vmatprep.subr.mxu0 0.0
      %1513 = vmatpush1.msra.mxu0 0.0
      %1514 = vmatprep.subr.mxu0 0.0
      %1515 = vmatpush1.msra.mxu0 0.0
      %1516 = vmatprep.subr.mxu0 0.0
      %1517 = vmatpush1.msra.mxu0 0.0
      %1518 = vmatprep.subr.mxu0 0.0
      %1519 = vmatpush1.msra.mxu0 0.0
      %1520 = vmatprep.subr.mxu0 0.0
      %1521 = vmatpush1.msra.mxu0 0.0
      %1522 = vmatprep.subr.mxu0 0.0
      %1523 = vmatpush1.msra.mxu0 0.0
      %1524 = vmatprep.subr.mxu0 0.0
      %1525 = vmatpush1.msra.mxu0 0.0
      %1526 = vmatprep.subr.mxu0 0.0
      %1527 = vmatpush1.msra.mxu0 0.0
      %1528 = vmatprep.subr.mxu0 0.0
      %1529 = vmatpush1.msra.mxu0 0.0
      %1530 = vmatprep.subr.mxu0 0.0
      %1531 = vmatpush1.msra.mxu0 0.0
      %1532 = vmatprep.mubr.f32.mxu0 0.0
      %1533 = vmatmul.mubr.f32.gmra.mrb[0].mxu0 %v1229
      %v1534 = vpop.f32.mrb[0].mxu0
      %v1535 = vadd.f32 %v1224, %v1534
      %v1536 = vpop.f32.mrb[0].mxu0
      %v1537 = vadd.f32 %v1226, %v1536
      %1538 = vdwg.mxu0
      %1539 = vrot.lane.b32.xlu0 %v423, 15
      %v1540 = vpop.permute.xlu0 %1539
      %1541 = vrot.lane.b32.xlu0 %v429, 15
      %v1542 = vpop.permute.xlu0 %1541
      %1543 = vrot.lane.b32.xlu0 %v425, 15
      %v1544 = vpop.permute.xlu0 %1543
      %1545 = vrot.lane.b32.xlu0 %v431, 15
      %v1546 = vpop.permute.xlu0 %1545
      %1547 = vrot.lane.b32.xlu0 %v509, 15
      %v1548 = vpop.permute.xlu0 %1547
      %1549 = vrot.lane.b32.xlu0 %v515, 15
      %v1550 = vpop.permute.xlu0 %1549
      %1551 = vrot.lane.b32.xlu0 %v511, 15
      %v1552 = vpop.permute.xlu0 %1551
      %1553 = vrot.lane.b32.xlu0 %v517, 15
      %v1554 = vpop.permute.xlu0 %1553
      %1555 = vrot.lane.b32.xlu0 %v595, 15
      %v1556 = vpop.permute.xlu0 %1555
      %1557 = vrot.lane.b32.xlu0 %v601, 15
      %v1558 = vpop.permute.xlu0 %1557
      %1559 = vrot.lane.b32.xlu0 %v597, 15
      %v1560 = vpop.permute.xlu0 %1559
      %1561 = vrot.lane.b32.xlu0 %v603, 15
      %v1562 = vpop.permute.xlu0 %1561
      %1563 = vrot.lane.b32.xlu0 %v681, 15
      %v1564 = vpop.permute.xlu0 %1563
      %1565 = vrot.lane.b32.xlu0 %v687, 15
      %v1566 = vpop.permute.xlu0 %1565
      %1567 = vrot.lane.b32.xlu0 %v683, 15
      %v1568 = vpop.permute.xlu0 %1567
      %1569 = vrot.lane.b32.xlu0 %v689, 15
      %v1570 = vpop.permute.xlu0 %1569
      %vm1571 = vcmp.lt.s32.totalorder %v724, 15
      %v1572 = vsel %vm1571, %v1564, %v1568
      %v1573 = vsel %vm1571, %v1566, %v1570
      %v1574 = vsel %vm1571, %v1560, %v1564
      %v1575 = vsel %vm1571, %v1562, %v1566
      %v1576 = vsel %vm1571, %v1556, %v1560
      %v1577 = vsel %vm1571, %v1558, %v1562
      %v1578 = vsel %vm1571, %v1552, %v1556
      %v1579 = vsel %vm1571, %v1554, %v1558
      %v1580 = vsel %vm1571, %v1548, %v1552
      %v1581 = vsel %vm1571, %v1550, %v1554
      %v1582 = vsel %vm1571, %v1544, %v1548
      %v1583 = vsel %vm1571, %v1546, %v1550
      %v1584 = vsel %vm1571, %v1540, %v1544
      %v1585 = vsel %vm1571, %v1542, %v1546
      %v1586 = vsel %vm1571, %v1568, %v1540
      %v1587 = vsel %vm1571, %v1570, %v1542
      %s1588 = scalar_lea.vmem %s2, 2
      %v1589 = vld [vmem:[%s1588] ss:$8 sm:$0xf]
      %v1590 = vld [vmem:[%s1588] ss:$8 sm:$0xf0]
      %v1591 = vor.u32 %v1589, %v1590
      %v1593 = vlaneseq
      %v1594 = vshrl.u32 %v1593, 7
      %v1595 = vsub.s32 0, %v1594
      %v1596 = vrot.slane %v1591, %v1595
      %v1597 = vlaneseq
      %v1598 = vshrl.u32 %v1597, 7
      %v1599 = vsub.s32 1, %v1598
      %v1600 = vrot.slane %v1591, %v1599
      %v1601 = vlaneseq
      %v1602 = vshrl.u32 %v1601, 7
      %v1603 = vsub.s32 2, %v1602
      %v1604 = vrot.slane %v1591, %v1603
      %v1605 = vlaneseq
      %v1606 = vshrl.u32 %v1605, 7
      %v1607 = vsub.s32 3, %v1606
      %v1608 = vrot.slane %v1591, %v1607
      %v1609 = vlaneseq
      %v1610 = vshrl.u32 %v1609, 7
      %v1611 = vsub.s32 4, %v1610
      %v1612 = vrot.slane %v1591, %v1611
      %v1613 = vlaneseq
      %v1614 = vshrl.u32 %v1613, 7
      %v1615 = vsub.s32 5, %v1614
      %v1616 = vrot.slane %v1591, %v1615
      %v1617 = vlaneseq
      %v1618 = vshrl.u32 %v1617, 7
      %v1619 = vsub.s32 6, %v1618
      %v1620 = vrot.slane %v1591, %v1619
      %v1621 = vlaneseq
      %v1622 = vshrl.u32 %v1621, 7
      %v1623 = vsub.s32 7, %v1622
      %v1624 = vrot.slane %v1591, %v1623
      %v1633 = vmul.f32 %v1586, %v1596
      %v1634 = vmul.f32 %v1584, %v1600
      %v1635 = vmul.f32 %v1582, %v1604
      %v1636 = vmul.f32 %v1580, %v1608
      %v1637 = vmul.f32 %v1578, %v1612
      %v1638 = vmul.f32 %v1576, %v1616
      %v1639 = vmul.f32 %v1574, %v1620
      %v1640 = vmul.f32 %v1572, %v1624
      %v1641 = vmul.f32 %v1587, %v1596
      %v1642 = vmul.f32 %v1585, %v1600
      %v1643 = vmul.f32 %v1583, %v1604
      %v1644 = vmul.f32 %v1581, %v1608
      %v1645 = vmul.f32 %v1579, %v1612
      %v1646 = vmul.f32 %v1577, %v1616
      %v1647 = vmul.f32 %v1575, %v1620
      %v1648 = vmul.f32 %v1573, %v1624
      %s1649 = scalar_lea.vmem %s3, 16
      %v1650 = vld [vmem:[%s1649] sm:$0xff]
      %v1652 = vsel %vm915, %v1650, 0
      %v1655 = vsel %vm919, %v1641, 0
      %v1658 = vsel %vm919, %v1642, 0
      %v1661 = vsel %vm919, %v1643, 0
      %v1664 = vsel %vm919, %v1644, 0
      %v1667 = vsel %vm919, %v1645, 0
      %v1670 = vsel %vm919, %v1646, 0
      %v1673 = vsel %vm919, %v1647, 0
      %v1676 = vsel %vm919, %v1648, 0
      %1678 = vmatprep.subr.mxu0 %v1634
      %1679 = vmatpush1.msra.mxu0 %v1633
      %1680 = vmatprep.subr.mxu0 %v1658
      %1681 = vmatpush1.msra.mxu0 %v1655
      %1682 = vmatprep.subr.mxu0 0.0
      %1683 = vmatpush1.msra.mxu0 0.0
      %1684 = vmatprep.subr.mxu0 0.0
      %1685 = vmatpush1.msra.mxu0 0.0
      %1686 = vmatprep.subr.mxu0 0.0
      %1687 = vmatpush1.msra.mxu0 0.0
      %1688 = vmatprep.subr.mxu0 0.0
      %1689 = vmatpush1.msra.mxu0 0.0
      %1690 = vmatprep.subr.mxu0 0.0
      %1691 = vmatpush1.msra.mxu0 0.0
      %1692 = vmatprep.subr.mxu0 0.0
      %1693 = vmatpush1.msra.mxu0 0.0
      %1694 = vmatprep.subr.mxu0 0.0
      %1695 = vmatpush1.msra.mxu0 0.0
      %1696 = vmatprep.subr.mxu0 0.0
      %1697 = vmatpush1.msra.mxu0 0.0
      %1698 = vmatprep.subr.mxu0 0.0
      %1699 = vmatpush1.msra.mxu0 0.0
      %1700 = vmatprep.subr.mxu0 0.0
      %1701 = vmatpush1.msra.mxu0 0.0
      %1702 = vmatprep.subr.mxu0 0.0
      %1703 = vmatpush1.msra.mxu0 0.0
      %1704 = vmatprep.subr.mxu0 0.0
      %1705 = vmatpush1.msra.mxu0 0.0
      %1706 = vmatprep.subr.mxu0 0.0
      %1707 = vmatpush1.msra.mxu0 0.0
      %1708 = vmatprep.subr.mxu0 0.0
      %1709 = vmatpush1.msra.mxu0 0.0
      %1710 = vmatprep.subr.mxu0 0.0
      %1711 = vmatpush1.msra.mxu0 0.0
      %1712 = vmatprep.subr.mxu0 0.0
      %1713 = vmatpush1.msra.mxu0 0.0
      %1714 = vmatprep.subr.mxu0 0.0
      %1715 = vmatpush1.msra.mxu0 0.0
      %1716 = vmatprep.subr.mxu0 0.0
      %1717 = vmatpush1.msra.mxu0 0.0
      %1718 = vmatprep.subr.mxu0 0.0
      %1719 = vmatpush1.msra.mxu0 0.0
      %1720 = vmatprep.subr.mxu0 0.0
      %1721 = vmatpush1.msra.mxu0 0.0
      %1722 = vmatprep.subr.mxu0 0.0
      %1723 = vmatpush1.msra.mxu0 0.0
      %1724 = vmatprep.subr.mxu0 0.0
      %1725 = vmatpush1.msra.mxu0 0.0
      %1726 = vmatprep.subr.mxu0 0.0
      %1727 = vmatpush1.msra.mxu0 0.0
      %1728 = vmatprep.subr.mxu0 0.0
      %1729 = vmatpush1.msra.mxu0 0.0
      %1730 = vmatprep.subr.mxu0 0.0
      %1731 = vmatpush1.msra.mxu0 0.0
      %1732 = vmatprep.subr.mxu0 0.0
      %1733 = vmatpush1.msra.mxu0 0.0
      %1734 = vmatprep.subr.mxu0 0.0
      %1735 = vmatpush1.msra.mxu0 0.0
      %1736 = vmatprep.subr.mxu0 0.0
      %1737 = vmatpush1.msra.mxu0 0.0
      %1738 = vmatprep.subr.mxu0 0.0
      %1739 = vmatpush1.msra.mxu0 0.0
      %1740 = vmatprep.subr.mxu0 0.0
      %1741 = vmatpush1.msra.mxu0 0.0
      %1742 = vmatprep.mubr.f32.mxu0 0.0
      %1743 = vmatmul.mubr.f32.gmra.mrb[0].mxu0 %v1652
      %v1744 = vpop.f32.mrb[0].mxu0
      %v1745 = vadd.f32 0.0, %v1744
      %v1746 = vpop.f32.mrb[0].mxu0
      %v1747 = vadd.f32 0.0, %v1746
      %1748 = vdwg.mxu0
      %1749 = vmatprep.subr.mxu0 %v1636
      %1750 = vmatpush1.msra.mxu0 %v1635
      %1751 = vmatprep.subr.mxu0 %v1664
      %1752 = vmatpush1.msra.mxu0 %v1661
      %1753 = vmatprep.subr.mxu0 0.0
      %1754 = vmatpush1.msra.mxu0 0.0
      %1755 = vmatprep.subr.mxu0 0.0
      %1756 = vmatpush1.msra.mxu0 0.0
      %1757 = vmatprep.subr.mxu0 0.0
      %1758 = vmatpush1.msra.mxu0 0.0
      %1759 = vmatprep.subr.mxu0 0.0
      %1760 = vmatpush1.msra.mxu0 0.0
      %1761 = vmatprep.subr.mxu0 0.0
      %1762 = vmatpush1.msra.mxu0 0.0
      %1763 = vmatprep.subr.mxu0 0.0
      %1764 = vmatpush1.msra.mxu0 0.0
      %1765 = vmatprep.subr.mxu0 0.0
      %1766 = vmatpush1.msra.mxu0 0.0
      %1767 = vmatprep.subr.mxu0 0.0
      %1768 = vmatpush1.msra.mxu0 0.0
      %1769 = vmatprep.subr.mxu0 0.0
      %1770 = vmatpush1.msra.mxu0 0.0
      %1771 = vmatprep.subr.mxu0 0.0
      %1772 = vmatpush1.msra.mxu0 0.0
      %1773 = vmatprep.subr.mxu0 0.0
      %1774 = vmatpush1.msra.mxu0 0.0
      %1775 = vmatprep.subr.mxu0 0.0
      %1776 = vmatpush1.msra.mxu0 0.0
      %1777 = vmatprep.subr.mxu0 0.0
      %1778 = vmatpush1.msra.mxu0 0.0
      %1779 = vmatprep.subr.mxu0 0.0
      %1780 = vmatpush1.msra.mxu0 0.0
      %1781 = vmatprep.subr.mxu0 0.0
      %1782 = vmatpush1.msra.mxu0 0.0
      %1783 = vmatprep.subr.mxu0 0.0
      %1784 = vmatpush1.msra.mxu0 0.0
      %1785 = vmatprep.subr.mxu0 0.0
      %1786 = vmatpush1.msra.mxu0 0.0
      %1787 = vmatprep.subr.mxu0 0.0
      %1788 = vmatpush1.msra.mxu0 0.0
      %1789 = vmatprep.subr.mxu0 0.0
      %1790 = vmatpush1.msra.mxu0 0.0
      %1791 = vmatprep.subr.mxu0 0.0
      %1792 = vmatpush1.msra.mxu0 0.0
      %1793 = vmatprep.subr.mxu0 0.0
      %1794 = vmatpush1.msra.mxu0 0.0
      %1795 = vmatprep.subr.mxu0 0.0
      %1796 = vmatpush1.msra.mxu0 0.0
      %1797 = vmatprep.subr.mxu0 0.0
      %1798 = vmatpush1.msra.mxu0 0.0
      %1799 = vmatprep.subr.mxu0 0.0
      %1800 = vmatpush1.msra.mxu0 0.0
      %1801 = vmatprep.subr.mxu0 0.0
      %1802 = vmatpush1.msra.mxu0 0.0
      %1803 = vmatprep.subr.mxu0 0.0
      %1804 = vmatpush1.msra.mxu0 0.0
      %1805 = vmatprep.subr.mxu0 0.0
      %1806 = vmatpush1.msra.mxu0 0.0
      %1807 = vmatprep.subr.mxu0 0.0
      %1808 = vmatpush1.msra.mxu0 0.0
      %1809 = vmatprep.subr.mxu0 0.0
      %1810 = vmatpush1.msra.mxu0 0.0
      %1811 = vmatprep.subr.mxu0 0.0
      %1812 = vmatpush1.msra.mxu0 0.0
      %1813 = vmatprep.mubr.f32.mxu0 0.0
      %1814 = vmatmul.mubr.f32.gmra.mrb[0].mxu0 %v1652
      %v1815 = vpop.f32.mrb[0].mxu0
      %v1816 = vadd.f32 0.0, %v1815
      %v1817 = vpop.f32.mrb[0].mxu0
      %v1818 = vadd.f32 0.0, %v1817
      %1819 = vdwg.mxu0
      %1820 = vmatprep.subr.mxu0 %v1638
      %1821 = vmatpush1.msra.mxu0 %v1637
      %1822 = vmatprep.subr.mxu0 %v1670
      %1823 = vmatpush1.msra.mxu0 %v1667
      %1824 = vmatprep.subr.mxu0 0.0
      %1825 = vmatpush1.msra.mxu0 0.0
      %1826 = vmatprep.subr.mxu0 0.0
      %1827 = vmatpush1.msra.mxu0 0.0
      %1828 = vmatprep.subr.mxu0 0.0
      %1829 = vmatpush1.msra.mxu0 0.0
      %1830 = vmatprep.subr.mxu0 0.0
      %1831 = vmatpush1.msra.mxu0 0.0
      %1832 = vmatprep.subr.mxu0 0.0
      %1833 = vmatpush1.msra.mxu0 0.0
      %1834 = vmatprep.subr.mxu0 0.0
      %1835 = vmatpush1.msra.mxu0 0.0
      %1836 = vmatprep.subr.mxu0 0.0
      %1837 = vmatpush1.msra.mxu0 0.0
      %1838 = vmatprep.subr.mxu0 0.0
      %1839 = vmatpush1.msra.mxu0 0.0
      %1840 = vmatprep.subr.mxu0 0.0
      %1841 = vmatpush1.msra.mxu0 0.0
      %1842 = vmatprep.subr.mxu0 0.0
      %1843 = vmatpush1.msra.mxu0 0.0
      %1844 = vmatprep.subr.mxu0 0.0
      %1845 = vmatpush1.msra.mxu0 0.0
      %1846 = vmatprep.subr.mxu0 0.0
      %1847 = vmatpush1.msra.mxu0 0.0
      %1848 = vmatprep.subr.mxu0 0.0
      %1849 = vmatpush1.msra.mxu0 0.0
      %1850 = vmatprep.subr.mxu0 0.0
      %1851 = vmatpush1.msra.mxu0 0.0
      %1852 = vmatprep.subr.mxu0 0.0
      %1853 = vmatpush1.msra.mxu0 0.0
      %1854 = vmatprep.subr.mxu0 0.0
      %1855 = vmatpush1.msra.mxu0 0.0
      %1856 = vmatprep.subr.mxu0 0.0
      %1857 = vmatpush1.msra.mxu0 0.0
      %1858 = vmatprep.subr.mxu0 0.0
      %1859 = vmatpush1.msra.mxu0 0.0
      %1860 = vmatprep.subr.mxu0 0.0
      %1861 = vmatpush1.msra.mxu0 0.0
      %1862 = vmatprep.subr.mxu0 0.0
      %1863 = vmatpush1.msra.mxu0 0.0
      %1864 = vmatprep.subr.mxu0 0.0
      %1865 = vmatpush1.msra.mxu0 0.0
      %1866 = vmatprep.subr.mxu0 0.0
      %1867 = vmatpush1.msra.mxu0 0.0
      %1868 = vmatprep.subr.mxu0 0.0
      %1869 = vmatpush1.msra.mxu0 0.0
      %1870 = vmatprep.subr.mxu0 0.0
      %1871 = vmatpush1.msra.mxu0 0.0
      %1872 = vmatprep.subr.mxu0 0.0
      %1873 = vmatpush1.msra.mxu0 0.0
      %1874 = vmatprep.subr.mxu0 0.0
      %1875 = vmatpush1.msra.mxu0 0.0
      %1876 = vmatprep.subr.mxu0 0.0
      %1877 = vmatpush1.msra.mxu0 0.0
      %1878 = vmatprep.subr.mxu0 0.0
      %1879 = vmatpush1.msra.mxu0 0.0
      %1880 = vmatprep.subr.mxu0 0.0
      %1881 = vmatpush1.msra.mxu0 0.0
      %1882 = vmatprep.subr.mxu0 0.0
      %1883 = vmatpush1.msra.mxu0 0.0
      %1884 = vmatprep.mubr.f32.mxu0 0.0
      %1885 = vmatmul.mubr.f32.gmra.mrb[0].mxu0 %v1652
      %v1886 = vpop.f32.mrb[0].mxu0
      %v1887 = vadd.f32 0.0, %v1886
      %v1888 = vpop.f32.mrb[0].mxu0
      %v1889 = vadd.f32 0.0, %v1888
      %1890 = vdwg.mxu0
      %1891 = vmatprep.subr.mxu0 %v1640
      %1892 = vmatpush1.msra.mxu0 %v1639
      %1893 = vmatprep.subr.mxu0 %v1676
      %1894 = vmatpush1.msra.mxu0 %v1673
      %1895 = vmatprep.subr.mxu0 0.0
      %1896 = vmatpush1.msra.mxu0 0.0
      %1897 = vmatprep.subr.mxu0 0.0
      %1898 = vmatpush1.msra.mxu0 0.0
      %1899 = vmatprep.subr.mxu0 0.0
      %1900 = vmatpush1.msra.mxu0 0.0
      %1901 = vmatprep.subr.mxu0 0.0
      %1902 = vmatpush1.msra.mxu0 0.0
      %1903 = vmatprep.subr.mxu0 0.0
      %1904 = vmatpush1.msra.mxu0 0.0
      %1905 = vmatprep.subr.mxu0 0.0
      %1906 = vmatpush1.msra.mxu0 0.0
      %1907 = vmatprep.subr.mxu0 0.0
      %1908 = vmatpush1.msra.mxu0 0.0
      %1909 = vmatprep.subr.mxu0 0.0
      %1910 = vmatpush1.msra.mxu0 0.0
      %1911 = vmatprep.subr.mxu0 0.0
      %1912 = vmatpush1.msra.mxu0 0.0
      %1913 = vmatprep.subr.mxu0 0.0
      %1914 = vmatpush1.msra.mxu0 0.0
      %1915 = vmatprep.subr.mxu0 0.0
      %1916 = vmatpush1.msra.mxu0 0.0
      %1917 = vmatprep.subr.mxu0 0.0
      %1918 = vmatpush1.msra.mxu0 0.0
      %1919 = vmatprep.subr.mxu0 0.0
      %1920 = vmatpush1.msra.mxu0 0.0
      %1921 = vmatprep.subr.mxu0 0.0
      %1922 = vmatpush1.msra.mxu0 0.0
      %1923 = vmatprep.subr.mxu0 0.0
      %1924 = vmatpush1.msra.mxu0 0.0
      %1925 = vmatprep.subr.mxu0 0.0
      %1926 = vmatpush1.msra.mxu0 0.0
      %1927 = vmatprep.subr.mxu0 0.0
      %1928 = vmatpush1.msra.mxu0 0.0
      %1929 = vmatprep.subr.mxu0 0.0
      %1930 = vmatpush1.msra.mxu0 0.0
      %1931 = vmatprep.subr.mxu0 0.0
      %1932 = vmatpush1.msra.mxu0 0.0
      %1933 = vmatprep.subr.mxu0 0.0
      %1934 = vmatpush1.msra.mxu0 0.0
      %1935 = vmatprep.subr.mxu0 0.0
      %1936 = vmatpush1.msra.mxu0 0.0
      %1937 = vmatprep.subr.mxu0 0.0
      %1938 = vmatpush1.msra.mxu0 0.0
      %1939 = vmatprep.subr.mxu0 0.0
      %1940 = vmatpush1.msra.mxu0 0.0
      %1941 = vmatprep.subr.mxu0 0.0
      %1942 = vmatpush1.msra.mxu0 0.0
      %1943 = vmatprep.subr.mxu0 0.0
      %1944 = vmatpush1.msra.mxu0 0.0
      %1945 = vmatprep.subr.mxu0 0.0
      %1946 = vmatpush1.msra.mxu0 0.0
      %1947 = vmatprep.subr.mxu0 0.0
      %1948 = vmatpush1.msra.mxu0 0.0
      %1949 = vmatprep.subr.mxu0 0.0
      %1950 = vmatpush1.msra.mxu0 0.0
      %1951 = vmatprep.subr.mxu0 0.0
      %1952 = vmatpush1.msra.mxu0 0.0
      %1953 = vmatprep.subr.mxu0 0.0
      %1954 = vmatpush1.msra.mxu0 0.0
      %1955 = vmatprep.mubr.f32.mxu0 0.0
      %1956 = vmatmul.mubr.f32.gmra.mrb[0].mxu0 %v1652
      %v1957 = vpop.f32.mrb[0].mxu0
      %v1958 = vadd.f32 0.0, %v1957
      %v1959 = vpop.f32.mrb[0].mxu0
      %v1960 = vadd.f32 0.0, %v1959
      %1961 = vdwg.mxu0
      %v1962 = vadd.f32 %v1322, %v1745
      %v1963 = vadd.f32 %v1324, %v1747
      %v1964 = vadd.f32 %v1393, %v1816
      %v1965 = vadd.f32 %v1395, %v1818
      %v1966 = vadd.f32 %v1464, %v1887
      %v1967 = vadd.f32 %v1466, %v1889
      %v1968 = vadd.f32 %v1535, %v1958
      %v1969 = vadd.f32 %v1537, %v1960
      %1970 = vrot.lane.b32.xlu0 %v423, 1
      %v1971 = vpop.permute.xlu0 %1970
      %1972 = vrot.lane.b32.xlu0 %v429, 1
      %v1973 = vpop.permute.xlu0 %1972
      %1974 = vrot.lane.b32.xlu0 %v425, 1
      %v1975 = vpop.permute.xlu0 %1974
      %1976 = vrot.lane.b32.xlu0 %v431, 1
      %v1977 = vpop.permute.xlu0 %1976
      %1978 = vrot.lane.b32.xlu0 %v509, 1
      %v1979 = vpop.permute.xlu0 %1978
      %1980 = vrot.lane.b32.xlu0 %v515, 1
      %v1981 = vpop.permute.xlu0 %1980
      %1982 = vrot.lane.b32.xlu0 %v511, 1
      %v1983 = vpop.permute.xlu0 %1982
      %1984 = vrot.lane.b32.xlu0 %v517, 1
      %v1985 = vpop.permute.xlu0 %1984
      %1986 = vrot.lane.b32.xlu0 %v595, 1
      %v1987 = vpop.permute.xlu0 %1986
      %1988 = vrot.lane.b32.xlu0 %v601, 1
      %v1989 = vpop.permute.xlu0 %1988
      %1990 = vrot.lane.b32.xlu0 %v597, 1
      %v1991 = vpop.permute.xlu0 %1990
      %1992 = vrot.lane.b32.xlu0 %v603, 1
      %v1993 = vpop.permute.xlu0 %1992
      %1994 = vrot.lane.b32.xlu0 %v681, 1
      %v1995 = vpop.permute.xlu0 %1994
      %1996 = vrot.lane.b32.xlu0 %v687, 1
      %v1997 = vpop.permute.xlu0 %1996
      %1998 = vrot.lane.b32.xlu0 %v683, 1
      %v1999 = vpop.permute.xlu0 %1998
      %2000 = vrot.lane.b32.xlu0 %v689, 1
      %v2001 = vpop.permute.xlu0 %2000
      %vm2002 = vcmp.lt.s32.totalorder %v724, 1
      %v2003 = vsel %vm2002, %v1995, %v1999
      %v2004 = vsel %vm2002, %v1997, %v2001
      %v2005 = vsel %vm2002, %v1991, %v1995
      %v2006 = vsel %vm2002, %v1993, %v1997
      %v2007 = vsel %vm2002, %v1987, %v1991
      %v2008 = vsel %vm2002, %v1989, %v1993
      %v2009 = vsel %vm2002, %v1983, %v1987
      %v2010 = vsel %vm2002, %v1985, %v1989
      %v2011 = vsel %vm2002, %v1979, %v1983
      %v2012 = vsel %vm2002, %v1981, %v1985
      %v2013 = vsel %vm2002, %v1975, %v1979
      %v2014 = vsel %vm2002, %v1977, %v1981
      %v2015 = vsel %vm2002, %v1971, %v1975
      %v2016 = vsel %vm2002, %v1973, %v1977
      %v2017 = vsel %vm2002, %v1999, %v1971
      %v2018 = vsel %vm2002, %v2001, %v1973
      %s2019 = scalar_lea.vmem %s2, 3
      %v2020 = vld [vmem:[%s2019] ss:$8 sm:$0xf]
      %v2021 = vld [vmem:[%s2019] ss:$8 sm:$0xf0]
      %v2022 = vor.u32 %v2020, %v2021
      %v2024 = vlaneseq
      %v2025 = vshrl.u32 %v2024, 7
      %v2026 = vsub.s32 0, %v2025
      %v2027 = vrot.slane %v2022, %v2026
      %v2028 = vlaneseq
      %v2029 = vshrl.u32 %v2028, 7
      %v2030 = vsub.s32 1, %v2029
      %v2031 = vrot.slane %v2022, %v2030
      %v2032 = vlaneseq
      %v2033 = vshrl.u32 %v2032, 7
      %v2034 = vsub.s32 2, %v2033
      %v2035 = vrot.slane %v2022, %v2034
      %v2036 = vlaneseq
      %v2037 = vshrl.u32 %v2036, 7
      %v2038 = vsub.s32 3, %v2037
      %v2039 = vrot.slane %v2022, %v2038
      %v2040 = vlaneseq
      %v2041 = vshrl.u32 %v2040, 7
      %v2042 = vsub.s32 4, %v2041
      %v2043 = vrot.slane %v2022, %v2042
      %v2044 = vlaneseq
      %v2045 = vshrl.u32 %v2044, 7
      %v2046 = vsub.s32 5, %v2045
      %v2047 = vrot.slane %v2022, %v2046
      %v2048 = vlaneseq
      %v2049 = vshrl.u32 %v2048, 7
      %v2050 = vsub.s32 6, %v2049
      %v2051 = vrot.slane %v2022, %v2050
      %v2052 = vlaneseq
      %v2053 = vshrl.u32 %v2052, 7
      %v2054 = vsub.s32 7, %v2053
      %v2055 = vrot.slane %v2022, %v2054
      %v2064 = vmul.f32 %v2017, %v2027
      %v2065 = vmul.f32 %v2015, %v2031
      %v2066 = vmul.f32 %v2013, %v2035
      %v2067 = vmul.f32 %v2011, %v2039
      %v2068 = vmul.f32 %v2009, %v2043
      %v2069 = vmul.f32 %v2007, %v2047
      %v2070 = vmul.f32 %v2005, %v2051
      %v2071 = vmul.f32 %v2003, %v2055
      %v2072 = vmul.f32 %v2018, %v2027
      %v2073 = vmul.f32 %v2016, %v2031
      %v2074 = vmul.f32 %v2014, %v2035
      %v2075 = vmul.f32 %v2012, %v2039
      %v2076 = vmul.f32 %v2010, %v2043
      %v2077 = vmul.f32 %v2008, %v2047
      %v2078 = vmul.f32 %v2006, %v2051
      %v2079 = vmul.f32 %v2004, %v2055
      %s2080 = scalar_lea.vmem %s3, 24
      %v2081 = vld [vmem:[%s2080] sm:$0xff]
      %v2083 = vsel %vm915, %v2081, 0
      %v2086 = vsel %vm919, %v2072, 0
      %v2089 = vsel %vm919, %v2073, 0
      %v2092 = vsel %vm919, %v2074, 0
      %v2095 = vsel %vm919, %v2075, 0
      %v2098 = vsel %vm919, %v2076, 0
      %v2101 = vsel %vm919, %v2077, 0
      %v2104 = vsel %vm919, %v2078, 0
      %v2107 = vsel %vm919, %v2079, 0
      %2109 = vmatprep.subr.mxu0 %v2065
      %2110 = vmatpush1.msra.mxu0 %v2064
      %2111 = vmatprep.subr.mxu0 %v2089
      %2112 = vmatpush1.msra.mxu0 %v2086
      %2113 = vmatprep.subr.mxu0 0.0
      %2114 = vmatpush1.msra.mxu0 0.0
      %2115 = vmatprep.subr.mxu0 0.0
      %2116 = vmatpush1.msra.mxu0 0.0
      %2117 = vmatprep.subr.mxu0 0.0
      %2118 = vmatpush1.msra.mxu0 0.0
      %2119 = vmatprep.subr.mxu0 0.0
      %2120 = vmatpush1.msra.mxu0 0.0
      %2121 = vmatprep.subr.mxu0 0.0
      %2122 = vmatpush1.msra.mxu0 0.0
      %2123 = vmatprep.subr.mxu0 0.0
      %2124 = vmatpush1.msra.mxu0 0.0
      %2125 = vmatprep.subr.mxu0 0.0
      %2126 = vmatpush1.msra.mxu0 0.0
      %2127 = vmatprep.subr.mxu0 0.0
      %2128 = vmatpush1.msra.mxu0 0.0
      %2129 = vmatprep.subr.mxu0 0.0
      %2130 = vmatpush1.msra.mxu0 0.0
      %2131 = vmatprep.subr.mxu0 0.0
      %2132 = vmatpush1.msra.mxu0 0.0
      %2133 = vmatprep.subr.mxu0 0.0
      %2134 = vmatpush1.msra.mxu0 0.0
      %2135 = vmatprep.subr.mxu0 0.0
      %2136 = vmatpush1.msra.mxu0 0.0
      %2137 = vmatprep.subr.mxu0 0.0
      %2138 = vmatpush1.msra.mxu0 0.0
      %2139 = vmatprep.subr.mxu0 0.0
      %2140 = vmatpush1.msra.mxu0 0.0
      %2141 = vmatprep.subr.mxu0 0.0
      %2142 = vmatpush1.msra.mxu0 0.0
      %2143 = vmatprep.subr.mxu0 0.0
      %2144 = vmatpush1.msra.mxu0 0.0
      %2145 = vmatprep.subr.mxu0 0.0
      %2146 = vmatpush1.msra.mxu0 0.0
      %2147 = vmatprep.subr.mxu0 0.0
      %2148 = vmatpush1.msra.mxu0 0.0
      %2149 = vmatprep.subr.mxu0 0.0
      %2150 = vmatpush1.msra.mxu0 0.0
      %2151 = vmatprep.subr.mxu0 0.0
      %2152 = vmatpush1.msra.mxu0 0.0
      %2153 = vmatprep.subr.mxu0 0.0
      %2154 = vmatpush1.msra.mxu0 0.0
      %2155 = vmatprep.subr.mxu0 0.0
      %2156 = vmatpush1.msra.mxu0 0.0
      %2157 = vmatprep.subr.mxu0 0.0
      %2158 = vmatpush1.msra.mxu0 0.0
      %2159 = vmatprep.subr.mxu0 0.0
      %2160 = vmatpush1.msra.mxu0 0.0
      %2161 = vmatprep.subr.mxu0 0.0
      %2162 = vmatpush1.msra.mxu0 0.0
      %2163 = vmatprep.subr.mxu0 0.0
      %2164 = vmatpush1.msra.mxu0 0.0
      %2165 = vmatprep.subr.mxu0 0.0
      %2166 = vmatpush1.msra.mxu0 0.0
      %2167 = vmatprep.subr.mxu0 0.0
      %2168 = vmatpush1.msra.mxu0 0.0
      %2169 = vmatprep.subr.mxu0 0.0
      %2170 = vmatpush1.msra.mxu0 0.0
      %2171 = vmatprep.subr.mxu0 0.0
      %2172 = vmatpush1.msra.mxu0 0.0
      %2173 = vmatprep.mubr.f32.mxu0 0.0
      %2174 = vmatmul.mubr.f32.gmra.mrb[0].mxu0 %v2083
      %v2175 = vpop.f32.mrb[0].mxu0
      %v2176 = vadd.f32 0.0, %v2175
      %v2177 = vpop.f32.mrb[0].mxu0
      %v2178 = vadd.f32 0.0, %v2177
      %2179 = vdwg.mxu0
      %2180 = vmatprep.subr.mxu0 %v2067
      %2181 = vmatpush1.msra.mxu0 %v2066
      %2182 = vmatprep.subr.mxu0 %v2095
      %2183 = vmatpush1.msra.mxu0 %v2092
      %2184 = vmatprep.subr.mxu0 0.0
      %2185 = vmatpush1.msra.mxu0 0.0
      %2186 = vmatprep.subr.mxu0 0.0
      %2187 = vmatpush1.msra.mxu0 0.0
      %2188 = vmatprep.subr.mxu0 0.0
      %2189 = vmatpush1.msra.mxu0 0.0
      %2190 = vmatprep.subr.mxu0 0.0
      %2191 = vmatpush1.msra.mxu0 0.0
      %2192 = vmatprep.subr.mxu0 0.0
      %2193 = vmatpush1.msra.mxu0 0.0
      %2194 = vmatprep.subr.mxu0 0.0
      %2195 = vmatpush1.msra.mxu0 0.0
      %2196 = vmatprep.subr.mxu0 0.0
      %2197 = vmatpush1.msra.mxu0 0.0
      %2198 = vmatprep.subr.mxu0 0.0
      %2199 = vmatpush1.msra.mxu0 0.0
      %2200 = vmatprep.subr.mxu0 0.0
      %2201 = vmatpush1.msra.mxu0 0.0
      %2202 = vmatprep.subr.mxu0 0.0
      %2203 = vmatpush1.msra.mxu0 0.0
      %2204 = vmatprep.subr.mxu0 0.0
      %2205 = vmatpush1.msra.mxu0 0.0
      %2206 = vmatprep.subr.mxu0 0.0
      %2207 = vmatpush1.msra.mxu0 0.0
      %2208 = vmatprep.subr.mxu0 0.0
      %2209 = vmatpush1.msra.mxu0 0.0
      %2210 = vmatprep.subr.mxu0 0.0
      %2211 = vmatpush1.msra.mxu0 0.0
      %2212 = vmatprep.subr.mxu0 0.0
      %2213 = vmatpush1.msra.mxu0 0.0
      %2214 = vmatprep.subr.mxu0 0.0
      %2215 = vmatpush1.msra.mxu0 0.0
      %2216 = vmatprep.subr.mxu0 0.0
      %2217 = vmatpush1.msra.mxu0 0.0
      %2218 = vmatprep.subr.mxu0 0.0
      %2219 = vmatpush1.msra.mxu0 0.0
      %2220 = vmatprep.subr.mxu0 0.0
      %2221 = vmatpush1.msra.mxu0 0.0
      %2222 = vmatprep.subr.mxu0 0.0
      %2223 = vmatpush1.msra.mxu0 0.0
      %2224 = vmatprep.subr.mxu0 0.0
      %2225 = vmatpush1.msra.mxu0 0.0
      %2226 = vmatprep.subr.mxu0 0.0
      %2227 = vmatpush1.msra.mxu0 0.0
      %2228 = vmatprep.subr.mxu0 0.0
      %2229 = vmatpush1.msra.mxu0 0.0
      %2230 = vmatprep.subr.mxu0 0.0
      %2231 = vmatpush1.msra.mxu0 0.0
      %2232 = vmatprep.subr.mxu0 0.0
      %2233 = vmatpush1.msra.mxu0 0.0
      %2234 = vmatprep.subr.mxu0 0.0
      %2235 = vmatpush1.msra.mxu0 0.0
      %2236 = vmatprep.subr.mxu0 0.0
      %2237 = vmatpush1.msra.mxu0 0.0
      %2238 = vmatprep.subr.mxu0 0.0
      %2239 = vmatpush1.msra.mxu0 0.0
      %2240 = vmatprep.subr.mxu0 0.0
      %2241 = vmatpush1.msra.mxu0 0.0
      %2242 = vmatprep.subr.mxu0 0.0
      %2243 = vmatpush1.msra.mxu0 0.0
      %2244 = vmatprep.mubr.f32.mxu0 0.0
      %2245 = vmatmul.mubr.f32.gmra.mrb[0].mxu0 %v2083
      %v2246 = vpop.f32.mrb[0].mxu0
      %v2247 = vadd.f32 0.0, %v2246
      %v2248 = vpop.f32.mrb[0].mxu0
      %v2249 = vadd.f32 0.0, %v2248
      %2250 = vdwg.mxu0
      %2251 = vmatprep.subr.mxu0 %v2069
      %2252 = vmatpush1.msra.mxu0 %v2068
      %2253 = vmatprep.subr.mxu0 %v2101
      %2254 = vmatpush1.msra.mxu0 %v2098
      %2255 = vmatprep.subr.mxu0 0.0
      %2256 = vmatpush1.msra.mxu0 0.0
      %2257 = vmatprep.subr.mxu0 0.0
      %2258 = vmatpush1.msra.mxu0 0.0
      %2259 = vmatprep.subr.mxu0 0.0
      %2260 = vmatpush1.msra.mxu0 0.0
      %2261 = vmatprep.subr.mxu0 0.0
      %2262 = vmatpush1.msra.mxu0 0.0
      %2263 = vmatprep.subr.mxu0 0.0
      %2264 = vmatpush1.msra.mxu0 0.0
      %2265 = vmatprep.subr.mxu0 0.0
      %2266 = vmatpush1.msra.mxu0 0.0
      %2267 = vmatprep.subr.mxu0 0.0
      %2268 = vmatpush1.msra.mxu0 0.0
      %2269 = vmatprep.subr.mxu0 0.0
      %2270 = vmatpush1.msra.mxu0 0.0
      %2271 = vmatprep.subr.mxu0 0.0
      %2272 = vmatpush1.msra.mxu0 0.0
      %2273 = vmatprep.subr.mxu0 0.0
      %2274 = vmatpush1.msra.mxu0 0.0
      %2275 = vmatprep.subr.mxu0 0.0
      %2276 = vmatpush1.msra.mxu0 0.0
      %2277 = vmatprep.subr.mxu0 0.0
      %2278 = vmatpush1.msra.mxu0 0.0
      %2279 = vmatprep.subr.mxu0 0.0
      %2280 = vmatpush1.msra.mxu0 0.0
      %2281 = vmatprep.subr.mxu0 0.0
      %2282 = vmatpush1.msra.mxu0 0.0
      %2283 = vmatprep.subr.mxu0 0.0
      %2284 = vmatpush1.msra.mxu0 0.0
      %2285 = vmatprep.subr.mxu0 0.0
      %2286 = vmatpush1.msra.mxu0 0.0
      %2287 = vmatprep.subr.mxu0 0.0
      %2288 = vmatpush1.msra.mxu0 0.0
      %2289 = vmatprep.subr.mxu0 0.0
      %2290 = vmatpush1.msra.mxu0 0.0
      %2291 = vmatprep.subr.mxu0 0.0
      %2292 = vmatpush1.msra.mxu0 0.0
      %2293 = vmatprep.subr.mxu0 0.0
      %2294 = vmatpush1.msra.mxu0 0.0
      %2295 = vmatprep.subr.mxu0 0.0
      %2296 = vmatpush1.msra.mxu0 0.0
      %2297 = vmatprep.subr.mxu0 0.0
      %2298 = vmatpush1.msra.mxu0 0.0
      %2299 = vmatprep.subr.mxu0 0.0
      %2300 = vmatpush1.msra.mxu0 0.0
      %2301 = vmatprep.subr.mxu0 0.0
      %2302 = vmatpush1.msra.mxu0 0.0
      %2303 = vmatprep.subr.mxu0 0.0
      %2304 = vmatpush1.msra.mxu0 0.0
      %2305 = vmatprep.subr.mxu0 0.0
      %2306 = vmatpush1.msra.mxu0 0.0
      %2307 = vmatprep.subr.mxu0 0.0
      %2308 = vmatpush1.msra.mxu0 0.0
      %2309 = vmatprep.subr.mxu0 0.0
      %2310 = vmatpush1.msra.mxu0 0.0
      %2311 = vmatprep.subr.mxu0 0.0
      %2312 = vmatpush1.msra.mxu0 0.0
      %2313 = vmatprep.subr.mxu0 0.0
      %2314 = vmatpush1.msra.mxu0 0.0
      %2315 = vmatprep.mubr.f32.mxu0 0.0
      %2316 = vmatmul.mubr.f32.gmra.mrb[0].mxu0 %v2083
      %v2317 = vpop.f32.mrb[0].mxu0
      %v2318 = vadd.f32 0.0, %v2317
      %v2319 = vpop.f32.mrb[0].mxu0
      %v2320 = vadd.f32 0.0, %v2319
      %2321 = vdwg.mxu0
      %2322 = vmatprep.subr.mxu0 %v2071
      %2323 = vmatpush1.msra.mxu0 %v2070
      %2324 = vmatprep.subr.mxu0 %v2107
      %2325 = vmatpush1.msra.mxu0 %v2104
      %2326 = vmatprep.subr.mxu0 0.0
      %2327 = vmatpush1.msra.mxu0 0.0
      %2328 = vmatprep.subr.mxu0 0.0
      %2329 = vmatpush1.msra.mxu0 0.0
      %2330 = vmatprep.subr.mxu0 0.0
      %2331 = vmatpush1.msra.mxu0 0.0
      %2332 = vmatprep.subr.mxu0 0.0
      %2333 = vmatpush1.msra.mxu0 0.0
      %2334 = vmatprep.subr.mxu0 0.0
      %2335 = vmatpush1.msra.mxu0 0.0
      %2336 = vmatprep.subr.mxu0 0.0
      %2337 = vmatpush1.msra.mxu0 0.0
      %2338 = vmatprep.subr.mxu0 0.0
      %2339 = vmatpush1.msra.mxu0 0.0
      %2340 = vmatprep.subr.mxu0 0.0
      %2341 = vmatpush1.msra.mxu0 0.0
      %2342 = vmatprep.subr.mxu0 0.0
      %2343 = vmatpush1.msra.mxu0 0.0
      %2344 = vmatprep.subr.mxu0 0.0
      %2345 = vmatpush1.msra.mxu0 0.0
      %2346 = vmatprep.subr.mxu0 0.0
      %2347 = vmatpush1.msra.mxu0 0.0
      %2348 = vmatprep.subr.mxu0 0.0
      %2349 = vmatpush1.msra.mxu0 0.0
      %2350 = vmatprep.subr.mxu0 0.0
      %2351 = vmatpush1.msra.mxu0 0.0
      %2352 = vmatprep.subr.mxu0 0.0
      %2353 = vmatpush1.msra.mxu0 0.0
      %2354 = vmatprep.subr.mxu0 0.0
      %2355 = vmatpush1.msra.mxu0 0.0
      %2356 = vmatprep.subr.mxu0 0.0
      %2357 = vmatpush1.msra.mxu0 0.0
      %2358 = vmatprep.subr.mxu0 0.0
      %2359 = vmatpush1.msra.mxu0 0.0
      %2360 = vmatprep.subr.mxu0 0.0
      %2361 = vmatpush1.msra.mxu0 0.0
      %2362 = vmatprep.subr.mxu0 0.0
      %2363 = vmatpush1.msra.mxu0 0.0
      %2364 = vmatprep.subr.mxu0 0.0
      %2365 = vmatpush1.msra.mxu0 0.0
      %2366 = vmatprep.subr.mxu0 0.0
      %2367 = vmatpush1.msra.mxu0 0.0
      %2368 = vmatprep.subr.mxu0 0.0
      %2369 = vmatpush1.msra.mxu0 0.0
      %2370 = vmatprep.subr.mxu0 0.0
      %2371 = vmatpush1.msra.mxu0 0.0
      %2372 = vmatprep.subr.mxu0 0.0
      %2373 = vmatpush1.msra.mxu0 0.0
      %2374 = vmatprep.subr.mxu0 0.0
      %2375 = vmatpush1.msra.mxu0 0.0
      %2376 = vmatprep.subr.mxu0 0.0
      %2377 = vmatpush1.msra.mxu0 0.0
      %2378 = vmatprep.subr.mxu0 0.0
      %2379 = vmatpush1.msra.mxu0 0.0
      %2380 = vmatprep.subr.mxu0 0.0
      %2381 = vmatpush1.msra.mxu0 0.0
      %2382 = vmatprep.subr.mxu0 0.0
      %2383 = vmatpush1.msra.mxu0 0.0
      %2384 = vmatprep.subr.mxu0 0.0
      %2385 = vmatpush1.msra.mxu0 0.0
      %2386 = vmatprep.mubr.f32.mxu0 0.0
      %2387 = vmatmul.mubr.f32.gmra.mrb[0].mxu0 %v2083
      %v2388 = vpop.f32.mrb[0].mxu0
      %v2389 = vadd.f32 0.0, %v2388
      %v2390 = vpop.f32.mrb[0].mxu0
      %v2391 = vadd.f32 0.0, %v2390
      %2392 = vdwg.mxu0
      %v2393 = vadd.f32 %v1962, %v2176
      %v2394 = vadd.f32 %v1963, %v2178
      %v2395 = vadd.f32 %v1964, %v2247
      %v2396 = vadd.f32 %v1965, %v2249
      %v2397 = vadd.f32 %v1966, %v2318
      %v2398 = vadd.f32 %v1967, %v2320
      %v2399 = vadd.f32 %v1968, %v2389
      %v2400 = vadd.f32 %v1969, %v2391
      %s2401 = scalar_lea.vmem %s3, 32
      %v2402 = vld [vmem:[%s2401] sm:$0xff]
      %v2404 = vsel %vm915, %v2402, 0
      %v2407 = vsel %vm919, %v429, 0
      %v2410 = vsel %vm919, %v431, 0
      %v2413 = vsel %vm919, %v515, 0
      %v2416 = vsel %vm919, %v517, 0
      %v2419 = vsel %vm919, %v601, 0
      %v2422 = vsel %vm919, %v603, 0
      %v2425 = vsel %vm919, %v687, 0
      %v2428 = vsel %vm919, %v689, 0
      %2430 = vmatprep.subr.mxu0 %v425
      %2431 = vmatpush1.msra.mxu0 %v423
      %2432 = vmatprep.subr.mxu0 %v2410
      %2433 = vmatpush1.msra.mxu0 %v2407
      %2434 = vmatprep.subr.mxu0 0.0
      %2435 = vmatpush1.msra.mxu0 0.0
      %2436 = vmatprep.subr.mxu0 0.0
      %2437 = vmatpush1.msra.mxu0 0.0
      %2438 = vmatprep.subr.mxu0 0.0
      %2439 = vmatpush1.msra.mxu0 0.0
      %2440 = vmatprep.subr.mxu0 0.0
      %2441 = vmatpush1.msra.mxu0 0.0
      %2442 = vmatprep.subr.mxu0 0.0
      %2443 = vmatpush1.msra.mxu0 0.0
      %2444 = vmatprep.subr.mxu0 0.0
      %2445 = vmatpush1.msra.mxu0 0.0
      %2446 = vmatprep.subr.mxu0 0.0
      %2447 = vmatpush1.msra.mxu0 0.0
      %2448 = vmatprep.subr.mxu0 0.0
      %2449 = vmatpush1.msra.mxu0 0.0
      %2450 = vmatprep.subr.mxu0 0.0
      %2451 = vmatpush1.msra.mxu0 0.0
      %2452 = vmatprep.subr.mxu0 0.0
      %2453 = vmatpush1.msra.mxu0 0.0
      %2454 = vmatprep.subr.mxu0 0.0
      %2455 = vmatpush1.msra.mxu0 0.0
      %2456 = vmatprep.subr.mxu0 0.0
      %2457 = vmatpush1.msra.mxu0 0.0
      %2458 = vmatprep.subr.mxu0 0.0
      %2459 = vmatpush1.msra.mxu0 0.0
      %2460 = vmatprep.subr.mxu0 0.0
      %2461 = vmatpush1.msra.mxu0 0.0
      %2462 = vmatprep.subr.mxu0 0.0
      %2463 = vmatpush1.msra.mxu0 0.0
      %2464 = vmatprep.subr.mxu0 0.0
      %2465 = vmatpush1.msra.mxu0 0.0
      %2466 = vmatprep.subr.mxu0 0.0
      %2467 = vmatpush1.msra.mxu0 0.0
      %2468 = vmatprep.subr.mxu0 0.0
      %2469 = vmatpush1.msra.mxu0 0.0
      %2470 = vmatprep.subr.mxu0 0.0
      %2471 = vmatpush1.msra.mxu0 0.0
      %2472 = vmatprep.subr.mxu0 0.0
      %2473 = vmatpush1.msra.mxu0 0.0
      %2474 = vmatprep.subr.mxu0 0.0
      %2475 = vmatpush1.msra.mxu0 0.0
      %2476 = vmatprep.subr.mxu0 0.0
      %2477 = vmatpush1.msra.mxu0 0.0
      %2478 = vmatprep.subr.mxu0 0.0
      %2479 = vmatpush1.msra.mxu0 0.0
      %2480 = vmatprep.subr.mxu0 0.0
      %2481 = vmatpush1.msra.mxu0 0.0
      %2482 = vmatprep.subr.mxu0 0.0
      %2483 = vmatpush1.msra.mxu0 0.0
      %2484 = vmatprep.subr.mxu0 0.0
      %2485 = vmatpush1.msra.mxu0 0.0
      %2486 = vmatprep.subr.mxu0 0.0
      %2487 = vmatpush1.msra.mxu0 0.0
      %2488 = vmatprep.subr.mxu0 0.0
      %2489 = vmatpush1.msra.mxu0 0.0
      %2490 = vmatprep.subr.mxu0 0.0
      %2491 = vmatpush1.msra.mxu0 0.0
      %2492 = vmatprep.subr.mxu0 0.0
      %2493 = vmatpush1.msra.mxu0 0.0
      %2494 = vmatprep.mubr.f32.mxu0 0.0
      %2495 = vmatmul.mubr.f32.gmra.mrb[0].mxu0 %v2404
      %v2496 = vpop.f32.mrb[0].mxu0
      %v2497 = vadd.f32 0.0, %v2496
      %v2498 = vpop.f32.mrb[0].mxu0
      %v2499 = vadd.f32 0.0, %v2498
      %2500 = vdwg.mxu0
      %2501 = vmatprep.subr.mxu0 %v511
      %2502 = vmatpush1.msra.mxu0 %v509
      %2503 = vmatprep.subr.mxu0 %v2416
      %2504 = vmatpush1.msra.mxu0 %v2413
      %2505 = vmatprep.subr.mxu0 0.0
      %2506 = vmatpush1.msra.mxu0 0.0
      %2507 = vmatprep.subr.mxu0 0.0
      %2508 = vmatpush1.msra.mxu0 0.0
      %2509 = vmatprep.subr.mxu0 0.0
      %2510 = vmatpush1.msra.mxu0 0.0
      %2511 = vmatprep.subr.mxu0 0.0
      %2512 = vmatpush1.msra.mxu0 0.0
      %2513 = vmatprep.subr.mxu0 0.0
      %2514 = vmatpush1.msra.mxu0 0.0
      %2515 = vmatprep.subr.mxu0 0.0
      %2516 = vmatpush1.msra.mxu0 0.0
      %2517 = vmatprep.subr.mxu0 0.0
      %2518 = vmatpush1.msra.mxu0 0.0
      %2519 = vmatprep.subr.mxu0 0.0
      %2520 = vmatpush1.msra.mxu0 0.0
      %2521 = vmatprep.subr.mxu0 0.0
      %2522 = vmatpush1.msra.mxu0 0.0
      %2523 = vmatprep.subr.mxu0 0.0
      %2524 = vmatpush1.msra.mxu0 0.0
      %2525 = vmatprep.subr.mxu0 0.0
      %2526 = vmatpush1.msra.mxu0 0.0
      %2527 = vmatprep.subr.mxu0 0.0
      %2528 = vmatpush1.msra.mxu0 0.0
      %2529 = vmatprep.subr.mxu0 0.0
      %2530 = vmatpush1.msra.mxu0 0.0
      %2531 = vmatprep.subr.mxu0 0.0
      %2532 = vmatpush1.msra.mxu0 0.0
      %2533 = vmatprep.subr.mxu0 0.0
      %2534 = vmatpush1.msra.mxu0 0.0
      %2535 = vmatprep.subr.mxu0 0.0
      %2536 = vmatpush1.msra.mxu0 0.0
      %2537 = vmatprep.subr.mxu0 0.0
      %2538 = vmatpush1.msra.mxu0 0.0
      %2539 = vmatprep.subr.mxu0 0.0
      %2540 = vmatpush1.msra.mxu0 0.0
      %2541 = vmatprep.subr.mxu0 0.0
      %2542 = vmatpush1.msra.mxu0 0.0
      %2543 = vmatprep.subr.mxu0 0.0
      %2544 = vmatpush1.msra.mxu0 0.0
      %2545 = vmatprep.subr.mxu0 0.0
      %2546 = vmatpush1.msra.mxu0 0.0
      %2547 = vmatprep.subr.mxu0 0.0
      %2548 = vmatpush1.msra.mxu0 0.0
      %2549 = vmatprep.subr.mxu0 0.0
      %2550 = vmatpush1.msra.mxu0 0.0
      %2551 = vmatprep.subr.mxu0 0.0
      %2552 = vmatpush1.msra.mxu0 0.0
      %2553 = vmatprep.subr.mxu0 0.0
      %2554 = vmatpush1.msra.mxu0 0.0
      %2555 = vmatprep.subr.mxu0 0.0
      %2556 = vmatpush1.msra.mxu0 0.0
      %2557 = vmatprep.subr.mxu0 0.0
      %2558 = vmatpush1.msra.mxu0 0.0
      %2559 = vmatprep.subr.mxu0 0.0
      %2560 = vmatpush1.msra.mxu0 0.0
      %2561 = vmatprep.subr.mxu0 0.0
      %2562 = vmatpush1.msra.mxu0 0.0
      %2563 = vmatprep.subr.mxu0 0.0
      %2564 = vmatpush1.msra.mxu0 0.0
      %2565 = vmatprep.mubr.f32.mxu0 0.0
      %2566 = vmatmul.mubr.f32.gmra.mrb[0].mxu0 %v2404
      %v2567 = vpop.f32.mrb[0].mxu0
      %v2568 = vadd.f32 0.0, %v2567
      %v2569 = vpop.f32.mrb[0].mxu0
      %v2570 = vadd.f32 0.0, %v2569
      %2571 = vdwg.mxu0
      %2572 = vmatprep.subr.mxu0 %v597
      %2573 = vmatpush1.msra.mxu0 %v595
      %2574 = vmatprep.subr.mxu0 %v2422
      %2575 = vmatpush1.msra.mxu0 %v2419
      %2576 = vmatprep.subr.mxu0 0.0
      %2577 = vmatpush1.msra.mxu0 0.0
      %2578 = vmatprep.subr.mxu0 0.0
      %2579 = vmatpush1.msra.mxu0 0.0
      %2580 = vmatprep.subr.mxu0 0.0
      %2581 = vmatpush1.msra.mxu0 0.0
      %2582 = vmatprep.subr.mxu0 0.0
      %2583 = vmatpush1.msra.mxu0 0.0
      %2584 = vmatprep.subr.mxu0 0.0
      %2585 = vmatpush1.msra.mxu0 0.0
      %2586 = vmatprep.subr.mxu0 0.0
      %2587 = vmatpush1.msra.mxu0 0.0
      %2588 = vmatprep.subr.mxu0 0.0
      %2589 = vmatpush1.msra.mxu0 0.0
      %2590 = vmatprep.subr.mxu0 0.0
      %2591 = vmatpush1.msra.mxu0 0.0
      %2592 = vmatprep.subr.mxu0 0.0
      %2593 = vmatpush1.msra.mxu0 0.0
      %2594 = vmatprep.subr.mxu0 0.0
      %2595 = vmatpush1.msra.mxu0 0.0
      %2596 = vmatprep.subr.mxu0 0.0
      %2597 = vmatpush1.msra.mxu0 0.0
      %2598 = vmatprep.subr.mxu0 0.0
      %2599 = vmatpush1.msra.mxu0 0.0
      %2600 = vmatprep.subr.mxu0 0.0
      %2601 = vmatpush1.msra.mxu0 0.0
      %2602 = vmatprep.subr.mxu0 0.0
      %2603 = vmatpush1.msra.mxu0 0.0
      %2604 = vmatprep.subr.mxu0 0.0
      %2605 = vmatpush1.msra.mxu0 0.0
      %2606 = vmatprep.subr.mxu0 0.0
      %2607 = vmatpush1.msra.mxu0 0.0
      %2608 = vmatprep.subr.mxu0 0.0
      %2609 = vmatpush1.msra.mxu0 0.0
      %2610 = vmatprep.subr.mxu0 0.0
      %2611 = vmatpush1.msra.mxu0 0.0
      %2612 = vmatprep.subr.mxu0 0.0
      %2613 = vmatpush1.msra.mxu0 0.0
      %2614 = vmatprep.subr.mxu0 0.0
      %2615 = vmatpush1.msra.mxu0 0.0
      %2616 = vmatprep.subr.mxu0 0.0
      %2617 = vmatpush1.msra.mxu0 0.0
      %2618 = vmatprep.subr.mxu0 0.0
      %2619 = vmatpush1.msra.mxu0 0.0
      %2620 = vmatprep.subr.mxu0 0.0
      %2621 = vmatpush1.msra.mxu0 0.0
      %2622 = vmatprep.subr.mxu0 0.0
      %2623 = vmatpush1.msra.mxu0 0.0
      %2624 = vmatprep.subr.mxu0 0.0
      %2625 = vmatpush1.msra.mxu0 0.0
      %2626 = vmatprep.subr.mxu0 0.0
      %2627 = vmatpush1.msra.mxu0 0.0
      %2628 = vmatprep.subr.mxu0 0.0
      %2629 = vmatpush1.msra.mxu0 0.0
      %2630 = vmatprep.subr.mxu0 0.0
      %2631 = vmatpush1.msra.mxu0 0.0
      %2632 = vmatprep.subr.mxu0 0.0
      %2633 = vmatpush1.msra.mxu0 0.0
      %2634 = vmatprep.subr.mxu0 0.0
      %2635 = vmatpush1.msra.mxu0 0.0
      %2636 = vmatprep.mubr.f32.mxu0 0.0
      %2637 = vmatmul.mubr.f32.gmra.mrb[0].mxu0 %v2404
      %v2638 = vpop.f32.mrb[0].mxu0
      %v2639 = vadd.f32 0.0, %v2638
      %v2640 = vpop.f32.mrb[0].mxu0
      %v2641 = vadd.f32 0.0, %v2640
      %2642 = vdwg.mxu0
      %2643 = vmatprep.subr.mxu0 %v683
      %2644 = vmatpush1.msra.mxu0 %v681
      %2645 = vmatprep.subr.mxu0 %v2428
      %2646 = vmatpush1.msra.mxu0 %v2425
      %2647 = vmatprep.subr.mxu0 0.0
      %2648 = vmatpush1.msra.mxu0 0.0
      %2649 = vmatprep.subr.mxu0 0.0
      %2650 = vmatpush1.msra.mxu0 0.0
      %2651 = vmatprep.subr.mxu0 0.0
      %2652 = vmatpush1.msra.mxu0 0.0
      %2653 = vmatprep.subr.mxu0 0.0
      %2654 = vmatpush1.msra.mxu0 0.0
      %2655 = vmatprep.subr.mxu0 0.0
      %2656 = vmatpush1.msra.mxu0 0.0
      %2657 = vmatprep.subr.mxu0 0.0
      %2658 = vmatpush1.msra.mxu0 0.0
      %2659 = vmatprep.subr.mxu0 0.0
      %2660 = vmatpush1.msra.mxu0 0.0
      %2661 = vmatprep.subr.mxu0 0.0
      %2662 = vmatpush1.msra.mxu0 0.0
      %2663 = vmatprep.subr.mxu0 0.0
      %2664 = vmatpush1.msra.mxu0 0.0
      %2665 = vmatprep.subr.mxu0 0.0
      %2666 = vmatpush1.msra.mxu0 0.0
      %2667 = vmatprep.subr.mxu0 0.0
      %2668 = vmatpush1.msra.mxu0 0.0
      %2669 = vmatprep.subr.mxu0 0.0
      %2670 = vmatpush1.msra.mxu0 0.0
      %2671 = vmatprep.subr.mxu0 0.0
      %2672 = vmatpush1.msra.mxu0 0.0
      %2673 = vmatprep.subr.mxu0 0.0
      %2674 = vmatpush1.msra.mxu0 0.0
      %2675 = vmatprep.subr.mxu0 0.0
      %2676 = vmatpush1.msra.mxu0 0.0
      %2677 = vmatprep.subr.mxu0 0.0
      %2678 = vmatpush1.msra.mxu0 0.0
      %2679 = vmatprep.subr.mxu0 0.0
      %2680 = vmatpush1.msra.mxu0 0.0
      %2681 = vmatprep.subr.mxu0 0.0
      %2682 = vmatpush1.msra.mxu0 0.0
      %2683 = vmatprep.subr.mxu0 0.0
      %2684 = vmatpush1.msra.mxu0 0.0
      %2685 = vmatprep.subr.mxu0 0.0
      %2686 = vmatpush1.msra.mxu0 0.0
      %2687 = vmatprep.subr.mxu0 0.0
      %2688 = vmatpush1.msra.mxu0 0.0
      %2689 = vmatprep.subr.mxu0 0.0
      %2690 = vmatpush1.msra.mxu0 0.0
      %2691 = vmatprep.subr.mxu0 0.0
      %2692 = vmatpush1.msra.mxu0 0.0
      %2693 = vmatprep.subr.mxu0 0.0
      %2694 = vmatpush1.msra.mxu0 0.0
      %2695 = vmatprep.subr.mxu0 0.0
      %2696 = vmatpush1.msra.mxu0 0.0
      %2697 = vmatprep.subr.mxu0 0.0
      %2698 = vmatpush1.msra.mxu0 0.0
      %2699 = vmatprep.subr.mxu0 0.0
      %2700 = vmatpush1.msra.mxu0 0.0
      %2701 = vmatprep.subr.mxu0 0.0
      %2702 = vmatpush1.msra.mxu0 0.0
      %2703 = vmatprep.subr.mxu0 0.0
      %2704 = vmatpush1.msra.mxu0 0.0
      %2705 = vmatprep.subr.mxu0 0.0
      %2706 = vmatpush1.msra.mxu0 0.0
      %2707 = vmatprep.mubr.f32.mxu0 0.0
      %2708 = vmatmul.mubr.f32.gmra.mrb[0].mxu0 %v2404
      %v2709 = vpop.f32.mrb[0].mxu0
      %v2710 = vadd.f32 0.0, %v2709
      %v2711 = vpop.f32.mrb[0].mxu0
      %v2712 = vadd.f32 0.0, %v2711
      %2713 = vdwg.mxu0
      %v2714 = vadd.f32 %v2393, %v2497
      %v2715 = vadd.f32 %v2394, %v2499
      %v2716 = vadd.f32 %v2395, %v2568
      %v2717 = vadd.f32 %v2396, %v2570
      %v2718 = vadd.f32 %v2397, %v2639
      %v2719 = vadd.f32 %v2398, %v2641
      %v2720 = vadd.f32 %v2399, %v2710
      %v2721 = vadd.f32 %v2400, %v2712
      %2722 = vrot.lane.b32.xlu0 %v423, 127
      %v2723 = vpop.permute.xlu0 %2722
      %2724 = vrot.lane.b32.xlu0 %v429, 127
      %v2725 = vpop.permute.xlu0 %2724
      %2726 = vrot.lane.b32.xlu0 %v425, 127
      %v2727 = vpop.permute.xlu0 %2726
      %2728 = vrot.lane.b32.xlu0 %v431, 127
      %v2729 = vpop.permute.xlu0 %2728
      %2730 = vrot.lane.b32.xlu0 %v509, 127
      %v2731 = vpop.permute.xlu0 %2730
      %2732 = vrot.lane.b32.xlu0 %v515, 127
      %v2733 = vpop.permute.xlu0 %2732
      %2734 = vrot.lane.b32.xlu0 %v511, 127
      %v2735 = vpop.permute.xlu0 %2734
      %2736 = vrot.lane.b32.xlu0 %v517, 127
      %v2737 = vpop.permute.xlu0 %2736
      %2738 = vrot.lane.b32.xlu0 %v595, 127
      %v2739 = vpop.permute.xlu0 %2738
      %2740 = vrot.lane.b32.xlu0 %v601, 127
      %v2741 = vpop.permute.xlu0 %2740
      %2742 = vrot.lane.b32.xlu0 %v597, 127
      %v2743 = vpop.permute.xlu0 %2742
      %2744 = vrot.lane.b32.xlu0 %v603, 127
      %v2745 = vpop.permute.xlu0 %2744
      %2746 = vrot.lane.b32.xlu0 %v681, 127
      %v2747 = vpop.permute.xlu0 %2746
      %2748 = vrot.lane.b32.xlu0 %v687, 127
      %v2749 = vpop.permute.xlu0 %2748
      %2750 = vrot.lane.b32.xlu0 %v683, 127
      %v2751 = vpop.permute.xlu0 %2750
      %2752 = vrot.lane.b32.xlu0 %v689, 127
      %v2753 = vpop.permute.xlu0 %2752
      %vm2754 = vcmp.lt.s32.totalorder %v724, 127
      %v2755 = vsel %vm2754, %v2747, %v2751
      %v2756 = vsel %vm2754, %v2749, %v2753
      %v2757 = vsel %vm2754, %v2743, %v2747
      %v2758 = vsel %vm2754, %v2745, %v2749
      %v2759 = vsel %vm2754, %v2739, %v2743
      %v2760 = vsel %vm2754, %v2741, %v2745
      %v2761 = vsel %vm2754, %v2735, %v2739
      %v2762 = vsel %vm2754, %v2737, %v2741
      %v2763 = vsel %vm2754, %v2731, %v2735
      %v2764 = vsel %vm2754, %v2733, %v2737
      %v2765 = vsel %vm2754, %v2727, %v2731
      %v2766 = vsel %vm2754, %v2729, %v2733
      %v2767 = vsel %vm2754, %v2723, %v2727
      %v2768 = vsel %vm2754, %v2725, %v2729
      %v2769 = vsel %vm2754, %v2751, %v2723
      %v2770 = vsel %vm2754, %v2753, %v2725
      %s2771 = scalar_lea.vmem %s2, 5
      %v2772 = vld [vmem:[%s2771] ss:$8 sm:$0xf]
      %v2773 = vld [vmem:[%s2771] ss:$8 sm:$0xf0]
      %v2774 = vor.u32 %v2772, %v2773
      %v2776 = vlaneseq
      %v2777 = vshrl.u32 %v2776, 7
      %v2778 = vsub.s32 0, %v2777
      %v2779 = vrot.slane %v2774, %v2778
      %v2780 = vlaneseq
      %v2781 = vshrl.u32 %v2780, 7
      %v2782 = vsub.s32 1, %v2781
      %v2783 = vrot.slane %v2774, %v2782
      %v2784 = vlaneseq
      %v2785 = vshrl.u32 %v2784, 7
      %v2786 = vsub.s32 2, %v2785
      %v2787 = vrot.slane %v2774, %v2786
      %v2788 = vlaneseq
      %v2789 = vshrl.u32 %v2788, 7
      %v2790 = vsub.s32 3, %v2789
      %v2791 = vrot.slane %v2774, %v2790
      %v2792 = vlaneseq
      %v2793 = vshrl.u32 %v2792, 7
      %v2794 = vsub.s32 4, %v2793
      %v2795 = vrot.slane %v2774, %v2794
      %v2796 = vlaneseq
      %v2797 = vshrl.u32 %v2796, 7
      %v2798 = vsub.s32 5, %v2797
      %v2799 = vrot.slane %v2774, %v2798
      %v2800 = vlaneseq
      %v2801 = vshrl.u32 %v2800, 7
      %v2802 = vsub.s32 6, %v2801
      %v2803 = vrot.slane %v2774, %v2802
      %v2804 = vlaneseq
      %v2805 = vshrl.u32 %v2804, 7
      %v2806 = vsub.s32 7, %v2805
      %v2807 = vrot.slane %v2774, %v2806
      %v2816 = vmul.f32 %v2767, %v2779
      %v2817 = vmul.f32 %v2765, %v2783
      %v2818 = vmul.f32 %v2763, %v2787
      %v2819 = vmul.f32 %v2761, %v2791
      %v2820 = vmul.f32 %v2759, %v2795
      %v2821 = vmul.f32 %v2757, %v2799
      %v2822 = vmul.f32 %v2755, %v2803
      %v2823 = vmul.f32 %v2769, %v2807
      %v2824 = vmul.f32 %v2768, %v2779
      %v2825 = vmul.f32 %v2766, %v2783
      %v2826 = vmul.f32 %v2764, %v2787
      %v2827 = vmul.f32 %v2762, %v2791
      %v2828 = vmul.f32 %v2760, %v2795
      %v2829 = vmul.f32 %v2758, %v2799
      %v2830 = vmul.f32 %v2756, %v2803
      %v2831 = vmul.f32 %v2770, %v2807
      %s2832 = scalar_lea.vmem %s3, 40
      %v2833 = vld [vmem:[%s2832] sm:$0xff]
      %v2835 = vsel %vm915, %v2833, 0
      %v2838 = vsel %vm919, %v2824, 0
      %v2841 = vsel %vm919, %v2825, 0
      %v2844 = vsel %vm919, %v2826, 0
      %v2847 = vsel %vm919, %v2827, 0
      %v2850 = vsel %vm919, %v2828, 0
      %v2853 = vsel %vm919, %v2829, 0
      %v2856 = vsel %vm919, %v2830, 0
      %v2859 = vsel %vm919, %v2831, 0
      %2861 = vmatprep.subr.mxu0 %v2817
      %2862 = vmatpush1.msra.mxu0 %v2816
      %2863 = vmatprep.subr.mxu0 %v2841
      %2864 = vmatpush1.msra.mxu0 %v2838
      %2865 = vmatprep.subr.mxu0 0.0
      %2866 = vmatpush1.msra.mxu0 0.0
      %2867 = vmatprep.subr.mxu0 0.0
      %2868 = vmatpush1.msra.mxu0 0.0
      %2869 = vmatprep.subr.mxu0 0.0
      %2870 = vmatpush1.msra.mxu0 0.0
      %2871 = vmatprep.subr.mxu0 0.0
      %2872 = vmatpush1.msra.mxu0 0.0
      %2873 = vmatprep.subr.mxu0 0.0
      %2874 = vmatpush1.msra.mxu0 0.0
      %2875 = vmatprep.subr.mxu0 0.0
      %2876 = vmatpush1.msra.mxu0 0.0
      %2877 = vmatprep.subr.mxu0 0.0
      %2878 = vmatpush1.msra.mxu0 0.0
      %2879 = vmatprep.subr.mxu0 0.0
      %2880 = vmatpush1.msra.mxu0 0.0
      %2881 = vmatprep.subr.mxu0 0.0
      %2882 = vmatpush1.msra.mxu0 0.0
      %2883 = vmatprep.subr.mxu0 0.0
      %2884 = vmatpush1.msra.mxu0 0.0
      %2885 = vmatprep.subr.mxu0 0.0
      %2886 = vmatpush1.msra.mxu0 0.0
      %2887 = vmatprep.subr.mxu0 0.0
      %2888 = vmatpush1.msra.mxu0 0.0
      %2889 = vmatprep.subr.mxu0 0.0
      %2890 = vmatpush1.msra.mxu0 0.0
      %2891 = vmatprep.subr.mxu0 0.0
      %2892 = vmatpush1.msra.mxu0 0.0
      %2893 = vmatprep.subr.mxu0 0.0
      %2894 = vmatpush1.msra.mxu0 0.0
      %2895 = vmatprep.subr.mxu0 0.0
      %2896 = vmatpush1.msra.mxu0 0.0
      %2897 = vmatprep.subr.mxu0 0.0
      %2898 = vmatpush1.msra.mxu0 0.0
      %2899 = vmatprep.subr.mxu0 0.0
      %2900 = vmatpush1.msra.mxu0 0.0
      %2901 = vmatprep.subr.mxu0 0.0
      %2902 = vmatpush1.msra.mxu0 0.0
      %2903 = vmatprep.subr.mxu0 0.0
      %2904 = vmatpush1.msra.mxu0 0.0
      %2905 = vmatprep.subr.mxu0 0.0
      %2906 = vmatpush1.msra.mxu0 0.0
      %2907 = vmatprep.subr.mxu0 0.0
      %2908 = vmatpush1.msra.mxu0 0.0
      %2909 = vmatprep.subr.mxu0 0.0
      %2910 = vmatpush1.msra.mxu0 0.0
      %2911 = vmatprep.subr.mxu0 0.0
      %2912 = vmatpush1.msra.mxu0 0.0
      %2913 = vmatprep.subr.mxu0 0.0
      %2914 = vmatpush1.msra.mxu0 0.0
      %2915 = vmatprep.subr.mxu0 0.0
      %2916 = vmatpush1.msra.mxu0 0.0
      %2917 = vmatprep.subr.mxu0 0.0
      %2918 = vmatpush1.msra.mxu0 0.0
      %2919 = vmatprep.subr.mxu0 0.0
      %2920 = vmatpush1.msra.mxu0 0.0
      %2921 = vmatprep.subr.mxu0 0.0
      %2922 = vmatpush1.msra.mxu0 0.0
      %2923 = vmatprep.subr.mxu0 0.0
      %2924 = vmatpush1.msra.mxu0 0.0
      %2925 = vmatprep.mubr.f32.mxu0 0.0
      %2926 = vmatmul.mubr.f32.gmra.mrb[0].mxu0 %v2835
      %v2927 = vpop.f32.mrb[0].mxu0
      %v2928 = vadd.f32 0.0, %v2927
      %v2929 = vpop.f32.mrb[0].mxu0
      %v2930 = vadd.f32 0.0, %v2929
      %2931 = vdwg.mxu0
      %2932 = vmatprep.subr.mxu0 %v2819
      %2933 = vmatpush1.msra.mxu0 %v2818
      %2934 = vmatprep.subr.mxu0 %v2847
      %2935 = vmatpush1.msra.mxu0 %v2844
      %2936 = vmatprep.subr.mxu0 0.0
      %2937 = vmatpush1.msra.mxu0 0.0
      %2938 = vmatprep.subr.mxu0 0.0
      %2939 = vmatpush1.msra.mxu0 0.0
      %2940 = vmatprep.subr.mxu0 0.0
      %2941 = vmatpush1.msra.mxu0 0.0
      %2942 = vmatprep.subr.mxu0 0.0
      %2943 = vmatpush1.msra.mxu0 0.0
      %2944 = vmatprep.subr.mxu0 0.0
      %2945 = vmatpush1.msra.mxu0 0.0
      %2946 = vmatprep.subr.mxu0 0.0
      %2947 = vmatpush1.msra.mxu0 0.0
      %2948 = vmatprep.subr.mxu0 0.0
      %2949 = vmatpush1.msra.mxu0 0.0
      %2950 = vmatprep.subr.mxu0 0.0
      %2951 = vmatpush1.msra.mxu0 0.0
      %2952 = vmatprep.subr.mxu0 0.0
      %2953 = vmatpush1.msra.mxu0 0.0
      %2954 = vmatprep.subr.mxu0 0.0
      %2955 = vmatpush1.msra.mxu0 0.0
      %2956 = vmatprep.subr.mxu0 0.0
      %2957 = vmatpush1.msra.mxu0 0.0
      %2958 = vmatprep.subr.mxu0 0.0
      %2959 = vmatpush1.msra.mxu0 0.0
      %2960 = vmatprep.subr.mxu0 0.0
      %2961 = vmatpush1.msra.mxu0 0.0
      %2962 = vmatprep.subr.mxu0 0.0
      %2963 = vmatpush1.msra.mxu0 0.0
      %2964 = vmatprep.subr.mxu0 0.0
      %2965 = vmatpush1.msra.mxu0 0.0
      %2966 = vmatprep.subr.mxu0 0.0
      %2967 = vmatpush1.msra.mxu0 0.0
      %2968 = vmatprep.subr.mxu0 0.0
      %2969 = vmatpush1.msra.mxu0 0.0
      %2970 = vmatprep.subr.mxu0 0.0
      %2971 = vmatpush1.msra.mxu0 0.0
      %2972 = vmatprep.subr.mxu0 0.0
      %2973 = vmatpush1.msra.mxu0 0.0
      %2974 = vmatprep.subr.mxu0 0.0
      %2975 = vmatpush1.msra.mxu0 0.0
      %2976 = vmatprep.subr.mxu0 0.0
      %2977 = vmatpush1.msra.mxu0 0.0
      %2978 = vmatprep.subr.mxu0 0.0
      %2979 = vmatpush1.msra.mxu0 0.0
      %2980 = vmatprep.subr.mxu0 0.0
      %2981 = vmatpush1.msra.mxu0 0.0
      %2982 = vmatprep.subr.mxu0 0.0
      %2983 = vmatpush1.msra.mxu0 0.0
      %2984 = vmatprep.subr.mxu0 0.0
      %2985 = vmatpush1.msra.mxu0 0.0
      %2986 = vmatprep.subr.mxu0 0.0
      %2987 = vmatpush1.msra.mxu0 0.0
      %2988 = vmatprep.subr.mxu0 0.0
      %2989 = vmatpush1.msra.mxu0 0.0
      %2990 = vmatprep.subr.mxu0 0.0
      %2991 = vmatpush1.msra.mxu0 0.0
      %2992 = vmatprep.subr.mxu0 0.0
      %2993 = vmatpush1.msra.mxu0 0.0
      %2994 = vmatprep.subr.mxu0 0.0
      %2995 = vmatpush1.msra.mxu0 0.0
      %2996 = vmatprep.mubr.f32.mxu0 0.0
      %2997 = vmatmul.mubr.f32.gmra.mrb[0].mxu0 %v2835
      %v2998 = vpop.f32.mrb[0].mxu0
      %v2999 = vadd.f32 0.0, %v2998
      %v3000 = vpop.f32.mrb[0].mxu0
      %v3001 = vadd.f32 0.0, %v3000
      %3002 = vdwg.mxu0
      %3003 = vmatprep.subr.mxu0 %v2821
      %3004 = vmatpush1.msra.mxu0 %v2820
      %3005 = vmatprep.subr.mxu0 %v2853
      %3006 = vmatpush1.msra.mxu0 %v2850
      %3007 = vmatprep.subr.mxu0 0.0
      %3008 = vmatpush1.msra.mxu0 0.0
      %3009 = vmatprep.subr.mxu0 0.0
      %3010 = vmatpush1.msra.mxu0 0.0
      %3011 = vmatprep.subr.mxu0 0.0
      %3012 = vmatpush1.msra.mxu0 0.0
      %3013 = vmatprep.subr.mxu0 0.0
      %3014 = vmatpush1.msra.mxu0 0.0
      %3015 = vmatprep.subr.mxu0 0.0
      %3016 = vmatpush1.msra.mxu0 0.0
      %3017 = vmatprep.subr.mxu0 0.0
      %3018 = vmatpush1.msra.mxu0 0.0
      %3019 = vmatprep.subr.mxu0 0.0
      %3020 = vmatpush1.msra.mxu0 0.0
      %3021 = vmatprep.subr.mxu0 0.0
      %3022 = vmatpush1.msra.mxu0 0.0
      %3023 = vmatprep.subr.mxu0 0.0
      %3024 = vmatpush1.msra.mxu0 0.0
      %3025 = vmatprep.subr.mxu0 0.0
      %3026 = vmatpush1.msra.mxu0 0.0
      %3027 = vmatprep.subr.mxu0 0.0
      %3028 = vmatpush1.msra.mxu0 0.0
      %3029 = vmatprep.subr.mxu0 0.0
      %3030 = vmatpush1.msra.mxu0 0.0
      %3031 = vmatprep.subr.mxu0 0.0
      %3032 = vmatpush1.msra.mxu0 0.0
      %3033 = vmatprep.subr.mxu0 0.0
      %3034 = vmatpush1.msra.mxu0 0.0
      %3035 = vmatprep.subr.mxu0 0.0
      %3036 = vmatpush1.msra.mxu0 0.0
      %3037 = vmatprep.subr.mxu0 0.0
      %3038 = vmatpush1.msra.mxu0 0.0
      %3039 = vmatprep.subr.mxu0 0.0
      %3040 = vmatpush1.msra.mxu0 0.0
      %3041 = vmatprep.subr.mxu0 0.0
      %3042 = vmatpush1.msra.mxu0 0.0
      %3043 = vmatprep.subr.mxu0 0.0
      %3044 = vmatpush1.msra.mxu0 0.0
      %3045 = vmatprep.subr.mxu0 0.0
      %3046 = vmatpush1.msra.mxu0 0.0
      %3047 = vmatprep.subr.mxu0 0.0
      %3048 = vmatpush1.msra.mxu0 0.0
      %3049 = vmatprep.subr.mxu0 0.0
      %3050 = vmatpush1.msra.mxu0 0.0
      %3051 = vmatprep.subr.mxu0 0.0
      %3052 = vmatpush1.msra.mxu0 0.0
      %3053 = vmatprep.subr.mxu0 0.0
      %3054 = vmatpush1.msra.mxu0 0.0
      %3055 = vmatprep.subr.mxu0 0.0
      %3056 = vmatpush1.msra.mxu0 0.0
      %3057 = vmatprep.subr.mxu0 0.0
      %3058 = vmatpush1.msra.mxu0 0.0
      %3059 = vmatprep.subr.mxu0 0.0
      %3060 = vmatpush1.msra.mxu0 0.0
      %3061 = vmatprep.subr.mxu0 0.0
      %3062 = vmatpush1.msra.mxu0 0.0
      %3063 = vmatprep.subr.mxu0 0.0
      %3064 = vmatpush1.msra.mxu0 0.0
      %3065 = vmatprep.subr.mxu0 0.0
      %3066 = vmatpush1.msra.mxu0 0.0
      %3067 = vmatprep.mubr.f32.mxu0 0.0
      %3068 = vmatmul.mubr.f32.gmra.mrb[0].mxu0 %v2835
      %v3069 = vpop.f32.mrb[0].mxu0
      %v3070 = vadd.f32 0.0, %v3069
      %v3071 = vpop.f32.mrb[0].mxu0
      %v3072 = vadd.f32 0.0, %v3071
      %3073 = vdwg.mxu0
      %3074 = vmatprep.subr.mxu0 %v2823
      %3075 = vmatpush1.msra.mxu0 %v2822
      %3076 = vmatprep.subr.mxu0 %v2859
      %3077 = vmatpush1.msra.mxu0 %v2856
      %3078 = vmatprep.subr.mxu0 0.0
      %3079 = vmatpush1.msra.mxu0 0.0
      %3080 = vmatprep.subr.mxu0 0.0
      %3081 = vmatpush1.msra.mxu0 0.0
      %3082 = vmatprep.subr.mxu0 0.0
      %3083 = vmatpush1.msra.mxu0 0.0
      %3084 = vmatprep.subr.mxu0 0.0
      %3085 = vmatpush1.msra.mxu0 0.0
      %3086 = vmatprep.subr.mxu0 0.0
      %3087 = vmatpush1.msra.mxu0 0.0
      %3088 = vmatprep.subr.mxu0 0.0
      %3089 = vmatpush1.msra.mxu0 0.0
      %3090 = vmatprep.subr.mxu0 0.0
      %3091 = vmatpush1.msra.mxu0 0.0
      %3092 = vmatprep.subr.mxu0 0.0
      %3093 = vmatpush1.msra.mxu0 0.0
      %3094 = vmatprep.subr.mxu0 0.0
      %3095 = vmatpush1.msra.mxu0 0.0
      %3096 = vmatprep.subr.mxu0 0.0
      %3097 = vmatpush1.msra.mxu0 0.0
      %3098 = vmatprep.subr.mxu0 0.0
      %3099 = vmatpush1.msra.mxu0 0.0
      %3100 = vmatprep.subr.mxu0 0.0
      %3101 = vmatpush1.msra.mxu0 0.0
      %3102 = vmatprep.subr.mxu0 0.0
      %3103 = vmatpush1.msra.mxu0 0.0
      %3104 = vmatprep.subr.mxu0 0.0
      %3105 = vmatpush1.msra.mxu0 0.0
      %3106 = vmatprep.subr.mxu0 0.0
      %3107 = vmatpush1.msra.mxu0 0.0
      %3108 = vmatprep.subr.mxu0 0.0
      %3109 = vmatpush1.msra.mxu0 0.0
      %3110 = vmatprep.subr.mxu0 0.0
      %3111 = vmatpush1.msra.mxu0 0.0
      %3112 = vmatprep.subr.mxu0 0.0
      %3113 = vmatpush1.msra.mxu0 0.0
      %3114 = vmatprep.subr.mxu0 0.0
      %3115 = vmatpush1.msra.mxu0 0.0
      %3116 = vmatprep.subr.mxu0 0.0
      %3117 = vmatpush1.msra.mxu0 0.0
      %3118 = vmatprep.subr.mxu0 0.0
      %3119 = vmatpush1.msra.mxu0 0.0
      %3120 = vmatprep.subr.mxu0 0.0
      %3121 = vmatpush1.msra.mxu0 0.0
      %3122 = vmatprep.subr.mxu0 0.0
      %3123 = vmatpush1.msra.mxu0 0.0
      %3124 = vmatprep.subr.mxu0 0.0
      %3125 = vmatpush1.msra.mxu0 0.0
      %3126 = vmatprep.subr.mxu0 0.0
      %3127 = vmatpush1.msra.mxu0 0.0
      %3128 = vmatprep.subr.mxu0 0.0
      %3129 = vmatpush1.msra.mxu0 0.0
      %3130 = vmatprep.subr.mxu0 0.0
      %3131 = vmatpush1.msra.mxu0 0.0
      %3132 = vmatprep.subr.mxu0 0.0
      %3133 = vmatpush1.msra.mxu0 0.0
      %3134 = vmatprep.subr.mxu0 0.0
      %3135 = vmatpush1.msra.mxu0 0.0
      %3136 = vmatprep.subr.mxu0 0.0
      %3137 = vmatpush1.msra.mxu0 0.0
      %3138 = vmatprep.mubr.f32.mxu0 0.0
      %3139 = vmatmul.mubr.f32.gmra.mrb[0].mxu0 %v2835
      %v3140 = vpop.f32.mrb[0].mxu0
      %v3141 = vadd.f32 0.0, %v3140
      %v3142 = vpop.f32.mrb[0].mxu0
      %v3143 = vadd.f32 0.0, %v3142
      %3144 = vdwg.mxu0
      %v3145 = vadd.f32 %v2714, %v2928
      %v3146 = vadd.f32 %v2715, %v2930
      %v3147 = vadd.f32 %v2716, %v2999
      %v3148 = vadd.f32 %v2717, %v3001
      %v3149 = vadd.f32 %v2718, %v3070
      %v3150 = vadd.f32 %v2719, %v3072
      %v3151 = vadd.f32 %v2720, %v3141
      %v3152 = vadd.f32 %v2721, %v3143
      %3153 = vrot.lane.b32.xlu0 %v423, 113
      %v3154 = vpop.permute.xlu0 %3153
      %3155 = vrot.lane.b32.xlu0 %v429, 113
      %v3156 = vpop.permute.xlu0 %3155
      %3157 = vrot.lane.b32.xlu0 %v425, 113
      %v3158 = vpop.permute.xlu0 %3157
      %3159 = vrot.lane.b32.xlu0 %v431, 113
      %v3160 = vpop.permute.xlu0 %3159
      %3161 = vrot.lane.b32.xlu0 %v509, 113
      %v3162 = vpop.permute.xlu0 %3161
      %3163 = vrot.lane.b32.xlu0 %v515, 113
      %v3164 = vpop.permute.xlu0 %3163
      %3165 = vrot.lane.b32.xlu0 %v511, 113
      %v3166 = vpop.permute.xlu0 %3165
      %3167 = vrot.lane.b32.xlu0 %v517, 113
      %v3168 = vpop.permute.xlu0 %3167
      %3169 = vrot.lane.b32.xlu0 %v595, 113
      %v3170 = vpop.permute.xlu0 %3169
      %3171 = vrot.lane.b32.xlu0 %v601, 113
      %v3172 = vpop.permute.xlu0 %3171
      %3173 = vrot.lane.b32.xlu0 %v597, 113
      %v3174 = vpop.permute.xlu0 %3173
      %3175 = vrot.lane.b32.xlu0 %v603, 113
      %v3176 = vpop.permute.xlu0 %3175
      %3177 = vrot.lane.b32.xlu0 %v681, 113
      %v3178 = vpop.permute.xlu0 %3177
      %3179 = vrot.lane.b32.xlu0 %v687, 113
      %v3180 = vpop.permute.xlu0 %3179
      %3181 = vrot.lane.b32.xlu0 %v683, 113
      %v3182 = vpop.permute.xlu0 %3181
      %3183 = vrot.lane.b32.xlu0 %v689, 113
      %v3184 = vpop.permute.xlu0 %3183
      %vm3185 = vcmp.lt.s32.totalorder %v724, 113
      %v3186 = vsel %vm3185, %v3178, %v3182
      %v3187 = vsel %vm3185, %v3180, %v3184
      %v3188 = vsel %vm3185, %v3174, %v3178
      %v3189 = vsel %vm3185, %v3176, %v3180
      %v3190 = vsel %vm3185, %v3170, %v3174
      %v3191 = vsel %vm3185, %v3172, %v3176
      %v3192 = vsel %vm3185, %v3166, %v3170
      %v3193 = vsel %vm3185, %v3168, %v3172
      %v3194 = vsel %vm3185, %v3162, %v3166
      %v3195 = vsel %vm3185, %v3164, %v3168
      %v3196 = vsel %vm3185, %v3158, %v3162
      %v3197 = vsel %vm3185, %v3160, %v3164
      %v3198 = vsel %vm3185, %v3154, %v3158
      %v3199 = vsel %vm3185, %v3156, %v3160
      %v3200 = vsel %vm3185, %v3182, %v3154
      %v3201 = vsel %vm3185, %v3184, %v3156
      %s3202 = scalar_lea.vmem %s2, 6
      %v3203 = vld [vmem:[%s3202] ss:$8 sm:$0xf]
      %v3204 = vld [vmem:[%s3202] ss:$8 sm:$0xf0]
      %v3205 = vor.u32 %v3203, %v3204
      %v3207 = vlaneseq
      %v3208 = vshrl.u32 %v3207, 7
      %v3209 = vsub.s32 0, %v3208
      %v3210 = vrot.slane %v3205, %v3209
      %v3211 = vlaneseq
      %v3212 = vshrl.u32 %v3211, 7
      %v3213 = vsub.s32 1, %v3212
      %v3214 = vrot.slane %v3205, %v3213
      %v3215 = vlaneseq
      %v3216 = vshrl.u32 %v3215, 7
      %v3217 = vsub.s32 2, %v3216
      %v3218 = vrot.slane %v3205, %v3217
      %v3219 = vlaneseq
      %v3220 = vshrl.u32 %v3219, 7
      %v3221 = vsub.s32 3, %v3220
      %v3222 = vrot.slane %v3205, %v3221
      %v3223 = vlaneseq
      %v3224 = vshrl.u32 %v3223, 7
      %v3225 = vsub.s32 4, %v3224
      %v3226 = vrot.slane %v3205, %v3225
      %v3227 = vlaneseq
      %v3228 = vshrl.u32 %v3227, 7
      %v3229 = vsub.s32 5, %v3228
      %v3230 = vrot.slane %v3205, %v3229
      %v3231 = vlaneseq
      %v3232 = vshrl.u32 %v3231, 7
      %v3233 = vsub.s32 6, %v3232
      %v3234 = vrot.slane %v3205, %v3233
      %v3235 = vlaneseq
      %v3236 = vshrl.u32 %v3235, 7
      %v3237 = vsub.s32 7, %v3236
      %v3238 = vrot.slane %v3205, %v3237
      %v3247 = vmul.f32 %v3198, %v3210
      %v3248 = vmul.f32 %v3196, %v3214
      %v3249 = vmul.f32 %v3194, %v3218
      %v3250 = vmul.f32 %v3192, %v3222
      %v3251 = vmul.f32 %v3190, %v3226
      %v3252 = vmul.f32 %v3188, %v3230
      %v3253 = vmul.f32 %v3186, %v3234
      %v3254 = vmul.f32 %v3200, %v3238
      %v3255 = vmul.f32 %v3199, %v3210
      %v3256 = vmul.f32 %v3197, %v3214
      %v3257 = vmul.f32 %v3195, %v3218
      %v3258 = vmul.f32 %v3193, %v3222
      %v3259 = vmul.f32 %v3191, %v3226
      %v3260 = vmul.f32 %v3189, %v3230
      %v3261 = vmul.f32 %v3187, %v3234
      %v3262 = vmul.f32 %v3201, %v3238
      %s3263 = scalar_lea.vmem %s3, 48
      %v3264 = vld [vmem:[%s3263] sm:$0xff]
      %v3266 = vsel %vm915, %v3264, 0
      %v3269 = vsel %vm919, %v3255, 0
      %v3272 = vsel %vm919, %v3256, 0
      %v3275 = vsel %vm919, %v3257, 0
      %v3278 = vsel %vm919, %v3258, 0
      %v3281 = vsel %vm919, %v3259, 0
      %v3284 = vsel %vm919, %v3260, 0
      %v3287 = vsel %vm919, %v3261, 0
      %v3290 = vsel %vm919, %v3262, 0
      %3292 = vmatprep.subr.mxu0 %v3248
      %3293 = vmatpush1.msra.mxu0 %v3247
      %3294 = vmatprep.subr.mxu0 %v3272
      %3295 = vmatpush1.msra.mxu0 %v3269
      %3296 = vmatprep.subr.mxu0 0.0
      %3297 = vmatpush1.msra.mxu0 0.0
      %3298 = vmatprep.subr.mxu0 0.0
      %3299 = vmatpush1.msra.mxu0 0.0
      %3300 = vmatprep.subr.mxu0 0.0
      %3301 = vmatpush1.msra.mxu0 0.0
      %3302 = vmatprep.subr.mxu0 0.0
      %3303 = vmatpush1.msra.mxu0 0.0
      %3304 = vmatprep.subr.mxu0 0.0
      %3305 = vmatpush1.msra.mxu0 0.0
      %3306 = vmatprep.subr.mxu0 0.0
      %3307 = vmatpush1.msra.mxu0 0.0
      %3308 = vmatprep.subr.mxu0 0.0
      %3309 = vmatpush1.msra.mxu0 0.0
      %3310 = vmatprep.subr.mxu0 0.0
      %3311 = vmatpush1.msra.mxu0 0.0
      %3312 = vmatprep.subr.mxu0 0.0
      %3313 = vmatpush1.msra.mxu0 0.0
      %3314 = vmatprep.subr.mxu0 0.0
      %3315 = vmatpush1.msra.mxu0 0.0
      %3316 = vmatprep.subr.mxu0 0.0
      %3317 = vmatpush1.msra.mxu0 0.0
      %3318 = vmatprep.subr.mxu0 0.0
      %3319 = vmatpush1.msra.mxu0 0.0
      %3320 = vmatprep.subr.mxu0 0.0
      %3321 = vmatpush1.msra.mxu0 0.0
      %3322 = vmatprep.subr.mxu0 0.0
      %3323 = vmatpush1.msra.mxu0 0.0
      %3324 = vmatprep.subr.mxu0 0.0
      %3325 = vmatpush1.msra.mxu0 0.0
      %3326 = vmatprep.subr.mxu0 0.0
      %3327 = vmatpush1.msra.mxu0 0.0
      %3328 = vmatprep.subr.mxu0 0.0
      %3329 = vmatpush1.msra.mxu0 0.0
      %3330 = vmatprep.subr.mxu0 0.0
      %3331 = vmatpush1.msra.mxu0 0.0
      %3332 = vmatprep.subr.mxu0 0.0
      %3333 = vmatpush1.msra.mxu0 0.0
      %3334 = vmatprep.subr.mxu0 0.0
      %3335 = vmatpush1.msra.mxu0 0.0
      %3336 = vmatprep.subr.mxu0 0.0
      %3337 = vmatpush1.msra.mxu0 0.0
      %3338 = vmatprep.subr.mxu0 0.0
      %3339 = vmatpush1.msra.mxu0 0.0
      %3340 = vmatprep.subr.mxu0 0.0
      %3341 = vmatpush1.msra.mxu0 0.0
      %3342 = vmatprep.subr.mxu0 0.0
      %3343 = vmatpush1.msra.mxu0 0.0
      %3344 = vmatprep.subr.mxu0 0.0
      %3345 = vmatpush1.msra.mxu0 0.0
      %3346 = vmatprep.subr.mxu0 0.0
      %3347 = vmatpush1.msra.mxu0 0.0
      %3348 = vmatprep.subr.mxu0 0.0
      %3349 = vmatpush1.msra.mxu0 0.0
      %3350 = vmatprep.subr.mxu0 0.0
      %3351 = vmatpush1.msra.mxu0 0.0
      %3352 = vmatprep.subr.mxu0 0.0
      %3353 = vmatpush1.msra.mxu0 0.0
      %3354 = vmatprep.subr.mxu0 0.0
      %3355 = vmatpush1.msra.mxu0 0.0
      %3356 = vmatprep.mubr.f32.mxu0 0.0
      %3357 = vmatmul.mubr.f32.gmra.mrb[0].mxu0 %v3266
      %v3358 = vpop.f32.mrb[0].mxu0
      %v3359 = vadd.f32 0.0, %v3358
      %v3360 = vpop.f32.mrb[0].mxu0
      %v3361 = vadd.f32 0.0, %v3360
      %3362 = vdwg.mxu0
      %3363 = vmatprep.subr.mxu0 %v3250
      %3364 = vmatpush1.msra.mxu0 %v3249
      %3365 = vmatprep.subr.mxu0 %v3278
      %3366 = vmatpush1.msra.mxu0 %v3275
      %3367 = vmatprep.subr.mxu0 0.0
      %3368 = vmatpush1.msra.mxu0 0.0
      %3369 = vmatprep.subr.mxu0 0.0
      %3370 = vmatpush1.msra.mxu0 0.0
      %3371 = vmatprep.subr.mxu0 0.0
      %3372 = vmatpush1.msra.mxu0 0.0
      %3373 = vmatprep.subr.mxu0 0.0
      %3374 = vmatpush1.msra.mxu0 0.0
      %3375 = vmatprep.subr.mxu0 0.0
      %3376 = vmatpush1.msra.mxu0 0.0
      %3377 = vmatprep.subr.mxu0 0.0
      %3378 = vmatpush1.msra.mxu0 0.0
      %3379 = vmatprep.subr.mxu0 0.0
      %3380 = vmatpush1.msra.mxu0 0.0
      %3381 = vmatprep.subr.mxu0 0.0
      %3382 = vmatpush1.msra.mxu0 0.0
      %3383 = vmatprep.subr.mxu0 0.0
      %3384 = vmatpush1.msra.mxu0 0.0
      %3385 = vmatprep.subr.mxu0 0.0
      %3386 = vmatpush1.msra.mxu0 0.0
      %3387 = vmatprep.subr.mxu0 0.0
      %3388 = vmatpush1.msra.mxu0 0.0
      %3389 = vmatprep.subr.mxu0 0.0
      %3390 = vmatpush1.msra.mxu0 0.0
      %3391 = vmatprep.subr.mxu0 0.0
      %3392 = vmatpush1.msra.mxu0 0.0
      %3393 = vmatprep.subr.mxu0 0.0
      %3394 = vmatpush1.msra.mxu0 0.0
      %3395 = vmatprep.subr.mxu0 0.0
      %3396 = vmatpush1.msra.mxu0 0.0
      %3397 = vmatprep.subr.mxu0 0.0
      %3398 = vmatpush1.msra.mxu0 0.0
      %3399 = vmatprep.subr.mxu0 0.0
      %3400 = vmatpush1.msra.mxu0 0.0
      %3401 = vmatprep.subr.mxu0 0.0
      %3402 = vmatpush1.msra.mxu0 0.0
      %3403 = vmatprep.subr.mxu0 0.0
      %3404 = vmatpush1.msra.mxu0 0.0
      %3405 = vmatprep.subr.mxu0 0.0
      %3406 = vmatpush1.msra.mxu0 0.0
      %3407 = vmatprep.subr.mxu0 0.0
      %3408 = vmatpush1.msra.mxu0 0.0
      %3409 = vmatprep.subr.mxu0 0.0
      %3410 = vmatpush1.msra.mxu0 0.0
      %3411 = vmatprep.subr.mxu0 0.0
      %3412 = vmatpush1.msra.mxu0 0.0
      %3413 = vmatprep.subr.mxu0 0.0
      %3414 = vmatpush1.msra.mxu0 0.0
      %3415 = vmatprep.subr.mxu0 0.0
      %3416 = vmatpush1.msra.mxu0 0.0
      %3417 = vmatprep.subr.mxu0 0.0
      %3418 = vmatpush1.msra.mxu0 0.0
      %3419 = vmatprep.subr.mxu0 0.0
      %3420 = vmatpush1.msra.mxu0 0.0
      %3421 = vmatprep.subr.mxu0 0.0
      %3422 = vmatpush1.msra.mxu0 0.0
      %3423 = vmatprep.subr.mxu0 0.0
      %3424 = vmatpush1.msra.mxu0 0.0
      %3425 = vmatprep.subr.mxu0 0.0
      %3426 = vmatpush1.msra.mxu0 0.0
      %3427 = vmatprep.mubr.f32.mxu0 0.0
      %3428 = vmatmul.mubr.f32.gmra.mrb[0].mxu0 %v3266
      %v3429 = vpop.f32.mrb[0].mxu0
      %v3430 = vadd.f32 0.0, %v3429
      %v3431 = vpop.f32.mrb[0].mxu0
      %v3432 = vadd.f32 0.0, %v3431
      %3433 = vdwg.mxu0
      %3434 = vmatprep.subr.mxu0 %v3252
      %3435 = vmatpush1.msra.mxu0 %v3251
      %3436 = vmatprep.subr.mxu0 %v3284
      %3437 = vmatpush1.msra.mxu0 %v3281
      %3438 = vmatprep.subr.mxu0 0.0
      %3439 = vmatpush1.msra.mxu0 0.0
      %3440 = vmatprep.subr.mxu0 0.0
      %3441 = vmatpush1.msra.mxu0 0.0
      %3442 = vmatprep.subr.mxu0 0.0
      %3443 = vmatpush1.msra.mxu0 0.0
      %3444 = vmatprep.subr.mxu0 0.0
      %3445 = vmatpush1.msra.mxu0 0.0
      %3446 = vmatprep.subr.mxu0 0.0
      %3447 = vmatpush1.msra.mxu0 0.0
      %3448 = vmatprep.subr.mxu0 0.0
      %3449 = vmatpush1.msra.mxu0 0.0
      %3450 = vmatprep.subr.mxu0 0.0
      %3451 = vmatpush1.msra.mxu0 0.0
      %3452 = vmatprep.subr.mxu0 0.0
      %3453 = vmatpush1.msra.mxu0 0.0
      %3454 = vmatprep.subr.mxu0 0.0
      %3455 = vmatpush1.msra.mxu0 0.0
      %3456 = vmatprep.subr.mxu0 0.0
      %3457 = vmatpush1.msra.mxu0 0.0
      %3458 = vmatprep.subr.mxu0 0.0
      %3459 = vmatpush1.msra.mxu0 0.0
      %3460 = vmatprep.subr.mxu0 0.0
      %3461 = vmatpush1.msra.mxu0 0.0
      %3462 = vmatprep.subr.mxu0 0.0
      %3463 = vmatpush1.msra.mxu0 0.0
      %3464 = vmatprep.subr.mxu0 0.0
      %3465 = vmatpush1.msra.mxu0 0.0
      %3466 = vmatprep.subr.mxu0 0.0
      %3467 = vmatpush1.msra.mxu0 0.0
      %3468 = vmatprep.subr.mxu0 0.0
      %3469 = vmatpush1.msra.mxu0 0.0
      %3470 = vmatprep.subr.mxu0 0.0
      %3471 = vmatpush1.msra.mxu0 0.0
      %3472 = vmatprep.subr.mxu0 0.0
      %3473 = vmatpush1.msra.mxu0 0.0
      %3474 = vmatprep.subr.mxu0 0.0
      %3475 = vmatpush1.msra.mxu0 0.0
      %3476 = vmatprep.subr.mxu0 0.0
      %3477 = vmatpush1.msra.mxu0 0.0
      %3478 = vmatprep.subr.mxu0 0.0
      %3479 = vmatpush1.msra.mxu0 0.0
      %3480 = vmatprep.subr.mxu0 0.0
      %3481 = vmatpush1.msra.mxu0 0.0
      %3482 = vmatprep.subr.mxu0 0.0
      %3483 = vmatpush1.msra.mxu0 0.0
      %3484 = vmatprep.subr.mxu0 0.0
      %3485 = vmatpush1.msra.mxu0 0.0
      %3486 = vmatprep.subr.mxu0 0.0
      %3487 = vmatpush1.msra.mxu0 0.0
      %3488 = vmatprep.subr.mxu0 0.0
      %3489 = vmatpush1.msra.mxu0 0.0
      %3490 = vmatprep.subr.mxu0 0.0
      %3491 = vmatpush1.msra.mxu0 0.0
      %3492 = vmatprep.subr.mxu0 0.0
      %3493 = vmatpush1.msra.mxu0 0.0
      %3494 = vmatprep.subr.mxu0 0.0
      %3495 = vmatpush1.msra.mxu0 0.0
      %3496 = vmatprep.subr.mxu0 0.0
      %3497 = vmatpush1.msra.mxu0 0.0
      %3498 = vmatprep.mubr.f32.mxu0 0.0
      %3499 = vmatmul.mubr.f32.gmra.mrb[0].mxu0 %v3266
      %v3500 = vpop.f32.mrb[0].mxu0
      %v3501 = vadd.f32 0.0, %v3500
      %v3502 = vpop.f32.mrb[0].mxu0
      %v3503 = vadd.f32 0.0, %v3502
      %3504 = vdwg.mxu0
      %3505 = vmatprep.subr.mxu0 %v3254
      %3506 = vmatpush1.msra.mxu0 %v3253
      %3507 = vmatprep.subr.mxu0 %v3290
      %3508 = vmatpush1.msra.mxu0 %v3287
      %3509 = vmatprep.subr.mxu0 0.0
      %3510 = vmatpush1.msra.mxu0 0.0
      %3511 = vmatprep.subr.mxu0 0.0
      %3512 = vmatpush1.msra.mxu0 0.0
      %3513 = vmatprep.subr.mxu0 0.0
      %3514 = vmatpush1.msra.mxu0 0.0
      %3515 = vmatprep.subr.mxu0 0.0
      %3516 = vmatpush1.msra.mxu0 0.0
      %3517 = vmatprep.subr.mxu0 0.0
      %3518 = vmatpush1.msra.mxu0 0.0
      %3519 = vmatprep.subr.mxu0 0.0
      %3520 = vmatpush1.msra.mxu0 0.0
      %3521 = vmatprep.subr.mxu0 0.0
      %3522 = vmatpush1.msra.mxu0 0.0
      %3523 = vmatprep.subr.mxu0 0.0
      %3524 = vmatpush1.msra.mxu0 0.0
      %3525 = vmatprep.subr.mxu0 0.0
      %3526 = vmatpush1.msra.mxu0 0.0
      %3527 = vmatprep.subr.mxu0 0.0
      %3528 = vmatpush1.msra.mxu0 0.0
      %3529 = vmatprep.subr.mxu0 0.0
      %3530 = vmatpush1.msra.mxu0 0.0
      %3531 = vmatprep.subr.mxu0 0.0
      %3532 = vmatpush1.msra.mxu0 0.0
      %3533 = vmatprep.subr.mxu0 0.0
      %3534 = vmatpush1.msra.mxu0 0.0
      %3535 = vmatprep.subr.mxu0 0.0
      %3536 = vmatpush1.msra.mxu0 0.0
      %3537 = vmatprep.subr.mxu0 0.0
      %3538 = vmatpush1.msra.mxu0 0.0
      %3539 = vmatprep.subr.mxu0 0.0
      %3540 = vmatpush1.msra.mxu0 0.0
      %3541 = vmatprep.subr.mxu0 0.0
      %3542 = vmatpush1.msra.mxu0 0.0
      %3543 = vmatprep.subr.mxu0 0.0
      %3544 = vmatpush1.msra.mxu0 0.0
      %3545 = vmatprep.subr.mxu0 0.0
      %3546 = vmatpush1.msra.mxu0 0.0
      %3547 = vmatprep.subr.mxu0 0.0
      %3548 = vmatpush1.msra.mxu0 0.0
      %3549 = vmatprep.subr.mxu0 0.0
      %3550 = vmatpush1.msra.mxu0 0.0
      %3551 = vmatprep.subr.mxu0 0.0
      %3552 = vmatpush1.msra.mxu0 0.0
      %3553 = vmatprep.subr.mxu0 0.0
      %3554 = vmatpush1.msra.mxu0 0.0
      %3555 = vmatprep.subr.mxu0 0.0
      %3556 = vmatpush1.msra.mxu0 0.0
      %3557 = vmatprep.subr.mxu0 0.0
      %3558 = vmatpush1.msra.mxu0 0.0
      %3559 = vmatprep.subr.mxu0 0.0
      %3560 = vmatpush1.msra.mxu0 0.0
      %3561 = vmatprep.subr.mxu0 0.0
      %3562 = vmatpush1.msra.mxu0 0.0
      %3563 = vmatprep.subr.mxu0 0.0
      %3564 = vmatpush1.msra.mxu0 0.0
      %3565 = vmatprep.subr.mxu0 0.0
      %3566 = vmatpush1.msra.mxu0 0.0
      %3567 = vmatprep.subr.mxu0 0.0
      %3568 = vmatpush1.msra.mxu0 0.0
      %3569 = vmatprep.mubr.f32.mxu0 0.0
      %3570 = vmatmul.mubr.f32.gmra.mrb[0].mxu0 %v3266
      %v3571 = vpop.f32.mrb[0].mxu0
      %v3572 = vadd.f32 0.0, %v3571
      %v3573 = vpop.f32.mrb[0].mxu0
      %v3574 = vadd.f32 0.0, %v3573
      %3575 = vdwg.mxu0
      %v3576 = vadd.f32 %v3145, %v3359
      %v3577 = vadd.f32 %v3146, %v3361
      %v3578 = vadd.f32 %v3147, %v3430
      %v3579 = vadd.f32 %v3148, %v3432
      %v3580 = vadd.f32 %v3149, %v3501
      %v3581 = vadd.f32 %v3150, %v3503
      %v3582 = vadd.f32 %v3151, %v3572
      %v3583 = vadd.f32 %v3152, %v3574
      %3584 = vrot.lane.b32.xlu0 %v423, 112
      %v3585 = vpop.permute.xlu0 %3584
      %3586 = vrot.lane.b32.xlu0 %v429, 112
      %v3587 = vpop.permute.xlu0 %3586
      %3588 = vrot.lane.b32.xlu0 %v425, 112
      %v3589 = vpop.permute.xlu0 %3588
      %3590 = vrot.lane.b32.xlu0 %v431, 112
      %v3591 = vpop.permute.xlu0 %3590
      %3592 = vrot.lane.b32.xlu0 %v509, 112
      %v3593 = vpop.permute.xlu0 %3592
      %3594 = vrot.lane.b32.xlu0 %v515, 112
      %v3595 = vpop.permute.xlu0 %3594
      %3596 = vrot.lane.b32.xlu0 %v511, 112
      %v3597 = vpop.permute.xlu0 %3596
      %3598 = vrot.lane.b32.xlu0 %v517, 112
      %v3599 = vpop.permute.xlu0 %3598
      %3600 = vrot.lane.b32.xlu0 %v595, 112
      %v3601 = vpop.permute.xlu0 %3600
      %3602 = vrot.lane.b32.xlu0 %v601, 112
      %v3603 = vpop.permute.xlu0 %3602
      %3604 = vrot.lane.b32.xlu0 %v597, 112
      %v3605 = vpop.permute.xlu0 %3604
      %3606 = vrot.lane.b32.xlu0 %v603, 112
      %v3607 = vpop.permute.xlu0 %3606
      %3608 = vrot.lane.b32.xlu0 %v681, 112
      %v3609 = vpop.permute.xlu0 %3608
      %3610 = vrot.lane.b32.xlu0 %v687, 112
      %v3611 = vpop.permute.xlu0 %3610
      %3612 = vrot.lane.b32.xlu0 %v683, 112
      %v3613 = vpop.permute.xlu0 %3612
      %3614 = vrot.lane.b32.xlu0 %v689, 112
      %v3615 = vpop.permute.xlu0 %3614
      %vm3616 = vcmp.lt.s32.totalorder %v724, 112
      %v3617 = vsel %vm3616, %v3609, %v3613
      %v3618 = vsel %vm3616, %v3611, %v3615
      %v3619 = vsel %vm3616, %v3605, %v3609
      %v3620 = vsel %vm3616, %v3607, %v3611
      %v3621 = vsel %vm3616, %v3601, %v3605
      %v3622 = vsel %vm3616, %v3603, %v3607
      %v3623 = vsel %vm3616, %v3597, %v3601
      %v3624 = vsel %vm3616, %v3599, %v3603
      %v3625 = vsel %vm3616, %v3593, %v3597
      %v3626 = vsel %vm3616, %v3595, %v3599
      %v3627 = vsel %vm3616, %v3589, %v3593
      %v3628 = vsel %vm3616, %v3591, %v3595
      %v3629 = vsel %vm3616, %v3585, %v3589
      %v3630 = vsel %vm3616, %v3587, %v3591
      %v3631 = vsel %vm3616, %v3613, %v3585
      %v3632 = vsel %vm3616, %v3615, %v3587
      %s3633 = scalar_lea.vmem %s2, 7
      %v3634 = vld [vmem:[%s3633] ss:$8 sm:$0xf]
      %v3635 = vld [vmem:[%s3633] ss:$8 sm:$0xf0]
      %v3636 = vor.u32 %v3634, %v3635
      %v3638 = vlaneseq
      %v3639 = vshrl.u32 %v3638, 7
      %v3640 = vsub.s32 0, %v3639
      %v3641 = vrot.slane %v3636, %v3640
      %v3642 = vlaneseq
      %v3643 = vshrl.u32 %v3642, 7
      %v3644 = vsub.s32 1, %v3643
      %v3645 = vrot.slane %v3636, %v3644
      %v3646 = vlaneseq
      %v3647 = vshrl.u32 %v3646, 7
      %v3648 = vsub.s32 2, %v3647
      %v3649 = vrot.slane %v3636, %v3648
      %v3650 = vlaneseq
      %v3651 = vshrl.u32 %v3650, 7
      %v3652 = vsub.s32 3, %v3651
      %v3653 = vrot.slane %v3636, %v3652
      %v3654 = vlaneseq
      %v3655 = vshrl.u32 %v3654, 7
      %v3656 = vsub.s32 4, %v3655
      %v3657 = vrot.slane %v3636, %v3656
      %v3658 = vlaneseq
      %v3659 = vshrl.u32 %v3658, 7
      %v3660 = vsub.s32 5, %v3659
      %v3661 = vrot.slane %v3636, %v3660
      %v3662 = vlaneseq
      %v3663 = vshrl.u32 %v3662, 7
      %v3664 = vsub.s32 6, %v3663
      %v3665 = vrot.slane %v3636, %v3664
      %v3666 = vlaneseq
      %v3667 = vshrl.u32 %v3666, 7
      %v3668 = vsub.s32 7, %v3667
      %v3669 = vrot.slane %v3636, %v3668
      %v3678 = vmul.f32 %v3629, %v3641
      %v3679 = vmul.f32 %v3627, %v3645
      %v3680 = vmul.f32 %v3625, %v3649
      %v3681 = vmul.f32 %v3623, %v3653
      %v3682 = vmul.f32 %v3621, %v3657
      %v3683 = vmul.f32 %v3619, %v3661
      %v3684 = vmul.f32 %v3617, %v3665
      %v3685 = vmul.f32 %v3631, %v3669
      %v3686 = vmul.f32 %v3630, %v3641
      %v3687 = vmul.f32 %v3628, %v3645
      %v3688 = vmul.f32 %v3626, %v3649
      %v3689 = vmul.f32 %v3624, %v3653
      %v3690 = vmul.f32 %v3622, %v3657
      %v3691 = vmul.f32 %v3620, %v3661
      %v3692 = vmul.f32 %v3618, %v3665
      %v3693 = vmul.f32 %v3632, %v3669
      %s3694 = scalar_lea.vmem %s3, 56
      %v3695 = vld [vmem:[%s3694] sm:$0xff]
      %v3697 = vsel %vm915, %v3695, 0
      %v3700 = vsel %vm919, %v3686, 0
      %v3703 = vsel %vm919, %v3687, 0
      %v3706 = vsel %vm919, %v3688, 0
      %v3709 = vsel %vm919, %v3689, 0
      %v3712 = vsel %vm919, %v3690, 0
      %v3715 = vsel %vm919, %v3691, 0
      %v3718 = vsel %vm919, %v3692, 0
      %v3721 = vsel %vm919, %v3693, 0
      %3723 = vmatprep.subr.mxu0 %v3679
      %3724 = vmatpush1.msra.mxu0 %v3678
      %3725 = vmatprep.subr.mxu0 %v3703
      %3726 = vmatpush1.msra.mxu0 %v3700
      %3727 = vmatprep.subr.mxu0 0.0
      %3728 = vmatpush1.msra.mxu0 0.0
      %3729 = vmatprep.subr.mxu0 0.0
      %3730 = vmatpush1.msra.mxu0 0.0
      %3731 = vmatprep.subr.mxu0 0.0
      %3732 = vmatpush1.msra.mxu0 0.0
      %3733 = vmatprep.subr.mxu0 0.0
      %3734 = vmatpush1.msra.mxu0 0.0
      %3735 = vmatprep.subr.mxu0 0.0
      %3736 = vmatpush1.msra.mxu0 0.0
      %3737 = vmatprep.subr.mxu0 0.0
      %3738 = vmatpush1.msra.mxu0 0.0
      %3739 = vmatprep.subr.mxu0 0.0
      %3740 = vmatpush1.msra.mxu0 0.0
      %3741 = vmatprep.subr.mxu0 0.0
      %3742 = vmatpush1.msra.mxu0 0.0
      %3743 = vmatprep.subr.mxu0 0.0
      %3744 = vmatpush1.msra.mxu0 0.0
      %3745 = vmatprep.subr.mxu0 0.0
      %3746 = vmatpush1.msra.mxu0 0.0
      %3747 = vmatprep.subr.mxu0 0.0
      %3748 = vmatpush1.msra.mxu0 0.0
      %3749 = vmatprep.subr.mxu0 0.0
      %3750 = vmatpush1.msra.mxu0 0.0
      %3751 = vmatprep.subr.mxu0 0.0
      %3752 = vmatpush1.msra.mxu0 0.0
      %3753 = vmatprep.subr.mxu0 0.0
      %3754 = vmatpush1.msra.mxu0 0.0
      %3755 = vmatprep.subr.mxu0 0.0
      %3756 = vmatpush1.msra.mxu0 0.0
      %3757 = vmatprep.subr.mxu0 0.0
      %3758 = vmatpush1.msra.mxu0 0.0
      %3759 = vmatprep.subr.mxu0 0.0
      %3760 = vmatpush1.msra.mxu0 0.0
      %3761 = vmatprep.subr.mxu0 0.0
      %3762 = vmatpush1.msra.mxu0 0.0
      %3763 = vmatprep.subr.mxu0 0.0
      %3764 = vmatpush1.msra.mxu0 0.0
      %3765 = vmatprep.subr.mxu0 0.0
      %3766 = vmatpush1.msra.mxu0 0.0
      %3767 = vmatprep.subr.mxu0 0.0
      %3768 = vmatpush1.msra.mxu0 0.0
      %3769 = vmatprep.subr.mxu0 0.0
      %3770 = vmatpush1.msra.mxu0 0.0
      %3771 = vmatprep.subr.mxu0 0.0
      %3772 = vmatpush1.msra.mxu0 0.0
      %3773 = vmatprep.subr.mxu0 0.0
      %3774 = vmatpush1.msra.mxu0 0.0
      %3775 = vmatprep.subr.mxu0 0.0
      %3776 = vmatpush1.msra.mxu0 0.0
      %3777 = vmatprep.subr.mxu0 0.0
      %3778 = vmatpush1.msra.mxu0 0.0
      %3779 = vmatprep.subr.mxu0 0.0
      %3780 = vmatpush1.msra.mxu0 0.0
      %3781 = vmatprep.subr.mxu0 0.0
      %3782 = vmatpush1.msra.mxu0 0.0
      %3783 = vmatprep.subr.mxu0 0.0
      %3784 = vmatpush1.msra.mxu0 0.0
      %3785 = vmatprep.subr.mxu0 0.0
      %3786 = vmatpush1.msra.mxu0 0.0
      %3787 = vmatprep.mubr.f32.mxu0 0.0
      %3788 = vmatmul.mubr.f32.gmra.mrb[0].mxu0 %v3697
      %v3789 = vpop.f32.mrb[0].mxu0
      %v3790 = vadd.f32 0.0, %v3789
      %v3791 = vpop.f32.mrb[0].mxu0
      %v3792 = vadd.f32 0.0, %v3791
      %3793 = vdwg.mxu0
      %3794 = vmatprep.subr.mxu0 %v3681
      %3795 = vmatpush1.msra.mxu0 %v3680
      %3796 = vmatprep.subr.mxu0 %v3709
      %3797 = vmatpush1.msra.mxu0 %v3706
      %3798 = vmatprep.subr.mxu0 0.0
      %3799 = vmatpush1.msra.mxu0 0.0
      %3800 = vmatprep.subr.mxu0 0.0
      %3801 = vmatpush1.msra.mxu0 0.0
      %3802 = vmatprep.subr.mxu0 0.0
      %3803 = vmatpush1.msra.mxu0 0.0
      %3804 = vmatprep.subr.mxu0 0.0
      %3805 = vmatpush1.msra.mxu0 0.0
      %3806 = vmatprep.subr.mxu0 0.0
      %3807 = vmatpush1.msra.mxu0 0.0
      %3808 = vmatprep.subr.mxu0 0.0
      %3809 = vmatpush1.msra.mxu0 0.0
      %3810 = vmatprep.subr.mxu0 0.0
      %3811 = vmatpush1.msra.mxu0 0.0
      %3812 = vmatprep.subr.mxu0 0.0
      %3813 = vmatpush1.msra.mxu0 0.0
      %3814 = vmatprep.subr.mxu0 0.0
      %3815 = vmatpush1.msra.mxu0 0.0
      %3816 = vmatprep.subr.mxu0 0.0
      %3817 = vmatpush1.msra.mxu0 0.0
      %3818 = vmatprep.subr.mxu0 0.0
      %3819 = vmatpush1.msra.mxu0 0.0
      %3820 = vmatprep.subr.mxu0 0.0
      %3821 = vmatpush1.msra.mxu0 0.0
      %3822 = vmatprep.subr.mxu0 0.0
      %3823 = vmatpush1.msra.mxu0 0.0
      %3824 = vmatprep.subr.mxu0 0.0
      %3825 = vmatpush1.msra.mxu0 0.0
      %3826 = vmatprep.subr.mxu0 0.0
      %3827 = vmatpush1.msra.mxu0 0.0
      %3828 = vmatprep.subr.mxu0 0.0
      %3829 = vmatpush1.msra.mxu0 0.0
      %3830 = vmatprep.subr.mxu0 0.0
      %3831 = vmatpush1.msra.mxu0 0.0
      %3832 = vmatprep.subr.mxu0 0.0
      %3833 = vmatpush1.msra.mxu0 0.0
      %3834 = vmatprep.subr.mxu0 0.0
      %3835 = vmatpush1.msra.mxu0 0.0
      %3836 = vmatprep.subr.mxu0 0.0
      %3837 = vmatpush1.msra.mxu0 0.0
      %3838 = vmatprep.subr.mxu0 0.0
      %3839 = vmatpush1.msra.mxu0 0.0
      %3840 = vmatprep.subr.mxu0 0.0
      %3841 = vmatpush1.msra.mxu0 0.0
      %3842 = vmatprep.subr.mxu0 0.0
      %3843 = vmatpush1.msra.mxu0 0.0
      %3844 = vmatprep.subr.mxu0 0.0
      %3845 = vmatpush1.msra.mxu0 0.0
      %3846 = vmatprep.subr.mxu0 0.0
      %3847 = vmatpush1.msra.mxu0 0.0
      %3848 = vmatprep.subr.mxu0 0.0
      %3849 = vmatpush1.msra.mxu0 0.0
      %3850 = vmatprep.subr.mxu0 0.0
      %3851 = vmatpush1.msra.mxu0 0.0
      %3852 = vmatprep.subr.mxu0 0.0
      %3853 = vmatpush1.msra.mxu0 0.0
      %3854 = vmatprep.subr.mxu0 0.0
      %3855 = vmatpush1.msra.mxu0 0.0
      %3856 = vmatprep.subr.mxu0 0.0
      %3857 = vmatpush1.msra.mxu0 0.0
      %3858 = vmatprep.mubr.f32.mxu0 0.0
      %3859 = vmatmul.mubr.f32.gmra.mrb[0].mxu0 %v3697
      %v3860 = vpop.f32.mrb[0].mxu0
      %v3861 = vadd.f32 0.0, %v3860
      %v3862 = vpop.f32.mrb[0].mxu0
      %v3863 = vadd.f32 0.0, %v3862
      %3864 = vdwg.mxu0
      %3865 = vmatprep.subr.mxu0 %v3683
      %3866 = vmatpush1.msra.mxu0 %v3682
      %3867 = vmatprep.subr.mxu0 %v3715
      %3868 = vmatpush1.msra.mxu0 %v3712
      %3869 = vmatprep.subr.mxu0 0.0
      %3870 = vmatpush1.msra.mxu0 0.0
      %3871 = vmatprep.subr.mxu0 0.0
      %3872 = vmatpush1.msra.mxu0 0.0
      %3873 = vmatprep.subr.mxu0 0.0
      %3874 = vmatpush1.msra.mxu0 0.0
      %3875 = vmatprep.subr.mxu0 0.0
      %3876 = vmatpush1.msra.mxu0 0.0
      %3877 = vmatprep.subr.mxu0 0.0
      %3878 = vmatpush1.msra.mxu0 0.0
      %3879 = vmatprep.subr.mxu0 0.0
      %3880 = vmatpush1.msra.mxu0 0.0
      %3881 = vmatprep.subr.mxu0 0.0
      %3882 = vmatpush1.msra.mxu0 0.0
      %3883 = vmatprep.subr.mxu0 0.0
      %3884 = vmatpush1.msra.mxu0 0.0
      %3885 = vmatprep.subr.mxu0 0.0
      %3886 = vmatpush1.msra.mxu0 0.0
      %3887 = vmatprep.subr.mxu0 0.0
      %3888 = vmatpush1.msra.mxu0 0.0
      %3889 = vmatprep.subr.mxu0 0.0
      %3890 = vmatpush1.msra.mxu0 0.0
      %3891 = vmatprep.subr.mxu0 0.0
      %3892 = vmatpush1.msra.mxu0 0.0
      %3893 = vmatprep.subr.mxu0 0.0
      %3894 = vmatpush1.msra.mxu0 0.0
      %3895 = vmatprep.subr.mxu0 0.0
      %3896 = vmatpush1.msra.mxu0 0.0
      %3897 = vmatprep.subr.mxu0 0.0
      %3898 = vmatpush1.msra.mxu0 0.0
      %3899 = vmatprep.subr.mxu0 0.0
      %3900 = vmatpush1.msra.mxu0 0.0
      %3901 = vmatprep.subr.mxu0 0.0
      %3902 = vmatpush1.msra.mxu0 0.0
      %3903 = vmatprep.subr.mxu0 0.0
      %3904 = vmatpush1.msra.mxu0 0.0
      %3905 = vmatprep.subr.mxu0 0.0
      %3906 = vmatpush1.msra.mxu0 0.0
      %3907 = vmatprep.subr.mxu0 0.0
      %3908 = vmatpush1.msra.mxu0 0.0
      %3909 = vmatprep.subr.mxu0 0.0
      %3910 = vmatpush1.msra.mxu0 0.0
      %3911 = vmatprep.subr.mxu0 0.0
      %3912 = vmatpush1.msra.mxu0 0.0
      %3913 = vmatprep.subr.mxu0 0.0
      %3914 = vmatpush1.msra.mxu0 0.0
      %3915 = vmatprep.subr.mxu0 0.0
      %3916 = vmatpush1.msra.mxu0 0.0
      %3917 = vmatprep.subr.mxu0 0.0
      %3918 = vmatpush1.msra.mxu0 0.0
      %3919 = vmatprep.subr.mxu0 0.0
      %3920 = vmatpush1.msra.mxu0 0.0
      %3921 = vmatprep.subr.mxu0 0.0
      %3922 = vmatpush1.msra.mxu0 0.0
      %3923 = vmatprep.subr.mxu0 0.0
      %3924 = vmatpush1.msra.mxu0 0.0
      %3925 = vmatprep.subr.mxu0 0.0
      %3926 = vmatpush1.msra.mxu0 0.0
      %3927 = vmatprep.subr.mxu0 0.0
      %3928 = vmatpush1.msra.mxu0 0.0
      %3929 = vmatprep.mubr.f32.mxu0 0.0
      %3930 = vmatmul.mubr.f32.gmra.mrb[0].mxu0 %v3697
      %v3931 = vpop.f32.mrb[0].mxu0
      %v3932 = vadd.f32 0.0, %v3931
      %v3933 = vpop.f32.mrb[0].mxu0
      %v3934 = vadd.f32 0.0, %v3933
      %3935 = vdwg.mxu0
      %3936 = vmatprep.subr.mxu0 %v3685
      %3937 = vmatpush1.msra.mxu0 %v3684
      %3938 = vmatprep.subr.mxu0 %v3721
      %3939 = vmatpush1.msra.mxu0 %v3718
      %3940 = vmatprep.subr.mxu0 0.0
      %3941 = vmatpush1.msra.mxu0 0.0
      %3942 = vmatprep.subr.mxu0 0.0
      %3943 = vmatpush1.msra.mxu0 0.0
      %3944 = vmatprep.subr.mxu0 0.0
      %3945 = vmatpush1.msra.mxu0 0.0
      %3946 = vmatprep.subr.mxu0 0.0
      %3947 = vmatpush1.msra.mxu0 0.0
      %3948 = vmatprep.subr.mxu0 0.0
      %3949 = vmatpush1.msra.mxu0 0.0
      %3950 = vmatprep.subr.mxu0 0.0
      %3951 = vmatpush1.msra.mxu0 0.0
      %3952 = vmatprep.subr.mxu0 0.0
      %3953 = vmatpush1.msra.mxu0 0.0
      %3954 = vmatprep.subr.mxu0 0.0
      %3955 = vmatpush1.msra.mxu0 0.0
      %3956 = vmatprep.subr.mxu0 0.0
      %3957 = vmatpush1.msra.mxu0 0.0
      %3958 = vmatprep.subr.mxu0 0.0
      %3959 = vmatpush1.msra.mxu0 0.0
      %3960 = vmatprep.subr.mxu0 0.0
      %3961 = vmatpush1.msra.mxu0 0.0
      %3962 = vmatprep.subr.mxu0 0.0
      %3963 = vmatpush1.msra.mxu0 0.0
      %3964 = vmatprep.subr.mxu0 0.0
      %3965 = vmatpush1.msra.mxu0 0.0
      %3966 = vmatprep.subr.mxu0 0.0
      %3967 = vmatpush1.msra.mxu0 0.0
      %3968 = vmatprep.subr.mxu0 0.0
      %3969 = vmatpush1.msra.mxu0 0.0
      %3970 = vmatprep.subr.mxu0 0.0
      %3971 = vmatpush1.msra.mxu0 0.0
      %3972 = vmatprep.subr.mxu0 0.0
      %3973 = vmatpush1.msra.mxu0 0.0
      %3974 = vmatprep.subr.mxu0 0.0
      %3975 = vmatpush1.msra.mxu0 0.0
      %3976 = vmatprep.subr.mxu0 0.0
      %3977 = vmatpush1.msra.mxu0 0.0
      %3978 = vmatprep.subr.mxu0 0.0
      %3979 = vmatpush1.msra.mxu0 0.0
      %3980 = vmatprep.subr.mxu0 0.0
      %3981 = vmatpush1.msra.mxu0 0.0
      %3982 = vmatprep.subr.mxu0 0.0
      %3983 = vmatpush1.msra.mxu0 0.0
      %3984 = vmatprep.subr.mxu0 0.0
      %3985 = vmatpush1.msra.mxu0 0.0
      %3986 = vmatprep.subr.mxu0 0.0
      %3987 = vmatpush1.msra.mxu0 0.0
      %3988 = vmatprep.subr.mxu0 0.0
      %3989 = vmatpush1.msra.mxu0 0.0
      %3990 = vmatprep.subr.mxu0 0.0
      %3991 = vmatpush1.msra.mxu0 0.0
      %3992 = vmatprep.subr.mxu0 0.0
      %3993 = vmatpush1.msra.mxu0 0.0
      %3994 = vmatprep.subr.mxu0 0.0
      %3995 = vmatpush1.msra.mxu0 0.0
      %3996 = vmatprep.subr.mxu0 0.0
      %3997 = vmatpush1.msra.mxu0 0.0
      %3998 = vmatprep.subr.mxu0 0.0
      %3999 = vmatpush1.msra.mxu0 0.0
      %4000 = vmatprep.mubr.f32.mxu0 0.0
      %4001 = vmatmul.mubr.f32.gmra.mrb[0].mxu0 %v3697
      %v4002 = vpop.f32.mrb[0].mxu0
      %v4003 = vadd.f32 0.0, %v4002
      %v4004 = vpop.f32.mrb[0].mxu0
      %v4005 = vadd.f32 0.0, %v4004
      %4006 = vdwg.mxu0
      %v4007 = vadd.f32 %v3576, %v3790
      %v4008 = vadd.f32 %v3577, %v3792
      %v4009 = vadd.f32 %v3578, %v3861
      %v4010 = vadd.f32 %v3579, %v3863
      %v4011 = vadd.f32 %v3580, %v3932
      %v4012 = vadd.f32 %v3581, %v3934
      %v4013 = vadd.f32 %v3582, %v4003
      %v4014 = vadd.f32 %v3583, %v4005
      %4015 = vrot.lane.b32.xlu0 %v423, 111
      %v4016 = vpop.permute.xlu0 %4015
      %4017 = vrot.lane.b32.xlu0 %v429, 111
      %v4018 = vpop.permute.xlu0 %4017
      %4019 = vrot.lane.b32.xlu0 %v425, 111
      %v4020 = vpop.permute.xlu0 %4019
      %4021 = vrot.lane.b32.xlu0 %v431, 111
      %v4022 = vpop.permute.xlu0 %4021
      %4023 = vrot.lane.b32.xlu0 %v509, 111
      %v4024 = vpop.permute.xlu0 %4023
      %4025 = vrot.lane.b32.xlu0 %v515, 111
      %v4026 = vpop.permute.xlu0 %4025
      %4027 = vrot.lane.b32.xlu0 %v511, 111
      %v4028 = vpop.permute.xlu0 %4027
      %4029 = vrot.lane.b32.xlu0 %v517, 111
      %v4030 = vpop.permute.xlu0 %4029
      %4031 = vrot.lane.b32.xlu0 %v595, 111
      %v4032 = vpop.permute.xlu0 %4031
      %4033 = vrot.lane.b32.xlu0 %v601, 111
      %v4034 = vpop.permute.xlu0 %4033
      %4035 = vrot.lane.b32.xlu0 %v597, 111
      %v4036 = vpop.permute.xlu0 %4035
      %4037 = vrot.lane.b32.xlu0 %v603, 111
      %v4038 = vpop.permute.xlu0 %4037
      %4039 = vrot.lane.b32.xlu0 %v681, 111
      %v4040 = vpop.permute.xlu0 %4039
      %4041 = vrot.lane.b32.xlu0 %v687, 111
      %v4042 = vpop.permute.xlu0 %4041
      %4043 = vrot.lane.b32.xlu0 %v683, 111
      %v4044 = vpop.permute.xlu0 %4043
      %4045 = vrot.lane.b32.xlu0 %v689, 111
      %v4046 = vpop.permute.xlu0 %4045
      %vm4047 = vcmp.lt.s32.totalorder %v724, 111
      %v4048 = vsel %vm4047, %v4040, %v4044
      %v4049 = vsel %vm4047, %v4042, %v4046
      %v4050 = vsel %vm4047, %v4036, %v4040
      %v4051 = vsel %vm4047, %v4038, %v4042
      %v4052 = vsel %vm4047, %v4032, %v4036
      %v4053 = vsel %vm4047, %v4034, %v4038
      %v4054 = vsel %vm4047, %v4028, %v4032
      %v4055 = vsel %vm4047, %v4030, %v4034
      %v4056 = vsel %vm4047, %v4024, %v4028
      %v4057 = vsel %vm4047, %v4026, %v4030
      %v4058 = vsel %vm4047, %v4020, %v4024
      %v4059 = vsel %vm4047, %v4022, %v4026
      %v4060 = vsel %vm4047, %v4016, %v4020
      %v4061 = vsel %vm4047, %v4018, %v4022
      %v4062 = vsel %vm4047, %v4044, %v4016
      %v4063 = vsel %vm4047, %v4046, %v4018
      %s4064 = scalar_lea.vmem %s2, 64
      %v4065 = vld [vmem:[%s4064] ss:$8 sm:$0xf]
      %v4066 = vld [vmem:[%s4064] ss:$8 sm:$0xf0]
      %v4067 = vor.u32 %v4065, %v4066
      %v4069 = vlaneseq
      %v4070 = vshrl.u32 %v4069, 7
      %v4071 = vsub.s32 0, %v4070
      %v4072 = vrot.slane %v4067, %v4071
      %v4073 = vlaneseq
      %v4074 = vshrl.u32 %v4073, 7
      %v4075 = vsub.s32 1, %v4074
      %v4076 = vrot.slane %v4067, %v4075
      %v4077 = vlaneseq
      %v4078 = vshrl.u32 %v4077, 7
      %v4079 = vsub.s32 2, %v4078
      %v4080 = vrot.slane %v4067, %v4079
      %v4081 = vlaneseq
      %v4082 = vshrl.u32 %v4081, 7
      %v4083 = vsub.s32 3, %v4082
      %v4084 = vrot.slane %v4067, %v4083
      %v4085 = vlaneseq
      %v4086 = vshrl.u32 %v4085, 7
      %v4087 = vsub.s32 4, %v4086
      %v4088 = vrot.slane %v4067, %v4087
      %v4089 = vlaneseq
      %v4090 = vshrl.u32 %v4089, 7
      %v4091 = vsub.s32 5, %v4090
      %v4092 = vrot.slane %v4067, %v4091
      %v4093 = vlaneseq
      %v4094 = vshrl.u32 %v4093, 7
      %v4095 = vsub.s32 6, %v4094
      %v4096 = vrot.slane %v4067, %v4095
      %v4097 = vlaneseq
      %v4098 = vshrl.u32 %v4097, 7
      %v4099 = vsub.s32 7, %v4098
      %v4100 = vrot.slane %v4067, %v4099
      %v4109 = vmul.f32 %v4060, %v4072
      %v4110 = vmul.f32 %v4058, %v4076
      %v4111 = vmul.f32 %v4056, %v4080
      %v4112 = vmul.f32 %v4054, %v4084
      %v4113 = vmul.f32 %v4052, %v4088
      %v4114 = vmul.f32 %v4050, %v4092
      %v4115 = vmul.f32 %v4048, %v4096
      %v4116 = vmul.f32 %v4062, %v4100
      %v4117 = vmul.f32 %v4061, %v4072
      %v4118 = vmul.f32 %v4059, %v4076
      %v4119 = vmul.f32 %v4057, %v4080
      %v4120 = vmul.f32 %v4055, %v4084
      %v4121 = vmul.f32 %v4053, %v4088
      %v4122 = vmul.f32 %v4051, %v4092
      %v4123 = vmul.f32 %v4049, %v4096
      %v4124 = vmul.f32 %v4063, %v4100
      %s4125 = scalar_lea.vmem %s3, 64
      %v4126 = vld [vmem:[%s4125] sm:$0xff]
      %v4128 = vsel %vm915, %v4126, 0
      %v4131 = vsel %vm919, %v4117, 0
      %v4134 = vsel %vm919, %v4118, 0
      %v4137 = vsel %vm919, %v4119, 0
      %v4140 = vsel %vm919, %v4120, 0
      %v4143 = vsel %vm919, %v4121, 0
      %v4146 = vsel %vm919, %v4122, 0
      %v4149 = vsel %vm919, %v4123, 0
      %v4152 = vsel %vm919, %v4124, 0
      %4154 = vmatprep.subr.mxu0 %v4110
      %4155 = vmatpush1.msra.mxu0 %v4109
      %4156 = vmatprep.subr.mxu0 %v4134
      %4157 = vmatpush1.msra.mxu0 %v4131
      %4158 = vmatprep.subr.mxu0 0.0
      %4159 = vmatpush1.msra.mxu0 0.0
      %4160 = vmatprep.subr.mxu0 0.0
      %4161 = vmatpush1.msra.mxu0 0.0
      %4162 = vmatprep.subr.mxu0 0.0
      %4163 = vmatpush1.msra.mxu0 0.0
      %4164 = vmatprep.subr.mxu0 0.0
      %4165 = vmatpush1.msra.mxu0 0.0
      %4166 = vmatprep.subr.mxu0 0.0
      %4167 = vmatpush1.msra.mxu0 0.0
      %4168 = vmatprep.subr.mxu0 0.0
      %4169 = vmatpush1.msra.mxu0 0.0
      %4170 = vmatprep.subr.mxu0 0.0
      %4171 = vmatpush1.msra.mxu0 0.0
      %4172 = vmatprep.subr.mxu0 0.0
      %4173 = vmatpush1.msra.mxu0 0.0
      %4174 = vmatprep.subr.mxu0 0.0
      %4175 = vmatpush1.msra.mxu0 0.0
      %4176 = vmatprep.subr.mxu0 0.0
      %4177 = vmatpush1.msra.mxu0 0.0
      %4178 = vmatprep.subr.mxu0 0.0
      %4179 = vmatpush1.msra.mxu0 0.0
      %4180 = vmatprep.subr.mxu0 0.0
      %4181 = vmatpush1.msra.mxu0 0.0
      %4182 = vmatprep.subr.mxu0 0.0
      %4183 = vmatpush1.msra.mxu0 0.0
      %4184 = vmatprep.subr.mxu0 0.0
      %4185 = vmatpush1.msra.mxu0 0.0
      %4186 = vmatprep.subr.mxu0 0.0
      %4187 = vmatpush1.msra.mxu0 0.0
      %4188 = vmatprep.subr.mxu0 0.0
      %4189 = vmatpush1.msra.mxu0 0.0
      %4190 = vmatprep.subr.mxu0 0.0
      %4191 = vmatpush1.msra.mxu0 0.0
      %4192 = vmatprep.subr.mxu0 0.0
      %4193 = vmatpush1.msra.mxu0 0.0
      %4194 = vmatprep.subr.mxu0 0.0
      %4195 = vmatpush1.msra.mxu0 0.0
      %4196 = vmatprep.subr.mxu0 0.0
      %4197 = vmatpush1.msra.mxu0 0.0
      %4198 = vmatprep.subr.mxu0 0.0
      %4199 = vmatpush1.msra.mxu0 0.0
      %4200 = vmatprep.subr.mxu0 0.0
      %4201 = vmatpush1.msra.mxu0 0.0
      %4202 = vmatprep.subr.mxu0 0.0
      %4203 = vmatpush1.msra.mxu0 0.0
      %4204 = vmatprep.subr.mxu0 0.0
      %4205 = vmatpush1.msra.mxu0 0.0
      %4206 = vmatprep.subr.mxu0 0.0
      %4207 = vmatpush1.msra.mxu0 0.0
      %4208 = vmatprep.subr.mxu0 0.0
      %4209 = vmatpush1.msra.mxu0 0.0
      %4210 = vmatprep.subr.mxu0 0.0
      %4211 = vmatpush1.msra.mxu0 0.0
      %4212 = vmatprep.subr.mxu0 0.0
      %4213 = vmatpush1.msra.mxu0 0.0
      %4214 = vmatprep.subr.mxu0 0.0
      %4215 = vmatpush1.msra.mxu0 0.0
      %4216 = vmatprep.subr.mxu0 0.0
      %4217 = vmatpush1.msra.mxu0 0.0
      %4218 = vmatprep.mubr.f32.mxu0 0.0
      %4219 = vmatmul.mubr.f32.gmra.mrb[0].mxu0 %v4128
      %v4220 = vpop.f32.mrb[0].mxu0
      %v4221 = vadd.f32 0.0, %v4220
      %v4222 = vpop.f32.mrb[0].mxu0
      %v4223 = vadd.f32 0.0, %v4222
      %4224 = vdwg.mxu0
      %4225 = vmatprep.subr.mxu0 %v4112
      %4226 = vmatpush1.msra.mxu0 %v4111
      %4227 = vmatprep.subr.mxu0 %v4140
      %4228 = vmatpush1.msra.mxu0 %v4137
      %4229 = vmatprep.subr.mxu0 0.0
      %4230 = vmatpush1.msra.mxu0 0.0
      %4231 = vmatprep.subr.mxu0 0.0
      %4232 = vmatpush1.msra.mxu0 0.0
      %4233 = vmatprep.subr.mxu0 0.0
      %4234 = vmatpush1.msra.mxu0 0.0
      %4235 = vmatprep.subr.mxu0 0.0
      %4236 = vmatpush1.msra.mxu0 0.0
      %4237 = vmatprep.subr.mxu0 0.0
      %4238 = vmatpush1.msra.mxu0 0.0
      %4239 = vmatprep.subr.mxu0 0.0
      %4240 = vmatpush1.msra.mxu0 0.0
      %4241 = vmatprep.subr.mxu0 0.0
      %4242 = vmatpush1.msra.mxu0 0.0
      %4243 = vmatprep.subr.mxu0 0.0
      %4244 = vmatpush1.msra.mxu0 0.0
      %4245 = vmatprep.subr.mxu0 0.0
      %4246 = vmatpush1.msra.mxu0 0.0
      %4247 = vmatprep.subr.mxu0 0.0
      %4248 = vmatpush1.msra.mxu0 0.0
      %4249 = vmatprep.subr.mxu0 0.0
      %4250 = vmatpush1.msra.mxu0 0.0
      %4251 = vmatprep.subr.mxu0 0.0
      %4252 = vmatpush1.msra.mxu0 0.0
      %4253 = vmatprep.subr.mxu0 0.0
      %4254 = vmatpush1.msra.mxu0 0.0
      %4255 = vmatprep.subr.mxu0 0.0
      %4256 = vmatpush1.msra.mxu0 0.0
      %4257 = vmatprep.subr.mxu0 0.0
      %4258 = vmatpush1.msra.mxu0 0.0
      %4259 = vmatprep.subr.mxu0 0.0
      %4260 = vmatpush1.msra.mxu0 0.0
      %4261 = vmatprep.subr.mxu0 0.0
      %4262 = vmatpush1.msra.mxu0 0.0
      %4263 = vmatprep.subr.mxu0 0.0
      %4264 = vmatpush1.msra.mxu0 0.0
      %4265 = vmatprep.subr.mxu0 0.0
      %4266 = vmatpush1.msra.mxu0 0.0
      %4267 = vmatprep.subr.mxu0 0.0
      %4268 = vmatpush1.msra.mxu0 0.0
      %4269 = vmatprep.subr.mxu0 0.0
      %4270 = vmatpush1.msra.mxu0 0.0
      %4271 = vmatprep.subr.mxu0 0.0
      %4272 = vmatpush1.msra.mxu0 0.0
      %4273 = vmatprep.subr.mxu0 0.0
      %4274 = vmatpush1.msra.mxu0 0.0
      %4275 = vmatprep.subr.mxu0 0.0
      %4276 = vmatpush1.msra.mxu0 0.0
      %4277 = vmatprep.subr.mxu0 0.0
      %4278 = vmatpush1.msra.mxu0 0.0
      %4279 = vmatprep.subr.mxu0 0.0
      %4280 = vmatpush1.msra.mxu0 0.0
      %4281 = vmatprep.subr.mxu0 0.0
      %4282 = vmatpush1.msra.mxu0 0.0
      %4283 = vmatprep.subr.mxu0 0.0
      %4284 = vmatpush1.msra.mxu0 0.0
      %4285 = vmatprep.subr.mxu0 0.0
      %4286 = vmatpush1.msra.mxu0 0.0
      %4287 = vmatprep.subr.mxu0 0.0
      %4288 = vmatpush1.msra.mxu0 0.0
      %4289 = vmatprep.mubr.f32.mxu0 0.0
      %4290 = vmatmul.mubr.f32.gmra.mrb[0].mxu0 %v4128
      %v4291 = vpop.f32.mrb[0].mxu0
      %v4292 = vadd.f32 0.0, %v4291
      %v4293 = vpop.f32.mrb[0].mxu0
      %v4294 = vadd.f32 0.0, %v4293
      %4295 = vdwg.mxu0
      %4296 = vmatprep.subr.mxu0 %v4114
      %4297 = vmatpush1.msra.mxu0 %v4113
      %4298 = vmatprep.subr.mxu0 %v4146
      %4299 = vmatpush1.msra.mxu0 %v4143
      %4300 = vmatprep.subr.mxu0 0.0
      %4301 = vmatpush1.msra.mxu0 0.0
      %4302 = vmatprep.subr.mxu0 0.0
      %4303 = vmatpush1.msra.mxu0 0.0
      %4304 = vmatprep.subr.mxu0 0.0
      %4305 = vmatpush1.msra.mxu0 0.0
      %4306 = vmatprep.subr.mxu0 0.0
      %4307 = vmatpush1.msra.mxu0 0.0
      %4308 = vmatprep.subr.mxu0 0.0
      %4309 = vmatpush1.msra.mxu0 0.0
      %4310 = vmatprep.subr.mxu0 0.0
      %4311 = vmatpush1.msra.mxu0 0.0
      %4312 = vmatprep.subr.mxu0 0.0
      %4313 = vmatpush1.msra.mxu0 0.0
      %4314 = vmatprep.subr.mxu0 0.0
      %4315 = vmatpush1.msra.mxu0 0.0
      %4316 = vmatprep.subr.mxu0 0.0
      %4317 = vmatpush1.msra.mxu0 0.0
      %4318 = vmatprep.subr.mxu0 0.0
      %4319 = vmatpush1.msra.mxu0 0.0
      %4320 = vmatprep.subr.mxu0 0.0
      %4321 = vmatpush1.msra.mxu0 0.0
      %4322 = vmatprep.subr.mxu0 0.0
      %4323 = vmatpush1.msra.mxu0 0.0
      %4324 = vmatprep.subr.mxu0 0.0
      %4325 = vmatpush1.msra.mxu0 0.0
      %4326 = vmatprep.subr.mxu0 0.0
      %4327 = vmatpush1.msra.mxu0 0.0
      %4328 = vmatprep.subr.mxu0 0.0
      %4329 = vmatpush1.msra.mxu0 0.0
      %4330 = vmatprep.subr.mxu0 0.0
      %4331 = vmatpush1.msra.mxu0 0.0
      %4332 = vmatprep.subr.mxu0 0.0
      %4333 = vmatpush1.msra.mxu0 0.0
      %4334 = vmatprep.subr.mxu0 0.0
      %4335 = vmatpush1.msra.mxu0 0.0
      %4336 = vmatprep.subr.mxu0 0.0
      %4337 = vmatpush1.msra.mxu0 0.0
      %4338 = vmatprep.subr.mxu0 0.0
      %4339 = vmatpush1.msra.mxu0 0.0
      %4340 = vmatprep.subr.mxu0 0.0
      %4341 = vmatpush1.msra.mxu0 0.0
      %4342 = vmatprep.subr.mxu0 0.0
      %4343 = vmatpush1.msra.mxu0 0.0
      %4344 = vmatprep.subr.mxu0 0.0
      %4345 = vmatpush1.msra.mxu0 0.0
      %4346 = vmatprep.subr.mxu0 0.0
      %4347 = vmatpush1.msra.mxu0 0.0
      %4348 = vmatprep.subr.mxu0 0.0
      %4349 = vmatpush1.msra.mxu0 0.0
      %4350 = vmatprep.subr.mxu0 0.0
      %4351 = vmatpush1.msra.mxu0 0.0
      %4352 = vmatprep.subr.mxu0 0.0
      %4353 = vmatpush1.msra.mxu0 0.0
      %4354 = vmatprep.subr.mxu0 0.0
      %4355 = vmatpush1.msra.mxu0 0.0
      %4356 = vmatprep.subr.mxu0 0.0
      %4357 = vmatpush1.msra.mxu0 0.0
      %4358 = vmatprep.subr.mxu0 0.0
      %4359 = vmatpush1.msra.mxu0 0.0
      %4360 = vmatprep.mubr.f32.mxu0 0.0
      %4361 = vmatmul.mubr.f32.gmra.mrb[0].mxu0 %v4128
      %v4362 = vpop.f32.mrb[0].mxu0
      %v4363 = vadd.f32 0.0, %v4362
      %v4364 = vpop.f32.mrb[0].mxu0
      %v4365 = vadd.f32 0.0, %v4364
      %4366 = vdwg.mxu0
      %4367 = vmatprep.subr.mxu0 %v4116
      %4368 = vmatpush1.msra.mxu0 %v4115
      %4369 = vmatprep.subr.mxu0 %v4152
      %4370 = vmatpush1.msra.mxu0 %v4149
      %4371 = vmatprep.subr.mxu0 0.0
      %4372 = vmatpush1.msra.mxu0 0.0
      %4373 = vmatprep.subr.mxu0 0.0
      %4374 = vmatpush1.msra.mxu0 0.0
      %4375 = vmatprep.subr.mxu0 0.0
      %4376 = vmatpush1.msra.mxu0 0.0
      %4377 = vmatprep.subr.mxu0 0.0
      %4378 = vmatpush1.msra.mxu0 0.0
      %4379 = vmatprep.subr.mxu0 0.0
      %4380 = vmatpush1.msra.mxu0 0.0
      %4381 = vmatprep.subr.mxu0 0.0
      %4382 = vmatpush1.msra.mxu0 0.0
      %4383 = vmatprep.subr.mxu0 0.0
      %4384 = vmatpush1.msra.mxu0 0.0
      %4385 = vmatprep.subr.mxu0 0.0
      %4386 = vmatpush1.msra.mxu0 0.0
      %4387 = vmatprep.subr.mxu0 0.0
      %4388 = vmatpush1.msra.mxu0 0.0
      %4389 = vmatprep.subr.mxu0 0.0
      %4390 = vmatpush1.msra.mxu0 0.0
      %4391 = vmatprep.subr.mxu0 0.0
      %4392 = vmatpush1.msra.mxu0 0.0
      %4393 = vmatprep.subr.mxu0 0.0
      %4394 = vmatpush1.msra.mxu0 0.0
      %4395 = vmatprep.subr.mxu0 0.0
      %4396 = vmatpush1.msra.mxu0 0.0
      %4397 = vmatprep.subr.mxu0 0.0
      %4398 = vmatpush1.msra.mxu0 0.0
      %4399 = vmatprep.subr.mxu0 0.0
      %4400 = vmatpush1.msra.mxu0 0.0
      %4401 = vmatprep.subr.mxu0 0.0
      %4402 = vmatpush1.msra.mxu0 0.0
      %4403 = vmatprep.subr.mxu0 0.0
      %4404 = vmatpush1.msra.mxu0 0.0
      %4405 = vmatprep.subr.mxu0 0.0
      %4406 = vmatpush1.msra.mxu0 0.0
      %4407 = vmatprep.subr.mxu0 0.0
      %4408 = vmatpush1.msra.mxu0 0.0
      %4409 = vmatprep.subr.mxu0 0.0
      %4410 = vmatpush1.msra.mxu0 0.0
      %4411 = vmatprep.subr.mxu0 0.0
      %4412 = vmatpush1.msra.mxu0 0.0
      %4413 = vmatprep.subr.mxu0 0.0
      %4414 = vmatpush1.msra.mxu0 0.0
      %4415 = vmatprep.subr.mxu0 0.0
      %4416 = vmatpush1.msra.mxu0 0.0
      %4417 = vmatprep.subr.mxu0 0.0
      %4418 = vmatpush1.msra.mxu0 0.0
      %4419 = vmatprep.subr.mxu0 0.0
      %4420 = vmatpush1.msra.mxu0 0.0
      %4421 = vmatprep.subr.mxu0 0.0
      %4422 = vmatpush1.msra.mxu0 0.0
      %4423 = vmatprep.subr.mxu0 0.0
      %4424 = vmatpush1.msra.mxu0 0.0
      %4425 = vmatprep.subr.mxu0 0.0
      %4426 = vmatpush1.msra.mxu0 0.0
      %4427 = vmatprep.subr.mxu0 0.0
      %4428 = vmatpush1.msra.mxu0 0.0
      %4429 = vmatprep.subr.mxu0 0.0
      %4430 = vmatpush1.msra.mxu0 0.0
      %4431 = vmatprep.mubr.f32.mxu0 0.0
      %4432 = vmatmul.mubr.f32.gmra.mrb[0].mxu0 %v4128
      %v4433 = vpop.f32.mrb[0].mxu0
      %v4434 = vadd.f32 0.0, %v4433
      %v4435 = vpop.f32.mrb[0].mxu0
      %v4436 = vadd.f32 0.0, %v4435
      %4437 = vdwg.mxu0
      %v4438 = vadd.f32 %v4007, %v4221
      %v4439 = vadd.f32 %v4008, %v4223
      %v4440 = vadd.f32 %v4009, %v4292
      %v4441 = vadd.f32 %v4010, %v4294
      %v4442 = vadd.f32 %v4011, %v4363
      %v4443 = vadd.f32 %v4012, %v4365
      %v4444 = vadd.f32 %v4013, %v4434
      %v4445 = vadd.f32 %v4014, %v4436
      %v4446 = vld [vmem:[%s4] sm:$0xff]
      %4448 = vset.pattern.permute.xlu0 0
      %4449 = vperm.xlu0 %4448, %v4446
      %v4450 = vpop.permute.xlu0 %4449
      %v4452 = vadd.f32 %v4438, %v4450
      %v4453 = vadd.f32 %v4439, %v4450
      %v4454 = vadd.f32 %v4440, %v4450
      %v4455 = vadd.f32 %v4441, %v4450
      %v4456 = vadd.f32 %v4442, %v4450
      %v4457 = vadd.f32 %v4443, %v4450
      %v4458 = vadd.f32 %v4444, %v4450
      %v4459 = vadd.f32 %v4445, %v4450
      %vm4460 = vcmp.ge.f32.partialorder %v4452, 0.0
      %vm4461 = vcmp.ge.f32.partialorder %v4453, 0.0
      %vm4462 = vcmp.ge.f32.partialorder %v4454, 0.0
      %vm4463 = vcmp.ge.f32.partialorder %v4455, 0.0
      %vm4464 = vcmp.ge.f32.partialorder %v4456, 0.0
      %vm4465 = vcmp.ge.f32.partialorder %v4457, 0.0
      %vm4466 = vcmp.ge.f32.partialorder %v4458, 0.0
      %vm4467 = vcmp.ge.f32.partialorder %v4459, 0.0
      %v4468 = vmul.f32 %v4452, 0.1
      %v4469 = vmul.f32 %v4453, 0.1
      %v4470 = vmul.f32 %v4454, 0.1
      %v4471 = vmul.f32 %v4455, 0.1
      %v4472 = vmul.f32 %v4456, 0.1
      %v4473 = vmul.f32 %v4457, 0.1
      %v4474 = vmul.f32 %v4458, 0.1
      %v4475 = vmul.f32 %v4459, 0.1
      %v4476 = vsel %vm4460, %v4452, %v4468
      %v4477 = vsel %vm4461, %v4453, %v4469
      %v4478 = vsel %vm4462, %v4454, %v4470
      %v4479 = vsel %vm4463, %v4455, %v4471
      %v4480 = vsel %vm4464, %v4456, %v4472
      %v4481 = vsel %vm4465, %v4457, %v4473
      %v4482 = vsel %vm4466, %v4458, %v4474
      %v4483 = vsel %vm4467, %v4459, %v4475
      %4484 = vrot.lane.b32.xlu0 %v4476, 17
      %v4485 = vpop.permute.xlu0 %4484
      %4486 = vrot.lane.b32.xlu0 %v4477, 17
      %v4487 = vpop.permute.xlu0 %4486
      %4488 = vrot.lane.b32.xlu0 %v4478, 17
      %v4489 = vpop.permute.xlu0 %4488
      %4490 = vrot.lane.b32.xlu0 %v4479, 17
      %v4491 = vpop.permute.xlu0 %4490
      %4492 = vrot.lane.b32.xlu0 %v4480, 17
      %v4493 = vpop.permute.xlu0 %4492
      %4494 = vrot.lane.b32.xlu0 %v4481, 17
      %v4495 = vpop.permute.xlu0 %4494
      %4496 = vrot.lane.b32.xlu0 %v4482, 17
      %v4497 = vpop.permute.xlu0 %4496
      %4498 = vrot.lane.b32.xlu0 %v4483, 17
      %v4499 = vpop.permute.xlu0 %4498
      %v4500 = vsel %vm725, %v4497, %v4499
      %v4501 = vsel %vm725, %v4495, %v4497
      %v4502 = vsel %vm725, %v4493, %v4495
      %v4503 = vsel %vm725, %v4491, %v4493
      %v4504 = vsel %vm725, %v4489, %v4491
      %v4505 = vsel %vm725, %v4487, %v4489
      %v4506 = vsel %vm725, %v4485, %v4487
      %v4507 = vsel %vm725, %v4499, %v4485
      %v4508 = vmul.f32 %v4507, %v749
      %v4509 = vmul.f32 %v4506, %v753
      %v4510 = vmul.f32 %v4505, %v757
      %v4511 = vmul.f32 %v4504, %v761
      %v4512 = vmul.f32 %v4503, %v765
      %v4513 = vmul.f32 %v4502, %v769
      %v4514 = vmul.f32 %v4501, %v773
      %v4515 = vmul.f32 %v4500, %v777
      %v4516 = vld [vmem:[%s5] sm:$0xff]
      %4517 = vrot.lane.b32.xlu0 %v4476, 16
      %v4518 = vpop.permute.xlu0 %4517
      %4519 = vrot.lane.b32.xlu0 %v4477, 16
      %v4520 = vpop.permute.xlu0 %4519
      %4521 = vrot.lane.b32.xlu0 %v4478, 16
      %v4522 = vpop.permute.xlu0 %4521
      %4523 = vrot.lane.b32.xlu0 %v4479, 16
      %v4524 = vpop.permute.xlu0 %4523
      %4525 = vrot.lane.b32.xlu0 %v4480, 16
      %v4526 = vpop.permute.xlu0 %4525
      %4527 = vrot.lane.b32.xlu0 %v4481, 16
      %v4528 = vpop.permute.xlu0 %4527
      %4529 = vrot.lane.b32.xlu0 %v4482, 16
      %v4530 = vpop.permute.xlu0 %4529
      %4531 = vrot.lane.b32.xlu0 %v4483, 16
      %v4532 = vpop.permute.xlu0 %4531
      %v4533 = vsel %vm835, %v4530, %v4532
      %v4534 = vsel %vm835, %v4528, %v4530
      %v4535 = vsel %vm835, %v4526, %v4528
      %v4536 = vsel %vm835, %v4524, %v4526
      %v4537 = vsel %vm835, %v4522, %v4524
      %v4538 = vsel %vm835, %v4520, %v4522
      %v4539 = vsel %vm835, %v4518, %v4520
      %v4540 = vsel %vm835, %v4532, %v4518
      %v4541 = vmul.f32 %v4540, %v860
      %v4542 = vmul.f32 %v4539, %v864
      %v4543 = vmul.f32 %v4538, %v868
      %v4544 = vmul.f32 %v4537, %v872
      %v4545 = vmul.f32 %v4536, %v876
      %v4546 = vmul.f32 %v4535, %v880
      %v4547 = vmul.f32 %v4534, %v884
      %v4548 = vmul.f32 %v4533, %v888
      %s4549 = scalar_lea.vmem %s5, 8
      %v4550 = vld [vmem:[%s4549] sm:$0xff]
      %vm4551 = vcmask 64512
      %v4553 = vsel %vm4551, %v4550, 0
      %4555 = vmatprep.subr.mxu0 %v4542
      %4556 = vmatpush1.msra.mxu0 %v4541
      %4557 = vmatprep.subr.mxu0 0.0
      %4558 = vmatpush1.msra.mxu0 0.0
      %4559 = vmatprep.subr.mxu0 0.0
      %4560 = vmatpush1.msra.mxu0 0.0
      %4561 = vmatprep.subr.mxu0 0.0
      %4562 = vmatpush1.msra.mxu0 0.0
      %4563 = vmatprep.subr.mxu0 0.0
      %4564 = vmatpush1.msra.mxu0 0.0
      %4565 = vmatprep.subr.mxu0 0.0
      %4566 = vmatpush1.msra.mxu0 0.0
      %4567 = vmatprep.subr.mxu0 0.0
      %4568 = vmatpush1.msra.mxu0 0.0
      %4569 = vmatprep.subr.mxu0 0.0
      %4570 = vmatpush1.msra.mxu0 0.0
      %4571 = vmatprep.subr.mxu0 0.0
      %4572 = vmatpush1.msra.mxu0 0.0
      %4573 = vmatprep.subr.mxu0 0.0
      %4574 = vmatpush1.msra.mxu0 0.0
      %4575 = vmatprep.subr.mxu0 0.0
      %4576 = vmatpush1.msra.mxu0 0.0
      %4577 = vmatprep.subr.mxu0 0.0
      %4578 = vmatpush1.msra.mxu0 0.0
      %4579 = vmatprep.subr.mxu0 0.0
      %4580 = vmatpush1.msra.mxu0 0.0
      %4581 = vmatprep.subr.mxu0 0.0
      %4582 = vmatpush1.msra.mxu0 0.0
      %4583 = vmatprep.subr.mxu0 0.0
      %4584 = vmatpush1.msra.mxu0 0.0
      %4585 = vmatprep.subr.mxu0 0.0
      %4586 = vmatpush1.msra.mxu0 0.0
      %4587 = vmatprep.subr.mxu0 0.0
      %4588 = vmatpush1.msra.mxu0 0.0
      %4589 = vmatprep.subr.mxu0 0.0
      %4590 = vmatpush1.msra.mxu0 0.0
      %4591 = vmatprep.subr.mxu0 0.0
      %4592 = vmatpush1.msra.mxu0 0.0
      %4593 = vmatprep.subr.mxu0 0.0
      %4594 = vmatpush1.msra.mxu0 0.0
      %4595 = vmatprep.subr.mxu0 0.0
      %4596 = vmatpush1.msra.mxu0 0.0
      %4597 = vmatprep.subr.mxu0 0.0
      %4598 = vmatpush1.msra.mxu0 0.0
      %4599 = vmatprep.subr.mxu0 0.0
      %4600 = vmatpush1.msra.mxu0 0.0
      %4601 = vmatprep.subr.mxu0 0.0
      %4602 = vmatpush1.msra.mxu0 0.0
      %4603 = vmatprep.subr.mxu0 0.0
      %4604 = vmatpush1.msra.mxu0 0.0
      %4605 = vmatprep.subr.mxu0 0.0
      %4606 = vmatpush1.msra.mxu0 0.0
      %4607 = vmatprep.subr.mxu0 0.0
      %4608 = vmatpush1.msra.mxu0 0.0
      %4609 = vmatprep.subr.mxu0 0.0
      %4610 = vmatpush1.msra.mxu0 0.0
      %4611 = vmatprep.subr.mxu0 0.0
      %4612 = vmatpush1.msra.mxu0 0.0
      %4613 = vmatprep.subr.mxu0 0.0
      %4614 = vmatpush1.msra.mxu0 0.0
      %4615 = vmatprep.subr.mxu0 0.0
      %4616 = vmatpush1.msra.mxu0 0.0
      %4617 = vmatprep.subr.mxu0 0.0
      %4618 = vmatpush1.msra.mxu0 0.0
      %4619 = vmatprep.mubr.f32.mxu0 0.0
      %4620 = vmatmul.mubr.f32.gmra.mrb[0].mxu0 %v4553
      %v4621 = vpop.f32.mrb[0].mxu0
      %v4622 = vadd.f32 0.0, %v4621
      %v4623 = vpop.f32.mrb[0].mxu0
      %v4624 = vadd.f32 0.0, %v4623
      %4625 = vdwg.mxu0
      %4626 = vmatprep.subr.mxu0 %v4544
      %4627 = vmatpush1.msra.mxu0 %v4543
      %4628 = vmatprep.subr.mxu0 0.0
      %4629 = vmatpush1.msra.mxu0 0.0
      %4630 = vmatprep.subr.mxu0 0.0
      %4631 = vmatpush1.msra.mxu0 0.0
      %4632 = vmatprep.subr.mxu0 0.0
      %4633 = vmatpush1.msra.mxu0 0.0
      %4634 = vmatprep.subr.mxu0 0.0
      %4635 = vmatpush1.msra.mxu0 0.0
      %4636 = vmatprep.subr.mxu0 0.0
      %4637 = vmatpush1.msra.mxu0 0.0
      %4638 = vmatprep.subr.mxu0 0.0
      %4639 = vmatpush1.msra.mxu0 0.0
      %4640 = vmatprep.subr.mxu0 0.0
      %4641 = vmatpush1.msra.mxu0 0.0
      %4642 = vmatprep.subr.mxu0 0.0
      %4643 = vmatpush1.msra.mxu0 0.0
      %4644 = vmatprep.subr.mxu0 0.0
      %4645 = vmatpush1.msra.mxu0 0.0
      %4646 = vmatprep.subr.mxu0 0.0
      %4647 = vmatpush1.msra.mxu0 0.0
      %4648 = vmatprep.subr.mxu0 0.0
      %4649 = vmatpush1.msra.mxu0 0.0
      %4650 = vmatprep.subr.mxu0 0.0
      %4651 = vmatpush1.msra.mxu0 0.0
      %4652 = vmatprep.subr.mxu0 0.0
      %4653 = vmatpush1.msra.mxu0 0.0
      %4654 = vmatprep.subr.mxu0 0.0
      %4655 = vmatpush1.msra.mxu0 0.0
      %4656 = vmatprep.subr.mxu0 0.0
      %4657 = vmatpush1.msra.mxu0 0.0
      %4658 = vmatprep.subr.mxu0 0.0
      %4659 = vmatpush1.msra.mxu0 0.0
      %4660 = vmatprep.subr.mxu0 0.0
      %4661 = vmatpush1.msra.mxu0 0.0
      %4662 = vmatprep.subr.mxu0 0.0
      %4663 = vmatpush1.msra.mxu0 0.0
      %4664 = vmatprep.subr.mxu0 0.0
      %4665 = vmatpush1.msra.mxu0 0.0
      %4666 = vmatprep.subr.mxu0 0.0
      %4667 = vmatpush1.msra.mxu0 0.0
      %4668 = vmatprep.subr.mxu0 0.0
      %4669 = vmatpush1.msra.mxu0 0.0
      %4670 = vmatprep.subr.mxu0 0.0
      %4671 = vmatpush1.msra.mxu0 0.0
      %4672 = vmatprep.subr.mxu0 0.0
      %4673 = vmatpush1.msra.mxu0 0.0
      %4674 = vmatprep.subr.mxu0 0.0
      %4675 = vmatpush1.msra.mxu0 0.0
      %4676 = vmatprep.subr.mxu0 0.0
      %4677 = vmatpush1.msra.mxu0 0.0
      %4678 = vmatprep.subr.mxu0 0.0
      %4679 = vmatpush1.msra.mxu0 0.0
      %4680 = vmatprep.subr.mxu0 0.0
      %4681 = vmatpush1.msra.mxu0 0.0
      %4682 = vmatprep.subr.mxu0 0.0
      %4683 = vmatpush1.msra.mxu0 0.0
      %4684 = vmatprep.subr.mxu0 0.0
      %4685 = vmatpush1.msra.mxu0 0.0
      %4686 = vmatprep.subr.mxu0 0.0
      %4687 = vmatpush1.msra.mxu0 0.0
      %4688 = vmatprep.subr.mxu0 0.0
      %4689 = vmatpush1.msra.mxu0 0.0
      %4690 = vmatprep.mubr.f32.mxu0 0.0
      %4691 = vmatmul.mubr.f32.gmra.mrb[0].mxu0 %v4553
      %v4692 = vpop.f32.mrb[0].mxu0
      %v4693 = vadd.f32 0.0, %v4692
      %v4694 = vpop.f32.mrb[0].mxu0
      %v4695 = vadd.f32 0.0, %v4694
      %4696 = vdwg.mxu0
      %4697 = vmatprep.subr.mxu0 %v4546
      %4698 = vmatpush1.msra.mxu0 %v4545
      %4699 = vmatprep.subr.mxu0 0.0
      %4700 = vmatpush1.msra.mxu0 0.0
      %4701 = vmatprep.subr.mxu0 0.0
      %4702 = vmatpush1.msra.mxu0 0.0
      %4703 = vmatprep.subr.mxu0 0.0
      %4704 = vmatpush1.msra.mxu0 0.0
      %4705 = vmatprep.subr.mxu0 0.0
      %4706 = vmatpush1.msra.mxu0 0.0
      %4707 = vmatprep.subr.mxu0 0.0
      %4708 = vmatpush1.msra.mxu0 0.0
      %4709 = vmatprep.subr.mxu0 0.0
      %4710 = vmatpush1.msra.mxu0 0.0
      %4711 = vmatprep.subr.mxu0 0.0
      %4712 = vmatpush1.msra.mxu0 0.0
      %4713 = vmatprep.subr.mxu0 0.0
      %4714 = vmatpush1.msra.mxu0 0.0
      %4715 = vmatprep.subr.mxu0 0.0
      %4716 = vmatpush1.msra.mxu0 0.0
      %4717 = vmatprep.subr.mxu0 0.0
      %4718 = vmatpush1.msra.mxu0 0.0
      %4719 = vmatprep.subr.mxu0 0.0
      %4720 = vmatpush1.msra.mxu0 0.0
      %4721 = vmatprep.subr.mxu0 0.0
      %4722 = vmatpush1.msra.mxu0 0.0
      %4723 = vmatprep.subr.mxu0 0.0
      %4724 = vmatpush1.msra.mxu0 0.0
      %4725 = vmatprep.subr.mxu0 0.0
      %4726 = vmatpush1.msra.mxu0 0.0
      %4727 = vmatprep.subr.mxu0 0.0
      %4728 = vmatpush1.msra.mxu0 0.0
      %4729 = vmatprep.subr.mxu0 0.0
      %4730 = vmatpush1.msra.mxu0 0.0
      %4731 = vmatprep.subr.mxu0 0.0
      %4732 = vmatpush1.msra.mxu0 0.0
      %4733 = vmatprep.subr.mxu0 0.0
      %4734 = vmatpush1.msra.mxu0 0.0
      %4735 = vmatprep.subr.mxu0 0.0
      %4736 = vmatpush1.msra.mxu0 0.0
      %4737 = vmatprep.subr.mxu0 0.0
      %4738 = vmatpush1.msra.mxu0 0.0
      %4739 = vmatprep.subr.mxu0 0.0
      %4740 = vmatpush1.msra.mxu0 0.0
      %4741 = vmatprep.subr.mxu0 0.0
      %4742 = vmatpush1.msra.mxu0 0.0
      %4743 = vmatprep.subr.mxu0 0.0
      %4744 = vmatpush1.msra.mxu0 0.0
      %4745 = vmatprep.subr.mxu0 0.0
      %4746 = vmatpush1.msra.mxu0 0.0
      %4747 = vmatprep.subr.mxu0 0.0
      %4748 = vmatpush1.msra.mxu0 0.0
      %4749 = vmatprep.subr.mxu0 0.0
      %4750 = vmatpush1.msra.mxu0 0.0
      %4751 = vmatprep.subr.mxu0 0.0
      %4752 = vmatpush1.msra.mxu0 0.0
      %4753 = vmatprep.subr.mxu0 0.0
      %4754 = vmatpush1.msra.mxu0 0.0
      %4755 = vmatprep.subr.mxu0 0.0
      %4756 = vmatpush1.msra.mxu0 0.0
      %4757 = vmatprep.subr.mxu0 0.0
      %4758 = vmatpush1.msra.mxu0 0.0
      %4759 = vmatprep.subr.mxu0 0.0
      %4760 = vmatpush1.msra.mxu0 0.0
      %4761 = vmatprep.mubr.f32.mxu0 0.0
      %4762 = vmatmul.mubr.f32.gmra.mrb[0].mxu0 %v4553
      %v4763 = vpop.f32.mrb[0].mxu0
      %v4764 = vadd.f32 0.0, %v4763
      %v4765 = vpop.f32.mrb[0].mxu0
      %v4766 = vadd.f32 0.0, %v4765
      %4767 = vdwg.mxu0
      %4768 = vmatprep.subr.mxu0 %v4548
      %4769 = vmatpush1.msra.mxu0 %v4547
      %4770 = vmatprep.subr.mxu0 0.0
      %4771 = vmatpush1.msra.mxu0 0.0
      %4772 = vmatprep.subr.mxu0 0.0
      %4773 = vmatpush1.msra.mxu0 0.0
      %4774 = vmatprep.subr.mxu0 0.0
      %4775 = vmatpush1.msra.mxu0 0.0
      %4776 = vmatprep.subr.mxu0 0.0
      %4777 = vmatpush1.msra.mxu0 0.0
      %4778 = vmatprep.subr.mxu0 0.0
      %4779 = vmatpush1.msra.mxu0 0.0
      %4780 = vmatprep.subr.mxu0 0.0
      %4781 = vmatpush1.msra.mxu0 0.0
      %4782 = vmatprep.subr.mxu0 0.0
      %4783 = vmatpush1.msra.mxu0 0.0
      %4784 = vmatprep.subr.mxu0 0.0
      %4785 = vmatpush1.msra.mxu0 0.0
      %4786 = vmatprep.subr.mxu0 0.0
      %4787 = vmatpush1.msra.mxu0 0.0
      %4788 = vmatprep.subr.mxu0 0.0
      %4789 = vmatpush1.msra.mxu0 0.0
      %4790 = vmatprep.subr.mxu0 0.0
      %4791 = vmatpush1.msra.mxu0 0.0
      %4792 = vmatprep.subr.mxu0 0.0
      %4793 = vmatpush1.msra.mxu0 0.0
      %4794 = vmatprep.subr.mxu0 0.0
      %4795 = vmatpush1.msra.mxu0 0.0
      %4796 = vmatprep.subr.mxu0 0.0
      %4797 = vmatpush1.msra.mxu0 0.0
      %4798 = vmatprep.subr.mxu0 0.0
      %4799 = vmatpush1.msra.mxu0 0.0
      %4800 = vmatprep.subr.mxu0 0.0
      %4801 = vmatpush1.msra.mxu0 0.0
      %4802 = vmatprep.subr.mxu0 0.0
      %4803 = vmatpush1.msra.mxu0 0.0
      %4804 = vmatprep.subr.mxu0 0.0
      %4805 = vmatpush1.msra.mxu0 0.0
      %4806 = vmatprep.subr.mxu0 0.0
      %4807 = vmatpush1.msra.mxu0 0.0
      %4808 = vmatprep.subr.mxu0 0.0
      %4809 = vmatpush1.msra.mxu0 0.0
      %4810 = vmatprep.subr.mxu0 0.0
      %4811 = vmatpush1.msra.mxu0 0.0
      %4812 = vmatprep.subr.mxu0 0.0
      %4813 = vmatpush1.msra.mxu0 0.0
      %4814 = vmatprep.subr.mxu0 0.0
      %4815 = vmatpush1.msra.mxu0 0.0
      %4816 = vmatprep.subr.mxu0 0.0
      %4817 = vmatpush1.msra.mxu0 0.0
      %4818 = vmatprep.subr.mxu0 0.0
      %4819 = vmatpush1.msra.mxu0 0.0
      %4820 = vmatprep.subr.mxu0 0.0
      %4821 = vmatpush1.msra.mxu0 0.0
      %4822 = vmatprep.subr.mxu0 0.0
      %4823 = vmatpush1.msra.mxu0 0.0
      %4824 = vmatprep.subr.mxu0 0.0
      %4825 = vmatpush1.msra.mxu0 0.0
      %4826 = vmatprep.subr.mxu0 0.0
      %4827 = vmatpush1.msra.mxu0 0.0
      %4828 = vmatprep.subr.mxu0 0.0
      %4829 = vmatpush1.msra.mxu0 0.0
      %4830 = vmatprep.subr.mxu0 0.0
      %4831 = vmatpush1.msra.mxu0 0.0
      %4832 = vmatprep.mubr.f32.mxu0 0.0
      %4833 = vmatmul.mubr.f32.gmra.mrb[0].mxu0 %v4553
      %v4834 = vpop.f32.mrb[0].mxu0
      %v4835 = vadd.f32 0.0, %v4834
      %v4836 = vpop.f32.mrb[0].mxu0
      %v4837 = vadd.f32 0.0, %v4836
      %4838 = vdwg.mxu0
      %v4840 = vsel %vm4551, %v4516, 0
      %4842 = vmatprep.subr.mxu0 %v4509
      %4843 = vmatpush1.msra.mxu0 %v4508
      %4844 = vmatprep.subr.mxu0 0.0
      %4845 = vmatpush1.msra.mxu0 0.0
      %4846 = vmatprep.subr.mxu0 0.0
      %4847 = vmatpush1.msra.mxu0 0.0
      %4848 = vmatprep.subr.mxu0 0.0
      %4849 = vmatpush1.msra.mxu0 0.0
      %4850 = vmatprep.subr.mxu0 0.0
      %4851 = vmatpush1.msra.mxu0 0.0
      %4852 = vmatprep.subr.mxu0 0.0
      %4853 = vmatpush1.msra.mxu0 0.0
      %4854 = vmatprep.subr.mxu0 0.0
      %4855 = vmatpush1.msra.mxu0 0.0
      %4856 = vmatprep.subr.mxu0 0.0
      %4857 = vmatpush1.msra.mxu0 0.0
      %4858 = vmatprep.subr.mxu0 0.0
      %4859 = vmatpush1.msra.mxu0 0.0
      %4860 = vmatprep.subr.mxu0 0.0
      %4861 = vmatpush1.msra.mxu0 0.0
      %4862 = vmatprep.subr.mxu0 0.0
      %4863 = vmatpush1.msra.mxu0 0.0
      %4864 = vmatprep.subr.mxu0 0.0
      %4865 = vmatpush1.msra.mxu0 0.0
      %4866 = vmatprep.subr.mxu0 0.0
      %4867 = vmatpush1.msra.mxu0 0.0
      %4868 = vmatprep.subr.mxu0 0.0
      %4869 = vmatpush1.msra.mxu0 0.0
      %4870 = vmatprep.subr.mxu0 0.0
      %4871 = vmatpush1.msra.mxu0 0.0
      %4872 = vmatprep.subr.mxu0 0.0
      %4873 = vmatpush1.msra.mxu0 0.0
      %4874 = vmatprep.subr.mxu0 0.0
      %4875 = vmatpush1.msra.mxu0 0.0
      %4876 = vmatprep.subr.mxu0 0.0
      %4877 = vmatpush1.msra.mxu0 0.0
      %4878 = vmatprep.subr.mxu0 0.0
      %4879 = vmatpush1.msra.mxu0 0.0
      %4880 = vmatprep.subr.mxu0 0.0
      %4881 = vmatpush1.msra.mxu0 0.0
      %4882 = vmatprep.subr.mxu0 0.0
      %4883 = vmatpush1.msra.mxu0 0.0
      %4884 = vmatprep.subr.mxu0 0.0
      %4885 = vmatpush1.msra.mxu0 0.0
      %4886 = vmatprep.subr.mxu0 0.0
      %4887 = vmatpush1.msra.mxu0 0.0
      %4888 = vmatprep.subr.mxu0 0.0
      %4889 = vmatpush1.msra.mxu0 0.0
      %4890 = vmatprep.subr.mxu0 0.0
      %4891 = vmatpush1.msra.mxu0 0.0
      %4892 = vmatprep.subr.mxu0 0.0
      %4893 = vmatpush1.msra.mxu0 0.0
      %4894 = vmatprep.subr.mxu0 0.0
      %4895 = vmatpush1.msra.mxu0 0.0
      %4896 = vmatprep.subr.mxu0 0.0
      %4897 = vmatpush1.msra.mxu0 0.0
      %4898 = vmatprep.subr.mxu0 0.0
      %4899 = vmatpush1.msra.mxu0 0.0
      %4900 = vmatprep.subr.mxu0 0.0
      %4901 = vmatpush1.msra.mxu0 0.0
      %4902 = vmatprep.subr.mxu0 0.0
      %4903 = vmatpush1.msra.mxu0 0.0
      %4904 = vmatprep.subr.mxu0 0.0
      %4905 = vmatpush1.msra.mxu0 0.0
      %4906 = vmatprep.mubr.f32.mxu0 0.0
      %4907 = vmatmul.mubr.f32.gmra.mrb[0].mxu0 %v4840
      %v4908 = vpop.f32.mrb[0].mxu0
      %v4909 = vadd.f32 %v4622, %v4908
      %v4910 = vpop.f32.mrb[0].mxu0
      %v4911 = vadd.f32 %v4624, %v4910
      %4912 = vdwg.mxu0
      %4913 = vmatprep.subr.mxu0 %v4511
      %4914 = vmatpush1.msra.mxu0 %v4510
      %4915 = vmatprep.subr.mxu0 0.0
      %4916 = vmatpush1.msra.mxu0 0.0
      %4917 = vmatprep.subr.mxu0 0.0
      %4918 = vmatpush1.msra.mxu0 0.0
      %4919 = vmatprep.subr.mxu0 0.0
      %4920 = vmatpush1.msra.mxu0 0.0
      %4921 = vmatprep.subr.mxu0 0.0
      %4922 = vmatpush1.msra.mxu0 0.0
      %4923 = vmatprep.subr.mxu0 0.0
      %4924 = vmatpush1.msra.mxu0 0.0
      %4925 = vmatprep.subr.mxu0 0.0
      %4926 = vmatpush1.msra.mxu0 0.0
      %4927 = vmatprep.subr.mxu0 0.0
      %4928 = vmatpush1.msra.mxu0 0.0
      %4929 = vmatprep.subr.mxu0 0.0
      %4930 = vmatpush1.msra.mxu0 0.0
      %4931 = vmatprep.subr.mxu0 0.0
      %4932 = vmatpush1.msra.mxu0 0.0
      %4933 = vmatprep.subr.mxu0 0.0
      %4934 = vmatpush1.msra.mxu0 0.0
      %4935 = vmatprep.subr.mxu0 0.0
      %4936 = vmatpush1.msra.mxu0 0.0
      %4937 = vmatprep.subr.mxu0 0.0
      %4938 = vmatpush1.msra.mxu0 0.0
      %4939 = vmatprep.subr.mxu0 0.0
      %4940 = vmatpush1.msra.mxu0 0.0
      %4941 = vmatprep.subr.mxu0 0.0
      %4942 = vmatpush1.msra.mxu0 0.0
      %4943 = vmatprep.subr.mxu0 0.0
      %4944 = vmatpush1.msra.mxu0 0.0
      %4945 = vmatprep.subr.mxu0 0.0
      %4946 = vmatpush1.msra.mxu0 0.0
      %4947 = vmatprep.subr.mxu0 0.0
      %4948 = vmatpush1.msra.mxu0 0.0
      %4949 = vmatprep.subr.mxu0 0.0
      %4950 = vmatpush1.msra.mxu0 0.0
      %4951 = vmatprep.subr.mxu0 0.0
      %4952 = vmatpush1.msra.mxu0 0.0
      %4953 = vmatprep.subr.mxu0 0.0
      %4954 = vmatpush1.msra.mxu0 0.0
      %4955 = vmatprep.subr.mxu0 0.0
      %4956 = vmatpush1.msra.mxu0 0.0
      %4957 = vmatprep.subr.mxu0 0.0
      %4958 = vmatpush1.msra.mxu0 0.0
      %4959 = vmatprep.subr.mxu0 0.0
      %4960 = vmatpush1.msra.mxu0 0.0
      %4961 = vmatprep.subr.mxu0 0.0
      %4962 = vmatpush1.msra.mxu0 0.0
      %4963 = vmatprep.subr.mxu0 0.0
      %4964 = vmatpush1.msra.mxu0 0.0
      %4965 = vmatprep.subr.mxu0 0.0
      %4966 = vmatpush1.msra.mxu0 0.0
      %4967 = vmatprep.subr.mxu0 0.0
      %4968 = vmatpush1.msra.mxu0 0.0
      %4969 = vmatprep.subr.mxu0 0.0
      %4970 = vmatpush1.msra.mxu0 0.0
      %4971 = vmatprep.subr.mxu0 0.0
      %4972 = vmatpush1.msra.mxu0 0.0
      %4973 = vmatprep.subr.mxu0 0.0
      %4974 = vmatpush1.msra.mxu0 0.0
      %4975 = vmatprep.subr.mxu0 0.0
      %4976 = vmatpush1.msra.mxu0 0.0
      %4977 = vmatprep.mubr.f32.mxu0 0.0
      %4978 = vmatmul.mubr.f32.gmra.mrb[0].mxu0 %v4840
      %v4979 = vpop.f32.mrb[0].mxu0
      %v4980 = vadd.f32 %v4693, %v4979
      %v4981 = vpop.f32.mrb[0].mxu0
      %v4982 = vadd.f32 %v4695, %v4981
      %4983 = vdwg.mxu0
      %4984 = vmatprep.subr.mxu0 %v4513
      %4985 = vmatpush1.msra.mxu0 %v4512
      %4986 = vmatprep.subr.mxu0 0.0
      %4987 = vmatpush1.msra.mxu0 0.0
      %4988 = vmatprep.subr.mxu0 0.0
      %4989 = vmatpush1.msra.mxu0 0.0
      %4990 = vmatprep.subr.mxu0 0.0
      %4991 = vmatpush1.msra.mxu0 0.0
      %4992 = vmatprep.subr.mxu0 0.0
      %4993 = vmatpush1.msra.mxu0 0.0
      %4994 = vmatprep.subr.mxu0 0.0
      %4995 = vmatpush1.msra.mxu0 0.0
      %4996 = vmatprep.subr.mxu0 0.0
      %4997 = vmatpush1.msra.mxu0 0.0
      %4998 = vmatprep.subr.mxu0 0.0
      %4999 = vmatpush1.msra.mxu0 0.0
      %5000 = vmatprep.subr.mxu0 0.0
      %5001 = vmatpush1.msra.mxu0 0.0
      %5002 = vmatprep.subr.mxu0 0.0
      %5003 = vmatpush1.msra.mxu0 0.0
      %5004 = vmatprep.subr.mxu0 0.0
      %5005 = vmatpush1.msra.mxu0 0.0
      %5006 = vmatprep.subr.mxu0 0.0
      %5007 = vmatpush1.msra.mxu0 0.0
      %5008 = vmatprep.subr.mxu0 0.0
      %5009 = vmatpush1.msra.mxu0 0.0
      %5010 = vmatprep.subr.mxu0 0.0
      %5011 = vmatpush1.msra.mxu0 0.0
      %5012 = vmatprep.subr.mxu0 0.0
      %5013 = vmatpush1.msra.mxu0 0.0
      %5014 = vmatprep.subr.mxu0 0.0
      %5015 = vmatpush1.msra.mxu0 0.0
      %5016 = vmatprep.subr.mxu0 0.0
      %5017 = vmatpush1.msra.mxu0 0.0
      %5018 = vmatprep.subr.mxu0 0.0
      %5019 = vmatpush1.msra.mxu0 0.0
      %5020 = vmatprep.subr.mxu0 0.0
      %5021 = vmatpush1.msra.mxu0 0.0
      %5022 = vmatprep.subr.mxu0 0.0
      %5023 = vmatpush1.msra.mxu0 0.0
      %5024 = vmatprep.subr.mxu0 0.0
      %5025 = vmatpush1.msra.mxu0 0.0
      %5026 = vmatprep.subr.mxu0 0.0
      %5027 = vmatpush1.msra.mxu0 0.0
      %5028 = vmatprep.subr.mxu0 0.0
      %5029 = vmatpush1.msra.mxu0 0.0
      %5030 = vmatprep.subr.mxu0 0.0
      %5031 = vmatpush1.msra.mxu0 0.0
      %5032 = vmatprep.subr.mxu0 0.0
      %5033 = vmatpush1.msra.mxu0 0.0
      %5034 = vmatprep.subr.mxu0 0.0
      %5035 = vmatpush1.msra.mxu0 0.0
      %5036 = vmatprep.subr.mxu0 0.0
      %5037 = vmatpush1.msra.mxu0 0.0
      %5038 = vmatprep.subr.mxu0 0.0
      %5039 = vmatpush1.msra.mxu0 0.0
      %5040 = vmatprep.subr.mxu0 0.0
      %5041 = vmatpush1.msra.mxu0 0.0
      %5042 = vmatprep.subr.mxu0 0.0
      %5043 = vmatpush1.msra.mxu0 0.0
      %5044 = vmatprep.subr.mxu0 0.0
      %5045 = vmatpush1.msra.mxu0 0.0
      %5046 = vmatprep.subr.mxu0 0.0
      %5047 = vmatpush1.msra.mxu0 0.0
      %5048 = vmatprep.mubr.f32.mxu0 0.0
      %5049 = vmatmul.mubr.f32.gmra.mrb[0].mxu0 %v4840
      %v5050 = vpop.f32.mrb[0].mxu0
      %v5051 = vadd.f32 %v4764, %v5050
      %v5052 = vpop.f32.mrb[0].mxu0
      %v5053 = vadd.f32 %v4766, %v5052
      %5054 = vdwg.mxu0
      %5055 = vmatprep.subr.mxu0 %v4515
      %5056 = vmatpush1.msra.mxu0 %v4514
      %5057 = vmatprep.subr.mxu0 0.0
      %5058 = vmatpush1.msra.mxu0 0.0
      %5059 = vmatprep.subr.mxu0 0.0
      %5060 = vmatpush1.msra.mxu0 0.0
      %5061 = vmatprep.subr.mxu0 0.0
      %5062 = vmatpush1.msra.mxu0 0.0
      %5063 = vmatprep.subr.mxu0 0.0
      %5064 = vmatpush1.msra.mxu0 0.0
      %5065 = vmatprep.subr.mxu0 0.0
      %5066 = vmatpush1.msra.mxu0 0.0
      %5067 = vmatprep.subr.mxu0 0.0
      %5068 = vmatpush1.msra.mxu0 0.0
      %5069 = vmatprep.subr.mxu0 0.0
      %5070 = vmatpush1.msra.mxu0 0.0
      %5071 = vmatprep.subr.mxu0 0.0
      %5072 = vmatpush1.msra.mxu0 0.0
      %5073 = vmatprep.subr.mxu0 0.0
      %5074 = vmatpush1.msra.mxu0 0.0
      %5075 = vmatprep.subr.mxu0 0.0
      %5076 = vmatpush1.msra.mxu0 0.0
      %5077 = vmatprep.subr.mxu0 0.0
      %5078 = vmatpush1.msra.mxu0 0.0
      %5079 = vmatprep.subr.mxu0 0.0
      %5080 = vmatpush1.msra.mxu0 0.0
      %5081 = vmatprep.subr.mxu0 0.0
      %5082 = vmatpush1.msra.mxu0 0.0
      %5083 = vmatprep.subr.mxu0 0.0
      %5084 = vmatpush1.msra.mxu0 0.0
      %5085 = vmatprep.subr.mxu0 0.0
      %5086 = vmatpush1.msra.mxu0 0.0
      %5087 = vmatprep.subr.mxu0 0.0
      %5088 = vmatpush1.msra.mxu0 0.0
      %5089 = vmatprep.subr.mxu0 0.0
      %5090 = vmatpush1.msra.mxu0 0.0
      %5091 = vmatprep.subr.mxu0 0.0
      %5092 = vmatpush1.msra.mxu0 0.0
      %5093 = vmatprep.subr.mxu0 0.0
      %5094 = vmatpush1.msra.mxu0 0.0
      %5095 = vmatprep.subr.mxu0 0.0
      %5096 = vmatpush1.msra.mxu0 0.0
      %5097 = vmatprep.subr.mxu0 0.0
      %5098 = vmatpush1.msra.mxu0 0.0
      %5099 = vmatprep.subr.mxu0 0.0
      %5100 = vmatpush1.msra.mxu0 0.0
      %5101 = vmatprep.subr.mxu0 0.0
      %5102 = vmatpush1.msra.mxu0 0.0
      %5103 = vmatprep.subr.mxu0 0.0
      %5104 = vmatpush1.msra.mxu0 0.0
      %5105 = vmatprep.subr.mxu0 0.0
      %5106 = vmatpush1.msra.mxu0 0.0
      %5107 = vmatprep.subr.mxu0 0.0
      %5108 = vmatpush1.msra.mxu0 0.0
      %5109 = vmatprep.subr.mxu0 0.0
      %5110 = vmatpush1.msra.mxu0 0.0
      %5111 = vmatprep.subr.mxu0 0.0
      %5112 = vmatpush1.msra.mxu0 0.0
      %5113 = vmatprep.subr.mxu0 0.0
      %5114 = vmatpush1.msra.mxu0 0.0
      %5115 = vmatprep.subr.mxu0 0.0
      %5116 = vmatpush1.msra.mxu0 0.0
      %5117 = vmatprep.subr.mxu0 0.0
      %5118 = vmatpush1.msra.mxu0 0.0
      %5119 = vmatprep.mubr.f32.mxu0 0.0
      %5120 = vmatmul.mubr.f32.gmra.mrb[0].mxu0 %v4840
      %v5121 = vpop.f32.mrb[0].mxu0
      %v5122 = vadd.f32 %v4835, %v5121
      %v5123 = vpop.f32.mrb[0].mxu0
      %v5124 = vadd.f32 %v4837, %v5123
      %5125 = vdwg.mxu0
      %5126 = vrot.lane.b32.xlu0 %v4476, 15
      %v5127 = vpop.permute.xlu0 %5126
      %5128 = vrot.lane.b32.xlu0 %v4477, 15
      %v5129 = vpop.permute.xlu0 %5128
      %5130 = vrot.lane.b32.xlu0 %v4478, 15
      %v5131 = vpop.permute.xlu0 %5130
      %5132 = vrot.lane.b32.xlu0 %v4479, 15
      %v5133 = vpop.permute.xlu0 %5132
      %5134 = vrot.lane.b32.xlu0 %v4480, 15
      %v5135 = vpop.permute.xlu0 %5134
      %5136 = vrot.lane.b32.xlu0 %v4481, 15
      %v5137 = vpop.permute.xlu0 %5136
      %5138 = vrot.lane.b32.xlu0 %v4482, 15
      %v5139 = vpop.permute.xlu0 %5138
      %5140 = vrot.lane.b32.xlu0 %v4483, 15
      %v5141 = vpop.permute.xlu0 %5140
      %v5142 = vsel %vm1571, %v5139, %v5141
      %v5143 = vsel %vm1571, %v5137, %v5139
      %v5144 = vsel %vm1571, %v5135, %v5137
      %v5145 = vsel %vm1571, %v5133, %v5135
      %v5146 = vsel %vm1571, %v5131, %v5133
      %v5147 = vsel %vm1571, %v5129, %v5131
      %v5148 = vsel %vm1571, %v5127, %v5129
      %v5149 = vsel %vm1571, %v5141, %v5127
      %v5150 = vmul.f32 %v5149, %v1596
      %v5151 = vmul.f32 %v5148, %v1600
      %v5152 = vmul.f32 %v5147, %v1604
      %v5153 = vmul.f32 %v5146, %v1608
      %v5154 = vmul.f32 %v5145, %v1612
      %v5155 = vmul.f32 %v5144, %v1616
      %v5156 = vmul.f32 %v5143, %v1620
      %v5157 = vmul.f32 %v5142, %v1624
      %s5158 = scalar_lea.vmem %s5, 16
      %v5159 = vld [vmem:[%s5158] sm:$0xff]
      %v5161 = vsel %vm4551, %v5159, 0
      %5163 = vmatprep.subr.mxu0 %v5151
      %5164 = vmatpush1.msra.mxu0 %v5150
      %5165 = vmatprep.subr.mxu0 0.0
      %5166 = vmatpush1.msra.mxu0 0.0
      %5167 = vmatprep.subr.mxu0 0.0
      %5168 = vmatpush1.msra.mxu0 0.0
      %5169 = vmatprep.subr.mxu0 0.0
      %5170 = vmatpush1.msra.mxu0 0.0
      %5171 = vmatprep.subr.mxu0 0.0
      %5172 = vmatpush1.msra.mxu0 0.0
      %5173 = vmatprep.subr.mxu0 0.0
      %5174 = vmatpush1.msra.mxu0 0.0
      %5175 = vmatprep.subr.mxu0 0.0
      %5176 = vmatpush1.msra.mxu0 0.0
      %5177 = vmatprep.subr.mxu0 0.0
      %5178 = vmatpush1.msra.mxu0 0.0
      %5179 = vmatprep.subr.mxu0 0.0
      %5180 = vmatpush1.msra.mxu0 0.0
      %5181 = vmatprep.subr.mxu0 0.0
      %5182 = vmatpush1.msra.mxu0 0.0
      %5183 = vmatprep.subr.mxu0 0.0
      %5184 = vmatpush1.msra.mxu0 0.0
      %5185 = vmatprep.subr.mxu0 0.0
      %5186 = vmatpush1.msra.mxu0 0.0
      %5187 = vmatprep.subr.mxu0 0.0
      %5188 = vmatpush1.msra.mxu0 0.0
      %5189 = vmatprep.subr.mxu0 0.0
      %5190 = vmatpush1.msra.mxu0 0.0
      %5191 = vmatprep.subr.mxu0 0.0
      %5192 = vmatpush1.msra.mxu0 0.0
      %5193 = vmatprep.subr.mxu0 0.0
      %5194 = vmatpush1.msra.mxu0 0.0
      %5195 = vmatprep.subr.mxu0 0.0
      %5196 = vmatpush1.msra.mxu0 0.0
      %5197 = vmatprep.subr.mxu0 0.0
      %5198 = vmatpush1.msra.mxu0 0.0
      %5199 = vmatprep.subr.mxu0 0.0
      %5200 = vmatpush1.msra.mxu0 0.0
      %5201 = vmatprep.subr.mxu0 0.0
      %5202 = vmatpush1.msra.mxu0 0.0
      %5203 = vmatprep.subr.mxu0 0.0
      %5204 = vmatpush1.msra.mxu0 0.0
      %5205 = vmatprep.subr.mxu0 0.0
      %5206 = vmatpush1.msra.mxu0 0.0
      %5207 = vmatprep.subr.mxu0 0.0
      %5208 = vmatpush1.msra.mxu0 0.0
      %5209 = vmatprep.subr.mxu0 0.0
      %5210 = vmatpush1.msra.mxu0 0.0
      %5211 = vmatprep.subr.mxu0 0.0
      %5212 = vmatpush1.msra.mxu0 0.0
      %5213 = vmatprep.subr.mxu0 0.0
      %5214 = vmatpush1.msra.mxu0 0.0
      %5215 = vmatprep.subr.mxu0 0.0
      %5216 = vmatpush1.msra.mxu0 0.0
      %5217 = vmatprep.subr.mxu0 0.0
      %5218 = vmatpush1.msra.mxu0 0.0
      %5219 = vmatprep.subr.mxu0 0.0
      %5220 = vmatpush1.msra.mxu0 0.0
      %5221 = vmatprep.subr.mxu0 0.0
      %5222 = vmatpush1.msra.mxu0 0.0
      %5223 = vmatprep.subr.mxu0 0.0
      %5224 = vmatpush1.msra.mxu0 0.0
      %5225 = vmatprep.subr.mxu0 0.0
      %5226 = vmatpush1.msra.mxu0 0.0
      %5227 = vmatprep.mubr.f32.mxu0 0.0
      %5228 = vmatmul.mubr.f32.gmra.mrb[0].mxu0 %v5161
      %v5229 = vpop.f32.mrb[0].mxu0
      %v5230 = vadd.f32 0.0, %v5229
      %v5231 = vpop.f32.mrb[0].mxu0
      %v5232 = vadd.f32 0.0, %v5231
      %5233 = vdwg.mxu0
      %5234 = vmatprep.subr.mxu0 %v5153
      %5235 = vmatpush1.msra.mxu0 %v5152
      %5236 = vmatprep.subr.mxu0 0.0
      %5237 = vmatpush1.msra.mxu0 0.0
      %5238 = vmatprep.subr.mxu0 0.0
      %5239 = vmatpush1.msra.mxu0 0.0
      %5240 = vmatprep.subr.mxu0 0.0
      %5241 = vmatpush1.msra.mxu0 0.0
      %5242 = vmatprep.subr.mxu0 0.0
      %5243 = vmatpush1.msra.mxu0 0.0
      %5244 = vmatprep.subr.mxu0 0.0
      %5245 = vmatpush1.msra.mxu0 0.0
      %5246 = vmatprep.subr.mxu0 0.0
      %5247 = vmatpush1.msra.mxu0 0.0
      %5248 = vmatprep.subr.mxu0 0.0
      %5249 = vmatpush1.msra.mxu0 0.0
      %5250 = vmatprep.subr.mxu0 0.0
      %5251 = vmatpush1.msra.mxu0 0.0
      %5252 = vmatprep.subr.mxu0 0.0
      %5253 = vmatpush1.msra.mxu0 0.0
      %5254 = vmatprep.subr.mxu0 0.0
      %5255 = vmatpush1.msra.mxu0 0.0
      %5256 = vmatprep.subr.mxu0 0.0
      %5257 = vmatpush1.msra.mxu0 0.0
      %5258 = vmatprep.subr.mxu0 0.0
      %5259 = vmatpush1.msra.mxu0 0.0
      %5260 = vmatprep.subr.mxu0 0.0
      %5261 = vmatpush1.msra.mxu0 0.0
      %5262 = vmatprep.subr.mxu0 0.0
      %5263 = vmatpush1.msra.mxu0 0.0
      %5264 = vmatprep.subr.mxu0 0.0
      %5265 = vmatpush1.msra.mxu0 0.0
      %5266 = vmatprep.subr.mxu0 0.0
      %5267 = vmatpush1.msra.mxu0 0.0
      %5268 = vmatprep.subr.mxu0 0.0
      %5269 = vmatpush1.msra.mxu0 0.0
      %5270 = vmatprep.subr.mxu0 0.0
      %5271 = vmatpush1.msra.mxu0 0.0
      %5272 = vmatprep.subr.mxu0 0.0
      %5273 = vmatpush1.msra.mxu0 0.0
      %5274 = vmatprep.subr.mxu0 0.0
      %5275 = vmatpush1.msra.mxu0 0.0
      %5276 = vmatprep.subr.mxu0 0.0
      %5277 = vmatpush1.msra.mxu0 0.0
      %5278 = vmatprep.subr.mxu0 0.0
      %5279 = vmatpush1.msra.mxu0 0.0
      %5280 = vmatprep.subr.mxu0 0.0
      %5281 = vmatpush1.msra.mxu0 0.0
      %5282 = vmatprep.subr.mxu0 0.0
      %5283 = vmatpush1.msra.mxu0 0.0
      %5284 = vmatprep.subr.mxu0 0.0
      %5285 = vmatpush1.msra.mxu0 0.0
      %5286 = vmatprep.subr.mxu0 0.0
      %5287 = vmatpush1.msra.mxu0 0.0
      %5288 = vmatprep.subr.mxu0 0.0
      %5289 = vmatpush1.msra.mxu0 0.0
      %5290 = vmatprep.subr.mxu0 0.0
      %5291 = vmatpush1.msra.mxu0 0.0
      %5292 = vmatprep.subr.mxu0 0.0
      %5293 = vmatpush1.msra.mxu0 0.0
      %5294 = vmatprep.subr.mxu0 0.0
      %5295 = vmatpush1.msra.mxu0 0.0
      %5296 = vmatprep.subr.mxu0 0.0
      %5297 = vmatpush1.msra.mxu0 0.0
      %5298 = vmatprep.mubr.f32.mxu0 0.0
      %5299 = vmatmul.mubr.f32.gmra.mrb[0].mxu0 %v5161
      %v5300 = vpop.f32.mrb[0].mxu0
      %v5301 = vadd.f32 0.0, %v5300
      %v5302 = vpop.f32.mrb[0].mxu0
      %v5303 = vadd.f32 0.0, %v5302
      %5304 = vdwg.mxu0
      %5305 = vmatprep.subr.mxu0 %v5155
      %5306 = vmatpush1.msra.mxu0 %v5154
      %5307 = vmatprep.subr.mxu0 0.0
      %5308 = vmatpush1.msra.mxu0 0.0
      %5309 = vmatprep.subr.mxu0 0.0
      %5310 = vmatpush1.msra.mxu0 0.0
      %5311 = vmatprep.subr.mxu0 0.0
      %5312 = vmatpush1.msra.mxu0 0.0
      %5313 = vmatprep.subr.mxu0 0.0
      %5314 = vmatpush1.msra.mxu0 0.0
      %5315 = vmatprep.subr.mxu0 0.0
      %5316 = vmatpush1.msra.mxu0 0.0
      %5317 = vmatprep.subr.mxu0 0.0
      %5318 = vmatpush1.msra.mxu0 0.0
      %5319 = vmatprep.subr.mxu0 0.0
      %5320 = vmatpush1.msra.mxu0 0.0
      %5321 = vmatprep.subr.mxu0 0.0
      %5322 = vmatpush1.msra.mxu0 0.0
      %5323 = vmatprep.subr.mxu0 0.0
      %5324 = vmatpush1.msra.mxu0 0.0
      %5325 = vmatprep.subr.mxu0 0.0
      %5326 = vmatpush1.msra.mxu0 0.0
      %5327 = vmatprep.subr.mxu0 0.0
      %5328 = vmatpush1.msra.mxu0 0.0
      %5329 = vmatprep.subr.mxu0 0.0
      %5330 = vmatpush1.msra.mxu0 0.0
      %5331 = vmatprep.subr.mxu0 0.0
      %5332 = vmatpush1.msra.mxu0 0.0
      %5333 = vmatprep.subr.mxu0 0.0
      %5334 = vmatpush1.msra.mxu0 0.0
      %5335 = vmatprep.subr.mxu0 0.0
      %5336 = vmatpush1.msra.mxu0 0.0
      %5337 = vmatprep.subr.mxu0 0.0
      %5338 = vmatpush1.msra.mxu0 0.0
      %5339 = vmatprep.subr.mxu0 0.0
      %5340 = vmatpush1.msra.mxu0 0.0
      %5341 = vmatprep.subr.mxu0 0.0
      %5342 = vmatpush1.msra.mxu0 0.0
      %5343 = vmatprep.subr.mxu0 0.0
      %5344 = vmatpush1.msra.mxu0 0.0
      %5345 = vmatprep.subr.mxu0 0.0
      %5346 = vmatpush1.msra.mxu0 0.0
      %5347 = vmatprep.subr.mxu0 0.0
      %5348 = vmatpush1.msra.mxu0 0.0
      %5349 = vmatprep.subr.mxu0 0.0
      %5350 = vmatpush1.msra.mxu0 0.0
      %5351 = vmatprep.subr.mxu0 0.0
      %5352 = vmatpush1.msra.mxu0 0.0
      %5353 = vmatprep.subr.mxu0 0.0
      %5354 = vmatpush1.msra.mxu0 0.0
      %5355 = vmatprep.subr.mxu0 0.0
      %5356 = vmatpush1.msra.mxu0 0.0
      %5357 = vmatprep.subr.mxu0 0.0
      %5358 = vmatpush1.msra.mxu0 0.0
      %5359 = vmatprep.subr.mxu0 0.0
      %5360 = vmatpush1.msra.mxu0 0.0
      %5361 = vmatprep.subr.mxu0 0.0
      %5362 = vmatpush1.msra.mxu0 0.0
      %5363 = vmatprep.subr.mxu0 0.0
      %5364 = vmatpush1.msra.mxu0 0.0
      %5365 = vmatprep.subr.mxu0 0.0
      %5366 = vmatpush1.msra.mxu0 0.0
      %5367 = vmatprep.subr.mxu0 0.0
      %5368 = vmatpush1.msra.mxu0 0.0
      %5369 = vmatprep.mubr.f32.mxu0 0.0
      %5370 = vmatmul.mubr.f32.gmra.mrb[0].mxu0 %v5161
      %v5371 = vpop.f32.mrb[0].mxu0
      %v5372 = vadd.f32 0.0, %v5371
      %v5373 = vpop.f32.mrb[0].mxu0
      %v5374 = vadd.f32 0.0, %v5373
      %5375 = vdwg.mxu0
      %5376 = vmatprep.subr.mxu0 %v5157
      %5377 = vmatpush1.msra.mxu0 %v5156
      %5378 = vmatprep.subr.mxu0 0.0
      %5379 = vmatpush1.msra.mxu0 0.0
      %5380 = vmatprep.subr.mxu0 0.0
      %5381 = vmatpush1.msra.mxu0 0.0
      %5382 = vmatprep.subr.mxu0 0.0
      %5383 = vmatpush1.msra.mxu0 0.0
      %5384 = vmatprep.subr.mxu0 0.0
      %5385 = vmatpush1.msra.mxu0 0.0
      %5386 = vmatprep.subr.mxu0 0.0
      %5387 = vmatpush1.msra.mxu0 0.0
      %5388 = vmatprep.subr.mxu0 0.0
      %5389 = vmatpush1.msra.mxu0 0.0
      %5390 = vmatprep.subr.mxu0 0.0
      %5391 = vmatpush1.msra.mxu0 0.0
      %5392 = vmatprep.subr.mxu0 0.0
      %5393 = vmatpush1.msra.mxu0 0.0
      %5394 = vmatprep.subr.mxu0 0.0
      %5395 = vmatpush1.msra.mxu0 0.0
      %5396 = vmatprep.subr.mxu0 0.0
      %5397 = vmatpush1.msra.mxu0 0.0
      %5398 = vmatprep.subr.mxu0 0.0
      %5399 = vmatpush1.msra.mxu0 0.0
      %5400 = vmatprep.subr.mxu0 0.0
      %5401 = vmatpush1.msra.mxu0 0.0
      %5402 = vmatprep.subr.mxu0 0.0
      %5403 = vmatpush1.msra.mxu0 0.0
      %5404 = vmatprep.subr.mxu0 0.0
      %5405 = vmatpush1.msra.mxu0 0.0
      %5406 = vmatprep.subr.mxu0 0.0
      %5407 = vmatpush1.msra.mxu0 0.0
      %5408 = vmatprep.subr.mxu0 0.0
      %5409 = vmatpush1.msra.mxu0 0.0
      %5410 = vmatprep.subr.mxu0 0.0
      %5411 = vmatpush1.msra.mxu0 0.0
      %5412 = vmatprep.subr.mxu0 0.0
      %5413 = vmatpush1.msra.mxu0 0.0
      %5414 = vmatprep.subr.mxu0 0.0
      %5415 = vmatpush1.msra.mxu0 0.0
      %5416 = vmatprep.subr.mxu0 0.0
      %5417 = vmatpush1.msra.mxu0 0.0
      %5418 = vmatprep.subr.mxu0 0.0
      %5419 = vmatpush1.msra.mxu0 0.0
      %5420 = vmatprep.subr.mxu0 0.0
      %5421 = vmatpush1.msra.mxu0 0.0
      %5422 = vmatprep.subr.mxu0 0.0
      %5423 = vmatpush1.msra.mxu0 0.0
      %5424 = vmatprep.subr.mxu0 0.0
      %5425 = vmatpush1.msra.mxu0 0.0
      %5426 = vmatprep.subr.mxu0 0.0
      %5427 = vmatpush1.msra.mxu0 0.0
      %5428 = vmatprep.subr.mxu0 0.0
      %5429 = vmatpush1.msra.mxu0 0.0
      %5430 = vmatprep.subr.mxu0 0.0
      %5431 = vmatpush1.msra.mxu0 0.0
      %5432 = vmatprep.subr.mxu0 0.0
      %5433 = vmatpush1.msra.mxu0 0.0
      %5434 = vmatprep.subr.mxu0 0.0
      %5435 = vmatpush1.msra.mxu0 0.0
      %5436 = vmatprep.subr.mxu0 0.0
      %5437 = vmatpush1.msra.mxu0 0.0
      %5438 = vmatprep.subr.mxu0 0.0
      %5439 = vmatpush1.msra.mxu0 0.0
      %5440 = vmatprep.mubr.f32.mxu0 0.0
      %5441 = vmatmul.mubr.f32.gmra.mrb[0].mxu0 %v5161
      %v5442 = vpop.f32.mrb[0].mxu0
      %v5443 = vadd.f32 0.0, %v5442
      %v5444 = vpop.f32.mrb[0].mxu0
      %v5445 = vadd.f32 0.0, %v5444
      %5446 = vdwg.mxu0
      %v5447 = vadd.f32 %v4909, %v5230
      %v5448 = vadd.f32 %v4911, %v5232
      %v5449 = vadd.f32 %v4980, %v5301
      %v5450 = vadd.f32 %v4982, %v5303
      %v5451 = vadd.f32 %v5051, %v5372
      %v5452 = vadd.f32 %v5053, %v5374
      %v5453 = vadd.f32 %v5122, %v5443
      %v5454 = vadd.f32 %v5124, %v5445
      %5455 = vrot.lane.b32.xlu0 %v4476, 1
      %v5456 = vpop.permute.xlu0 %5455
      %5457 = vrot.lane.b32.xlu0 %v4477, 1
      %v5458 = vpop.permute.xlu0 %5457
      %5459 = vrot.lane.b32.xlu0 %v4478, 1
      %v5460 = vpop.permute.xlu0 %5459
      %5461 = vrot.lane.b32.xlu0 %v4479, 1
      %v5462 = vpop.permute.xlu0 %5461
      %5463 = vrot.lane.b32.xlu0 %v4480, 1
      %v5464 = vpop.permute.xlu0 %5463
      %5465 = vrot.lane.b32.xlu0 %v4481, 1
      %v5466 = vpop.permute.xlu0 %5465
      %5467 = vrot.lane.b32.xlu0 %v4482, 1
      %v5468 = vpop.permute.xlu0 %5467
      %5469 = vrot.lane.b32.xlu0 %v4483, 1
      %v5470 = vpop.permute.xlu0 %5469
      %v5471 = vsel %vm2002, %v5468, %v5470
      %v5472 = vsel %vm2002, %v5466, %v5468
      %v5473 = vsel %vm2002, %v5464, %v5466
      %v5474 = vsel %vm2002, %v5462, %v5464
      %v5475 = vsel %vm2002, %v5460, %v5462
      %v5476 = vsel %vm2002, %v5458, %v5460
      %v5477 = vsel %vm2002, %v5456, %v5458
      %v5478 = vsel %vm2002, %v5470, %v5456
      %v5479 = vmul.f32 %v5478, %v2027
      %v5480 = vmul.f32 %v5477, %v2031
      %v5481 = vmul.f32 %v5476, %v2035
      %v5482 = vmul.f32 %v5475, %v2039
      %v5483 = vmul.f32 %v5474, %v2043
      %v5484 = vmul.f32 %v5473, %v2047
      %v5485 = vmul.f32 %v5472, %v2051
      %v5486 = vmul.f32 %v5471, %v2055
      %s5487 = scalar_lea.vmem %s5, 24
      %v5488 = vld [vmem:[%s5487] sm:$0xff]
      %v5490 = vsel %vm4551, %v5488, 0
      %5492 = vmatprep.subr.mxu0 %v5480
      %5493 = vmatpush1.msra.mxu0 %v5479
      %5494 = vmatprep.subr.mxu0 0.0
      %5495 = vmatpush1.msra.mxu0 0.0
      %5496 = vmatprep.subr.mxu0 0.0
      %5497 = vmatpush1.msra.mxu0 0.0
      %5498 = vmatprep.subr.mxu0 0.0
      %5499 = vmatpush1.msra.mxu0 0.0
      %5500 = vmatprep.subr.mxu0 0.0
      %5501 = vmatpush1.msra.mxu0 0.0
      %5502 = vmatprep.subr.mxu0 0.0
      %5503 = vmatpush1.msra.mxu0 0.0
      %5504 = vmatprep.subr.mxu0 0.0
      %5505 = vmatpush1.msra.mxu0 0.0
      %5506 = vmatprep.subr.mxu0 0.0
      %5507 = vmatpush1.msra.mxu0 0.0
      %5508 = vmatprep.subr.mxu0 0.0
      %5509 = vmatpush1.msra.mxu0 0.0
      %5510 = vmatprep.subr.mxu0 0.0
      %5511 = vmatpush1.msra.mxu0 0.0
      %5512 = vmatprep.subr.mxu0 0.0
      %5513 = vmatpush1.msra.mxu0 0.0
      %5514 = vmatprep.subr.mxu0 0.0
      %5515 = vmatpush1.msra.mxu0 0.0
      %5516 = vmatprep.subr.mxu0 0.0
      %5517 = vmatpush1.msra.mxu0 0.0
      %5518 = vmatprep.subr.mxu0 0.0
      %5519 = vmatpush1.msra.mxu0 0.0
      %5520 = vmatprep.subr.mxu0 0.0
      %5521 = vmatpush1.msra.mxu0 0.0
      %5522 = vmatprep.subr.mxu0 0.0
      %5523 = vmatpush1.msra.mxu0 0.0
      %5524 = vmatprep.subr.mxu0 0.0
      %5525 = vmatpush1.msra.mxu0 0.0
      %5526 = vmatprep.subr.mxu0 0.0
      %5527 = vmatpush1.msra.mxu0 0.0
      %5528 = vmatprep.subr.mxu0 0.0
      %5529 = vmatpush1.msra.mxu0 0.0
      %5530 = vmatprep.subr.mxu0 0.0
      %5531 = vmatpush1.msra.mxu0 0.0
      %5532 = vmatprep.subr.mxu0 0.0
      %5533 = vmatpush1.msra.mxu0 0.0
      %5534 = vmatprep.subr.mxu0 0.0
      %5535 = vmatpush1.msra.mxu0 0.0
      %5536 = vmatprep.subr.mxu0 0.0
      %5537 = vmatpush1.msra.mxu0 0.0
      %5538 = vmatprep.subr.mxu0 0.0
      %5539 = vmatpush1.msra.mxu0 0.0
      %5540 = vmatprep.subr.mxu0 0.0
      %5541 = vmatpush1.msra.mxu0 0.0
      %5542 = vmatprep.subr.mxu0 0.0
      %5543 = vmatpush1.msra.mxu0 0.0
      %5544 = vmatprep.subr.mxu0 0.0
      %5545 = vmatpush1.msra.mxu0 0.0
      %5546 = vmatprep.subr.mxu0 0.0
      %5547 = vmatpush1.msra.mxu0 0.0
      %5548 = vmatprep.subr.mxu0 0.0
      %5549 = vmatpush1.msra.mxu0 0.0
      %5550 = vmatprep.subr.mxu0 0.0
      %5551 = vmatpush1.msra.mxu0 0.0
      %5552 = vmatprep.subr.mxu0 0.0
      %5553 = vmatpush1.msra.mxu0 0.0
      %5554 = vmatprep.subr.mxu0 0.0
      %5555 = vmatpush1.msra.mxu0 0.0
      %5556 = vmatprep.mubr.f32.mxu0 0.0
      %5557 = vmatmul.mubr.f32.gmra.mrb[0].mxu0 %v5490
      %v5558 = vpop.f32.mrb[0].mxu0
      %v5559 = vadd.f32 0.0, %v5558
      %v5560 = vpop.f32.mrb[0].mxu0
      %v5561 = vadd.f32 0.0, %v5560
      %5562 = vdwg.mxu0
      %5563 = vmatprep.subr.mxu0 %v5482
      %5564 = vmatpush1.msra.mxu0 %v5481
      %5565 = vmatprep.subr.mxu0 0.0
      %5566 = vmatpush1.msra.mxu0 0.0
      %5567 = vmatprep.subr.mxu0 0.0
      %5568 = vmatpush1.msra.mxu0 0.0
      %5569 = vmatprep.subr.mxu0 0.0
      %5570 = vmatpush1.msra.mxu0 0.0
      %5571 = vmatprep.subr.mxu0 0.0
      %5572 = vmatpush1.msra.mxu0 0.0
      %5573 = vmatprep.subr.mxu0 0.0
      %5574 = vmatpush1.msra.mxu0 0.0
      %5575 = vmatprep.subr.mxu0 0.0
      %5576 = vmatpush1.msra.mxu0 0.0
      %5577 = vmatprep.subr.mxu0 0.0
      %5578 = vmatpush1.msra.mxu0 0.0
      %5579 = vmatprep.subr.mxu0 0.0
      %5580 = vmatpush1.msra.mxu0 0.0
      %5581 = vmatprep.subr.mxu0 0.0
      %5582 = vmatpush1.msra.mxu0 0.0
      %5583 = vmatprep.subr.mxu0 0.0
      %5584 = vmatpush1.msra.mxu0 0.0
      %5585 = vmatprep.subr.mxu0 0.0
      %5586 = vmatpush1.msra.mxu0 0.0
      %5587 = vmatprep.subr.mxu0 0.0
      %5588 = vmatpush1.msra.mxu0 0.0
      %5589 = vmatprep.subr.mxu0 0.0
      %5590 = vmatpush1.msra.mxu0 0.0
      %5591 = vmatprep.subr.mxu0 0.0
      %5592 = vmatpush1.msra.mxu0 0.0
      %5593 = vmatprep.subr.mxu0 0.0
      %5594 = vmatpush1.msra.mxu0 0.0
      %5595 = vmatprep.subr.mxu0 0.0
      %5596 = vmatpush1.msra.mxu0 0.0
      %5597 = vmatprep.subr.mxu0 0.0
      %5598 = vmatpush1.msra.mxu0 0.0
      %5599 = vmatprep.subr.mxu0 0.0
      %5600 = vmatpush1.msra.mxu0 0.0
      %5601 = vmatprep.subr.mxu0 0.0
      %5602 = vmatpush1.msra.mxu0 0.0
      %5603 = vmatprep.subr.mxu0 0.0
      %5604 = vmatpush1.msra.mxu0 0.0
      %5605 = vmatprep.subr.mxu0 0.0
      %5606 = vmatpush1.msra.mxu0 0.0
      %5607 = vmatprep.subr.mxu0 0.0
      %5608 = vmatpush1.msra.mxu0 0.0
      %5609 = vmatprep.subr.mxu0 0.0
      %5610 = vmatpush1.msra.mxu0 0.0
      %5611 = vmatprep.subr.mxu0 0.0
      %5612 = vmatpush1.msra.mxu0 0.0
      %5613 = vmatprep.subr.mxu0 0.0
      %5614 = vmatpush1.msra.mxu0 0.0
      %5615 = vmatprep.subr.mxu0 0.0
      %5616 = vmatpush1.msra.mxu0 0.0
      %5617 = vmatprep.subr.mxu0 0.0
      %5618 = vmatpush1.msra.mxu0 0.0
      %5619 = vmatprep.subr.mxu0 0.0
      %5620 = vmatpush1.msra.mxu0 0.0
      %5621 = vmatprep.subr.mxu0 0.0
      %5622 = vmatpush1.msra.mxu0 0.0
      %5623 = vmatprep.subr.mxu0 0.0
      %5624 = vmatpush1.msra.mxu0 0.0
      %5625 = vmatprep.subr.mxu0 0.0
      %5626 = vmatpush1.msra.mxu0 0.0
      %5627 = vmatprep.mubr.f32.mxu0 0.0
      %5628 = vmatmul.mubr.f32.gmra.mrb[0].mxu0 %v5490
      %v5629 = vpop.f32.mrb[0].mxu0
      %v5630 = vadd.f32 0.0, %v5629
      %v5631 = vpop.f32.mrb[0].mxu0
      %v5632 = vadd.f32 0.0, %v5631
      %5633 = vdwg.mxu0
      %5634 = vmatprep.subr.mxu0 %v5484
      %5635 = vmatpush1.msra.mxu0 %v5483
      %5636 = vmatprep.subr.mxu0 0.0
      %5637 = vmatpush1.msra.mxu0 0.0
      %5638 = vmatprep.subr.mxu0 0.0
      %5639 = vmatpush1.msra.mxu0 0.0
      %5640 = vmatprep.subr.mxu0 0.0
      %5641 = vmatpush1.msra.mxu0 0.0
      %5642 = vmatprep.subr.mxu0 0.0
      %5643 = vmatpush1.msra.mxu0 0.0
      %5644 = vmatprep.subr.mxu0 0.0
      %5645 = vmatpush1.msra.mxu0 0.0
      %5646 = vmatprep.subr.mxu0 0.0
      %5647 = vmatpush1.msra.mxu0 0.0
      %5648 = vmatprep.subr.mxu0 0.0
      %5649 = vmatpush1.msra.mxu0 0.0
      %5650 = vmatprep.subr.mxu0 0.0
      %5651 = vmatpush1.msra.mxu0 0.0
      %5652 = vmatprep.subr.mxu0 0.0
      %5653 = vmatpush1.msra.mxu0 0.0
      %5654 = vmatprep.subr.mxu0 0.0
      %5655 = vmatpush1.msra.mxu0 0.0
      %5656 = vmatprep.subr.mxu0 0.0
      %5657 = vmatpush1.msra.mxu0 0.0
      %5658 = vmatprep.subr.mxu0 0.0
      %5659 = vmatpush1.msra.mxu0 0.0
      %5660 = vmatprep.subr.mxu0 0.0
      %5661 = vmatpush1.msra.mxu0 0.0
      %5662 = vmatprep.subr.mxu0 0.0
      %5663 = vmatpush1.msra.mxu0 0.0
      %5664 = vmatprep.subr.mxu0 0.0
      %5665 = vmatpush1.msra.mxu0 0.0
      %5666 = vmatprep.subr.mxu0 0.0
      %5667 = vmatpush1.msra.mxu0 0.0
      %5668 = vmatprep.subr.mxu0 0.0
      %5669 = vmatpush1.msra.mxu0 0.0
      %5670 = vmatprep.subr.mxu0 0.0
      %5671 = vmatpush1.msra.mxu0 0.0
      %5672 = vmatprep.subr.mxu0 0.0
      %5673 = vmatpush1.msra.mxu0 0.0
      %5674 = vmatprep.subr.mxu0 0.0
      %5675 = vmatpush1.msra.mxu0 0.0
      %5676 = vmatprep.subr.mxu0 0.0
      %5677 = vmatpush1.msra.mxu0 0.0
      %5678 = vmatprep.subr.mxu0 0.0
      %5679 = vmatpush1.msra.mxu0 0.0
      %5680 = vmatprep.subr.mxu0 0.0
      %5681 = vmatpush1.msra.mxu0 0.0
      %5682 = vmatprep.subr.mxu0 0.0
      %5683 = vmatpush1.msra.mxu0 0.0
      %5684 = vmatprep.subr.mxu0 0.0
      %5685 = vmatpush1.msra.mxu0 0.0
      %5686 = vmatprep.subr.mxu0 0.0
      %5687 = vmatpush1.msra.mxu0 0.0
      %5688 = vmatprep.subr.mxu0 0.0
      %5689 = vmatpush1.msra.mxu0 0.0
      %5690 = vmatprep.subr.mxu0 0.0
      %5691 = vmatpush1.msra.mxu0 0.0
      %5692 = vmatprep.subr.mxu0 0.0
      %5693 = vmatpush1.msra.mxu0 0.0
      %5694 = vmatprep.subr.mxu0 0.0
      %5695 = vmatpush1.msra.mxu0 0.0
      %5696 = vmatprep.subr.mxu0 0.0
      %5697 = vmatpush1.msra.mxu0 0.0
      %5698 = vmatprep.mubr.f32.mxu0 0.0
      %5699 = vmatmul.mubr.f32.gmra.mrb[0].mxu0 %v5490
      %v5700 = vpop.f32.mrb[0].mxu0
      %v5701 = vadd.f32 0.0, %v5700
      %v5702 = vpop.f32.mrb[0].mxu0
      %v5703 = vadd.f32 0.0, %v5702
      %5704 = vdwg.mxu0
      %5705 = vmatprep.subr.mxu0 %v5486
      %5706 = vmatpush1.msra.mxu0 %v5485
      %5707 = vmatprep.subr.mxu0 0.0
      %5708 = vmatpush1.msra.mxu0 0.0
      %5709 = vmatprep.subr.mxu0 0.0
      %5710 = vmatpush1.msra.mxu0 0.0
      %5711 = vmatprep.subr.mxu0 0.0
      %5712 = vmatpush1.msra.mxu0 0.0
      %5713 = vmatprep.subr.mxu0 0.0
      %5714 = vmatpush1.msra.mxu0 0.0
      %5715 = vmatprep.subr.mxu0 0.0
      %5716 = vmatpush1.msra.mxu0 0.0
      %5717 = vmatprep.subr.mxu0 0.0
      %5718 = vmatpush1.msra.mxu0 0.0
      %5719 = vmatprep.subr.mxu0 0.0
      %5720 = vmatpush1.msra.mxu0 0.0
      %5721 = vmatprep.subr.mxu0 0.0
      %5722 = vmatpush1.msra.mxu0 0.0
      %5723 = vmatprep.subr.mxu0 0.0
      %5724 = vmatpush1.msra.mxu0 0.0
      %5725 = vmatprep.subr.mxu0 0.0
      %5726 = vmatpush1.msra.mxu0 0.0
      %5727 = vmatprep.subr.mxu0 0.0
      %5728 = vmatpush1.msra.mxu0 0.0
      %5729 = vmatprep.subr.mxu0 0.0
      %5730 = vmatpush1.msra.mxu0 0.0
      %5731 = vmatprep.subr.mxu0 0.0
      %5732 = vmatpush1.msra.mxu0 0.0
      %5733 = vmatprep.subr.mxu0 0.0
      %5734 = vmatpush1.msra.mxu0 0.0
      %5735 = vmatprep.subr.mxu0 0.0
      %5736 = vmatpush1.msra.mxu0 0.0
      %5737 = vmatprep.subr.mxu0 0.0
      %5738 = vmatpush1.msra.mxu0 0.0
      %5739 = vmatprep.subr.mxu0 0.0
      %5740 = vmatpush1.msra.mxu0 0.0
      %5741 = vmatprep.subr.mxu0 0.0
      %5742 = vmatpush1.msra.mxu0 0.0
      %5743 = vmatprep.subr.mxu0 0.0
      %5744 = vmatpush1.msra.mxu0 0.0
      %5745 = vmatprep.subr.mxu0 0.0
      %5746 = vmatpush1.msra.mxu0 0.0
      %5747 = vmatprep.subr.mxu0 0.0
      %5748 = vmatpush1.msra.mxu0 0.0
      %5749 = vmatprep.subr.mxu0 0.0
      %5750 = vmatpush1.msra.mxu0 0.0
      %5751 = vmatprep.subr.mxu0 0.0
      %5752 = vmatpush1.msra.mxu0 0.0
      %5753 = vmatprep.subr.mxu0 0.0
      %5754 = vmatpush1.msra.mxu0 0.0
      %5755 = vmatprep.subr.mxu0 0.0
      %5756 = vmatpush1.msra.mxu0 0.0
      %5757 = vmatprep.subr.mxu0 0.0
      %5758 = vmatpush1.msra.mxu0 0.0
      %5759 = vmatprep.subr.mxu0 0.0
      %5760 = vmatpush1.msra.mxu0 0.0
      %5761 = vmatprep.subr.mxu0 0.0
      %5762 = vmatpush1.msra.mxu0 0.0
      %5763 = vmatprep.subr.mxu0 0.0
      %5764 = vmatpush1.msra.mxu0 0.0
      %5765 = vmatprep.subr.mxu0 0.0
      %5766 = vmatpush1.msra.mxu0 0.0
      %5767 = vmatprep.subr.mxu0 0.0
      %5768 = vmatpush1.msra.mxu0 0.0
      %5769 = vmatprep.mubr.f32.mxu0 0.0
      %5770 = vmatmul.mubr.f32.gmra.mrb[0].mxu0 %v5490
      %v5771 = vpop.f32.mrb[0].mxu0
      %v5772 = vadd.f32 0.0, %v5771
      %v5773 = vpop.f32.mrb[0].mxu0
      %v5774 = vadd.f32 0.0, %v5773
      %5775 = vdwg.mxu0
      %v5776 = vadd.f32 %v5447, %v5559
      %v5777 = vadd.f32 %v5448, %v5561
      %v5778 = vadd.f32 %v5449, %v5630
      %v5779 = vadd.f32 %v5450, %v5632
      %v5780 = vadd.f32 %v5451, %v5701
      %v5781 = vadd.f32 %v5452, %v5703
      %v5782 = vadd.f32 %v5453, %v5772
      %v5783 = vadd.f32 %v5454, %v5774
      %s5784 = scalar_lea.vmem %s5, 32
      %v5785 = vld [vmem:[%s5784] sm:$0xff]
      %v5787 = vsel %vm4551, %v5785, 0
      %5789 = vmatprep.subr.mxu0 %v4477
      %5790 = vmatpush1.msra.mxu0 %v4476
      %5791 = vmatprep.subr.mxu0 0.0
      %5792 = vmatpush1.msra.mxu0 0.0
      %5793 = vmatprep.subr.mxu0 0.0
      %5794 = vmatpush1.msra.mxu0 0.0
      %5795 = vmatprep.subr.mxu0 0.0
      %5796 = vmatpush1.msra.mxu0 0.0
      %5797 = vmatprep.subr.mxu0 0.0
      %5798 = vmatpush1.msra.mxu0 0.0
      %5799 = vmatprep.subr.mxu0 0.0
      %5800 = vmatpush1.msra.mxu0 0.0
      %5801 = vmatprep.subr.mxu0 0.0
      %5802 = vmatpush1.msra.mxu0 0.0
      %5803 = vmatprep.subr.mxu0 0.0
      %5804 = vmatpush1.msra.mxu0 0.0
      %5805 = vmatprep.subr.mxu0 0.0
      %5806 = vmatpush1.msra.mxu0 0.0
      %5807 = vmatprep.subr.mxu0 0.0
      %5808 = vmatpush1.msra.mxu0 0.0
      %5809 = vmatprep.subr.mxu0 0.0
      %5810 = vmatpush1.msra.mxu0 0.0
      %5811 = vmatprep.subr.mxu0 0.0
      %5812 = vmatpush1.msra.mxu0 0.0
      %5813 = vmatprep.subr.mxu0 0.0
      %5814 = vmatpush1.msra.mxu0 0.0
      %5815 = vmatprep.subr.mxu0 0.0
      %5816 = vmatpush1.msra.mxu0 0.0
      %5817 = vmatprep.subr.mxu0 0.0
      %5818 = vmatpush1.msra.mxu0 0.0
      %5819 = vmatprep.subr.mxu0 0.0
      %5820 = vmatpush1.msra.mxu0 0.0
      %5821 = vmatprep.subr.mxu0 0.0
      %5822 = vmatpush1.msra.mxu0 0.0
      %5823 = vmatprep.subr.mxu0 0.0
      %5824 = vmatpush1.msra.mxu0 0.0
      %5825 = vmatprep.subr.mxu0 0.0
      %5826 = vmatpush1.msra.mxu0 0.0
      %5827 = vmatprep.subr.mxu0 0.0
      %5828 = vmatpush1.msra.mxu0 0.0
      %5829 = vmatprep.subr.mxu0 0.0
      %5830 = vmatpush1.msra.mxu0 0.0
      %5831 = vmatprep.subr.mxu0 0.0
      %5832 = vmatpush1.msra.mxu0 0.0
      %5833 = vmatprep.subr.mxu0 0.0
      %5834 = vmatpush1.msra.mxu0 0.0
      %5835 = vmatprep.subr.mxu0 0.0
      %5836 = vmatpush1.msra.mxu0 0.0
      %5837 = vmatprep.subr.mxu0 0.0
      %5838 = vmatpush1.msra.mxu0 0.0
      %5839 = vmatprep.subr.mxu0 0.0
      %5840 = vmatpush1.msra.mxu0 0.0
      %5841 = vmatprep.subr.mxu0 0.0
      %5842 = vmatpush1.msra.mxu0 0.0
      %5843 = vmatprep.subr.mxu0 0.0
      %5844 = vmatpush1.msra.mxu0 0.0
      %5845 = vmatprep.subr.mxu0 0.0
      %5846 = vmatpush1.msra.mxu0 0.0
      %5847 = vmatprep.subr.mxu0 0.0
      %5848 = vmatpush1.msra.mxu0 0.0
      %5849 = vmatprep.subr.mxu0 0.0
      %5850 = vmatpush1.msra.mxu0 0.0
      %5851 = vmatprep.subr.mxu0 0.0
      %5852 = vmatpush1.msra.mxu0 0.0
      %5853 = vmatprep.mubr.f32.mxu0 0.0
      %5854 = vmatmul.mubr.f32.gmra.mrb[0].mxu0 %v5787
      %v5855 = vpop.f32.mrb[0].mxu0
      %v5856 = vadd.f32 0.0, %v5855
      %v5857 = vpop.f32.mrb[0].mxu0
      %v5858 = vadd.f32 0.0, %v5857
      %5859 = vdwg.mxu0
      %5860 = vmatprep.subr.mxu0 %v4479
      %5861 = vmatpush1.msra.mxu0 %v4478
      %5862 = vmatprep.subr.mxu0 0.0
      %5863 = vmatpush1.msra.mxu0 0.0
      %5864 = vmatprep.subr.mxu0 0.0
      %5865 = vmatpush1.msra.mxu0 0.0
      %5866 = vmatprep.subr.mxu0 0.0
      %5867 = vmatpush1.msra.mxu0 0.0
      %5868 = vmatprep.subr.mxu0 0.0
      %5869 = vmatpush1.msra.mxu0 0.0
      %5870 = vmatprep.subr.mxu0 0.0
      %5871 = vmatpush1.msra.mxu0 0.0
      %5872 = vmatprep.subr.mxu0 0.0
      %5873 = vmatpush1.msra.mxu0 0.0
      %5874 = vmatprep.subr.mxu0 0.0
      %5875 = vmatpush1.msra.mxu0 0.0
      %5876 = vmatprep.subr.mxu0 0.0
      %5877 = vmatpush1.msra.mxu0 0.0
      %5878 = vmatprep.subr.mxu0 0.0
      %5879 = vmatpush1.msra.mxu0 0.0
      %5880 = vmatprep.subr.mxu0 0.0
      %5881 = vmatpush1.msra.mxu0 0.0
      %5882 = vmatprep.subr.mxu0 0.0
      %5883 = vmatpush1.msra.mxu0 0.0
      %5884 = vmatprep.subr.mxu0 0.0
      %5885 = vmatpush1.msra.mxu0 0.0
      %5886 = vmatprep.subr.mxu0 0.0
      %5887 = vmatpush1.msra.mxu0 0.0
      %5888 = vmatprep.subr.mxu0 0.0
      %5889 = vmatpush1.msra.mxu0 0.0
      %5890 = vmatprep.subr.mxu0 0.0
      %5891 = vmatpush1.msra.mxu0 0.0
      %5892 = vmatprep.subr.mxu0 0.0
      %5893 = vmatpush1.msra.mxu0 0.0
      %5894 = vmatprep.subr.mxu0 0.0
      %5895 = vmatpush1.msra.mxu0 0.0
      %5896 = vmatprep.subr.mxu0 0.0
      %5897 = vmatpush1.msra.mxu0 0.0
      %5898 = vmatprep.subr.mxu0 0.0
      %5899 = vmatpush1.msra.mxu0 0.0
      %5900 = vmatprep.subr.mxu0 0.0
      %5901 = vmatpush1.msra.mxu0 0.0
      %5902 = vmatprep.subr.mxu0 0.0
      %5903 = vmatpush1.msra.mxu0 0.0
      %5904 = vmatprep.subr.mxu0 0.0
      %5905 = vmatpush1.msra.mxu0 0.0
      %5906 = vmatprep.subr.mxu0 0.0
      %5907 = vmatpush1.msra.mxu0 0.0
      %5908 = vmatprep.subr.mxu0 0.0
      %5909 = vmatpush1.msra.mxu0 0.0
      %5910 = vmatprep.subr.mxu0 0.0
      %5911 = vmatpush1.msra.mxu0 0.0
      %5912 = vmatprep.subr.mxu0 0.0
      %5913 = vmatpush1.msra.mxu0 0.0
      %5914 = vmatprep.subr.mxu0 0.0
      %5915 = vmatpush1.msra.mxu0 0.0
      %5916 = vmatprep.subr.mxu0 0.0
      %5917 = vmatpush1.msra.mxu0 0.0
      %5918 = vmatprep.subr.mxu0 0.0
      %5919 = vmatpush1.msra.mxu0 0.0
      %5920 = vmatprep.subr.mxu0 0.0
      %5921 = vmatpush1.msra.mxu0 0.0
      %5922 = vmatprep.subr.mxu0 0.0
      %5923 = vmatpush1.msra.mxu0 0.0
      %5924 = vmatprep.mubr.f32.mxu0 0.0
      %5925 = vmatmul.mubr.f32.gmra.mrb[0].mxu0 %v5787
      %v5926 = vpop.f32.mrb[0].mxu0
      %v5927 = vadd.f32 0.0, %v5926
      %v5928 = vpop.f32.mrb[0].mxu0
      %v5929 = vadd.f32 0.0, %v5928
      %5930 = vdwg.mxu0
      %5931 = vmatprep.subr.mxu0 %v4481
      %5932 = vmatpush1.msra.mxu0 %v4480
      %5933 = vmatprep.subr.mxu0 0.0
      %5934 = vmatpush1.msra.mxu0 0.0
      %5935 = vmatprep.subr.mxu0 0.0
      %5936 = vmatpush1.msra.mxu0 0.0
      %5937 = vmatprep.subr.mxu0 0.0
      %5938 = vmatpush1.msra.mxu0 0.0
      %5939 = vmatprep.subr.mxu0 0.0
      %5940 = vmatpush1.msra.mxu0 0.0
      %5941 = vmatprep.subr.mxu0 0.0
      %5942 = vmatpush1.msra.mxu0 0.0
      %5943 = vmatprep.subr.mxu0 0.0
      %5944 = vmatpush1.msra.mxu0 0.0
      %5945 = vmatprep.subr.mxu0 0.0
      %5946 = vmatpush1.msra.mxu0 0.0
      %5947 = vmatprep.subr.mxu0 0.0
      %5948 = vmatpush1.msra.mxu0 0.0
      %5949 = vmatprep.subr.mxu0 0.0
      %5950 = vmatpush1.msra.mxu0 0.0
      %5951 = vmatprep.subr.mxu0 0.0
      %5952 = vmatpush1.msra.mxu0 0.0
      %5953 = vmatprep.subr.mxu0 0.0
      %5954 = vmatpush1.msra.mxu0 0.0
      %5955 = vmatprep.subr.mxu0 0.0
      %5956 = vmatpush1.msra.mxu0 0.0
      %5957 = vmatprep.subr.mxu0 0.0
      %5958 = vmatpush1.msra.mxu0 0.0
      %5959 = vmatprep.subr.mxu0 0.0
      %5960 = vmatpush1.msra.mxu0 0.0
      %5961 = vmatprep.subr.mxu0 0.0
      %5962 = vmatpush1.msra.mxu0 0.0
      %5963 = vmatprep.subr.mxu0 0.0
      %5964 = vmatpush1.msra.mxu0 0.0
      %5965 = vmatprep.subr.mxu0 0.0
      %5966 = vmatpush1.msra.mxu0 0.0
      %5967 = vmatprep.subr.mxu0 0.0
      %5968 = vmatpush1.msra.mxu0 0.0
      %5969 = vmatprep.subr.mxu0 0.0
      %5970 = vmatpush1.msra.mxu0 0.0
      %5971 = vmatprep.subr.mxu0 0.0
      %5972 = vmatpush1.msra.mxu0 0.0
      %5973 = vmatprep.subr.mxu0 0.0
      %5974 = vmatpush1.msra.mxu0 0.0
      %5975 = vmatprep.subr.mxu0 0.0
      %5976 = vmatpush1.msra.mxu0 0.0
      %5977 = vmatprep.subr.mxu0 0.0
      %5978 = vmatpush1.msra.mxu0 0.0
      %5979 = vmatprep.subr.mxu0 0.0
      %5980 = vmatpush1.msra.mxu0 0.0
      %5981 = vmatprep.subr.mxu0 0.0
      %5982 = vmatpush1.msra.mxu0 0.0
      %5983 = vmatprep.subr.mxu0 0.0
      %5984 = vmatpush1.msra.mxu0 0.0
      %5985 = vmatprep.subr.mxu0 0.0
      %5986 = vmatpush1.msra.mxu0 0.0
      %5987 = vmatprep.subr.mxu0 0.0
      %5988 = vmatpush1.msra.mxu0 0.0
      %5989 = vmatprep.subr.mxu0 0.0
      %5990 = vmatpush1.msra.mxu0 0.0
      %5991 = vmatprep.subr.mxu0 0.0
      %5992 = vmatpush1.msra.mxu0 0.0
      %5993 = vmatprep.subr.mxu0 0.0
      %5994 = vmatpush1.msra.mxu0 0.0
      %5995 = vmatprep.mubr.f32.mxu0 0.0
      %5996 = vmatmul.mubr.f32.gmra.mrb[0].mxu0 %v5787
      %v5997 = vpop.f32.mrb[0].mxu0
      %v5998 = vadd.f32 0.0, %v5997
      %v5999 = vpop.f32.mrb[0].mxu0
      %v6000 = vadd.f32 0.0, %v5999
      %6001 = vdwg.mxu0
      %6002 = vmatprep.subr.mxu0 %v4483
      %6003 = vmatpush1.msra.mxu0 %v4482
      %6004 = vmatprep.subr.mxu0 0.0
      %6005 = vmatpush1.msra.mxu0 0.0
      %6006 = vmatprep.subr.mxu0 0.0
      %6007 = vmatpush1.msra.mxu0 0.0
      %6008 = vmatprep.subr.mxu0 0.0
      %6009 = vmatpush1.msra.mxu0 0.0
      %6010 = vmatprep.subr.mxu0 0.0
      %6011 = vmatpush1.msra.mxu0 0.0
      %6012 = vmatprep.subr.mxu0 0.0
      %6013 = vmatpush1.msra.mxu0 0.0
      %6014 = vmatprep.subr.mxu0 0.0
      %6015 = vmatpush1.msra.mxu0 0.0
      %6016 = vmatprep.subr.mxu0 0.0
      %6017 = vmatpush1.msra.mxu0 0.0
      %6018 = vmatprep.subr.mxu0 0.0
      %6019 = vmatpush1.msra.mxu0 0.0
      %6020 = vmatprep.subr.mxu0 0.0
      %6021 = vmatpush1.msra.mxu0 0.0
      %6022 = vmatprep.subr.mxu0 0.0
      %6023 = vmatpush1.msra.mxu0 0.0
      %6024 = vmatprep.subr.mxu0 0.0
      %6025 = vmatpush1.msra.mxu0 0.0
      %6026 = vmatprep.subr.mxu0 0.0
      %6027 = vmatpush1.msra.mxu0 0.0
      %6028 = vmatprep.subr.mxu0 0.0
      %6029 = vmatpush1.msra.mxu0 0.0
      %6030 = vmatprep.subr.mxu0 0.0
      %6031 = vmatpush1.msra.mxu0 0.0
      %6032 = vmatprep.subr.mxu0 0.0
      %6033 = vmatpush1.msra.mxu0 0.0
      %6034 = vmatprep.subr.mxu0 0.0
      %6035 = vmatpush1.msra.mxu0 0.0
      %6036 = vmatprep.subr.mxu0 0.0
      %6037 = vmatpush1.msra.mxu0 0.0
      %6038 = vmatprep.subr.mxu0 0.0
      %6039 = vmatpush1.msra.mxu0 0.0
      %6040 = vmatprep.subr.mxu0 0.0
      %6041 = vmatpush1.msra.mxu0 0.0
      %6042 = vmatprep.subr.mxu0 0.0
      %6043 = vmatpush1.msra.mxu0 0.0
      %6044 = vmatprep.subr.mxu0 0.0
      %6045 = vmatpush1.msra.mxu0 0.0
      %6046 = vmatprep.subr.mxu0 0.0
      %6047 = vmatpush1.msra.mxu0 0.0
      %6048 = vmatprep.subr.mxu0 0.0
      %6049 = vmatpush1.msra.mxu0 0.0
      %6050 = vmatprep.subr.mxu0 0.0
      %6051 = vmatpush1.msra.mxu0 0.0
      %6052 = vmatprep.subr.mxu0 0.0
      %6053 = vmatpush1.msra.mxu0 0.0
      %6054 = vmatprep.subr.mxu0 0.0
      %6055 = vmatpush1.msra.mxu0 0.0
      %6056 = vmatprep.subr.mxu0 0.0
      %6057 = vmatpush1.msra.mxu0 0.0
      %6058 = vmatprep.subr.mxu0 0.0
      %6059 = vmatpush1.msra.mxu0 0.0
      %6060 = vmatprep.subr.mxu0 0.0
      %6061 = vmatpush1.msra.mxu0 0.0
      %6062 = vmatprep.subr.mxu0 0.0
      %6063 = vmatpush1.msra.mxu0 0.0
      %6064 = vmatprep.subr.mxu0 0.0
      %6065 = vmatpush1.msra.mxu0 0.0
      %6066 = vmatprep.mubr.f32.mxu0 0.0
      %6067 = vmatmul.mubr.f32.gmra.mrb[0].mxu0 %v5787
      %v6068 = vpop.f32.mrb[0].mxu0
      %v6069 = vadd.f32 0.0, %v6068
      %v6070 = vpop.f32.mrb[0].mxu0
      %v6071 = vadd.f32 0.0, %v6070
      %6072 = vdwg.mxu0
      %v6073 = vadd.f32 %v5776, %v5856
      %v6074 = vadd.f32 %v5777, %v5858
      %v6075 = vadd.f32 %v5778, %v5927
      %v6076 = vadd.f32 %v5779, %v5929
      %v6077 = vadd.f32 %v5780, %v5998
      %v6078 = vadd.f32 %v5781, %v6000
      %v6079 = vadd.f32 %v5782, %v6069
      %v6080 = vadd.f32 %v5783, %v6071
      %6081 = vrot.lane.b32.xlu0 %v4476, 127
      %v6082 = vpop.permute.xlu0 %6081
      %6083 = vrot.lane.b32.xlu0 %v4477, 127
      %v6084 = vpop.permute.xlu0 %6083
      %6085 = vrot.lane.b32.xlu0 %v4478, 127
      %v6086 = vpop.permute.xlu0 %6085
      %6087 = vrot.lane.b32.xlu0 %v4479, 127
      %v6088 = vpop.permute.xlu0 %6087
      %6089 = vrot.lane.b32.xlu0 %v4480, 127
      %v6090 = vpop.permute.xlu0 %6089
      %6091 = vrot.lane.b32.xlu0 %v4481, 127
      %v6092 = vpop.permute.xlu0 %6091
      %6093 = vrot.lane.b32.xlu0 %v4482, 127
      %v6094 = vpop.permute.xlu0 %6093
      %6095 = vrot.lane.b32.xlu0 %v4483, 127
      %v6096 = vpop.permute.xlu0 %6095
      %v6097 = vsel %vm2754, %v6094, %v6096
      %v6098 = vsel %vm2754, %v6092, %v6094
      %v6099 = vsel %vm2754, %v6090, %v6092
      %v6100 = vsel %vm2754, %v6088, %v6090
      %v6101 = vsel %vm2754, %v6086, %v6088
      %v6102 = vsel %vm2754, %v6084, %v6086
      %v6103 = vsel %vm2754, %v6082, %v6084
      %v6104 = vsel %vm2754, %v6096, %v6082
      %v6105 = vmul.f32 %v6103, %v2779
      %v6106 = vmul.f32 %v6102, %v2783
      %v6107 = vmul.f32 %v6101, %v2787
      %v6108 = vmul.f32 %v6100, %v2791
      %v6109 = vmul.f32 %v6099, %v2795
      %v6110 = vmul.f32 %v6098, %v2799
      %v6111 = vmul.f32 %v6097, %v2803
      %v6112 = vmul.f32 %v6104, %v2807
      %s6113 = scalar_lea.vmem %s5, 40
      %v6114 = vld [vmem:[%s6113] sm:$0xff]
      %v6116 = vsel %vm4551, %v6114, 0
      %6118 = vmatprep.subr.mxu0 %v6106
      %6119 = vmatpush1.msra.mxu0 %v6105
      %6120 = vmatprep.subr.mxu0 0.0
      %6121 = vmatpush1.msra.mxu0 0.0
      %6122 = vmatprep.subr.mxu0 0.0
      %6123 = vmatpush1.msra.mxu0 0.0
      %6124 = vmatprep.subr.mxu0 0.0
      %6125 = vmatpush1.msra.mxu0 0.0
      %6126 = vmatprep.subr.mxu0 0.0
      %6127 = vmatpush1.msra.mxu0 0.0
      %6128 = vmatprep.subr.mxu0 0.0
      %6129 = vmatpush1.msra.mxu0 0.0
      %6130 = vmatprep.subr.mxu0 0.0
      %6131 = vmatpush1.msra.mxu0 0.0
      %6132 = vmatprep.subr.mxu0 0.0
      %6133 = vmatpush1.msra.mxu0 0.0
      %6134 = vmatprep.subr.mxu0 0.0
      %6135 = vmatpush1.msra.mxu0 0.0
      %6136 = vmatprep.subr.mxu0 0.0
      %6137 = vmatpush1.msra.mxu0 0.0
      %6138 = vmatprep.subr.mxu0 0.0
      %6139 = vmatpush1.msra.mxu0 0.0
      %6140 = vmatprep.subr.mxu0 0.0
      %6141 = vmatpush1.msra.mxu0 0.0
      %6142 = vmatprep.subr.mxu0 0.0
      %6143 = vmatpush1.msra.mxu0 0.0
      %6144 = vmatprep.subr.mxu0 0.0
      %6145 = vmatpush1.msra.mxu0 0.0
      %6146 = vmatprep.subr.mxu0 0.0
      %6147 = vmatpush1.msra.mxu0 0.0
      %6148 = vmatprep.subr.mxu0 0.0
      %6149 = vmatpush1.msra.mxu0 0.0
      %6150 = vmatprep.subr.mxu0 0.0
      %6151 = vmatpush1.msra.mxu0 0.0
      %6152 = vmatprep.subr.mxu0 0.0
      %6153 = vmatpush1.msra.mxu0 0.0
      %6154 = vmatprep.subr.mxu0 0.0
      %6155 = vmatpush1.msra.mxu0 0.0
      %6156 = vmatprep.subr.mxu0 0.0
      %6157 = vmatpush1.msra.mxu0 0.0
      %6158 = vmatprep.subr.mxu0 0.0
      %6159 = vmatpush1.msra.mxu0 0.0
      %6160 = vmatprep.subr.mxu0 0.0
      %6161 = vmatpush1.msra.mxu0 0.0
      %6162 = vmatprep.subr.mxu0 0.0
      %6163 = vmatpush1.msra.mxu0 0.0
      %6164 = vmatprep.subr.mxu0 0.0
      %6165 = vmatpush1.msra.mxu0 0.0
      %6166 = vmatprep.subr.mxu0 0.0
      %6167 = vmatpush1.msra.mxu0 0.0
      %6168 = vmatprep.subr.mxu0 0.0
      %6169 = vmatpush1.msra.mxu0 0.0
      %6170 = vmatprep.subr.mxu0 0.0
      %6171 = vmatpush1.msra.mxu0 0.0
      %6172 = vmatprep.subr.mxu0 0.0
      %6173 = vmatpush1.msra.mxu0 0.0
      %6174 = vmatprep.subr.mxu0 0.0
      %6175 = vmatpush1.msra.mxu0 0.0
      %6176 = vmatprep.subr.mxu0 0.0
      %6177 = vmatpush1.msra.mxu0 0.0
      %6178 = vmatprep.subr.mxu0 0.0
      %6179 = vmatpush1.msra.mxu0 0.0
      %6180 = vmatprep.subr.mxu0 0.0
      %6181 = vmatpush1.msra.mxu0 0.0
      %6182 = vmatprep.mubr.f32.mxu0 0.0
      %6183 = vmatmul.mubr.f32.gmra.mrb[0].mxu0 %v6116
      %v6184 = vpop.f32.mrb[0].mxu0
      %v6185 = vadd.f32 0.0, %v6184
      %v6186 = vpop.f32.mrb[0].mxu0
      %v6187 = vadd.f32 0.0, %v6186
      %6188 = vdwg.mxu0
      %6189 = vmatprep.subr.mxu0 %v6108
      %6190 = vmatpush1.msra.mxu0 %v6107
      %6191 = vmatprep.subr.mxu0 0.0
      %6192 = vmatpush1.msra.mxu0 0.0
      %6193 = vmatprep.subr.mxu0 0.0
      %6194 = vmatpush1.msra.mxu0 0.0
      %6195 = vmatprep.subr.mxu0 0.0
      %6196 = vmatpush1.msra.mxu0 0.0
      %6197 = vmatprep.subr.mxu0 0.0
      %6198 = vmatpush1.msra.mxu0 0.0
      %6199 = vmatprep.subr.mxu0 0.0
      %6200 = vmatpush1.msra.mxu0 0.0
      %6201 = vmatprep.subr.mxu0 0.0
      %6202 = vmatpush1.msra.mxu0 0.0
      %6203 = vmatprep.subr.mxu0 0.0
      %6204 = vmatpush1.msra.mxu0 0.0
      %6205 = vmatprep.subr.mxu0 0.0
      %6206 = vmatpush1.msra.mxu0 0.0
      %6207 = vmatprep.subr.mxu0 0.0
      %6208 = vmatpush1.msra.mxu0 0.0
      %6209 = vmatprep.subr.mxu0 0.0
      %6210 = vmatpush1.msra.mxu0 0.0
      %6211 = vmatprep.subr.mxu0 0.0
      %6212 = vmatpush1.msra.mxu0 0.0
      %6213 = vmatprep.subr.mxu0 0.0
      %6214 = vmatpush1.msra.mxu0 0.0
      %6215 = vmatprep.subr.mxu0 0.0
      %6216 = vmatpush1.msra.mxu0 0.0
      %6217 = vmatprep.subr.mxu0 0.0
      %6218 = vmatpush1.msra.mxu0 0.0
      %6219 = vmatprep.subr.mxu0 0.0
      %6220 = vmatpush1.msra.mxu0 0.0
      %6221 = vmatprep.subr.mxu0 0.0
      %6222 = vmatpush1.msra.mxu0 0.0
      %6223 = vmatprep.subr.mxu0 0.0
      %6224 = vmatpush1.msra.mxu0 0.0
      %6225 = vmatprep.subr.mxu0 0.0
      %6226 = vmatpush1.msra.mxu0 0.0
      %6227 = vmatprep.subr.mxu0 0.0
      %6228 = vmatpush1.msra.mxu0 0.0
      %6229 = vmatprep.subr.mxu0 0.0
      %6230 = vmatpush1.msra.mxu0 0.0
      %6231 = vmatprep.subr.mxu0 0.0
      %6232 = vmatpush1.msra.mxu0 0.0
      %6233 = vmatprep.subr.mxu0 0.0
      %6234 = vmatpush1.msra.mxu0 0.0
      %6235 = vmatprep.subr.mxu0 0.0
      %6236 = vmatpush1.msra.mxu0 0.0
      %6237 = vmatprep.subr.mxu0 0.0
      %6238 = vmatpush1.msra.mxu0 0.0
      %6239 = vmatprep.subr.mxu0 0.0
      %6240 = vmatpush1.msra.mxu0 0.0
      %6241 = vmatprep.subr.mxu0 0.0
      %6242 = vmatpush1.msra.mxu0 0.0
      %6243 = vmatprep.subr.mxu0 0.0
      %6244 = vmatpush1.msra.mxu0 0.0
      %6245 = vmatprep.subr.mxu0 0.0
      %6246 = vmatpush1.msra.mxu0 0.0
      %6247 = vmatprep.subr.mxu0 0.0
      %6248 = vmatpush1.msra.mxu0 0.0
      %6249 = vmatprep.subr.mxu0 0.0
      %6250 = vmatpush1.msra.mxu0 0.0
      %6251 = vmatprep.subr.mxu0 0.0
      %6252 = vmatpush1.msra.mxu0 0.0
      %6253 = vmatprep.mubr.f32.mxu0 0.0
      %6254 = vmatmul.mubr.f32.gmra.mrb[0].mxu0 %v6116
      %v6255 = vpop.f32.mrb[0].mxu0
      %v6256 = vadd.f32 0.0, %v6255
      %v6257 = vpop.f32.mrb[0].mxu0
      %v6258 = vadd.f32 0.0, %v6257
      %6259 = vdwg.mxu0
      %6260 = vmatprep.subr.mxu0 %v6110
      %6261 = vmatpush1.msra.mxu0 %v6109
      %6262 = vmatprep.subr.mxu0 0.0
      %6263 = vmatpush1.msra.mxu0 0.0
      %6264 = vmatprep.subr.mxu0 0.0
      %6265 = vmatpush1.msra.mxu0 0.0
      %6266 = vmatprep.subr.mxu0 0.0
      %6267 = vmatpush1.msra.mxu0 0.0
      %6268 = vmatprep.subr.mxu0 0.0
      %6269 = vmatpush1.msra.mxu0 0.0
      %6270 = vmatprep.subr.mxu0 0.0
      %6271 = vmatpush1.msra.mxu0 0.0
      %6272 = vmatprep.subr.mxu0 0.0
      %6273 = vmatpush1.msra.mxu0 0.0
      %6274 = vmatprep.subr.mxu0 0.0
      %6275 = vmatpush1.msra.mxu0 0.0
      %6276 = vmatprep.subr.mxu0 0.0
      %6277 = vmatpush1.msra.mxu0 0.0
      %6278 = vmatprep.subr.mxu0 0.0
      %6279 = vmatpush1.msra.mxu0 0.0
      %6280 = vmatprep.subr.mxu0 0.0
      %6281 = vmatpush1.msra.mxu0 0.0
      %6282 = vmatprep.subr.mxu0 0.0
      %6283 = vmatpush1.msra.mxu0 0.0
      %6284 = vmatprep.subr.mxu0 0.0
      %6285 = vmatpush1.msra.mxu0 0.0
      %6286 = vmatprep.subr.mxu0 0.0
      %6287 = vmatpush1.msra.mxu0 0.0
      %6288 = vmatprep.subr.mxu0 0.0
      %6289 = vmatpush1.msra.mxu0 0.0
      %6290 = vmatprep.subr.mxu0 0.0
      %6291 = vmatpush1.msra.mxu0 0.0
      %6292 = vmatprep.subr.mxu0 0.0
      %6293 = vmatpush1.msra.mxu0 0.0
      %6294 = vmatprep.subr.mxu0 0.0
      %6295 = vmatpush1.msra.mxu0 0.0
      %6296 = vmatprep.subr.mxu0 0.0
      %6297 = vmatpush1.msra.mxu0 0.0
      %6298 = vmatprep.subr.mxu0 0.0
      %6299 = vmatpush1.msra.mxu0 0.0
      %6300 = vmatprep.subr.mxu0 0.0
      %6301 = vmatpush1.msra.mxu0 0.0
      %6302 = vmatprep.subr.mxu0 0.0
      %6303 = vmatpush1.msra.mxu0 0.0
      %6304 = vmatprep.subr.mxu0 0.0
      %6305 = vmatpush1.msra.mxu0 0.0
      %6306 = vmatprep.subr.mxu0 0.0
      %6307 = vmatpush1.msra.mxu0 0.0
      %6308 = vmatprep.subr.mxu0 0.0
      %6309 = vmatpush1.msra.mxu0 0.0
      %6310 = vmatprep.subr.mxu0 0.0
      %6311 = vmatpush1.msra.mxu0 0.0
      %6312 = vmatprep.subr.mxu0 0.0
      %6313 = vmatpush1.msra.mxu0 0.0
      %6314 = vmatprep.subr.mxu0 0.0
      %6315 = vmatpush1.msra.mxu0 0.0
      %6316 = vmatprep.subr.mxu0 0.0
      %6317 = vmatpush1.msra.mxu0 0.0
      %6318 = vmatprep.subr.mxu0 0.0
      %6319 = vmatpush1.msra.mxu0 0.0
      %6320 = vmatprep.subr.mxu0 0.0
      %6321 = vmatpush1.msra.mxu0 0.0
      %6322 = vmatprep.subr.mxu0 0.0
      %6323 = vmatpush1.msra.mxu0 0.0
      %6324 = vmatprep.mubr.f32.mxu0 0.0
      %6325 = vmatmul.mubr.f32.gmra.mrb[0].mxu0 %v6116
      %v6326 = vpop.f32.mrb[0].mxu0
      %v6327 = vadd.f32 0.0, %v6326
      %v6328 = vpop.f32.mrb[0].mxu0
      %v6329 = vadd.f32 0.0, %v6328
      %6330 = vdwg.mxu0
      %6331 = vmatprep.subr.mxu0 %v6112
      %6332 = vmatpush1.msra.mxu0 %v6111
      %6333 = vmatprep.subr.mxu0 0.0
      %6334 = vmatpush1.msra.mxu0 0.0
      %6335 = vmatprep.subr.mxu0 0.0
      %6336 = vmatpush1.msra.mxu0 0.0
      %6337 = vmatprep.subr.mxu0 0.0
      %6338 = vmatpush1.msra.mxu0 0.0
      %6339 = vmatprep.subr.mxu0 0.0
      %6340 = vmatpush1.msra.mxu0 0.0
      %6341 = vmatprep.subr.mxu0 0.0
      %6342 = vmatpush1.msra.mxu0 0.0
      %6343 = vmatprep.subr.mxu0 0.0
      %6344 = vmatpush1.msra.mxu0 0.0
      %6345 = vmatprep.subr.mxu0 0.0
      %6346 = vmatpush1.msra.mxu0 0.0
      %6347 = vmatprep.subr.mxu0 0.0
      %6348 = vmatpush1.msra.mxu0 0.0
      %6349 = vmatprep.subr.mxu0 0.0
      %6350 = vmatpush1.msra.mxu0 0.0
      %6351 = vmatprep.subr.mxu0 0.0
      %6352 = vmatpush1.msra.mxu0 0.0
      %6353 = vmatprep.subr.mxu0 0.0
      %6354 = vmatpush1.msra.mxu0 0.0
      %6355 = vmatprep.subr.mxu0 0.0
      %6356 = vmatpush1.msra.mxu0 0.0
      %6357 = vmatprep.subr.mxu0 0.0
      %6358 = vmatpush1.msra.mxu0 0.0
      %6359 = vmatprep.subr.mxu0 0.0
      %6360 = vmatpush1.msra.mxu0 0.0
      %6361 = vmatprep.subr.mxu0 0.0
      %6362 = vmatpush1.msra.mxu0 0.0
      %6363 = vmatprep.subr.mxu0 0.0
      %6364 = vmatpush1.msra.mxu0 0.0
      %6365 = vmatprep.subr.mxu0 0.0
      %6366 = vmatpush1.msra.mxu0 0.0
      %6367 = vmatprep.subr.mxu0 0.0
      %6368 = vmatpush1.msra.mxu0 0.0
      %6369 = vmatprep.subr.mxu0 0.0
      %6370 = vmatpush1.msra.mxu0 0.0
      %6371 = vmatprep.subr.mxu0 0.0
      %6372 = vmatpush1.msra.mxu0 0.0
      %6373 = vmatprep.subr.mxu0 0.0
      %6374 = vmatpush1.msra.mxu0 0.0
      %6375 = vmatprep.subr.mxu0 0.0
      %6376 = vmatpush1.msra.mxu0 0.0
      %6377 = vmatprep.subr.mxu0 0.0
      %6378 = vmatpush1.msra.mxu0 0.0
      %6379 = vmatprep.subr.mxu0 0.0
      %6380 = vmatpush1.msra.mxu0 0.0
      %6381 = vmatprep.subr.mxu0 0.0
      %6382 = vmatpush1.msra.mxu0 0.0
      %6383 = vmatprep.subr.mxu0 0.0
      %6384 = vmatpush1.msra.mxu0 0.0
      %6385 = vmatprep.subr.mxu0 0.0
      %6386 = vmatpush1.msra.mxu0 0.0
      %6387 = vmatprep.subr.mxu0 0.0
      %6388 = vmatpush1.msra.mxu0 0.0
      %6389 = vmatprep.subr.mxu0 0.0
      %6390 = vmatpush1.msra.mxu0 0.0
      %6391 = vmatprep.subr.mxu0 0.0
      %6392 = vmatpush1.msra.mxu0 0.0
      %6393 = vmatprep.subr.mxu0 0.0
      %6394 = vmatpush1.msra.mxu0 0.0
      %6395 = vmatprep.mubr.f32.mxu0 0.0
      %6396 = vmatmul.mubr.f32.gmra.mrb[0].mxu0 %v6116
      %v6397 = vpop.f32.mrb[0].mxu0
      %v6398 = vadd.f32 0.0, %v6397
      %v6399 = vpop.f32.mrb[0].mxu0
      %v6400 = vadd.f32 0.0, %v6399
      %6401 = vdwg.mxu0
      %v6402 = vadd.f32 %v6073, %v6185
      %v6403 = vadd.f32 %v6074, %v6187
      %v6404 = vadd.f32 %v6075, %v6256
      %v6405 = vadd.f32 %v6076, %v6258
      %v6406 = vadd.f32 %v6077, %v6327
      %v6407 = vadd.f32 %v6078, %v6329
      %v6408 = vadd.f32 %v6079, %v6398
      %v6409 = vadd.f32 %v6080, %v6400
      %6410 = vrot.lane.b32.xlu0 %v4476, 113
      %v6411 = vpop.permute.xlu0 %6410
      %6412 = vrot.lane.b32.xlu0 %v4477, 113
      %v6413 = vpop.permute.xlu0 %6412
      %6414 = vrot.lane.b32.xlu0 %v4478, 113
      %v6415 = vpop.permute.xlu0 %6414
      %6416 = vrot.lane.b32.xlu0 %v4479, 113
      %v6417 = vpop.permute.xlu0 %6416
      %6418 = vrot.lane.b32.xlu0 %v4480, 113
      %v6419 = vpop.permute.xlu0 %6418
      %6420 = vrot.lane.b32.xlu0 %v4481, 113
      %v6421 = vpop.permute.xlu0 %6420
      %6422 = vrot.lane.b32.xlu0 %v4482, 113
      %v6423 = vpop.permute.xlu0 %6422
      %6424 = vrot.lane.b32.xlu0 %v4483, 113
      %v6425 = vpop.permute.xlu0 %6424
      %v6426 = vsel %vm3185, %v6423, %v6425
      %v6427 = vsel %vm3185, %v6421, %v6423
      %v6428 = vsel %vm3185, %v6419, %v6421
      %v6429 = vsel %vm3185, %v6417, %v6419
      %v6430 = vsel %vm3185, %v6415, %v6417
      %v6431 = vsel %vm3185, %v6413, %v6415
      %v6432 = vsel %vm3185, %v6411, %v6413
      %v6433 = vsel %vm3185, %v6425, %v6411
      %v6434 = vmul.f32 %v6432, %v3210
      %v6435 = vmul.f32 %v6431, %v3214
      %v6436 = vmul.f32 %v6430, %v3218
      %v6437 = vmul.f32 %v6429, %v3222
      %v6438 = vmul.f32 %v6428, %v3226
      %v6439 = vmul.f32 %v6427, %v3230
      %v6440 = vmul.f32 %v6426, %v3234
      %v6441 = vmul.f32 %v6433, %v3238
      %s6442 = scalar_lea.vmem %s5, 48
      %v6443 = vld [vmem:[%s6442] sm:$0xff]
      %v6445 = vsel %vm4551, %v6443, 0
      %6447 = vmatprep.subr.mxu0 %v6435
      %6448 = vmatpush1.msra.mxu0 %v6434
      %6449 = vmatprep.subr.mxu0 0.0
      %6450 = vmatpush1.msra.mxu0 0.0
      %6451 = vmatprep.subr.mxu0 0.0
      %6452 = vmatpush1.msra.mxu0 0.0
      %6453 = vmatprep.subr.mxu0 0.0
      %6454 = vmatpush1.msra.mxu0 0.0
      %6455 = vmatprep.subr.mxu0 0.0
      %6456 = vmatpush1.msra.mxu0 0.0
      %6457 = vmatprep.subr.mxu0 0.0
      %6458 = vmatpush1.msra.mxu0 0.0
      %6459 = vmatprep.subr.mxu0 0.0
      %6460 = vmatpush1.msra.mxu0 0.0
      %6461 = vmatprep.subr.mxu0 0.0
      %6462 = vmatpush1.msra.mxu0 0.0
      %6463 = vmatprep.subr.mxu0 0.0
      %6464 = vmatpush1.msra.mxu0 0.0
      %6465 = vmatprep.subr.mxu0 0.0
      %6466 = vmatpush1.msra.mxu0 0.0
      %6467 = vmatprep.subr.mxu0 0.0
      %6468 = vmatpush1.msra.mxu0 0.0
      %6469 = vmatprep.subr.mxu0 0.0
      %6470 = vmatpush1.msra.mxu0 0.0
      %6471 = vmatprep.subr.mxu0 0.0
      %6472 = vmatpush1.msra.mxu0 0.0
      %6473 = vmatprep.subr.mxu0 0.0
      %6474 = vmatpush1.msra.mxu0 0.0
      %6475 = vmatprep.subr.mxu0 0.0
      %6476 = vmatpush1.msra.mxu0 0.0
      %6477 = vmatprep.subr.mxu0 0.0
      %6478 = vmatpush1.msra.mxu0 0.0
      %6479 = vmatprep.subr.mxu0 0.0
      %6480 = vmatpush1.msra.mxu0 0.0
      %6481 = vmatprep.subr.mxu0 0.0
      %6482 = vmatpush1.msra.mxu0 0.0
      %6483 = vmatprep.subr.mxu0 0.0
      %6484 = vmatpush1.msra.mxu0 0.0
      %6485 = vmatprep.subr.mxu0 0.0
      %6486 = vmatpush1.msra.mxu0 0.0
      %6487 = vmatprep.subr.mxu0 0.0
      %6488 = vmatpush1.msra.mxu0 0.0
      %6489 = vmatprep.subr.mxu0 0.0
      %6490 = vmatpush1.msra.mxu0 0.0
      %6491 = vmatprep.subr.mxu0 0.0
      %6492 = vmatpush1.msra.mxu0 0.0
      %6493 = vmatprep.subr.mxu0 0.0
      %6494 = vmatpush1.msra.mxu0 0.0
      %6495 = vmatprep.subr.mxu0 0.0
      %6496 = vmatpush1.msra.mxu0 0.0
      %6497 = vmatprep.subr.mxu0 0.0
      %6498 = vmatpush1.msra.mxu0 0.0
      %6499 = vmatprep.subr.mxu0 0.0
      %6500 = vmatpush1.msra.mxu0 0.0
      %6501 = vmatprep.subr.mxu0 0.0
      %6502 = vmatpush1.msra.mxu0 0.0
      %6503 = vmatprep.subr.mxu0 0.0
      %6504 = vmatpush1.msra.mxu0 0.0
      %6505 = vmatprep.subr.mxu0 0.0
      %6506 = vmatpush1.msra.mxu0 0.0
      %6507 = vmatprep.subr.mxu0 0.0
      %6508 = vmatpush1.msra.mxu0 0.0
      %6509 = vmatprep.subr.mxu0 0.0
      %6510 = vmatpush1.msra.mxu0 0.0
      %6511 = vmatprep.mubr.f32.mxu0 0.0
      %6512 = vmatmul.mubr.f32.gmra.mrb[0].mxu0 %v6445
      %v6513 = vpop.f32.mrb[0].mxu0
      %v6514 = vadd.f32 0.0, %v6513
      %v6515 = vpop.f32.mrb[0].mxu0
      %v6516 = vadd.f32 0.0, %v6515
      %6517 = vdwg.mxu0
      %6518 = vmatprep.subr.mxu0 %v6437
      %6519 = vmatpush1.msra.mxu0 %v6436
      %6520 = vmatprep.subr.mxu0 0.0
      %6521 = vmatpush1.msra.mxu0 0.0
      %6522 = vmatprep.subr.mxu0 0.0
      %6523 = vmatpush1.msra.mxu0 0.0
      %6524 = vmatprep.subr.mxu0 0.0
      %6525 = vmatpush1.msra.mxu0 0.0
      %6526 = vmatprep.subr.mxu0 0.0
      %6527 = vmatpush1.msra.mxu0 0.0
      %6528 = vmatprep.subr.mxu0 0.0
      %6529 = vmatpush1.msra.mxu0 0.0
      %6530 = vmatprep.subr.mxu0 0.0
      %6531 = vmatpush1.msra.mxu0 0.0
      %6532 = vmatprep.subr.mxu0 0.0
      %6533 = vmatpush1.msra.mxu0 0.0
      %6534 = vmatprep.subr.mxu0 0.0
      %6535 = vmatpush1.msra.mxu0 0.0
      %6536 = vmatprep.subr.mxu0 0.0
      %6537 = vmatpush1.msra.mxu0 0.0
      %6538 = vmatprep.subr.mxu0 0.0
      %6539 = vmatpush1.msra.mxu0 0.0
      %6540 = vmatprep.subr.mxu0 0.0
      %6541 = vmatpush1.msra.mxu0 0.0
      %6542 = vmatprep.subr.mxu0 0.0
      %6543 = vmatpush1.msra.mxu0 0.0
      %6544 = vmatprep.subr.mxu0 0.0
      %6545 = vmatpush1.msra.mxu0 0.0
      %6546 = vmatprep.subr.mxu0 0.0
      %6547 = vmatpush1.msra.mxu0 0.0
      %6548 = vmatprep.subr.mxu0 0.0
      %6549 = vmatpush1.msra.mxu0 0.0
      %6550 = vmatprep.subr.mxu0 0.0
      %6551 = vmatpush1.msra.mxu0 0.0
      %6552 = vmatprep.subr.mxu0 0.0
      %6553 = vmatpush1.msra.mxu0 0.0
      %6554 = vmatprep.subr.mxu0 0.0
      %6555 = vmatpush1.msra.mxu0 0.0
      %6556 = vmatprep.subr.mxu0 0.0
      %6557 = vmatpush1.msra.mxu0 0.0
      %6558 = vmatprep.subr.mxu0 0.0
      %6559 = vmatpush1.msra.mxu0 0.0
      %6560 = vmatprep.subr.mxu0 0.0
      %6561 = vmatpush1.msra.mxu0 0.0
      %6562 = vmatprep.subr.mxu0 0.0
      %6563 = vmatpush1.msra.mxu0 0.0
      %6564 = vmatprep.subr.mxu0 0.0
      %6565 = vmatpush1.msra.mxu0 0.0
      %6566 = vmatprep.subr.mxu0 0.0
      %6567 = vmatpush1.msra.mxu0 0.0
      %6568 = vmatprep.subr.mxu0 0.0
      %6569 = vmatpush1.msra.mxu0 0.0
      %6570 = vmatprep.subr.mxu0 0.0
      %6571 = vmatpush1.msra.mxu0 0.0
      %6572 = vmatprep.subr.mxu0 0.0
      %6573 = vmatpush1.msra.mxu0 0.0
      %6574 = vmatprep.subr.mxu0 0.0
      %6575 = vmatpush1.msra.mxu0 0.0
      %6576 = vmatprep.subr.mxu0 0.0
      %6577 = vmatpush1.msra.mxu0 0.0
      %6578 = vmatprep.subr.mxu0 0.0
      %6579 = vmatpush1.msra.mxu0 0.0
      %6580 = vmatprep.subr.mxu0 0.0
      %6581 = vmatpush1.msra.mxu0 0.0
      %6582 = vmatprep.mubr.f32.mxu0 0.0
      %6583 = vmatmul.mubr.f32.gmra.mrb[0].mxu0 %v6445
      %v6584 = vpop.f32.mrb[0].mxu0
      %v6585 = vadd.f32 0.0, %v6584
      %v6586 = vpop.f32.mrb[0].mxu0
      %v6587 = vadd.f32 0.0, %v6586
      %6588 = vdwg.mxu0
      %6589 = vmatprep.subr.mxu0 %v6439
      %6590 = vmatpush1.msra.mxu0 %v6438
      %6591 = vmatprep.subr.mxu0 0.0
      %6592 = vmatpush1.msra.mxu0 0.0
      %6593 = vmatprep.subr.mxu0 0.0
      %6594 = vmatpush1.msra.mxu0 0.0
      %6595 = vmatprep.subr.mxu0 0.0
      %6596 = vmatpush1.msra.mxu0 0.0
      %6597 = vmatprep.subr.mxu0 0.0
      %6598 = vmatpush1.msra.mxu0 0.0
      %6599 = vmatprep.subr.mxu0 0.0
      %6600 = vmatpush1.msra.mxu0 0.0
      %6601 = vmatprep.subr.mxu0 0.0
      %6602 = vmatpush1.msra.mxu0 0.0
      %6603 = vmatprep.subr.mxu0 0.0
      %6604 = vmatpush1.msra.mxu0 0.0
      %6605 = vmatprep.subr.mxu0 0.0
      %6606 = vmatpush1.msra.mxu0 0.0
      %6607 = vmatprep.subr.mxu0 0.0
      %6608 = vmatpush1.msra.mxu0 0.0
      %6609 = vmatprep.subr.mxu0 0.0
      %6610 = vmatpush1.msra.mxu0 0.0
      %6611 = vmatprep.subr.mxu0 0.0
      %6612 = vmatpush1.msra.mxu0 0.0
      %6613 = vmatprep.subr.mxu0 0.0
      %6614 = vmatpush1.msra.mxu0 0.0
      %6615 = vmatprep.subr.mxu0 0.0
      %6616 = vmatpush1.msra.mxu0 0.0
      %6617 = vmatprep.subr.mxu0 0.0
      %6618 = vmatpush1.msra.mxu0 0.0
      %6619 = vmatprep.subr.mxu0 0.0
      %6620 = vmatpush1.msra.mxu0 0.0
      %6621 = vmatprep.subr.mxu0 0.0
      %6622 = vmatpush1.msra.mxu0 0.0
      %6623 = vmatprep.subr.mxu0 0.0
      %6624 = vmatpush1.msra.mxu0 0.0
      %6625 = vmatprep.subr.mxu0 0.0
      %6626 = vmatpush1.msra.mxu0 0.0
      %6627 = vmatprep.subr.mxu0 0.0
      %6628 = vmatpush1.msra.mxu0 0.0
      %6629 = vmatprep.subr.mxu0 0.0
      %6630 = vmatpush1.msra.mxu0 0.0
      %6631 = vmatprep.subr.mxu0 0.0
      %6632 = vmatpush1.msra.mxu0 0.0
      %6633 = vmatprep.subr.mxu0 0.0
      %6634 = vmatpush1.msra.mxu0 0.0
      %6635 = vmatprep.subr.mxu0 0.0
      %6636 = vmatpush1.msra.mxu0 0.0
      %6637 = vmatprep.subr.mxu0 0.0
      %6638 = vmatpush1.msra.mxu0 0.0
      %6639 = vmatprep.subr.mxu0 0.0
      %6640 = vmatpush1.msra.mxu0 0.0
      %6641 = vmatprep.subr.mxu0 0.0
      %6642 = vmatpush1.msra.mxu0 0.0
      %6643 = vmatprep.subr.mxu0 0.0
      %6644 = vmatpush1.msra.mxu0 0.0
      %6645 = vmatprep.subr.mxu0 0.0
      %6646 = vmatpush1.msra.mxu0 0.0
      %6647 = vmatprep.subr.mxu0 0.0
      %6648 = vmatpush1.msra.mxu0 0.0
      %6649 = vmatprep.subr.mxu0 0.0
      %6650 = vmatpush1.msra.mxu0 0.0
      %6651 = vmatprep.subr.mxu0 0.0
      %6652 = vmatpush1.msra.mxu0 0.0
      %6653 = vmatprep.mubr.f32.mxu0 0.0
      %6654 = vmatmul.mubr.f32.gmra.mrb[0].mxu0 %v6445
      %v6655 = vpop.f32.mrb[0].mxu0
      %v6656 = vadd.f32 0.0, %v6655
      %v6657 = vpop.f32.mrb[0].mxu0
      %v6658 = vadd.f32 0.0, %v6657
      %6659 = vdwg.mxu0
      %6660 = vmatprep.subr.mxu0 %v6441
      %6661 = vmatpush1.msra.mxu0 %v6440
      %6662 = vmatprep.subr.mxu0 0.0
      %6663 = vmatpush1.msra.mxu0 0.0
      %6664 = vmatprep.subr.mxu0 0.0
      %6665 = vmatpush1.msra.mxu0 0.0
      %6666 = vmatprep.subr.mxu0 0.0
      %6667 = vmatpush1.msra.mxu0 0.0
      %6668 = vmatprep.subr.mxu0 0.0
      %6669 = vmatpush1.msra.mxu0 0.0
      %6670 = vmatprep.subr.mxu0 0.0
      %6671 = vmatpush1.msra.mxu0 0.0
      %6672 = vmatprep.subr.mxu0 0.0
      %6673 = vmatpush1.msra.mxu0 0.0
      %6674 = vmatprep.subr.mxu0 0.0
      %6675 = vmatpush1.msra.mxu0 0.0
      %6676 = vmatprep.subr.mxu0 0.0
      %6677 = vmatpush1.msra.mxu0 0.0
      %6678 = vmatprep.subr.mxu0 0.0
      %6679 = vmatpush1.msra.mxu0 0.0
      %6680 = vmatprep.subr.mxu0 0.0
      %6681 = vmatpush1.msra.mxu0 0.0
      %6682 = vmatprep.subr.mxu0 0.0
      %6683 = vmatpush1.msra.mxu0 0.0
      %6684 = vmatprep.subr.mxu0 0.0
      %6685 = vmatpush1.msra.mxu0 0.0
      %6686 = vmatprep.subr.mxu0 0.0
      %6687 = vmatpush1.msra.mxu0 0.0
      %6688 = vmatprep.subr.mxu0 0.0
      %6689 = vmatpush1.msra.mxu0 0.0
      %6690 = vmatprep.subr.mxu0 0.0
      %6691 = vmatpush1.msra.mxu0 0.0
      %6692 = vmatprep.subr.mxu0 0.0
      %6693 = vmatpush1.msra.mxu0 0.0
      %6694 = vmatprep.subr.mxu0 0.0
      %6695 = vmatpush1.msra.mxu0 0.0
      %6696 = vmatprep.subr.mxu0 0.0
      %6697 = vmatpush1.msra.mxu0 0.0
      %6698 = vmatprep.subr.mxu0 0.0
      %6699 = vmatpush1.msra.mxu0 0.0
      %6700 = vmatprep.subr.mxu0 0.0
      %6701 = vmatpush1.msra.mxu0 0.0
      %6702 = vmatprep.subr.mxu0 0.0
      %6703 = vmatpush1.msra.mxu0 0.0
      %6704 = vmatprep.subr.mxu0 0.0
      %6705 = vmatpush1.msra.mxu0 0.0
      %6706 = vmatprep.subr.mxu0 0.0
      %6707 = vmatpush1.msra.mxu0 0.0
      %6708 = vmatprep.subr.mxu0 0.0
      %6709 = vmatpush1.msra.mxu0 0.0
      %6710 = vmatprep.subr.mxu0 0.0
      %6711 = vmatpush1.msra.mxu0 0.0
      %6712 = vmatprep.subr.mxu0 0.0
      %6713 = vmatpush1.msra.mxu0 0.0
      %6714 = vmatprep.subr.mxu0 0.0
      %6715 = vmatpush1.msra.mxu0 0.0
      %6716 = vmatprep.subr.mxu0 0.0
      %6717 = vmatpush1.msra.mxu0 0.0
      %6718 = vmatprep.subr.mxu0 0.0
      %6719 = vmatpush1.msra.mxu0 0.0
      %6720 = vmatprep.subr.mxu0 0.0
      %6721 = vmatpush1.msra.mxu0 0.0
      %6722 = vmatprep.subr.mxu0 0.0
      %6723 = vmatpush1.msra.mxu0 0.0
      %6724 = vmatprep.mubr.f32.mxu0 0.0
      %6725 = vmatmul.mubr.f32.gmra.mrb[0].mxu0 %v6445
      %v6726 = vpop.f32.mrb[0].mxu0
      %v6727 = vadd.f32 0.0, %v6726
      %v6728 = vpop.f32.mrb[0].mxu0
      %v6729 = vadd.f32 0.0, %v6728
      %6730 = vdwg.mxu0
      %v6731 = vadd.f32 %v6402, %v6514
      %v6732 = vadd.f32 %v6403, %v6516
      %v6733 = vadd.f32 %v6404, %v6585
      %v6734 = vadd.f32 %v6405, %v6587
      %v6735 = vadd.f32 %v6406, %v6656
      %v6736 = vadd.f32 %v6407, %v6658
      %v6737 = vadd.f32 %v6408, %v6727
      %v6738 = vadd.f32 %v6409, %v6729
      %6739 = vrot.lane.b32.xlu0 %v4476, 112
      %v6740 = vpop.permute.xlu0 %6739
      %6741 = vrot.lane.b32.xlu0 %v4477, 112
      %v6742 = vpop.permute.xlu0 %6741
      %6743 = vrot.lane.b32.xlu0 %v4478, 112
      %v6744 = vpop.permute.xlu0 %6743
      %6745 = vrot.lane.b32.xlu0 %v4479, 112
      %v6746 = vpop.permute.xlu0 %6745
      %6747 = vrot.lane.b32.xlu0 %v4480, 112
      %v6748 = vpop.permute.xlu0 %6747
      %6749 = vrot.lane.b32.xlu0 %v4481, 112
      %v6750 = vpop.permute.xlu0 %6749
      %6751 = vrot.lane.b32.xlu0 %v4482, 112
      %v6752 = vpop.permute.xlu0 %6751
      %6753 = vrot.lane.b32.xlu0 %v4483, 112
      %v6754 = vpop.permute.xlu0 %6753
      %v6755 = vsel %vm3616, %v6752, %v6754
      %v6756 = vsel %vm3616, %v6750, %v6752
      %v6757 = vsel %vm3616, %v6748, %v6750
      %v6758 = vsel %vm3616, %v6746, %v6748
      %v6759 = vsel %vm3616, %v6744, %v6746
      %v6760 = vsel %vm3616, %v6742, %v6744
      %v6761 = vsel %vm3616, %v6740, %v6742
      %v6762 = vsel %vm3616, %v6754, %v6740
      %v6763 = vmul.f32 %v6761, %v3641
      %v6764 = vmul.f32 %v6760, %v3645
      %v6765 = vmul.f32 %v6759, %v3649
      %v6766 = vmul.f32 %v6758, %v3653
      %v6767 = vmul.f32 %v6757, %v3657
      %v6768 = vmul.f32 %v6756, %v3661
      %v6769 = vmul.f32 %v6755, %v3665
      %v6770 = vmul.f32 %v6762, %v3669
      %s6771 = scalar_lea.vmem %s5, 56
      %v6772 = vld [vmem:[%s6771] sm:$0xff]
      %v6774 = vsel %vm4551, %v6772, 0
      %6776 = vmatprep.subr.mxu0 %v6764
      %6777 = vmatpush1.msra.mxu0 %v6763
      %6778 = vmatprep.subr.mxu0 0.0
      %6779 = vmatpush1.msra.mxu0 0.0
      %6780 = vmatprep.subr.mxu0 0.0
      %6781 = vmatpush1.msra.mxu0 0.0
      %6782 = vmatprep.subr.mxu0 0.0
      %6783 = vmatpush1.msra.mxu0 0.0
      %6784 = vmatprep.subr.mxu0 0.0
      %6785 = vmatpush1.msra.mxu0 0.0
      %6786 = vmatprep.subr.mxu0 0.0
      %6787 = vmatpush1.msra.mxu0 0.0
      %6788 = vmatprep.subr.mxu0 0.0
      %6789 = vmatpush1.msra.mxu0 0.0
      %6790 = vmatprep.subr.mxu0 0.0
      %6791 = vmatpush1.msra.mxu0 0.0
      %6792 = vmatprep.subr.mxu0 0.0
      %6793 = vmatpush1.msra.mxu0 0.0
      %6794 = vmatprep.subr.mxu0 0.0
      %6795 = vmatpush1.msra.mxu0 0.0
      %6796 = vmatprep.subr.mxu0 0.0
      %6797 = vmatpush1.msra.mxu0 0.0
      %6798 = vmatprep.subr.mxu0 0.0
      %6799 = vmatpush1.msra.mxu0 0.0
      %6800 = vmatprep.subr.mxu0 0.0
      %6801 = vmatpush1.msra.mxu0 0.0
      %6802 = vmatprep.subr.mxu0 0.0
      %6803 = vmatpush1.msra.mxu0 0.0
      %6804 = vmatprep.subr.mxu0 0.0
      %6805 = vmatpush1.msra.mxu0 0.0
      %6806 = vmatprep.subr.mxu0 0.0
      %6807 = vmatpush1.msra.mxu0 0.0
      %6808 = vmatprep.subr.mxu0 0.0
      %6809 = vmatpush1.msra.mxu0 0.0
      %6810 = vmatprep.subr.mxu0 0.0
      %6811 = vmatpush1.msra.mxu0 0.0
      %6812 = vmatprep.subr.mxu0 0.0
      %6813 = vmatpush1.msra.mxu0 0.0
      %6814 = vmatprep.subr.mxu0 0.0
      %6815 = vmatpush1.msra.mxu0 0.0
      %6816 = vmatprep.subr.mxu0 0.0
      %6817 = vmatpush1.msra.mxu0 0.0
      %6818 = vmatprep.subr.mxu0 0.0
      %6819 = vmatpush1.msra.mxu0 0.0
      %6820 = vmatprep.subr.mxu0 0.0
      %6821 = vmatpush1.msra.mxu0 0.0
      %6822 = vmatprep.subr.mxu0 0.0
      %6823 = vmatpush1.msra.mxu0 0.0
      %6824 = vmatprep.subr.mxu0 0.0
      %6825 = vmatpush1.msra.mxu0 0.0
      %6826 = vmatprep.subr.mxu0 0.0
      %6827 = vmatpush1.msra.mxu0 0.0
      %6828 = vmatprep.subr.mxu0 0.0
      %6829 = vmatpush1.msra.mxu0 0.0
      %6830 = vmatprep.subr.mxu0 0.0
      %6831 = vmatpush1.msra.mxu0 0.0
      %6832 = vmatprep.subr.mxu0 0.0
      %6833 = vmatpush1.msra.mxu0 0.0
      %6834 = vmatprep.subr.mxu0 0.0
      %6835 = vmatpush1.msra.mxu0 0.0
      %6836 = vmatprep.subr.mxu0 0.0
      %6837 = vmatpush1.msra.mxu0 0.0
      %6838 = vmatprep.subr.mxu0 0.0
      %6839 = vmatpush1.msra.mxu0 0.0
      %6840 = vmatprep.mubr.f32.mxu0 0.0
      %6841 = vmatmul.mubr.f32.gmra.mrb[0].mxu0 %v6774
      %v6842 = vpop.f32.mrb[0].mxu0
      %v6843 = vadd.f32 0.0, %v6842
      %v6844 = vpop.f32.mrb[0].mxu0
      %v6845 = vadd.f32 0.0, %v6844
      %6846 = vdwg.mxu0
      %6847 = vmatprep.subr.mxu0 %v6766
      %6848 = vmatpush1.msra.mxu0 %v6765
      %6849 = vmatprep.subr.mxu0 0.0
      %6850 = vmatpush1.msra.mxu0 0.0
      %6851 = vmatprep.subr.mxu0 0.0
      %6852 = vmatpush1.msra.mxu0 0.0
      %6853 = vmatprep.subr.mxu0 0.0
      %6854 = vmatpush1.msra.mxu0 0.0
      %6855 = vmatprep.subr.mxu0 0.0
      %6856 = vmatpush1.msra.mxu0 0.0
      %6857 = vmatprep.subr.mxu0 0.0
      %6858 = vmatpush1.msra.mxu0 0.0
      %6859 = vmatprep.subr.mxu0 0.0
      %6860 = vmatpush1.msra.mxu0 0.0
      %6861 = vmatprep.subr.mxu0 0.0
      %6862 = vmatpush1.msra.mxu0 0.0
      %6863 = vmatprep.subr.mxu0 0.0
      %6864 = vmatpush1.msra.mxu0 0.0
      %6865 = vmatprep.subr.mxu0 0.0
      %6866 = vmatpush1.msra.mxu0 0.0
      %6867 = vmatprep.subr.mxu0 0.0
      %6868 = vmatpush1.msra.mxu0 0.0
      %6869 = vmatprep.subr.mxu0 0.0
      %6870 = vmatpush1.msra.mxu0 0.0
      %6871 = vmatprep.subr.mxu0 0.0
      %6872 = vmatpush1.msra.mxu0 0.0
      %6873 = vmatprep.subr.mxu0 0.0
      %6874 = vmatpush1.msra.mxu0 0.0
      %6875 = vmatprep.subr.mxu0 0.0
      %6876 = vmatpush1.msra.mxu0 0.0
      %6877 = vmatprep.subr.mxu0 0.0
      %6878 = vmatpush1.msra.mxu0 0.0
      %6879 = vmatprep.subr.mxu0 0.0
      %6880 = vmatpush1.msra.mxu0 0.0
      %6881 = vmatprep.subr.mxu0 0.0
      %6882 = vmatpush1.msra.mxu0 0.0
      %6883 = vmatprep.subr.mxu0 0.0
      %6884 = vmatpush1.msra.mxu0 0.0
      %6885 = vmatprep.subr.mxu0 0.0
      %6886 = vmatpush1.msra.mxu0 0.0
      %6887 = vmatprep.subr.mxu0 0.0
      %6888 = vmatpush1.msra.mxu0 0.0
      %6889 = vmatprep.subr.mxu0 0.0
      %6890 = vmatpush1.msra.mxu0 0.0
      %6891 = vmatprep.subr.mxu0 0.0
      %6892 = vmatpush1.msra.mxu0 0.0
      %6893 = vmatprep.subr.mxu0 0.0
      %6894 = vmatpush1.msra.mxu0 0.0
      %6895 = vmatprep.subr.mxu0 0.0
      %6896 = vmatpush1.msra.mxu0 0.0
      %6897 = vmatprep.subr.mxu0 0.0
      %6898 = vmatpush1.msra.mxu0 0.0
      %6899 = vmatprep.subr.mxu0 0.0
      %6900 = vmatpush1.msra.mxu0 0.0
      %6901 = vmatprep.subr.mxu0 0.0
      %6902 = vmatpush1.msra.mxu0 0.0
      %6903 = vmatprep.subr.mxu0 0.0
      %6904 = vmatpush1.msra.mxu0 0.0
      %6905 = vmatprep.subr.mxu0 0.0
      %6906 = vmatpush1.msra.mxu0 0.0
      %6907 = vmatprep.subr.mxu0 0.0
      %6908 = vmatpush1.msra.mxu0 0.0
      %6909 = vmatprep.subr.mxu0 0.0
      %6910 = vmatpush1.msra.mxu0 0.0
      %6911 = vmatprep.mubr.f32.mxu0 0.0
      %6912 = vmatmul.mubr.f32.gmra.mrb[0].mxu0 %v6774
      %v6913 = vpop.f32.mrb[0].mxu0
      %v6914 = vadd.f32 0.0, %v6913
      %v6915 = vpop.f32.mrb[0].mxu0
      %v6916 = vadd.f32 0.0, %v6915
      %6917 = vdwg.mxu0
      %6918 = vmatprep.subr.mxu0 %v6768
      %6919 = vmatpush1.msra.mxu0 %v6767
      %6920 = vmatprep.subr.mxu0 0.0
      %6921 = vmatpush1.msra.mxu0 0.0
      %6922 = vmatprep.subr.mxu0 0.0
      %6923 = vmatpush1.msra.mxu0 0.0
      %6924 = vmatprep.subr.mxu0 0.0
      %6925 = vmatpush1.msra.mxu0 0.0
      %6926 = vmatprep.subr.mxu0 0.0
      %6927 = vmatpush1.msra.mxu0 0.0
      %6928 = vmatprep.subr.mxu0 0.0
      %6929 = vmatpush1.msra.mxu0 0.0
      %6930 = vmatprep.subr.mxu0 0.0
      %6931 = vmatpush1.msra.mxu0 0.0
      %6932 = vmatprep.subr.mxu0 0.0
      %6933 = vmatpush1.msra.mxu0 0.0
      %6934 = vmatprep.subr.mxu0 0.0
      %6935 = vmatpush1.msra.mxu0 0.0
      %6936 = vmatprep.subr.mxu0 0.0
      %6937 = vmatpush1.msra.mxu0 0.0
      %6938 = vmatprep.subr.mxu0 0.0
      %6939 = vmatpush1.msra.mxu0 0.0
      %6940 = vmatprep.subr.mxu0 0.0
      %6941 = vmatpush1.msra.mxu0 0.0
      %6942 = vmatprep.subr.mxu0 0.0
      %6943 = vmatpush1.msra.mxu0 0.0
      %6944 = vmatprep.subr.mxu0 0.0
      %6945 = vmatpush1.msra.mxu0 0.0
      %6946 = vmatprep.subr.mxu0 0.0
      %6947 = vmatpush1.msra.mxu0 0.0
      %6948 = vmatprep.subr.mxu0 0.0
      %6949 = vmatpush1.msra.mxu0 0.0
      %6950 = vmatprep.subr.mxu0 0.0
      %6951 = vmatpush1.msra.mxu0 0.0
      %6952 = vmatprep.subr.mxu0 0.0
      %6953 = vmatpush1.msra.mxu0 0.0
      %6954 = vmatprep.subr.mxu0 0.0
      %6955 = vmatpush1.msra.mxu0 0.0
      %6956 = vmatprep.subr.mxu0 0.0
      %6957 = vmatpush1.msra.mxu0 0.0
      %6958 = vmatprep.subr.mxu0 0.0
      %6959 = vmatpush1.msra.mxu0 0.0
      %6960 = vmatprep.subr.mxu0 0.0
      %6961 = vmatpush1.msra.mxu0 0.0
      %6962 = vmatprep.subr.mxu0 0.0
      %6963 = vmatpush1.msra.mxu0 0.0
      %6964 = vmatprep.subr.mxu0 0.0
      %6965 = vmatpush1.msra.mxu0 0.0
      %6966 = vmatprep.subr.mxu0 0.0
      %6967 = vmatpush1.msra.mxu0 0.0
      %6968 = vmatprep.subr.mxu0 0.0
      %6969 = vmatpush1.msra.mxu0 0.0
      %6970 = vmatprep.subr.mxu0 0.0
      %6971 = vmatpush1.msra.mxu0 0.0
      %6972 = vmatprep.subr.mxu0 0.0
      %6973 = vmatpush1.msra.mxu0 0.0
      %6974 = vmatprep.subr.mxu0 0.0
      %6975 = vmatpush1.msra.mxu0 0.0
      %6976 = vmatprep.subr.mxu0 0.0
      %6977 = vmatpush1.msra.mxu0 0.0
      %6978 = vmatprep.subr.mxu0 0.0
      %6979 = vmatpush1.msra.mxu0 0.0
      %6980 = vmatprep.subr.mxu0 0.0
      %6981 = vmatpush1.msra.mxu0 0.0
      %6982 = vmatprep.mubr.f32.mxu0 0.0
      %6983 = vmatmul.mubr.f32.gmra.mrb[0].mxu0 %v6774
      %v6984 = vpop.f32.mrb[0].mxu0
      %v6985 = vadd.f32 0.0, %v6984
      %v6986 = vpop.f32.mrb[0].mxu0
      %v6987 = vadd.f32 0.0, %v6986
      %6988 = vdwg.mxu0
      %6989 = vmatprep.subr.mxu0 %v6770
      %6990 = vmatpush1.msra.mxu0 %v6769
      %6991 = vmatprep.subr.mxu0 0.0
      %6992 = vmatpush1.msra.mxu0 0.0
      %6993 = vmatprep.subr.mxu0 0.0
      %6994 = vmatpush1.msra.mxu0 0.0
      %6995 = vmatprep.subr.mxu0 0.0
      %6996 = vmatpush1.msra.mxu0 0.0
      %6997 = vmatprep.subr.mxu0 0.0
      %6998 = vmatpush1.msra.mxu0 0.0
      %6999 = vmatprep.subr.mxu0 0.0
      %7000 = vmatpush1.msra.mxu0 0.0
      %7001 = vmatprep.subr.mxu0 0.0
      %7002 = vmatpush1.msra.mxu0 0.0
      %7003 = vmatprep.subr.mxu0 0.0
      %7004 = vmatpush1.msra.mxu0 0.0
      %7005 = vmatprep.subr.mxu0 0.0
      %7006 = vmatpush1.msra.mxu0 0.0
      %7007 = vmatprep.subr.mxu0 0.0
      %7008 = vmatpush1.msra.mxu0 0.0
      %7009 = vmatprep.subr.mxu0 0.0
      %7010 = vmatpush1.msra.mxu0 0.0
      %7011 = vmatprep.subr.mxu0 0.0
      %7012 = vmatpush1.msra.mxu0 0.0
      %7013 = vmatprep.subr.mxu0 0.0
      %7014 = vmatpush1.msra.mxu0 0.0
      %7015 = vmatprep.subr.mxu0 0.0
      %7016 = vmatpush1.msra.mxu0 0.0
      %7017 = vmatprep.subr.mxu0 0.0
      %7018 = vmatpush1.msra.mxu0 0.0
      %7019 = vmatprep.subr.mxu0 0.0
      %7020 = vmatpush1.msra.mxu0 0.0
      %7021 = vmatprep.subr.mxu0 0.0
      %7022 = vmatpush1.msra.mxu0 0.0
      %7023 = vmatprep.subr.mxu0 0.0
      %7024 = vmatpush1.msra.mxu0 0.0
      %7025 = vmatprep.subr.mxu0 0.0
      %7026 = vmatpush1.msra.mxu0 0.0
      %7027 = vmatprep.subr.mxu0 0.0
      %7028 = vmatpush1.msra.mxu0 0.0
      %7029 = vmatprep.subr.mxu0 0.0
      %7030 = vmatpush1.msra.mxu0 0.0
      %7031 = vmatprep.subr.mxu0 0.0
      %7032 = vmatpush1.msra.mxu0 0.0
      %7033 = vmatprep.subr.mxu0 0.0
      %7034 = vmatpush1.msra.mxu0 0.0
      %7035 = vmatprep.subr.mxu0 0.0
      %7036 = vmatpush1.msra.mxu0 0.0
      %7037 = vmatprep.subr.mxu0 0.0
      %7038 = vmatpush1.msra.mxu0 0.0
      %7039 = vmatprep.subr.mxu0 0.0
      %7040 = vmatpush1.msra.mxu0 0.0
      %7041 = vmatprep.subr.mxu0 0.0
      %7042 = vmatpush1.msra.mxu0 0.0
      %7043 = vmatprep.subr.mxu0 0.0
      %7044 = vmatpush1.msra.mxu0 0.0
      %7045 = vmatprep.subr.mxu0 0.0
      %7046 = vmatpush1.msra.mxu0 0.0
      %7047 = vmatprep.subr.mxu0 0.0
      %7048 = vmatpush1.msra.mxu0 0.0
      %7049 = vmatprep.subr.mxu0 0.0
      %7050 = vmatpush1.msra.mxu0 0.0
      %7051 = vmatprep.subr.mxu0 0.0
      %7052 = vmatpush1.msra.mxu0 0.0
      %7053 = vmatprep.mubr.f32.mxu0 0.0
      %7054 = vmatmul.mubr.f32.gmra.mrb[0].mxu0 %v6774
      %v7055 = vpop.f32.mrb[0].mxu0
      %v7056 = vadd.f32 0.0, %v7055
      %v7057 = vpop.f32.mrb[0].mxu0
      %v7058 = vadd.f32 0.0, %v7057
      %7059 = vdwg.mxu0
      %v7060 = vadd.f32 %v6731, %v6843
      %v7061 = vadd.f32 %v6732, %v6845
      %v7062 = vadd.f32 %v6733, %v6914
      %v7063 = vadd.f32 %v6734, %v6916
      %v7064 = vadd.f32 %v6735, %v6985
      %v7065 = vadd.f32 %v6736, %v6987
      %v7066 = vadd.f32 %v6737, %v7056
      %v7067 = vadd.f32 %v6738, %v7058
      %7068 = vrot.lane.b32.xlu0 %v4476, 111
      %v7069 = vpop.permute.xlu0 %7068
      %7070 = vrot.lane.b32.xlu0 %v4477, 111
      %v7071 = vpop.permute.xlu0 %7070
      %7072 = vrot.lane.b32.xlu0 %v4478, 111
      %v7073 = vpop.permute.xlu0 %7072
      %7074 = vrot.lane.b32.xlu0 %v4479, 111
      %v7075 = vpop.permute.xlu0 %7074
      %7076 = vrot.lane.b32.xlu0 %v4480, 111
      %v7077 = vpop.permute.xlu0 %7076
      %7078 = vrot.lane.b32.xlu0 %v4481, 111
      %v7079 = vpop.permute.xlu0 %7078
      %7080 = vrot.lane.b32.xlu0 %v4482, 111
      %v7081 = vpop.permute.xlu0 %7080
      %7082 = vrot.lane.b32.xlu0 %v4483, 111
      %v7083 = vpop.permute.xlu0 %7082
      %v7084 = vsel %vm4047, %v7081, %v7083
      %v7085 = vsel %vm4047, %v7079, %v7081
      %v7086 = vsel %vm4047, %v7077, %v7079
      %v7087 = vsel %vm4047, %v7075, %v7077
      %v7088 = vsel %vm4047, %v7073, %v7075
      %v7089 = vsel %vm4047, %v7071, %v7073
      %v7090 = vsel %vm4047, %v7069, %v7071
      %v7091 = vsel %vm4047, %v7083, %v7069
      %v7092 = vmul.f32 %v7090, %v4072
      %v7093 = vmul.f32 %v7089, %v4076
      %v7094 = vmul.f32 %v7088, %v4080
      %v7095 = vmul.f32 %v7087, %v4084
      %v7096 = vmul.f32 %v7086, %v4088
      %v7097 = vmul.f32 %v7085, %v4092
      %v7098 = vmul.f32 %v7084, %v4096
      %v7099 = vmul.f32 %v7091, %v4100
      %s7100 = scalar_lea.vmem %s5, 64
      %v7101 = vld [vmem:[%s7100] sm:$0xff]
      %v7103 = vsel %vm4551, %v7101, 0
      %7105 = vmatprep.subr.mxu0 %v7093
      %7106 = vmatpush1.msra.mxu0 %v7092
      %7107 = vmatprep.subr.mxu0 0.0
      %7108 = vmatpush1.msra.mxu0 0.0
      %7109 = vmatprep.subr.mxu0 0.0
      %7110 = vmatpush1.msra.mxu0 0.0
      %7111 = vmatprep.subr.mxu0 0.0
      %7112 = vmatpush1.msra.mxu0 0.0
      %7113 = vmatprep.subr.mxu0 0.0
      %7114 = vmatpush1.msra.mxu0 0.0
      %7115 = vmatprep.subr.mxu0 0.0
      %7116 = vmatpush1.msra.mxu0 0.0
      %7117 = vmatprep.subr.mxu0 0.0
      %7118 = vmatpush1.msra.mxu0 0.0
      %7119 = vmatprep.subr.mxu0 0.0
      %7120 = vmatpush1.msra.mxu0 0.0
      %7121 = vmatprep.subr.mxu0 0.0
      %7122 = vmatpush1.msra.mxu0 0.0
      %7123 = vmatprep.subr.mxu0 0.0
      %7124 = vmatpush1.msra.mxu0 0.0
      %7125 = vmatprep.subr.mxu0 0.0
      %7126 = vmatpush1.msra.mxu0 0.0
      %7127 = vmatprep.subr.mxu0 0.0
      %7128 = vmatpush1.msra.mxu0 0.0
      %7129 = vmatprep.subr.mxu0 0.0
      %7130 = vmatpush1.msra.mxu0 0.0
      %7131 = vmatprep.subr.mxu0 0.0
      %7132 = vmatpush1.msra.mxu0 0.0
      %7133 = vmatprep.subr.mxu0 0.0
      %7134 = vmatpush1.msra.mxu0 0.0
      %7135 = vmatprep.subr.mxu0 0.0
      %7136 = vmatpush1.msra.mxu0 0.0
      %7137 = vmatprep.subr.mxu0 0.0
      %7138 = vmatpush1.msra.mxu0 0.0
      %7139 = vmatprep.subr.mxu0 0.0
      %7140 = vmatpush1.msra.mxu0 0.0
      %7141 = vmatprep.subr.mxu0 0.0
      %7142 = vmatpush1.msra.mxu0 0.0
      %7143 = vmatprep.subr.mxu0 0.0
      %7144 = vmatpush1.msra.mxu0 0.0
      %7145 = vmatprep.subr.mxu0 0.0
      %7146 = vmatpush1.msra.mxu0 0.0
      %7147 = vmatprep.subr.mxu0 0.0
      %7148 = vmatpush1.msra.mxu0 0.0
      %7149 = vmatprep.subr.mxu0 0.0
      %7150 = vmatpush1.msra.mxu0 0.0
      %7151 = vmatprep.subr.mxu0 0.0
      %7152 = vmatpush1.msra.mxu0 0.0
      %7153 = vmatprep.subr.mxu0 0.0
      %7154 = vmatpush1.msra.mxu0 0.0
      %7155 = vmatprep.subr.mxu0 0.0
      %7156 = vmatpush1.msra.mxu0 0.0
      %7157 = vmatprep.subr.mxu0 0.0
      %7158 = vmatpush1.msra.mxu0 0.0
      %7159 = vmatprep.subr.mxu0 0.0
      %7160 = vmatpush1.msra.mxu0 0.0
      %7161 = vmatprep.subr.mxu0 0.0
      %7162 = vmatpush1.msra.mxu0 0.0
      %7163 = vmatprep.subr.mxu0 0.0
      %7164 = vmatpush1.msra.mxu0 0.0
      %7165 = vmatprep.subr.mxu0 0.0
      %7166 = vmatpush1.msra.mxu0 0.0
      %7167 = vmatprep.subr.mxu0 0.0
      %7168 = vmatpush1.msra.mxu0 0.0
      %7169 = vmatprep.mubr.f32.mxu0 0.0
      %7170 = vmatmul.mubr.f32.gmra.mrb[0].mxu0 %v7103
      %v7171 = vpop.f32.mrb[0].mxu0
      %v7172 = vadd.f32 0.0, %v7171
      %v7173 = vpop.f32.mrb[0].mxu0
      %v7174 = vadd.f32 0.0, %v7173
      %7175 = vdwg.mxu0
      %7176 = vmatprep.subr.mxu0 %v7095
      %7177 = vmatpush1.msra.mxu0 %v7094
      %7178 = vmatprep.subr.mxu0 0.0
      %7179 = vmatpush1.msra.mxu0 0.0
      %7180 = vmatprep.subr.mxu0 0.0
      %7181 = vmatpush1.msra.mxu0 0.0
      %7182 = vmatprep.subr.mxu0 0.0
      %7183 = vmatpush1.msra.mxu0 0.0
      %7184 = vmatprep.subr.mxu0 0.0
      %7185 = vmatpush1.msra.mxu0 0.0
      %7186 = vmatprep.subr.mxu0 0.0
      %7187 = vmatpush1.msra.mxu0 0.0
      %7188 = vmatprep.subr.mxu0 0.0
      %7189 = vmatpush1.msra.mxu0 0.0
      %7190 = vmatprep.subr.mxu0 0.0
      %7191 = vmatpush1.msra.mxu0 0.0
      %7192 = vmatprep.subr.mxu0 0.0
      %7193 = vmatpush1.msra.mxu0 0.0
      %7194 = vmatprep.subr.mxu0 0.0
      %7195 = vmatpush1.msra.mxu0 0.0
      %7196 = vmatprep.subr.mxu0 0.0
      %7197 = vmatpush1.msra.mxu0 0.0
      %7198 = vmatprep.subr.mxu0 0.0
      %7199 = vmatpush1.msra.mxu0 0.0
      %7200 = vmatprep.subr.mxu0 0.0
      %7201 = vmatpush1.msra.mxu0 0.0
      %7202 = vmatprep.subr.mxu0 0.0
      %7203 = vmatpush1.msra.mxu0 0.0
      %7204 = vmatprep.subr.mxu0 0.0
      %7205 = vmatpush1.msra.mxu0 0.0
      %7206 = vmatprep.subr.mxu0 0.0
      %7207 = vmatpush1.msra.mxu0 0.0
      %7208 = vmatprep.subr.mxu0 0.0
      %7209 = vmatpush1.msra.mxu0 0.0
      %7210 = vmatprep.subr.mxu0 0.0
      %7211 = vmatpush1.msra.mxu0 0.0
      %7212 = vmatprep.subr.mxu0 0.0
      %7213 = vmatpush1.msra.mxu0 0.0
      %7214 = vmatprep.subr.mxu0 0.0
      %7215 = vmatpush1.msra.mxu0 0.0
      %7216 = vmatprep.subr.mxu0 0.0
      %7217 = vmatpush1.msra.mxu0 0.0
      %7218 = vmatprep.subr.mxu0 0.0
      %7219 = vmatpush1.msra.mxu0 0.0
      %7220 = vmatprep.subr.mxu0 0.0
      %7221 = vmatpush1.msra.mxu0 0.0
      %7222 = vmatprep.subr.mxu0 0.0
      %7223 = vmatpush1.msra.mxu0 0.0
      %7224 = vmatprep.subr.mxu0 0.0
      %7225 = vmatpush1.msra.mxu0 0.0
      %7226 = vmatprep.subr.mxu0 0.0
      %7227 = vmatpush1.msra.mxu0 0.0
      %7228 = vmatprep.subr.mxu0 0.0
      %7229 = vmatpush1.msra.mxu0 0.0
      %7230 = vmatprep.subr.mxu0 0.0
      %7231 = vmatpush1.msra.mxu0 0.0
      %7232 = vmatprep.subr.mxu0 0.0
      %7233 = vmatpush1.msra.mxu0 0.0
      %7234 = vmatprep.subr.mxu0 0.0
      %7235 = vmatpush1.msra.mxu0 0.0
      %7236 = vmatprep.subr.mxu0 0.0
      %7237 = vmatpush1.msra.mxu0 0.0
      %7238 = vmatprep.subr.mxu0 0.0
      %7239 = vmatpush1.msra.mxu0 0.0
      %7240 = vmatprep.mubr.f32.mxu0 0.0
      %7241 = vmatmul.mubr.f32.gmra.mrb[0].mxu0 %v7103
      %v7242 = vpop.f32.mrb[0].mxu0
      %v7243 = vadd.f32 0.0, %v7242
      %v7244 = vpop.f32.mrb[0].mxu0
      %v7245 = vadd.f32 0.0, %v7244
      %7246 = vdwg.mxu0
      %7247 = vmatprep.subr.mxu0 %v7097
      %7248 = vmatpush1.msra.mxu0 %v7096
      %7249 = vmatprep.subr.mxu0 0.0
      %7250 = vmatpush1.msra.mxu0 0.0
      %7251 = vmatprep.subr.mxu0 0.0
      %7252 = vmatpush1.msra.mxu0 0.0
      %7253 = vmatprep.subr.mxu0 0.0
      %7254 = vmatpush1.msra.mxu0 0.0
      %7255 = vmatprep.subr.mxu0 0.0
      %7256 = vmatpush1.msra.mxu0 0.0
      %7257 = vmatprep.subr.mxu0 0.0
      %7258 = vmatpush1.msra.mxu0 0.0
      %7259 = vmatprep.subr.mxu0 0.0
      %7260 = vmatpush1.msra.mxu0 0.0
      %7261 = vmatprep.subr.mxu0 0.0
      %7262 = vmatpush1.msra.mxu0 0.0
      %7263 = vmatprep.subr.mxu0 0.0
      %7264 = vmatpush1.msra.mxu0 0.0
      %7265 = vmatprep.subr.mxu0 0.0
      %7266 = vmatpush1.msra.mxu0 0.0
      %7267 = vmatprep.subr.mxu0 0.0
      %7268 = vmatpush1.msra.mxu0 0.0
      %7269 = vmatprep.subr.mxu0 0.0
      %7270 = vmatpush1.msra.mxu0 0.0
      %7271 = vmatprep.subr.mxu0 0.0
      %7272 = vmatpush1.msra.mxu0 0.0
      %7273 = vmatprep.subr.mxu0 0.0
      %7274 = vmatpush1.msra.mxu0 0.0
      %7275 = vmatprep.subr.mxu0 0.0
      %7276 = vmatpush1.msra.mxu0 0.0
      %7277 = vmatprep.subr.mxu0 0.0
      %7278 = vmatpush1.msra.mxu0 0.0
      %7279 = vmatprep.subr.mxu0 0.0
      %7280 = vmatpush1.msra.mxu0 0.0
      %7281 = vmatprep.subr.mxu0 0.0
      %7282 = vmatpush1.msra.mxu0 0.0
      %7283 = vmatprep.subr.mxu0 0.0
      %7284 = vmatpush1.msra.mxu0 0.0
      %7285 = vmatprep.subr.mxu0 0.0
      %7286 = vmatpush1.msra.mxu0 0.0
      %7287 = vmatprep.subr.mxu0 0.0
      %7288 = vmatpush1.msra.mxu0 0.0
      %7289 = vmatprep.subr.mxu0 0.0
      %7290 = vmatpush1.msra.mxu0 0.0
      %7291 = vmatprep.subr.mxu0 0.0
      %7292 = vmatpush1.msra.mxu0 0.0
      %7293 = vmatprep.subr.mxu0 0.0
      %7294 = vmatpush1.msra.mxu0 0.0
      %7295 = vmatprep.subr.mxu0 0.0
      %7296 = vmatpush1.msra.mxu0 0.0
      %7297 = vmatprep.subr.mxu0 0.0
      %7298 = vmatpush1.msra.mxu0 0.0
      %7299 = vmatprep.subr.mxu0 0.0
      %7300 = vmatpush1.msra.mxu0 0.0
      %7301 = vmatprep.subr.mxu0 0.0
      %7302 = vmatpush1.msra.mxu0 0.0
      %7303 = vmatprep.subr.mxu0 0.0
      %7304 = vmatpush1.msra.mxu0 0.0
      %7305 = vmatprep.subr.mxu0 0.0
      %7306 = vmatpush1.msra.mxu0 0.0
      %7307 = vmatprep.subr.mxu0 0.0
      %7308 = vmatpush1.msra.mxu0 0.0
      %7309 = vmatprep.subr.mxu0 0.0
      %7310 = vmatpush1.msra.mxu0 0.0
      %7311 = vmatprep.mubr.f32.mxu0 0.0
      %7312 = vmatmul.mubr.f32.gmra.mrb[0].mxu0 %v7103
      %v7313 = vpop.f32.mrb[0].mxu0
      %v7314 = vadd.f32 0.0, %v7313
      %v7315 = vpop.f32.mrb[0].mxu0
      %v7316 = vadd.f32 0.0, %v7315
      %7317 = vdwg.mxu0
      %7318 = vmatprep.subr.mxu0 %v7099
      %7319 = vmatpush1.msra.mxu0 %v7098
      %7320 = vmatprep.subr.mxu0 0.0
      %7321 = vmatpush1.msra.mxu0 0.0
      %7322 = vmatprep.subr.mxu0 0.0
      %7323 = vmatpush1.msra.mxu0 0.0
      %7324 = vmatprep.subr.mxu0 0.0
      %7325 = vmatpush1.msra.mxu0 0.0
      %7326 = vmatprep.subr.mxu0 0.0
      %7327 = vmatpush1.msra.mxu0 0.0
      %7328 = vmatprep.subr.mxu0 0.0
      %7329 = vmatpush1.msra.mxu0 0.0
      %7330 = vmatprep.subr.mxu0 0.0
      %7331 = vmatpush1.msra.mxu0 0.0
      %7332 = vmatprep.subr.mxu0 0.0
      %7333 = vmatpush1.msra.mxu0 0.0
      %7334 = vmatprep.subr.mxu0 0.0
      %7335 = vmatpush1.msra.mxu0 0.0
      %7336 = vmatprep.subr.mxu0 0.0
      %7337 = vmatpush1.msra.mxu0 0.0
      %7338 = vmatprep.subr.mxu0 0.0
      %7339 = vmatpush1.msra.mxu0 0.0
      %7340 = vmatprep.subr.mxu0 0.0
      %7341 = vmatpush1.msra.mxu0 0.0
      %7342 = vmatprep.subr.mxu0 0.0
      %7343 = vmatpush1.msra.mxu0 0.0
      %7344 = vmatprep.subr.mxu0 0.0
      %7345 = vmatpush1.msra.mxu0 0.0
      %7346 = vmatprep.subr.mxu0 0.0
      %7347 = vmatpush1.msra.mxu0 0.0
      %7348 = vmatprep.subr.mxu0 0.0
      %7349 = vmatpush1.msra.mxu0 0.0
      %7350 = vmatprep.subr.mxu0 0.0
      %7351 = vmatpush1.msra.mxu0 0.0
      %7352 = vmatprep.subr.mxu0 0.0
      %7353 = vmatpush1.msra.mxu0 0.0
      %7354 = vmatprep.subr.mxu0 0.0
      %7355 = vmatpush1.msra.mxu0 0.0
      %7356 = vmatprep.subr.mxu0 0.0
      %7357 = vmatpush1.msra.mxu0 0.0
      %7358 = vmatprep.subr.mxu0 0.0
      %7359 = vmatpush1.msra.mxu0 0.0
      %7360 = vmatprep.subr.mxu0 0.0
      %7361 = vmatpush1.msra.mxu0 0.0
      %7362 = vmatprep.subr.mxu0 0.0
      %7363 = vmatpush1.msra.mxu0 0.0
      %7364 = vmatprep.subr.mxu0 0.0
      %7365 = vmatpush1.msra.mxu0 0.0
      %7366 = vmatprep.subr.mxu0 0.0
      %7367 = vmatpush1.msra.mxu0 0.0
      %7368 = vmatprep.subr.mxu0 0.0
      %7369 = vmatpush1.msra.mxu0 0.0
      %7370 = vmatprep.subr.mxu0 0.0
      %7371 = vmatpush1.msra.mxu0 0.0
      %7372 = vmatprep.subr.mxu0 0.0
      %7373 = vmatpush1.msra.mxu0 0.0
      %7374 = vmatprep.subr.mxu0 0.0
      %7375 = vmatpush1.msra.mxu0 0.0
      %7376 = vmatprep.subr.mxu0 0.0
      %7377 = vmatpush1.msra.mxu0 0.0
      %7378 = vmatprep.subr.mxu0 0.0
      %7379 = vmatpush1.msra.mxu0 0.0
      %7380 = vmatprep.subr.mxu0 0.0
      %7381 = vmatpush1.msra.mxu0 0.0
      %7382 = vmatprep.mubr.f32.mxu0 0.0
      %7383 = vmatmul.mubr.f32.gmra.mrb[0].mxu0 %v7103
      %v7384 = vpop.f32.mrb[0].mxu0
      %v7385 = vadd.f32 0.0, %v7384
      %v7386 = vpop.f32.mrb[0].mxu0
      %v7387 = vadd.f32 0.0, %v7386
      %7388 = vdwg.mxu0
      %v7389 = vadd.f32 %v7060, %v7172
      %v7390 = vadd.f32 %v7061, %v7174
      %v7391 = vadd.f32 %v7062, %v7243
      %v7392 = vadd.f32 %v7063, %v7245
      %v7393 = vadd.f32 %v7064, %v7314
      %v7394 = vadd.f32 %v7065, %v7316
      %v7395 = vadd.f32 %v7066, %v7385
      %v7396 = vadd.f32 %v7067, %v7387
      %v7397 = vld [vmem:[%s6] sm:$0xff]
      %7399 = vset.pattern.permute.xlu0 0
      %7400 = vperm.xlu0 %7399, %v7397
      %v7401 = vpop.permute.xlu0 %7400
      %v7403 = vadd.f32 %v7389, %v7401
      %v7404 = vadd.f32 %v7390, %v7401
      %v7405 = vadd.f32 %v7391, %v7401
      %v7406 = vadd.f32 %v7392, %v7401
      %v7407 = vadd.f32 %v7393, %v7401
      %v7408 = vadd.f32 %v7394, %v7401
      %v7409 = vadd.f32 %v7395, %v7401
      %v7410 = vadd.f32 %v7396, %v7401
      %vm7411 = vcmp.ge.f32.partialorder %v7403, 0.0
      %vm7412 = vcmp.ge.f32.partialorder %v7404, 0.0
      %vm7413 = vcmp.ge.f32.partialorder %v7405, 0.0
      %vm7414 = vcmp.ge.f32.partialorder %v7406, 0.0
      %vm7415 = vcmp.ge.f32.partialorder %v7407, 0.0
      %vm7416 = vcmp.ge.f32.partialorder %v7408, 0.0
      %vm7417 = vcmp.ge.f32.partialorder %v7409, 0.0
      %vm7418 = vcmp.ge.f32.partialorder %v7410, 0.0
      %v7419 = vmul.f32 %v7403, 0.1
      %v7420 = vmul.f32 %v7404, 0.1
      %v7421 = vmul.f32 %v7405, 0.1
      %v7422 = vmul.f32 %v7406, 0.1
      %v7423 = vmul.f32 %v7407, 0.1
      %v7424 = vmul.f32 %v7408, 0.1
      %v7425 = vmul.f32 %v7409, 0.1
      %v7426 = vmul.f32 %v7410, 0.1
      %v7427 = vsel %vm7411, %v7403, %v7419
      %v7428 = vsel %vm7412, %v7404, %v7420
      %v7429 = vsel %vm7413, %v7405, %v7421
      %v7430 = vsel %vm7414, %v7406, %v7422
      %v7431 = vsel %vm7415, %v7407, %v7423
      %v7432 = vsel %vm7416, %v7408, %v7424
      %v7433 = vsel %vm7417, %v7409, %v7425
      %v7434 = vsel %vm7418, %v7410, %v7426
      %7435 = vrot.lane.b32.xlu0 %v7427, 17
      %v7436 = vpop.permute.xlu0 %7435
      %7437 = vrot.lane.b32.xlu0 %v7428, 17
      %v7438 = vpop.permute.xlu0 %7437
      %7439 = vrot.lane.b32.xlu0 %v7429, 17
      %v7440 = vpop.permute.xlu0 %7439
      %7441 = vrot.lane.b32.xlu0 %v7430, 17
      %v7442 = vpop.permute.xlu0 %7441
      %7443 = vrot.lane.b32.xlu0 %v7431, 17
      %v7444 = vpop.permute.xlu0 %7443
      %7445 = vrot.lane.b32.xlu0 %v7432, 17
      %v7446 = vpop.permute.xlu0 %7445
      %7447 = vrot.lane.b32.xlu0 %v7433, 17
      %v7448 = vpop.permute.xlu0 %7447
      %7449 = vrot.lane.b32.xlu0 %v7434, 17
      %v7450 = vpop.permute.xlu0 %7449
      %v7451 = vsel %vm725, %v7448, %v7450
      %v7452 = vsel %vm725, %v7446, %v7448
      %v7453 = vsel %vm725, %v7444, %v7446
      %v7454 = vsel %vm725, %v7442, %v7444
      %v7455 = vsel %vm725, %v7440, %v7442
      %v7456 = vsel %vm725, %v7438, %v7440
      %v7457 = vsel %vm725, %v7436, %v7438
      %v7458 = vsel %vm725, %v7450, %v7436
      %v7459 = vmul.f32 %v7458, %v749
      %v7460 = vmul.f32 %v7457, %v753
      %v7461 = vmul.f32 %v7456, %v757
      %v7462 = vmul.f32 %v7455, %v761
      %v7463 = vmul.f32 %v7454, %v765
      %v7464 = vmul.f32 %v7453, %v769
      %v7465 = vmul.f32 %v7452, %v773
      %v7466 = vmul.f32 %v7451, %v777
      %v7467 = vld [vmem:[%s7] sm:$0xf]
      %7468 = vrot.lane.b32.xlu0 %v7427, 16
      %v7469 = vpop.permute.xlu0 %7468
      %7470 = vrot.lane.b32.xlu0 %v7428, 16
      %v7471 = vpop.permute.xlu0 %7470
      %7472 = vrot.lane.b32.xlu0 %v7429, 16
      %v7473 = vpop.permute.xlu0 %7472
      %7474 = vrot.lane.b32.xlu0 %v7430, 16
      %v7475 = vpop.permute.xlu0 %7474
      %7476 = vrot.lane.b32.xlu0 %v7431, 16
      %v7477 = vpop.permute.xlu0 %7476
      %7478 = vrot.lane.b32.xlu0 %v7432, 16
      %v7479 = vpop.permute.xlu0 %7478
      %7480 = vrot.lane.b32.xlu0 %v7433, 16
      %v7481 = vpop.permute.xlu0 %7480
      %7482 = vrot.lane.b32.xlu0 %v7434, 16
      %v7483 = vpop.permute.xlu0 %7482
      %v7484 = vsel %vm835, %v7481, %v7483
      %v7485 = vsel %vm835, %v7479, %v7481
      %v7486 = vsel %vm835, %v7477, %v7479
      %v7487 = vsel %vm835, %v7475, %v7477
      %v7488 = vsel %vm835, %v7473, %v7475
      %v7489 = vsel %vm835, %v7471, %v7473
      %v7490 = vsel %vm835, %v7469, %v7471
      %v7491 = vsel %vm835, %v7483, %v7469
      %v7492 = vmul.f32 %v7491, %v860
      %v7493 = vmul.f32 %v7490, %v864
      %v7494 = vmul.f32 %v7489, %v868
      %v7495 = vmul.f32 %v7488, %v872
      %v7496 = vmul.f32 %v7487, %v876
      %v7497 = vmul.f32 %v7486, %v880
      %v7498 = vmul.f32 %v7485, %v884
      %v7499 = vmul.f32 %v7484, %v888
      %s7500 = scalar_lea.vmem %s7, 4
      %v7501 = vld [vmem:[%s7500] sm:$0xf]
      %v7503 = vsel %vm4551, %v7501, 0
      %7505 = vmatprep.subr.mxu0 %v7493
      %7506 = vmatpush1.msra.mxu0 %v7492
      %7507 = vmatprep.subr.mxu0 0.0
      %7508 = vmatpush1.msra.mxu0 0.0
      %7509 = vmatprep.subr.mxu0 0.0
      %7510 = vmatpush1.msra.mxu0 0.0
      %7511 = vmatprep.subr.mxu0 0.0
      %7512 = vmatpush1.msra.mxu0 0.0
      %7513 = vmatprep.subr.mxu0 0.0
      %7514 = vmatpush1.msra.mxu0 0.0
      %7515 = vmatprep.subr.mxu0 0.0
      %7516 = vmatpush1.msra.mxu0 0.0
      %7517 = vmatprep.subr.mxu0 0.0
      %7518 = vmatpush1.msra.mxu0 0.0
      %7519 = vmatprep.subr.mxu0 0.0
      %7520 = vmatpush1.msra.mxu0 0.0
      %7521 = vmatprep.subr.mxu0 0.0
      %7522 = vmatpush1.msra.mxu0 0.0
      %7523 = vmatprep.subr.mxu0 0.0
      %7524 = vmatpush1.msra.mxu0 0.0
      %7525 = vmatprep.subr.mxu0 0.0
      %7526 = vmatpush1.msra.mxu0 0.0
      %7527 = vmatprep.subr.mxu0 0.0
      %7528 = vmatpush1.msra.mxu0 0.0
      %7529 = vmatprep.subr.mxu0 0.0
      %7530 = vmatpush1.msra.mxu0 0.0
      %7531 = vmatprep.subr.mxu0 0.0
      %7532 = vmatpush1.msra.mxu0 0.0
      %7533 = vmatprep.subr.mxu0 0.0
      %7534 = vmatpush1.msra.mxu0 0.0
      %7535 = vmatprep.subr.mxu0 0.0
      %7536 = vmatpush1.msra.mxu0 0.0
      %7537 = vmatprep.subr.mxu0 0.0
      %7538 = vmatpush1.msra.mxu0 0.0
      %7539 = vmatprep.subr.mxu0 0.0
      %7540 = vmatpush1.msra.mxu0 0.0
      %7541 = vmatprep.subr.mxu0 0.0
      %7542 = vmatpush1.msra.mxu0 0.0
      %7543 = vmatprep.subr.mxu0 0.0
      %7544 = vmatpush1.msra.mxu0 0.0
      %7545 = vmatprep.subr.mxu0 0.0
      %7546 = vmatpush1.msra.mxu0 0.0
      %7547 = vmatprep.subr.mxu0 0.0
      %7548 = vmatpush1.msra.mxu0 0.0
      %7549 = vmatprep.subr.mxu0 0.0
      %7550 = vmatpush1.msra.mxu0 0.0
      %7551 = vmatprep.subr.mxu0 0.0
      %7552 = vmatpush1.msra.mxu0 0.0
      %7553 = vmatprep.subr.mxu0 0.0
      %7554 = vmatpush1.msra.mxu0 0.0
      %7555 = vmatprep.subr.mxu0 0.0
      %7556 = vmatpush1.msra.mxu0 0.0
      %7557 = vmatprep.subr.mxu0 0.0
      %7558 = vmatpush1.msra.mxu0 0.0
      %7559 = vmatprep.subr.mxu0 0.0
      %7560 = vmatpush1.msra.mxu0 0.0
      %7561 = vmatprep.subr.mxu0 0.0
      %7562 = vmatpush1.msra.mxu0 0.0
      %7563 = vmatprep.subr.mxu0 0.0
      %7564 = vmatpush1.msra.mxu0 0.0
      %7565 = vmatprep.subr.mxu0 0.0
      %7566 = vmatpush1.msra.mxu0 0.0
      %7567 = vmatprep.subr.mxu0 0.0
      %7568 = vmatpush1.msra.mxu0 0.0
      %7569 = vmatprep.mubr.f32.mxu0 0.0
      %7570 = vmatmul.mubr.f32.gmra.mrb[0].mxu0 %v7503
      %v7571 = vpop.f32.mrb[0].mxu0
      %v7572 = vadd.f32 0.0, %v7571
      %v7573 = vpop.f32.mrb[0].mxu0
      %v7574 = vadd.f32 0.0, %v7573
      %7575 = vdwg.mxu0
      %7576 = vmatprep.subr.mxu0 %v7495
      %7577 = vmatpush1.msra.mxu0 %v7494
      %7578 = vmatprep.subr.mxu0 0.0
      %7579 = vmatpush1.msra.mxu0 0.0
      %7580 = vmatprep.subr.mxu0 0.0
      %7581 = vmatpush1.msra.mxu0 0.0
      %7582 = vmatprep.subr.mxu0 0.0
      %7583 = vmatpush1.msra.mxu0 0.0
      %7584 = vmatprep.subr.mxu0 0.0
      %7585 = vmatpush1.msra.mxu0 0.0
      %7586 = vmatprep.subr.mxu0 0.0
      %7587 = vmatpush1.msra.mxu0 0.0
      %7588 = vmatprep.subr.mxu0 0.0
      %7589 = vmatpush1.msra.mxu0 0.0
      %7590 = vmatprep.subr.mxu0 0.0
      %7591 = vmatpush1.msra.mxu0 0.0
      %7592 = vmatprep.subr.mxu0 0.0
      %7593 = vmatpush1.msra.mxu0 0.0
      %7594 = vmatprep.subr.mxu0 0.0
      %7595 = vmatpush1.msra.mxu0 0.0
      %7596 = vmatprep.subr.mxu0 0.0
      %7597 = vmatpush1.msra.mxu0 0.0
      %7598 = vmatprep.subr.mxu0 0.0
      %7599 = vmatpush1.msra.mxu0 0.0
      %7600 = vmatprep.subr.mxu0 0.0
      %7601 = vmatpush1.msra.mxu0 0.0
      %7602 = vmatprep.subr.mxu0 0.0
      %7603 = vmatpush1.msra.mxu0 0.0
      %7604 = vmatprep.subr.mxu0 0.0
      %7605 = vmatpush1.msra.mxu0 0.0
      %7606 = vmatprep.subr.mxu0 0.0
      %7607 = vmatpush1.msra.mxu0 0.0
      %7608 = vmatprep.subr.mxu0 0.0
      %7609 = vmatpush1.msra.mxu0 0.0
      %7610 = vmatprep.subr.mxu0 0.0
      %7611 = vmatpush1.msra.mxu0 0.0
      %7612 = vmatprep.subr.mxu0 0.0
      %7613 = vmatpush1.msra.mxu0 0.0
      %7614 = vmatprep.subr.mxu0 0.0
      %7615 = vmatpush1.msra.mxu0 0.0
      %7616 = vmatprep.subr.mxu0 0.0
      %7617 = vmatpush1.msra.mxu0 0.0
      %7618 = vmatprep.subr.mxu0 0.0
      %7619 = vmatpush1.msra.mxu0 0.0
      %7620 = vmatprep.subr.mxu0 0.0
      %7621 = vmatpush1.msra.mxu0 0.0
      %7622 = vmatprep.subr.mxu0 0.0
      %7623 = vmatpush1.msra.mxu0 0.0
      %7624 = vmatprep.subr.mxu0 0.0
      %7625 = vmatpush1.msra.mxu0 0.0
      %7626 = vmatprep.subr.mxu0 0.0
      %7627 = vmatpush1.msra.mxu0 0.0
      %7628 = vmatprep.subr.mxu0 0.0
      %7629 = vmatpush1.msra.mxu0 0.0
      %7630 = vmatprep.subr.mxu0 0.0
      %7631 = vmatpush1.msra.mxu0 0.0
      %7632 = vmatprep.subr.mxu0 0.0
      %7633 = vmatpush1.msra.mxu0 0.0
      %7634 = vmatprep.subr.mxu0 0.0
      %7635 = vmatpush1.msra.mxu0 0.0
      %7636 = vmatprep.subr.mxu0 0.0
      %7637 = vmatpush1.msra.mxu0 0.0
      %7638 = vmatprep.subr.mxu0 0.0
      %7639 = vmatpush1.msra.mxu0 0.0
      %7640 = vmatprep.mubr.f32.mxu0 0.0
      %7641 = vmatmul.mubr.f32.gmra.mrb[0].mxu0 %v7503
      %v7642 = vpop.f32.mrb[0].mxu0
      %v7643 = vadd.f32 0.0, %v7642
      %v7644 = vpop.f32.mrb[0].mxu0
      %v7645 = vadd.f32 0.0, %v7644
      %7646 = vdwg.mxu0
      %7647 = vmatprep.subr.mxu0 %v7497
      %7648 = vmatpush1.msra.mxu0 %v7496
      %7649 = vmatprep.subr.mxu0 0.0
      %7650 = vmatpush1.msra.mxu0 0.0
      %7651 = vmatprep.subr.mxu0 0.0
      %7652 = vmatpush1.msra.mxu0 0.0
      %7653 = vmatprep.subr.mxu0 0.0
      %7654 = vmatpush1.msra.mxu0 0.0
      %7655 = vmatprep.subr.mxu0 0.0
      %7656 = vmatpush1.msra.mxu0 0.0
      %7657 = vmatprep.subr.mxu0 0.0
      %7658 = vmatpush1.msra.mxu0 0.0
      %7659 = vmatprep.subr.mxu0 0.0
      %7660 = vmatpush1.msra.mxu0 0.0
      %7661 = vmatprep.subr.mxu0 0.0
      %7662 = vmatpush1.msra.mxu0 0.0
      %7663 = vmatprep.subr.mxu0 0.0
      %7664 = vmatpush1.msra.mxu0 0.0
      %7665 = vmatprep.subr.mxu0 0.0
      %7666 = vmatpush1.msra.mxu0 0.0
      %7667 = vmatprep.subr.mxu0 0.0
      %7668 = vmatpush1.msra.mxu0 0.0
      %7669 = vmatprep.subr.mxu0 0.0
      %7670 = vmatpush1.msra.mxu0 0.0
      %7671 = vmatprep.subr.mxu0 0.0
      %7672 = vmatpush1.msra.mxu0 0.0
      %7673 = vmatprep.subr.mxu0 0.0
      %7674 = vmatpush1.msra.mxu0 0.0
      %7675 = vmatprep.subr.mxu0 0.0
      %7676 = vmatpush1.msra.mxu0 0.0
      %7677 = vmatprep.subr.mxu0 0.0
      %7678 = vmatpush1.msra.mxu0 0.0
      %7679 = vmatprep.subr.mxu0 0.0
      %7680 = vmatpush1.msra.mxu0 0.0
      %7681 = vmatprep.subr.mxu0 0.0
      %7682 = vmatpush1.msra.mxu0 0.0
      %7683 = vmatprep.subr.mxu0 0.0
      %7684 = vmatpush1.msra.mxu0 0.0
      %7685 = vmatprep.subr.mxu0 0.0
      %7686 = vmatpush1.msra.mxu0 0.0
      %7687 = vmatprep.subr.mxu0 0.0
      %7688 = vmatpush1.msra.mxu0 0.0
      %7689 = vmatprep.subr.mxu0 0.0
      %7690 = vmatpush1.msra.mxu0 0.0
      %7691 = vmatprep.subr.mxu0 0.0
      %7692 = vmatpush1.msra.mxu0 0.0
      %7693 = vmatprep.subr.mxu0 0.0
      %7694 = vmatpush1.msra.mxu0 0.0
      %7695 = vmatprep.subr.mxu0 0.0
      %7696 = vmatpush1.msra.mxu0 0.0
      %7697 = vmatprep.subr.mxu0 0.0
      %7698 = vmatpush1.msra.mxu0 0.0
      %7699 = vmatprep.subr.mxu0 0.0
      %7700 = vmatpush1.msra.mxu0 0.0
      %7701 = vmatprep.subr.mxu0 0.0
      %7702 = vmatpush1.msra.mxu0 0.0
      %7703 = vmatprep.subr.mxu0 0.0
      %7704 = vmatpush1.msra.mxu0 0.0
      %7705 = vmatprep.subr.mxu0 0.0
      %7706 = vmatpush1.msra.mxu0 0.0
      %7707 = vmatprep.subr.mxu0 0.0
      %7708 = vmatpush1.msra.mxu0 0.0
      %7709 = vmatprep.subr.mxu0 0.0
      %7710 = vmatpush1.msra.mxu0 0.0
      %7711 = vmatprep.mubr.f32.mxu0 0.0
      %7712 = vmatmul.mubr.f32.gmra.mrb[0].mxu0 %v7503
      %v7713 = vpop.f32.mrb[0].mxu0
      %v7714 = vadd.f32 0.0, %v7713
      %v7715 = vpop.f32.mrb[0].mxu0
      %v7716 = vadd.f32 0.0, %v7715
      %7717 = vdwg.mxu0
      %7718 = vmatprep.subr.mxu0 %v7499
      %7719 = vmatpush1.msra.mxu0 %v7498
      %7720 = vmatprep.subr.mxu0 0.0
      %7721 = vmatpush1.msra.mxu0 0.0
      %7722 = vmatprep.subr.mxu0 0.0
      %7723 = vmatpush1.msra.mxu0 0.0
      %7724 = vmatprep.subr.mxu0 0.0
      %7725 = vmatpush1.msra.mxu0 0.0
      %7726 = vmatprep.subr.mxu0 0.0
      %7727 = vmatpush1.msra.mxu0 0.0
      %7728 = vmatprep.subr.mxu0 0.0
      %7729 = vmatpush1.msra.mxu0 0.0
      %7730 = vmatprep.subr.mxu0 0.0
      %7731 = vmatpush1.msra.mxu0 0.0
      %7732 = vmatprep.subr.mxu0 0.0
      %7733 = vmatpush1.msra.mxu0 0.0
      %7734 = vmatprep.subr.mxu0 0.0
      %7735 = vmatpush1.msra.mxu0 0.0
      %7736 = vmatprep.subr.mxu0 0.0
      %7737 = vmatpush1.msra.mxu0 0.0
      %7738 = vmatprep.subr.mxu0 0.0
      %7739 = vmatpush1.msra.mxu0 0.0
      %7740 = vmatprep.subr.mxu0 0.0
      %7741 = vmatpush1.msra.mxu0 0.0
      %7742 = vmatprep.subr.mxu0 0.0
      %7743 = vmatpush1.msra.mxu0 0.0
      %7744 = vmatprep.subr.mxu0 0.0
      %7745 = vmatpush1.msra.mxu0 0.0
      %7746 = vmatprep.subr.mxu0 0.0
      %7747 = vmatpush1.msra.mxu0 0.0
      %7748 = vmatprep.subr.mxu0 0.0
      %7749 = vmatpush1.msra.mxu0 0.0
      %7750 = vmatprep.subr.mxu0 0.0
      %7751 = vmatpush1.msra.mxu0 0.0
      %7752 = vmatprep.subr.mxu0 0.0
      %7753 = vmatpush1.msra.mxu0 0.0
      %7754 = vmatprep.subr.mxu0 0.0
      %7755 = vmatpush1.msra.mxu0 0.0
      %7756 = vmatprep.subr.mxu0 0.0
      %7757 = vmatpush1.msra.mxu0 0.0
      %7758 = vmatprep.subr.mxu0 0.0
      %7759 = vmatpush1.msra.mxu0 0.0
      %7760 = vmatprep.subr.mxu0 0.0
      %7761 = vmatpush1.msra.mxu0 0.0
      %7762 = vmatprep.subr.mxu0 0.0
      %7763 = vmatpush1.msra.mxu0 0.0
      %7764 = vmatprep.subr.mxu0 0.0
      %7765 = vmatpush1.msra.mxu0 0.0
      %7766 = vmatprep.subr.mxu0 0.0
      %7767 = vmatpush1.msra.mxu0 0.0
      %7768 = vmatprep.subr.mxu0 0.0
      %7769 = vmatpush1.msra.mxu0 0.0
      %7770 = vmatprep.subr.mxu0 0.0
      %7771 = vmatpush1.msra.mxu0 0.0
      %7772 = vmatprep.subr.mxu0 0.0
      %7773 = vmatpush1.msra.mxu0 0.0
      %7774 = vmatprep.subr.mxu0 0.0
      %7775 = vmatpush1.msra.mxu0 0.0
      %7776 = vmatprep.subr.mxu0 0.0
      %7777 = vmatpush1.msra.mxu0 0.0
      %7778 = vmatprep.subr.mxu0 0.0
      %7779 = vmatpush1.msra.mxu0 0.0
      %7780 = vmatprep.subr.mxu0 0.0
      %7781 = vmatpush1.msra.mxu0 0.0
      %7782 = vmatprep.mubr.f32.mxu0 0.0
      %7783 = vmatmul.mubr.f32.gmra.mrb[0].mxu0 %v7503
      %v7784 = vpop.f32.mrb[0].mxu0
      %v7785 = vadd.f32 0.0, %v7784
      %v7786 = vpop.f32.mrb[0].mxu0
      %v7787 = vadd.f32 0.0, %v7786
      %7788 = vdwg.mxu0
      %v7790 = vsel %vm4551, %v7467, 0
      %7792 = vmatprep.subr.mxu0 %v7460
      %7793 = vmatpush1.msra.mxu0 %v7459
      %7794 = vmatprep.subr.mxu0 0.0
      %7795 = vmatpush1.msra.mxu0 0.0
      %7796 = vmatprep.subr.mxu0 0.0
      %7797 = vmatpush1.msra.mxu0 0.0
      %7798 = vmatprep.subr.mxu0 0.0
      %7799 = vmatpush1.msra.mxu0 0.0
      %7800 = vmatprep.subr.mxu0 0.0
      %7801 = vmatpush1.msra.mxu0 0.0
      %7802 = vmatprep.subr.mxu0 0.0
      %7803 = vmatpush1.msra.mxu0 0.0
      %7804 = vmatprep.subr.mxu0 0.0
      %7805 = vmatpush1.msra.mxu0 0.0
      %7806 = vmatprep.subr.mxu0 0.0
      %7807 = vmatpush1.msra.mxu0 0.0
      %7808 = vmatprep.subr.mxu0 0.0
      %7809 = vmatpush1.msra.mxu0 0.0
      %7810 = vmatprep.subr.mxu0 0.0
      %7811 = vmatpush1.msra.mxu0 0.0
      %7812 = vmatprep.subr.mxu0 0.0
      %7813 = vmatpush1.msra.mxu0 0.0
      %7814 = vmatprep.subr.mxu0 0.0
      %7815 = vmatpush1.msra.mxu0 0.0
      %7816 = vmatprep.subr.mxu0 0.0
      %7817 = vmatpush1.msra.mxu0 0.0
      %7818 = vmatprep.subr.mxu0 0.0
      %7819 = vmatpush1.msra.mxu0 0.0
      %7820 = vmatprep.subr.mxu0 0.0
      %7821 = vmatpush1.msra.mxu0 0.0
      %7822 = vmatprep.subr.mxu0 0.0
      %7823 = vmatpush1.msra.mxu0 0.0
      %7824 = vmatprep.subr.mxu0 0.0
      %7825 = vmatpush1.msra.mxu0 0.0
      %7826 = vmatprep.subr.mxu0 0.0
      %7827 = vmatpush1.msra.mxu0 0.0
      %7828 = vmatprep.subr.mxu0 0.0
      %7829 = vmatpush1.msra.mxu0 0.0
      %7830 = vmatprep.subr.mxu0 0.0
      %7831 = vmatpush1.msra.mxu0 0.0
      %7832 = vmatprep.subr.mxu0 0.0
      %7833 = vmatpush1.msra.mxu0 0.0
      %7834 = vmatprep.subr.mxu0 0.0
      %7835 = vmatpush1.msra.mxu0 0.0
      %7836 = vmatprep.subr.mxu0 0.0
      %7837 = vmatpush1.msra.mxu0 0.0
      %7838 = vmatprep.subr.mxu0 0.0
      %7839 = vmatpush1.msra.mxu0 0.0
      %7840 = vmatprep.subr.mxu0 0.0
      %7841 = vmatpush1.msra.mxu0 0.0
      %7842 = vmatprep.subr.mxu0 0.0
      %7843 = vmatpush1.msra.mxu0 0.0
      %7844 = vmatprep.subr.mxu0 0.0
      %7845 = vmatpush1.msra.mxu0 0.0
      %7846 = vmatprep.subr.mxu0 0.0
      %7847 = vmatpush1.msra.mxu0 0.0
      %7848 = vmatprep.subr.mxu0 0.0
      %7849 = vmatpush1.msra.mxu0 0.0
      %7850 = vmatprep.subr.mxu0 0.0
      %7851 = vmatpush1.msra.mxu0 0.0
      %7852 = vmatprep.subr.mxu0 0.0
      %7853 = vmatpush1.msra.mxu0 0.0
      %7854 = vmatprep.subr.mxu0 0.0
      %7855 = vmatpush1.msra.mxu0 0.0
      %7856 = vmatprep.mubr.f32.mxu0 0.0
      %7857 = vmatmul.mubr.f32.gmra.mrb[0].mxu0 %v7790
      %v7858 = vpop.f32.mrb[0].mxu0
      %v7859 = vadd.f32 %v7572, %v7858
      %v7860 = vpop.f32.mrb[0].mxu0
      %v7861 = vadd.f32 %v7574, %v7860
      %7862 = vdwg.mxu0
      %7863 = vmatprep.subr.mxu0 %v7462
      %7864 = vmatpush1.msra.mxu0 %v7461
      %7865 = vmatprep.subr.mxu0 0.0
      %7866 = vmatpush1.msra.mxu0 0.0
      %7867 = vmatprep.subr.mxu0 0.0
      %7868 = vmatpush1.msra.mxu0 0.0
      %7869 = vmatprep.subr.mxu0 0.0
      %7870 = vmatpush1.msra.mxu0 0.0
      %7871 = vmatprep.subr.mxu0 0.0
      %7872 = vmatpush1.msra.mxu0 0.0
      %7873 = vmatprep.subr.mxu0 0.0
      %7874 = vmatpush1.msra.mxu0 0.0
      %7875 = vmatprep.subr.mxu0 0.0
      %7876 = vmatpush1.msra.mxu0 0.0
      %7877 = vmatprep.subr.mxu0 0.0
      %7878 = vmatpush1.msra.mxu0 0.0
      %7879 = vmatprep.subr.mxu0 0.0
      %7880 = vmatpush1.msra.mxu0 0.0
      %7881 = vmatprep.subr.mxu0 0.0
      %7882 = vmatpush1.msra.mxu0 0.0
      %7883 = vmatprep.subr.mxu0 0.0
      %7884 = vmatpush1.msra.mxu0 0.0
      %7885 = vmatprep.subr.mxu0 0.0
      %7886 = vmatpush1.msra.mxu0 0.0
      %7887 = vmatprep.subr.mxu0 0.0
      %7888 = vmatpush1.msra.mxu0 0.0
      %7889 = vmatprep.subr.mxu0 0.0
      %7890 = vmatpush1.msra.mxu0 0.0
      %7891 = vmatprep.subr.mxu0 0.0
      %7892 = vmatpush1.msra.mxu0 0.0
      %7893 = vmatprep.subr.mxu0 0.0
      %7894 = vmatpush1.msra.mxu0 0.0
      %7895 = vmatprep.subr.mxu0 0.0
      %7896 = vmatpush1.msra.mxu0 0.0
      %7897 = vmatprep.subr.mxu0 0.0
      %7898 = vmatpush1.msra.mxu0 0.0
      %7899 = vmatprep.subr.mxu0 0.0
      %7900 = vmatpush1.msra.mxu0 0.0
      %7901 = vmatprep.subr.mxu0 0.0
      %7902 = vmatpush1.msra.mxu0 0.0
      %7903 = vmatprep.subr.mxu0 0.0
      %7904 = vmatpush1.msra.mxu0 0.0
      %7905 = vmatprep.subr.mxu0 0.0
      %7906 = vmatpush1.msra.mxu0 0.0
      %7907 = vmatprep.subr.mxu0 0.0
      %7908 = vmatpush1.msra.mxu0 0.0
      %7909 = vmatprep.subr.mxu0 0.0
      %7910 = vmatpush1.msra.mxu0 0.0
      %7911 = vmatprep.subr.mxu0 0.0
      %7912 = vmatpush1.msra.mxu0 0.0
      %7913 = vmatprep.subr.mxu0 0.0
      %7914 = vmatpush1.msra.mxu0 0.0
      %7915 = vmatprep.subr.mxu0 0.0
      %7916 = vmatpush1.msra.mxu0 0.0
      %7917 = vmatprep.subr.mxu0 0.0
      %7918 = vmatpush1.msra.mxu0 0.0
      %7919 = vmatprep.subr.mxu0 0.0
      %7920 = vmatpush1.msra.mxu0 0.0
      %7921 = vmatprep.subr.mxu0 0.0
      %7922 = vmatpush1.msra.mxu0 0.0
      %7923 = vmatprep.subr.mxu0 0.0
      %7924 = vmatpush1.msra.mxu0 0.0
      %7925 = vmatprep.subr.mxu0 0.0
      %7926 = vmatpush1.msra.mxu0 0.0
      %7927 = vmatprep.mubr.f32.mxu0 0.0
      %7928 = vmatmul.mubr.f32.gmra.mrb[0].mxu0 %v7790
      %v7929 = vpop.f32.mrb[0].mxu0
      %v7930 = vadd.f32 %v7643, %v7929
      %v7931 = vpop.f32.mrb[0].mxu0
      %v7932 = vadd.f32 %v7645, %v7931
      %7933 = vdwg.mxu0
      %7934 = vmatprep.subr.mxu0 %v7464
      %7935 = vmatpush1.msra.mxu0 %v7463
      %7936 = vmatprep.subr.mxu0 0.0
      %7937 = vmatpush1.msra.mxu0 0.0
      %7938 = vmatprep.subr.mxu0 0.0
      %7939 = vmatpush1.msra.mxu0 0.0
      %7940 = vmatprep.subr.mxu0 0.0
      %7941 = vmatpush1.msra.mxu0 0.0
      %7942 = vmatprep.subr.mxu0 0.0
      %7943 = vmatpush1.msra.mxu0 0.0
      %7944 = vmatprep.subr.mxu0 0.0
      %7945 = vmatpush1.msra.mxu0 0.0
      %7946 = vmatprep.subr.mxu0 0.0
      %7947 = vmatpush1.msra.mxu0 0.0
      %7948 = vmatprep.subr.mxu0 0.0
      %7949 = vmatpush1.msra.mxu0 0.0
      %7950 = vmatprep.subr.mxu0 0.0
      %7951 = vmatpush1.msra.mxu0 0.0
      %7952 = vmatprep.subr.mxu0 0.0
      %7953 = vmatpush1.msra.mxu0 0.0
      %7954 = vmatprep.subr.mxu0 0.0
      %7955 = vmatpush1.msra.mxu0 0.0
      %7956 = vmatprep.subr.mxu0 0.0
      %7957 = vmatpush1.msra.mxu0 0.0
      %7958 = vmatprep.subr.mxu0 0.0
      %7959 = vmatpush1.msra.mxu0 0.0
      %7960 = vmatprep.subr.mxu0 0.0
      %7961 = vmatpush1.msra.mxu0 0.0
      %7962 = vmatprep.subr.mxu0 0.0
      %7963 = vmatpush1.msra.mxu0 0.0
      %7964 = vmatprep.subr.mxu0 0.0
      %7965 = vmatpush1.msra.mxu0 0.0
      %7966 = vmatprep.subr.mxu0 0.0
      %7967 = vmatpush1.msra.mxu0 0.0
      %7968 = vmatprep.subr.mxu0 0.0
      %7969 = vmatpush1.msra.mxu0 0.0
      %7970 = vmatprep.subr.mxu0 0.0
      %7971 = vmatpush1.msra.mxu0 0.0
      %7972 = vmatprep.subr.mxu0 0.0
      %7973 = vmatpush1.msra.mxu0 0.0
      %7974 = vmatprep.subr.mxu0 0.0
      %7975 = vmatpush1.msra.mxu0 0.0
      %7976 = vmatprep.subr.mxu0 0.0
      %7977 = vmatpush1.msra.mxu0 0.0
      %7978 = vmatprep.subr.mxu0 0.0
      %7979 = vmatpush1.msra.mxu0 0.0
      %7980 = vmatprep.subr.mxu0 0.0
      %7981 = vmatpush1.msra.mxu0 0.0
      %7982 = vmatprep.subr.mxu0 0.0
      %7983 = vmatpush1.msra.mxu0 0.0
      %7984 = vmatprep.subr.mxu0 0.0
      %7985 = vmatpush1.msra.mxu0 0.0
      %7986 = vmatprep.subr.mxu0 0.0
      %7987 = vmatpush1.msra.mxu0 0.0
      %7988 = vmatprep.subr.mxu0 0.0
      %7989 = vmatpush1.msra.mxu0 0.0
      %7990 = vmatprep.subr.mxu0 0.0
      %7991 = vmatpush1.msra.mxu0 0.0
      %7992 = vmatprep.subr.mxu0 0.0
      %7993 = vmatpush1.msra.mxu0 0.0
      %7994 = vmatprep.subr.mxu0 0.0
      %7995 = vmatpush1.msra.mxu0 0.0
      %7996 = vmatprep.subr.mxu0 0.0
      %7997 = vmatpush1.msra.mxu0 0.0
      %7998 = vmatprep.mubr.f32.mxu0 0.0
      %7999 = vmatmul.mubr.f32.gmra.mrb[0].mxu0 %v7790
      %v8000 = vpop.f32.mrb[0].mxu0
      %v8001 = vadd.f32 %v7714, %v8000
      %v8002 = vpop.f32.mrb[0].mxu0
      %v8003 = vadd.f32 %v7716, %v8002
      %8004 = vdwg.mxu0
      %8005 = vmatprep.subr.mxu0 %v7466
      %8006 = vmatpush1.msra.mxu0 %v7465
      %8007 = vmatprep.subr.mxu0 0.0
      %8008 = vmatpush1.msra.mxu0 0.0
      %8009 = vmatprep.subr.mxu0 0.0
      %8010 = vmatpush1.msra.mxu0 0.0
      %8011 = vmatprep.subr.mxu0 0.0
      %8012 = vmatpush1.msra.mxu0 0.0
      %8013 = vmatprep.subr.mxu0 0.0
      %8014 = vmatpush1.msra.mxu0 0.0
      %8015 = vmatprep.subr.mxu0 0.0
      %8016 = vmatpush1.msra.mxu0 0.0
      %8017 = vmatprep.subr.mxu0 0.0
      %8018 = vmatpush1.msra.mxu0 0.0
      %8019 = vmatprep.subr.mxu0 0.0
      %8020 = vmatpush1.msra.mxu0 0.0
      %8021 = vmatprep.subr.mxu0 0.0
      %8022 = vmatpush1.msra.mxu0 0.0
      %8023 = vmatprep.subr.mxu0 0.0
      %8024 = vmatpush1.msra.mxu0 0.0
      %8025 = vmatprep.subr.mxu0 0.0
      %8026 = vmatpush1.msra.mxu0 0.0
      %8027 = vmatprep.subr.mxu0 0.0
      %8028 = vmatpush1.msra.mxu0 0.0
      %8029 = vmatprep.subr.mxu0 0.0
      %8030 = vmatpush1.msra.mxu0 0.0
      %8031 = vmatprep.subr.mxu0 0.0
      %8032 = vmatpush1.msra.mxu0 0.0
      %8033 = vmatprep.subr.mxu0 0.0
      %8034 = vmatpush1.msra.mxu0 0.0
      %8035 = vmatprep.subr.mxu0 0.0
      %8036 = vmatpush1.msra.mxu0 0.0
      %8037 = vmatprep.subr.mxu0 0.0
      %8038 = vmatpush1.msra.mxu0 0.0
      %8039 = vmatprep.subr.mxu0 0.0
      %8040 = vmatpush1.msra.mxu0 0.0
      %8041 = vmatprep.subr.mxu0 0.0
      %8042 = vmatpush1.msra.mxu0 0.0
      %8043 = vmatprep.subr.mxu0 0.0
      %8044 = vmatpush1.msra.mxu0 0.0
      %8045 = vmatprep.subr.mxu0 0.0
      %8046 = vmatpush1.msra.mxu0 0.0
      %8047 = vmatprep.subr.mxu0 0.0
      %8048 = vmatpush1.msra.mxu0 0.0
      %8049 = vmatprep.subr.mxu0 0.0
      %8050 = vmatpush1.msra.mxu0 0.0
      %8051 = vmatprep.subr.mxu0 0.0
      %8052 = vmatpush1.msra.mxu0 0.0
      %8053 = vmatprep.subr.mxu0 0.0
      %8054 = vmatpush1.msra.mxu0 0.0
      %8055 = vmatprep.subr.mxu0 0.0
      %8056 = vmatpush1.msra.mxu0 0.0
      %8057 = vmatprep.subr.mxu0 0.0
      %8058 = vmatpush1.msra.mxu0 0.0
      %8059 = vmatprep.subr.mxu0 0.0
      %8060 = vmatpush1.msra.mxu0 0.0
      %8061 = vmatprep.subr.mxu0 0.0
      %8062 = vmatpush1.msra.mxu0 0.0
      %8063 = vmatprep.subr.mxu0 0.0
      %8064 = vmatpush1.msra.mxu0 0.0
      %8065 = vmatprep.subr.mxu0 0.0
      %8066 = vmatpush1.msra.mxu0 0.0
      %8067 = vmatprep.subr.mxu0 0.0
      %8068 = vmatpush1.msra.mxu0 0.0
      %8069 = vmatprep.mubr.f32.mxu0 0.0
      %8070 = vmatmul.mubr.f32.gmra.mrb[0].mxu0 %v7790
      %v8071 = vpop.f32.mrb[0].mxu0
      %v8072 = vadd.f32 %v7785, %v8071
      %v8073 = vpop.f32.mrb[0].mxu0
      %v8074 = vadd.f32 %v7787, %v8073
      %8075 = vdwg.mxu0
      %8076 = vrot.lane.b32.xlu0 %v7427, 15
      %v8077 = vpop.permute.xlu0 %8076
      %8078 = vrot.lane.b32.xlu0 %v7428, 15
      %v8079 = vpop.permute.xlu0 %8078
      %8080 = vrot.lane.b32.xlu0 %v7429, 15
      %v8081 = vpop.permute.xlu0 %8080
      %8082 = vrot.lane.b32.xlu0 %v7430, 15
      %v8083 = vpop.permute.xlu0 %8082
      %8084 = vrot.lane.b32.xlu0 %v7431, 15
      %v8085 = vpop.permute.xlu0 %8084
      %8086 = vrot.lane.b32.xlu0 %v7432, 15
      %v8087 = vpop.permute.xlu0 %8086
      %8088 = vrot.lane.b32.xlu0 %v7433, 15
      %v8089 = vpop.permute.xlu0 %8088
      %8090 = vrot.lane.b32.xlu0 %v7434, 15
      %v8091 = vpop.permute.xlu0 %8090
      %v8092 = vsel %vm1571, %v8089, %v8091
      %v8093 = vsel %vm1571, %v8087, %v8089
      %v8094 = vsel %vm1571, %v8085, %v8087
      %v8095 = vsel %vm1571, %v8083, %v8085
      %v8096 = vsel %vm1571, %v8081, %v8083
      %v8097 = vsel %vm1571, %v8079, %v8081
      %v8098 = vsel %vm1571, %v8077, %v8079
      %v8099 = vsel %vm1571, %v8091, %v8077
      %v8100 = vmul.f32 %v8099, %v1596
      %v8101 = vmul.f32 %v8098, %v1600
      %v8102 = vmul.f32 %v8097, %v1604
      %v8103 = vmul.f32 %v8096, %v1608
      %v8104 = vmul.f32 %v8095, %v1612
      %v8105 = vmul.f32 %v8094, %v1616
      %v8106 = vmul.f32 %v8093, %v1620
      %v8107 = vmul.f32 %v8092, %v1624
      %s8108 = scalar_lea.vmem %s7, 8
      %v8109 = vld [vmem:[%s8108] sm:$0xf]
      %v8111 = vsel %vm4551, %v8109, 0
      %8113 = vmatprep.subr.mxu0 %v8101
      %8114 = vmatpush1.msra.mxu0 %v8100
      %8115 = vmatprep.subr.mxu0 0.0
      %8116 = vmatpush1.msra.mxu0 0.0
      %8117 = vmatprep.subr.mxu0 0.0
      %8118 = vmatpush1.msra.mxu0 0.0
      %8119 = vmatprep.subr.mxu0 0.0
      %8120 = vmatpush1.msra.mxu0 0.0
      %8121 = vmatprep.subr.mxu0 0.0
      %8122 = vmatpush1.msra.mxu0 0.0
      %8123 = vmatprep.subr.mxu0 0.0
      %8124 = vmatpush1.msra.mxu0 0.0
      %8125 = vmatprep.subr.mxu0 0.0
      %8126 = vmatpush1.msra.mxu0 0.0
      %8127 = vmatprep.subr.mxu0 0.0
      %8128 = vmatpush1.msra.mxu0 0.0
      %8129 = vmatprep.subr.mxu0 0.0
      %8130 = vmatpush1.msra.mxu0 0.0
      %8131 = vmatprep.subr.mxu0 0.0
      %8132 = vmatpush1.msra.mxu0 0.0
      %8133 = vmatprep.subr.mxu0 0.0
      %8134 = vmatpush1.msra.mxu0 0.0
      %8135 = vmatprep.subr.mxu0 0.0
      %8136 = vmatpush1.msra.mxu0 0.0
      %8137 = vmatprep.subr.mxu0 0.0
      %8138 = vmatpush1.msra.mxu0 0.0
      %8139 = vmatprep.subr.mxu0 0.0
      %8140 = vmatpush1.msra.mxu0 0.0
      %8141 = vmatprep.subr.mxu0 0.0
      %8142 = vmatpush1.msra.mxu0 0.0
      %8143 = vmatprep.subr.mxu0 0.0
      %8144 = vmatpush1.msra.mxu0 0.0
      %8145 = vmatprep.subr.mxu0 0.0
      %8146 = vmatpush1.msra.mxu0 0.0
      %8147 = vmatprep.subr.mxu0 0.0
      %8148 = vmatpush1.msra.mxu0 0.0
      %8149 = vmatprep.subr.mxu0 0.0
      %8150 = vmatpush1.msra.mxu0 0.0
      %8151 = vmatprep.subr.mxu0 0.0
      %8152 = vmatpush1.msra.mxu0 0.0
      %8153 = vmatprep.subr.mxu0 0.0
      %8154 = vmatpush1.msra.mxu0 0.0
      %8155 = vmatprep.subr.mxu0 0.0
      %8156 = vmatpush1.msra.mxu0 0.0
      %8157 = vmatprep.subr.mxu0 0.0
      %8158 = vmatpush1.msra.mxu0 0.0
      %8159 = vmatprep.subr.mxu0 0.0
      %8160 = vmatpush1.msra.mxu0 0.0
      %8161 = vmatprep.subr.mxu0 0.0
      %8162 = vmatpush1.msra.mxu0 0.0
      %8163 = vmatprep.subr.mxu0 0.0
      %8164 = vmatpush1.msra.mxu0 0.0
      %8165 = vmatprep.subr.mxu0 0.0
      %8166 = vmatpush1.msra.mxu0 0.0
      %8167 = vmatprep.subr.mxu0 0.0
      %8168 = vmatpush1.msra.mxu0 0.0
      %8169 = vmatprep.subr.mxu0 0.0
      %8170 = vmatpush1.msra.mxu0 0.0
      %8171 = vmatprep.subr.mxu0 0.0
      %8172 = vmatpush1.msra.mxu0 0.0
      %8173 = vmatprep.subr.mxu0 0.0
      %8174 = vmatpush1.msra.mxu0 0.0
      %8175 = vmatprep.subr.mxu0 0.0
      %8176 = vmatpush1.msra.mxu0 0.0
      %8177 = vmatprep.mubr.f32.mxu0 0.0
      %8178 = vmatmul.mubr.f32.gmra.mrb[0].mxu0 %v8111
      %v8179 = vpop.f32.mrb[0].mxu0
      %v8180 = vadd.f32 0.0, %v8179
      %v8181 = vpop.f32.mrb[0].mxu0
      %v8182 = vadd.f32 0.0, %v8181
      %8183 = vdwg.mxu0
      %8184 = vmatprep.subr.mxu0 %v8103
      %8185 = vmatpush1.msra.mxu0 %v8102
      %8186 = vmatprep.subr.mxu0 0.0
      %8187 = vmatpush1.msra.mxu0 0.0
      %8188 = vmatprep.subr.mxu0 0.0
      %8189 = vmatpush1.msra.mxu0 0.0
      %8190 = vmatprep.subr.mxu0 0.0
      %8191 = vmatpush1.msra.mxu0 0.0
      %8192 = vmatprep.subr.mxu0 0.0
      %8193 = vmatpush1.msra.mxu0 0.0
      %8194 = vmatprep.subr.mxu0 0.0
      %8195 = vmatpush1.msra.mxu0 0.0
      %8196 = vmatprep.subr.mxu0 0.0
      %8197 = vmatpush1.msra.mxu0 0.0
      %8198 = vmatprep.subr.mxu0 0.0
      %8199 = vmatpush1.msra.mxu0 0.0
      %8200 = vmatprep.subr.mxu0 0.0
      %8201 = vmatpush1.msra.mxu0 0.0
      %8202 = vmatprep.subr.mxu0 0.0
      %8203 = vmatpush1.msra.mxu0 0.0
      %8204 = vmatprep.subr.mxu0 0.0
      %8205 = vmatpush1.msra.mxu0 0.0
      %8206 = vmatprep.subr.mxu0 0.0
      %8207 = vmatpush1.msra.mxu0 0.0
      %8208 = vmatprep.subr.mxu0 0.0
      %8209 = vmatpush1.msra.mxu0 0.0
      %8210 = vmatprep.subr.mxu0 0.0
      %8211 = vmatpush1.msra.mxu0 0.0
      %8212 = vmatprep.subr.mxu0 0.0
      %8213 = vmatpush1.msra.mxu0 0.0
      %8214 = vmatprep.subr.mxu0 0.0
      %8215 = vmatpush1.msra.mxu0 0.0
      %8216 = vmatprep.subr.mxu0 0.0
      %8217 = vmatpush1.msra.mxu0 0.0
      %8218 = vmatprep.subr.mxu0 0.0
      %8219 = vmatpush1.msra.mxu0 0.0
      %8220 = vmatprep.subr.mxu0 0.0
      %8221 = vmatpush1.msra.mxu0 0.0
      %8222 = vmatprep.subr.mxu0 0.0
      %8223 = vmatpush1.msra.mxu0 0.0
      %8224 = vmatprep.subr.mxu0 0.0
      %8225 = vmatpush1.msra.mxu0 0.0
      %8226 = vmatprep.subr.mxu0 0.0
      %8227 = vmatpush1.msra.mxu0 0.0
      %8228 = vmatprep.subr.mxu0 0.0
      %8229 = vmatpush1.msra.mxu0 0.0
      %8230 = vmatprep.subr.mxu0 0.0
      %8231 = vmatpush1.msra.mxu0 0.0
      %8232 = vmatprep.subr.mxu0 0.0
      %8233 = vmatpush1.msra.mxu0 0.0
      %8234 = vmatprep.subr.mxu0 0.0
      %8235 = vmatpush1.msra.mxu0 0.0
      %8236 = vmatprep.subr.mxu0 0.0
      %8237 = vmatpush1.msra.mxu0 0.0
      %8238 = vmatprep.subr.mxu0 0.0
      %8239 = vmatpush1.msra.mxu0 0.0
      %8240 = vmatprep.subr.mxu0 0.0
      %8241 = vmatpush1.msra.mxu0 0.0
      %8242 = vmatprep.subr.mxu0 0.0
      %8243 = vmatpush1.msra.mxu0 0.0
      %8244 = vmatprep.subr.mxu0 0.0
      %8245 = vmatpush1.msra.mxu0 0.0
      %8246 = vmatprep.subr.mxu0 0.0
      %8247 = vmatpush1.msra.mxu0 0.0
      %8248 = vmatprep.mubr.f32.mxu0 0.0
      %8249 = vmatmul.mubr.f32.gmra.mrb[0].mxu0 %v8111
      %v8250 = vpop.f32.mrb[0].mxu0
      %v8251 = vadd.f32 0.0, %v8250
      %v8252 = vpop.f32.mrb[0].mxu0
      %v8253 = vadd.f32 0.0, %v8252
      %8254 = vdwg.mxu0
      %8255 = vmatprep.subr.mxu0 %v8105
      %8256 = vmatpush1.msra.mxu0 %v8104
      %8257 = vmatprep.subr.mxu0 0.0
      %8258 = vmatpush1.msra.mxu0 0.0
      %8259 = vmatprep.subr.mxu0 0.0
      %8260 = vmatpush1.msra.mxu0 0.0
      %8261 = vmatprep.subr.mxu0 0.0
      %8262 = vmatpush1.msra.mxu0 0.0
      %8263 = vmatprep.subr.mxu0 0.0
      %8264 = vmatpush1.msra.mxu0 0.0
      %8265 = vmatprep.subr.mxu0 0.0
      %8266 = vmatpush1.msra.mxu0 0.0
      %8267 = vmatprep.subr.mxu0 0.0
      %8268 = vmatpush1.msra.mxu0 0.0
      %8269 = vmatprep.subr.mxu0 0.0
      %8270 = vmatpush1.msra.mxu0 0.0
      %8271 = vmatprep.subr.mxu0 0.0
      %8272 = vmatpush1.msra.mxu0 0.0
      %8273 = vmatprep.subr.mxu0 0.0
      %8274 = vmatpush1.msra.mxu0 0.0
      %8275 = vmatprep.subr.mxu0 0.0
      %8276 = vmatpush1.msra.mxu0 0.0
      %8277 = vmatprep.subr.mxu0 0.0
      %8278 = vmatpush1.msra.mxu0 0.0
      %8279 = vmatprep.subr.mxu0 0.0
      %8280 = vmatpush1.msra.mxu0 0.0
      %8281 = vmatprep.subr.mxu0 0.0
      %8282 = vmatpush1.msra.mxu0 0.0
      %8283 = vmatprep.subr.mxu0 0.0
      %8284 = vmatpush1.msra.mxu0 0.0
      %8285 = vmatprep.subr.mxu0 0.0
      %8286 = vmatpush1.msra.mxu0 0.0
      %8287 = vmatprep.subr.mxu0 0.0
      %8288 = vmatpush1.msra.mxu0 0.0
      %8289 = vmatprep.subr.mxu0 0.0
      %8290 = vmatpush1.msra.mxu0 0.0
      %8291 = vmatprep.subr.mxu0 0.0
      %8292 = vmatpush1.msra.mxu0 0.0
      %8293 = vmatprep.subr.mxu0 0.0
      %8294 = vmatpush1.msra.mxu0 0.0
      %8295 = vmatprep.subr.mxu0 0.0
      %8296 = vmatpush1.msra.mxu0 0.0
      %8297 = vmatprep.subr.mxu0 0.0
      %8298 = vmatpush1.msra.mxu0 0.0
      %8299 = vmatprep.subr.mxu0 0.0
      %8300 = vmatpush1.msra.mxu0 0.0
      %8301 = vmatprep.subr.mxu0 0.0
      %8302 = vmatpush1.msra.mxu0 0.0
      %8303 = vmatprep.subr.mxu0 0.0
      %8304 = vmatpush1.msra.mxu0 0.0
      %8305 = vmatprep.subr.mxu0 0.0
      %8306 = vmatpush1.msra.mxu0 0.0
      %8307 = vmatprep.subr.mxu0 0.0
      %8308 = vmatpush1.msra.mxu0 0.0
      %8309 = vmatprep.subr.mxu0 0.0
      %8310 = vmatpush1.msra.mxu0 0.0
      %8311 = vmatprep.subr.mxu0 0.0
      %8312 = vmatpush1.msra.mxu0 0.0
      %8313 = vmatprep.subr.mxu0 0.0
      %8314 = vmatpush1.msra.mxu0 0.0
      %8315 = vmatprep.subr.mxu0 0.0
      %8316 = vmatpush1.msra.mxu0 0.0
      %8317 = vmatprep.subr.mxu0 0.0
      %8318 = vmatpush1.msra.mxu0 0.0
      %8319 = vmatprep.mubr.f32.mxu0 0.0
      %8320 = vmatmul.mubr.f32.gmra.mrb[0].mxu0 %v8111
      %v8321 = vpop.f32.mrb[0].mxu0
      %v8322 = vadd.f32 0.0, %v8321
      %v8323 = vpop.f32.mrb[0].mxu0
      %v8324 = vadd.f32 0.0, %v8323
      %8325 = vdwg.mxu0
      %8326 = vmatprep.subr.mxu0 %v8107
      %8327 = vmatpush1.msra.mxu0 %v8106
      %8328 = vmatprep.subr.mxu0 0.0
      %8329 = vmatpush1.msra.mxu0 0.0
      %8330 = vmatprep.subr.mxu0 0.0
      %8331 = vmatpush1.msra.mxu0 0.0
      %8332 = vmatprep.subr.mxu0 0.0
      %8333 = vmatpush1.msra.mxu0 0.0
      %8334 = vmatprep.subr.mxu0 0.0
      %8335 = vmatpush1.msra.mxu0 0.0
      %8336 = vmatprep.subr.mxu0 0.0
      %8337 = vmatpush1.msra.mxu0 0.0
      %8338 = vmatprep.subr.mxu0 0.0
      %8339 = vmatpush1.msra.mxu0 0.0
      %8340 = vmatprep.subr.mxu0 0.0
      %8341 = vmatpush1.msra.mxu0 0.0
      %8342 = vmatprep.subr.mxu0 0.0
      %8343 = vmatpush1.msra.mxu0 0.0
      %8344 = vmatprep.subr.mxu0 0.0
      %8345 = vmatpush1.msra.mxu0 0.0
      %8346 = vmatprep.subr.mxu0 0.0
      %8347 = vmatpush1.msra.mxu0 0.0
      %8348 = vmatprep.subr.mxu0 0.0
      %8349 = vmatpush1.msra.mxu0 0.0
      %8350 = vmatprep.subr.mxu0 0.0
      %8351 = vmatpush1.msra.mxu0 0.0
      %8352 = vmatprep.subr.mxu0 0.0
      %8353 = vmatpush1.msra.mxu0 0.0
      %8354 = vmatprep.subr.mxu0 0.0
      %8355 = vmatpush1.msra.mxu0 0.0
      %8356 = vmatprep.subr.mxu0 0.0
      %8357 = vmatpush1.msra.mxu0 0.0
      %8358 = vmatprep.subr.mxu0 0.0
      %8359 = vmatpush1.msra.mxu0 0.0
      %8360 = vmatprep.subr.mxu0 0.0
      %8361 = vmatpush1.msra.mxu0 0.0
      %8362 = vmatprep.subr.mxu0 0.0
      %8363 = vmatpush1.msra.mxu0 0.0
      %8364 = vmatprep.subr.mxu0 0.0
      %8365 = vmatpush1.msra.mxu0 0.0
      %8366 = vmatprep.subr.mxu0 0.0
      %8367 = vmatpush1.msra.mxu0 0.0
      %8368 = vmatprep.subr.mxu0 0.0
      %8369 = vmatpush1.msra.mxu0 0.0
      %8370 = vmatprep.subr.mxu0 0.0
      %8371 = vmatpush1.msra.mxu0 0.0
      %8372 = vmatprep.subr.mxu0 0.0
      %8373 = vmatpush1.msra.mxu0 0.0
      %8374 = vmatprep.subr.mxu0 0.0
      %8375 = vmatpush1.msra.mxu0 0.0
      %8376 = vmatprep.subr.mxu0 0.0
      %8377 = vmatpush1.msra.mxu0 0.0
      %8378 = vmatprep.subr.mxu0 0.0
      %8379 = vmatpush1.msra.mxu0 0.0
      %8380 = vmatprep.subr.mxu0 0.0
      %8381 = vmatpush1.msra.mxu0 0.0
      %8382 = vmatprep.subr.mxu0 0.0
      %8383 = vmatpush1.msra.mxu0 0.0
      %8384 = vmatprep.subr.mxu0 0.0
      %8385 = vmatpush1.msra.mxu0 0.0
      %8386 = vmatprep.subr.mxu0 0.0
      %8387 = vmatpush1.msra.mxu0 0.0
      %8388 = vmatprep.subr.mxu0 0.0
      %8389 = vmatpush1.msra.mxu0 0.0
      %8390 = vmatprep.mubr.f32.mxu0 0.0
      %8391 = vmatmul.mubr.f32.gmra.mrb[0].mxu0 %v8111
      %v8392 = vpop.f32.mrb[0].mxu0
      %v8393 = vadd.f32 0.0, %v8392
      %v8394 = vpop.f32.mrb[0].mxu0
      %v8395 = vadd.f32 0.0, %v8394
      %8396 = vdwg.mxu0
      %v8397 = vadd.f32 %v7859, %v8180
      %v8398 = vadd.f32 %v7861, %v8182
      %v8399 = vadd.f32 %v7930, %v8251
      %v8400 = vadd.f32 %v7932, %v8253
      %v8401 = vadd.f32 %v8001, %v8322
      %v8402 = vadd.f32 %v8003, %v8324
      %v8403 = vadd.f32 %v8072, %v8393
      %v8404 = vadd.f32 %v8074, %v8395
      %8405 = vrot.lane.b32.xlu0 %v7427, 1
      %v8406 = vpop.permute.xlu0 %8405
      %8407 = vrot.lane.b32.xlu0 %v7428, 1
      %v8408 = vpop.permute.xlu0 %8407
      %8409 = vrot.lane.b32.xlu0 %v7429, 1
      %v8410 = vpop.permute.xlu0 %8409
      %8411 = vrot.lane.b32.xlu0 %v7430, 1
      %v8412 = vpop.permute.xlu0 %8411
      %8413 = vrot.lane.b32.xlu0 %v7431, 1
      %v8414 = vpop.permute.xlu0 %8413
      %8415 = vrot.lane.b32.xlu0 %v7432, 1
      %v8416 = vpop.permute.xlu0 %8415
      %8417 = vrot.lane.b32.xlu0 %v7433, 1
      %v8418 = vpop.permute.xlu0 %8417
      %8419 = vrot.lane.b32.xlu0 %v7434, 1
      %v8420 = vpop.permute.xlu0 %8419
      %v8421 = vsel %vm2002, %v8418, %v8420
      %v8422 = vsel %vm2002, %v8416, %v8418
      %v8423 = vsel %vm2002, %v8414, %v8416
      %v8424 = vsel %vm2002, %v8412, %v8414
      %v8425 = vsel %vm2002, %v8410, %v8412
      %v8426 = vsel %vm2002, %v8408, %v8410
      %v8427 = vsel %vm2002, %v8406, %v8408
      %v8428 = vsel %vm2002, %v8420, %v8406
      %v8429 = vmul.f32 %v8428, %v2027
      %v8430 = vmul.f32 %v8427, %v2031
      %v8431 = vmul.f32 %v8426, %v2035
      %v8432 = vmul.f32 %v8425, %v2039
      %v8433 = vmul.f32 %v8424, %v2043
      %v8434 = vmul.f32 %v8423, %v2047
      %v8435 = vmul.f32 %v8422, %v2051
      %v8436 = vmul.f32 %v8421, %v2055
      %s8437 = scalar_lea.vmem %s7, 12
      %v8438 = vld [vmem:[%s8437] sm:$0xf]
      %v8440 = vsel %vm4551, %v8438, 0
      %8442 = vmatprep.subr.mxu0 %v8430
      %8443 = vmatpush1.msra.mxu0 %v8429
      %8444 = vmatprep.subr.mxu0 0.0
      %8445 = vmatpush1.msra.mxu0 0.0
      %8446 = vmatprep.subr.mxu0 0.0
      %8447 = vmatpush1.msra.mxu0 0.0
      %8448 = vmatprep.subr.mxu0 0.0
      %8449 = vmatpush1.msra.mxu0 0.0
      %8450 = vmatprep.subr.mxu0 0.0
      %8451 = vmatpush1.msra.mxu0 0.0
      %8452 = vmatprep.subr.mxu0 0.0
      %8453 = vmatpush1.msra.mxu0 0.0
      %8454 = vmatprep.subr.mxu0 0.0
      %8455 = vmatpush1.msra.mxu0 0.0
      %8456 = vmatprep.subr.mxu0 0.0
      %8457 = vmatpush1.msra.mxu0 0.0
      %8458 = vmatprep.subr.mxu0 0.0
      %8459 = vmatpush1.msra.mxu0 0.0
      %8460 = vmatprep.subr.mxu0 0.0
      %8461 = vmatpush1.msra.mxu0 0.0
      %8462 = vmatprep.subr.mxu0 0.0
      %8463 = vmatpush1.msra.mxu0 0.0
      %8464 = vmatprep.subr.mxu0 0.0
      %8465 = vmatpush1.msra.mxu0 0.0
      %8466 = vmatprep.subr.mxu0 0.0
      %8467 = vmatpush1.msra.mxu0 0.0
      %8468 = vmatprep.subr.mxu0 0.0
      %8469 = vmatpush1.msra.mxu0 0.0
      %8470 = vmatprep.subr.mxu0 0.0
      %8471 = vmatpush1.msra.mxu0 0.0
      %8472 = vmatprep.subr.mxu0 0.0
      %8473 = vmatpush1.msra.mxu0 0.0
      %8474 = vmatprep.subr.mxu0 0.0
      %8475 = vmatpush1.msra.mxu0 0.0
      %8476 = vmatprep.subr.mxu0 0.0
      %8477 = vmatpush1.msra.mxu0 0.0
      %8478 = vmatprep.subr.mxu0 0.0
      %8479 = vmatpush1.msra.mxu0 0.0
      %8480 = vmatprep.subr.mxu0 0.0
      %8481 = vmatpush1.msra.mxu0 0.0
      %8482 = vmatprep.subr.mxu0 0.0
      %8483 = vmatpush1.msra.mxu0 0.0
      %8484 = vmatprep.subr.mxu0 0.0
      %8485 = vmatpush1.msra.mxu0 0.0
      %8486 = vmatprep.subr.mxu0 0.0
      %8487 = vmatpush1.msra.mxu0 0.0
      %8488 = vmatprep.subr.mxu0 0.0
      %8489 = vmatpush1.msra.mxu0 0.0
      %8490 = vmatprep.subr.mxu0 0.0
      %8491 = vmatpush1.msra.mxu0 0.0
      %8492 = vmatprep.subr.mxu0 0.0
      %8493 = vmatpush1.msra.mxu0 0.0
      %8494 = vmatprep.subr.mxu0 0.0
      %8495 = vmatpush1.msra.mxu0 0.0
      %8496 = vmatprep.subr.mxu0 0.0
      %8497 = vmatpush1.msra.mxu0 0.0
      %8498 = vmatprep.subr.mxu0 0.0
      %8499 = vmatpush1.msra.mxu0 0.0
      %8500 = vmatprep.subr.mxu0 0.0
      %8501 = vmatpush1.msra.mxu0 0.0
      %8502 = vmatprep.subr.mxu0 0.0
      %8503 = vmatpush1.msra.mxu0 0.0
      %8504 = vmatprep.subr.mxu0 0.0
      %8505 = vmatpush1.msra.mxu0 0.0
      %8506 = vmatprep.mubr.f32.mxu0 0.0
      %8507 = vmatmul.mubr.f32.gmra.mrb[0].mxu0 %v8440
      %v8508 = vpop.f32.mrb[0].mxu0
      %v8509 = vadd.f32 0.0, %v8508
      %v8510 = vpop.f32.mrb[0].mxu0
      %v8511 = vadd.f32 0.0, %v8510
      %8512 = vdwg.mxu0
      %8513 = vmatprep.subr.mxu0 %v8432
      %8514 = vmatpush1.msra.mxu0 %v8431
      %8515 = vmatprep.subr.mxu0 0.0
      %8516 = vmatpush1.msra.mxu0 0.0
      %8517 = vmatprep.subr.mxu0 0.0
      %8518 = vmatpush1.msra.mxu0 0.0
      %8519 = vmatprep.subr.mxu0 0.0
      %8520 = vmatpush1.msra.mxu0 0.0
      %8521 = vmatprep.subr.mxu0 0.0
      %8522 = vmatpush1.msra.mxu0 0.0
      %8523 = vmatprep.subr.mxu0 0.0
      %8524 = vmatpush1.msra.mxu0 0.0
      %8525 = vmatprep.subr.mxu0 0.0
      %8526 = vmatpush1.msra.mxu0 0.0
      %8527 = vmatprep.subr.mxu0 0.0
      %8528 = vmatpush1.msra.mxu0 0.0
      %8529 = vmatprep.subr.mxu0 0.0
      %8530 = vmatpush1.msra.mxu0 0.0
      %8531 = vmatprep.subr.mxu0 0.0
      %8532 = vmatpush1.msra.mxu0 0.0
      %8533 = vmatprep.subr.mxu0 0.0
      %8534 = vmatpush1.msra.mxu0 0.0
      %8535 = vmatprep.subr.mxu0 0.0
      %8536 = vmatpush1.msra.mxu0 0.0
      %8537 = vmatprep.subr.mxu0 0.0
      %8538 = vmatpush1.msra.mxu0 0.0
      %8539 = vmatprep.subr.mxu0 0.0
      %8540 = vmatpush1.msra.mxu0 0.0
      %8541 = vmatprep.subr.mxu0 0.0
      %8542 = vmatpush1.msra.mxu0 0.0
      %8543 = vmatprep.subr.mxu0 0.0
      %8544 = vmatpush1.msra.mxu0 0.0
      %8545 = vmatprep.subr.mxu0 0.0
      %8546 = vmatpush1.msra.mxu0 0.0
      %8547 = vmatprep.subr.mxu0 0.0
      %8548 = vmatpush1.msra.mxu0 0.0
      %8549 = vmatprep.subr.mxu0 0.0
      %8550 = vmatpush1.msra.mxu0 0.0
      %8551 = vmatprep.subr.mxu0 0.0
      %8552 = vmatpush1.msra.mxu0 0.0
      %8553 = vmatprep.subr.mxu0 0.0
      %8554 = vmatpush1.msra.mxu0 0.0
      %8555 = vmatprep.subr.mxu0 0.0
      %8556 = vmatpush1.msra.mxu0 0.0
      %8557 = vmatprep.subr.mxu0 0.0
      %8558 = vmatpush1.msra.mxu0 0.0
      %8559 = vmatprep.subr.mxu0 0.0
      %8560 = vmatpush1.msra.mxu0 0.0
      %8561 = vmatprep.subr.mxu0 0.0
      %8562 = vmatpush1.msra.mxu0 0.0
      %8563 = vmatprep.subr.mxu0 0.0
      %8564 = vmatpush1.msra.mxu0 0.0
      %8565 = vmatprep.subr.mxu0 0.0
      %8566 = vmatpush1.msra.mxu0 0.0
      %8567 = vmatprep.subr.mxu0 0.0
      %8568 = vmatpush1.msra.mxu0 0.0
      %8569 = vmatprep.subr.mxu0 0.0
      %8570 = vmatpush1.msra.mxu0 0.0
      %8571 = vmatprep.subr.mxu0 0.0
      %8572 = vmatpush1.msra.mxu0 0.0
      %8573 = vmatprep.subr.mxu0 0.0
      %8574 = vmatpush1.msra.mxu0 0.0
      %8575 = vmatprep.subr.mxu0 0.0
      %8576 = vmatpush1.msra.mxu0 0.0
      %8577 = vmatprep.mubr.f32.mxu0 0.0
      %8578 = vmatmul.mubr.f32.gmra.mrb[0].mxu0 %v8440
      %v8579 = vpop.f32.mrb[0].mxu0
      %v8580 = vadd.f32 0.0, %v8579
      %v8581 = vpop.f32.mrb[0].mxu0
      %v8582 = vadd.f32 0.0, %v8581
      %8583 = vdwg.mxu0
      %8584 = vmatprep.subr.mxu0 %v8434
      %8585 = vmatpush1.msra.mxu0 %v8433
      %8586 = vmatprep.subr.mxu0 0.0
      %8587 = vmatpush1.msra.mxu0 0.0
      %8588 = vmatprep.subr.mxu0 0.0
      %8589 = vmatpush1.msra.mxu0 0.0
      %8590 = vmatprep.subr.mxu0 0.0
      %8591 = vmatpush1.msra.mxu0 0.0
      %8592 = vmatprep.subr.mxu0 0.0
      %8593 = vmatpush1.msra.mxu0 0.0
      %8594 = vmatprep.subr.mxu0 0.0
      %8595 = vmatpush1.msra.mxu0 0.0
      %8596 = vmatprep.subr.mxu0 0.0
      %8597 = vmatpush1.msra.mxu0 0.0
      %8598 = vmatprep.subr.mxu0 0.0
      %8599 = vmatpush1.msra.mxu0 0.0
      %8600 = vmatprep.subr.mxu0 0.0
      %8601 = vmatpush1.msra.mxu0 0.0
      %8602 = vmatprep.subr.mxu0 0.0
      %8603 = vmatpush1.msra.mxu0 0.0
      %8604 = vmatprep.subr.mxu0 0.0
      %8605 = vmatpush1.msra.mxu0 0.0
      %8606 = vmatprep.subr.mxu0 0.0
      %8607 = vmatpush1.msra.mxu0 0.0
      %8608 = vmatprep.subr.mxu0 0.0
      %8609 = vmatpush1.msra.mxu0 0.0
      %8610 = vmatprep.subr.mxu0 0.0
      %8611 = vmatpush1.msra.mxu0 0.0
      %8612 = vmatprep.subr.mxu0 0.0
      %8613 = vmatpush1.msra.mxu0 0.0
      %8614 = vmatprep.subr.mxu0 0.0
      %8615 = vmatpush1.msra.mxu0 0.0
      %8616 = vmatprep.subr.mxu0 0.0
      %8617 = vmatpush1.msra.mxu0 0.0
      %8618 = vmatprep.subr.mxu0 0.0
      %8619 = vmatpush1.msra.mxu0 0.0
      %8620 = vmatprep.subr.mxu0 0.0
      %8621 = vmatpush1.msra.mxu0 0.0
      %8622 = vmatprep.subr.mxu0 0.0
      %8623 = vmatpush1.msra.mxu0 0.0
      %8624 = vmatprep.subr.mxu0 0.0
      %8625 = vmatpush1.msra.mxu0 0.0
      %8626 = vmatprep.subr.mxu0 0.0
      %8627 = vmatpush1.msra.mxu0 0.0
      %8628 = vmatprep.subr.mxu0 0.0
      %8629 = vmatpush1.msra.mxu0 0.0
      %8630 = vmatprep.subr.mxu0 0.0
      %8631 = vmatpush1.msra.mxu0 0.0
      %8632 = vmatprep.subr.mxu0 0.0
      %8633 = vmatpush1.msra.mxu0 0.0
      %8634 = vmatprep.subr.mxu0 0.0
      %8635 = vmatpush1.msra.mxu0 0.0
      %8636 = vmatprep.subr.mxu0 0.0
      %8637 = vmatpush1.msra.mxu0 0.0
      %8638 = vmatprep.subr.mxu0 0.0
      %8639 = vmatpush1.msra.mxu0 0.0
      %8640 = vmatprep.subr.mxu0 0.0
      %8641 = vmatpush1.msra.mxu0 0.0
      %8642 = vmatprep.subr.mxu0 0.0
      %8643 = vmatpush1.msra.mxu0 0.0
      %8644 = vmatprep.subr.mxu0 0.0
      %8645 = vmatpush1.msra.mxu0 0.0
      %8646 = vmatprep.subr.mxu0 0.0
      %8647 = vmatpush1.msra.mxu0 0.0
      %8648 = vmatprep.mubr.f32.mxu0 0.0
      %8649 = vmatmul.mubr.f32.gmra.mrb[0].mxu0 %v8440
      %v8650 = vpop.f32.mrb[0].mxu0
      %v8651 = vadd.f32 0.0, %v8650
      %v8652 = vpop.f32.mrb[0].mxu0
      %v8653 = vadd.f32 0.0, %v8652
      %8654 = vdwg.mxu0
      %8655 = vmatprep.subr.mxu0 %v8436
      %8656 = vmatpush1.msra.mxu0 %v8435
      %8657 = vmatprep.subr.mxu0 0.0
      %8658 = vmatpush1.msra.mxu0 0.0
      %8659 = vmatprep.subr.mxu0 0.0
      %8660 = vmatpush1.msra.mxu0 0.0
      %8661 = vmatprep.subr.mxu0 0.0
      %8662 = vmatpush1.msra.mxu0 0.0
      %8663 = vmatprep.subr.mxu0 0.0
      %8664 = vmatpush1.msra.mxu0 0.0
      %8665 = vmatprep.subr.mxu0 0.0
      %8666 = vmatpush1.msra.mxu0 0.0
      %8667 = vmatprep.subr.mxu0 0.0
      %8668 = vmatpush1.msra.mxu0 0.0
      %8669 = vmatprep.subr.mxu0 0.0
      %8670 = vmatpush1.msra.mxu0 0.0
      %8671 = vmatprep.subr.mxu0 0.0
      %8672 = vmatpush1.msra.mxu0 0.0
      %8673 = vmatprep.subr.mxu0 0.0
      %8674 = vmatpush1.msra.mxu0 0.0
      %8675 = vmatprep.subr.mxu0 0.0
      %8676 = vmatpush1.msra.mxu0 0.0
      %8677 = vmatprep.subr.mxu0 0.0
      %8678 = vmatpush1.msra.mxu0 0.0
      %8679 = vmatprep.subr.mxu0 0.0
      %8680 = vmatpush1.msra.mxu0 0.0
      %8681 = vmatprep.subr.mxu0 0.0
      %8682 = vmatpush1.msra.mxu0 0.0
      %8683 = vmatprep.subr.mxu0 0.0
      %8684 = vmatpush1.msra.mxu0 0.0
      %8685 = vmatprep.subr.mxu0 0.0
      %8686 = vmatpush1.msra.mxu0 0.0
      %8687 = vmatprep.subr.mxu0 0.0
      %8688 = vmatpush1.msra.mxu0 0.0
      %8689 = vmatprep.subr.mxu0 0.0
      %8690 = vmatpush1.msra.mxu0 0.0
      %8691 = vmatprep.subr.mxu0 0.0
      %8692 = vmatpush1.msra.mxu0 0.0
      %8693 = vmatprep.subr.mxu0 0.0
      %8694 = vmatpush1.msra.mxu0 0.0
      %8695 = vmatprep.subr.mxu0 0.0
      %8696 = vmatpush1.msra.mxu0 0.0
      %8697 = vmatprep.subr.mxu0 0.0
      %8698 = vmatpush1.msra.mxu0 0.0
      %8699 = vmatprep.subr.mxu0 0.0
      %8700 = vmatpush1.msra.mxu0 0.0
      %8701 = vmatprep.subr.mxu0 0.0
      %8702 = vmatpush1.msra.mxu0 0.0
      %8703 = vmatprep.subr.mxu0 0.0
      %8704 = vmatpush1.msra.mxu0 0.0
      %8705 = vmatprep.subr.mxu0 0.0
      %8706 = vmatpush1.msra.mxu0 0.0
      %8707 = vmatprep.subr.mxu0 0.0
      %8708 = vmatpush1.msra.mxu0 0.0
      %8709 = vmatprep.subr.mxu0 0.0
      %8710 = vmatpush1.msra.mxu0 0.0
      %8711 = vmatprep.subr.mxu0 0.0
      %8712 = vmatpush1.msra.mxu0 0.0
      %8713 = vmatprep.subr.mxu0 0.0
      %8714 = vmatpush1.msra.mxu0 0.0
      %8715 = vmatprep.subr.mxu0 0.0
      %8716 = vmatpush1.msra.mxu0 0.0
      %8717 = vmatprep.subr.mxu0 0.0
      %8718 = vmatpush1.msra.mxu0 0.0
      %8719 = vmatprep.mubr.f32.mxu0 0.0
      %8720 = vmatmul.mubr.f32.gmra.mrb[0].mxu0 %v8440
      %v8721 = vpop.f32.mrb[0].mxu0
      %v8722 = vadd.f32 0.0, %v8721
      %v8723 = vpop.f32.mrb[0].mxu0
      %v8724 = vadd.f32 0.0, %v8723
      %8725 = vdwg.mxu0
      %v8726 = vadd.f32 %v8397, %v8509
      %v8727 = vadd.f32 %v8398, %v8511
      %v8728 = vadd.f32 %v8399, %v8580
      %v8729 = vadd.f32 %v8400, %v8582
      %v8730 = vadd.f32 %v8401, %v8651
      %v8731 = vadd.f32 %v8402, %v8653
      %v8732 = vadd.f32 %v8403, %v8722
      %v8733 = vadd.f32 %v8404, %v8724
      %s8734 = scalar_lea.vmem %s7, 16
      %v8735 = vld [vmem:[%s8734] sm:$0xf]
      %v8737 = vsel %vm4551, %v8735, 0
      %8739 = vmatprep.subr.mxu0 %v7428
      %8740 = vmatpush1.msra.mxu0 %v7427
      %8741 = vmatprep.subr.mxu0 0.0
      %8742 = vmatpush1.msra.mxu0 0.0
      %8743 = vmatprep.subr.mxu0 0.0
      %8744 = vmatpush1.msra.mxu0 0.0
      %8745 = vmatprep.subr.mxu0 0.0
      %8746 = vmatpush1.msra.mxu0 0.0
      %8747 = vmatprep.subr.mxu0 0.0
      %8748 = vmatpush1.msra.mxu0 0.0
      %8749 = vmatprep.subr.mxu0 0.0
      %8750 = vmatpush1.msra.mxu0 0.0
      %8751 = vmatprep.subr.mxu0 0.0
      %8752 = vmatpush1.msra.mxu0 0.0
      %8753 = vmatprep.subr.mxu0 0.0
      %8754 = vmatpush1.msra.mxu0 0.0
      %8755 = vmatprep.subr.mxu0 0.0
      %8756 = vmatpush1.msra.mxu0 0.0
      %8757 = vmatprep.subr.mxu0 0.0
      %8758 = vmatpush1.msra.mxu0 0.0
      %8759 = vmatprep.subr.mxu0 0.0
      %8760 = vmatpush1.msra.mxu0 0.0
      %8761 = vmatprep.subr.mxu0 0.0
      %8762 = vmatpush1.msra.mxu0 0.0
      %8763 = vmatprep.subr.mxu0 0.0
      %8764 = vmatpush1.msra.mxu0 0.0
      %8765 = vmatprep.subr.mxu0 0.0
      %8766 = vmatpush1.msra.mxu0 0.0
      %8767 = vmatprep.subr.mxu0 0.0
      %8768 = vmatpush1.msra.mxu0 0.0
      %8769 = vmatprep.subr.mxu0 0.0
      %8770 = vmatpush1.msra.mxu0 0.0
      %8771 = vmatprep.subr.mxu0 0.0
      %8772 = vmatpush1.msra.mxu0 0.0
      %8773 = vmatprep.subr.mxu0 0.0
      %8774 = vmatpush1.msra.mxu0 0.0
      %8775 = vmatprep.subr.mxu0 0.0
      %8776 = vmatpush1.msra.mxu0 0.0
      %8777 = vmatprep.subr.mxu0 0.0
      %8778 = vmatpush1.msra.mxu0 0.0
      %8779 = vmatprep.subr.mxu0 0.0
      %8780 = vmatpush1.msra.mxu0 0.0
      %8781 = vmatprep.subr.mxu0 0.0
      %8782 = vmatpush1.msra.mxu0 0.0
      %8783 = vmatprep.subr.mxu0 0.0
      %8784 = vmatpush1.msra.mxu0 0.0
      %8785 = vmatprep.subr.mxu0 0.0
      %8786 = vmatpush1.msra.mxu0 0.0
      %8787 = vmatprep.subr.mxu0 0.0
      %8788 = vmatpush1.msra.mxu0 0.0
      %8789 = vmatprep.subr.mxu0 0.0
      %8790 = vmatpush1.msra.mxu0 0.0
      %8791 = vmatprep.subr.mxu0 0.0
      %8792 = vmatpush1.msra.mxu0 0.0
      %8793 = vmatprep.subr.mxu0 0.0
      %8794 = vmatpush1.msra.mxu0 0.0
      %8795 = vmatprep.subr.mxu0 0.0
      %8796 = vmatpush1.msra.mxu0 0.0
      %8797 = vmatprep.subr.mxu0 0.0
      %8798 = vmatpush1.msra.mxu0 0.0
      %8799 = vmatprep.subr.mxu0 0.0
      %8800 = vmatpush1.msra.mxu0 0.0
      %8801 = vmatprep.subr.mxu0 0.0
      %8802 = vmatpush1.msra.mxu0 0.0
      %8803 = vmatprep.mubr.f32.mxu0 0.0
      %8804 = vmatmul.mubr.f32.gmra.mrb[0].mxu0 %v8737
      %v8805 = vpop.f32.mrb[0].mxu0
      %v8806 = vadd.f32 0.0, %v8805
      %v8807 = vpop.f32.mrb[0].mxu0
      %v8808 = vadd.f32 0.0, %v8807
      %8809 = vdwg.mxu0
      %8810 = vmatprep.subr.mxu0 %v7430
      %8811 = vmatpush1.msra.mxu0 %v7429
      %8812 = vmatprep.subr.mxu0 0.0
      %8813 = vmatpush1.msra.mxu0 0.0
      %8814 = vmatprep.subr.mxu0 0.0
      %8815 = vmatpush1.msra.mxu0 0.0
      %8816 = vmatprep.subr.mxu0 0.0
      %8817 = vmatpush1.msra.mxu0 0.0
      %8818 = vmatprep.subr.mxu0 0.0
      %8819 = vmatpush1.msra.mxu0 0.0
      %8820 = vmatprep.subr.mxu0 0.0
      %8821 = vmatpush1.msra.mxu0 0.0
      %8822 = vmatprep.subr.mxu0 0.0
      %8823 = vmatpush1.msra.mxu0 0.0
      %8824 = vmatprep.subr.mxu0 0.0
      %8825 = vmatpush1.msra.mxu0 0.0
      %8826 = vmatprep.subr.mxu0 0.0
      %8827 = vmatpush1.msra.mxu0 0.0
      %8828 = vmatprep.subr.mxu0 0.0
      %8829 = vmatpush1.msra.mxu0 0.0
      %8830 = vmatprep.subr.mxu0 0.0
      %8831 = vmatpush1.msra.mxu0 0.0
      %8832 = vmatprep.subr.mxu0 0.0
      %8833 = vmatpush1.msra.mxu0 0.0
      %8834 = vmatprep.subr.mxu0 0.0
      %8835 = vmatpush1.msra.mxu0 0.0
      %8836 = vmatprep.subr.mxu0 0.0
      %8837 = vmatpush1.msra.mxu0 0.0
      %8838 = vmatprep.subr.mxu0 0.0
      %8839 = vmatpush1.msra.mxu0 0.0
      %8840 = vmatprep.subr.mxu0 0.0
      %8841 = vmatpush1.msra.mxu0 0.0
      %8842 = vmatprep.subr.mxu0 0.0
      %8843 = vmatpush1.msra.mxu0 0.0
      %8844 = vmatprep.subr.mxu0 0.0
      %8845 = vmatpush1.msra.mxu0 0.0
      %8846 = vmatprep.subr.mxu0 0.0
      %8847 = vmatpush1.msra.mxu0 0.0
      %8848 = vmatprep.subr.mxu0 0.0
      %8849 = vmatpush1.msra.mxu0 0.0
      %8850 = vmatprep.subr.mxu0 0.0
      %8851 = vmatpush1.msra.mxu0 0.0
      %8852 = vmatprep.subr.mxu0 0.0
      %8853 = vmatpush1.msra.mxu0 0.0
      %8854 = vmatprep.subr.mxu0 0.0
      %8855 = vmatpush1.msra.mxu0 0.0
      %8856 = vmatprep.subr.mxu0 0.0
      %8857 = vmatpush1.msra.mxu0 0.0
      %8858 = vmatprep.subr.mxu0 0.0
      %8859 = vmatpush1.msra.mxu0 0.0
      %8860 = vmatprep.subr.mxu0 0.0
      %8861 = vmatpush1.msra.mxu0 0.0
      %8862 = vmatprep.subr.mxu0 0.0
      %8863 = vmatpush1.msra.mxu0 0.0
      %8864 = vmatprep.subr.mxu0 0.0
      %8865 = vmatpush1.msra.mxu0 0.0
      %8866 = vmatprep.subr.mxu0 0.0
      %8867 = vmatpush1.msra.mxu0 0.0
      %8868 = vmatprep.subr.mxu0 0.0
      %8869 = vmatpush1.msra.mxu0 0.0
      %8870 = vmatprep.subr.mxu0 0.0
      %8871 = vmatpush1.msra.mxu0 0.0
      %8872 = vmatprep.subr.mxu0 0.0
      %8873 = vmatpush1.msra.mxu0 0.0
      %8874 = vmatprep.mubr.f32.mxu0 0.0
      %8875 = vmatmul.mubr.f32.gmra.mrb[0].mxu0 %v8737
      %v8876 = vpop.f32.mrb[0].mxu0
      %v8877 = vadd.f32 0.0, %v8876
      %v8878 = vpop.f32.mrb[0].mxu0
      %v8879 = vadd.f32 0.0, %v8878
      %8880 = vdwg.mxu0
      %8881 = vmatprep.subr.mxu0 %v7432
      %8882 = vmatpush1.msra.mxu0 %v7431
      %8883 = vmatprep.subr.mxu0 0.0
      %8884 = vmatpush1.msra.mxu0 0.0
      %8885 = vmatprep.subr.mxu0 0.0
      %8886 = vmatpush1.msra.mxu0 0.0
      %8887 = vmatprep.subr.mxu0 0.0
      %8888 = vmatpush1.msra.mxu0 0.0
      %8889 = vmatprep.subr.mxu0 0.0
      %8890 = vmatpush1.msra.mxu0 0.0
      %8891 = vmatprep.subr.mxu0 0.0
      %8892 = vmatpush1.msra.mxu0 0.0
      %8893 = vmatprep.subr.mxu0 0.0
      %8894 = vmatpush1.msra.mxu0 0.0
      %8895 = vmatprep.subr.mxu0 0.0
      %8896 = vmatpush1.msra.mxu0 0.0
      %8897 = vmatprep.subr.mxu0 0.0
      %8898 = vmatpush1.msra.mxu0 0.0
      %8899 = vmatprep.subr.mxu0 0.0
      %8900 = vmatpush1.msra.mxu0 0.0
      %8901 = vmatprep.subr.mxu0 0.0
      %8902 = vmatpush1.msra.mxu0 0.0
      %8903 = vmatprep.subr.mxu0 0.0
      %8904 = vmatpush1.msra.mxu0 0.0
      %8905 = vmatprep.subr.mxu0 0.0
      %8906 = vmatpush1.msra.mxu0 0.0
      %8907 = vmatprep.subr.mxu0 0.0
      %8908 = vmatpush1.msra.mxu0 0.0
      %8909 = vmatprep.subr.mxu0 0.0
      %8910 = vmatpush1.msra.mxu0 0.0
      %8911 = vmatprep.subr.mxu0 0.0
      %8912 = vmatpush1.msra.mxu0 0.0
      %8913 = vmatprep.subr.mxu0 0.0
      %8914 = vmatpush1.msra.mxu0 0.0
      %8915 = vmatprep.subr.mxu0 0.0
      %8916 = vmatpush1.msra.mxu0 0.0
      %8917 = vmatprep.subr.mxu0 0.0
      %8918 = vmatpush1.msra.mxu0 0.0
      %8919 = vmatprep.subr.mxu0 0.0
      %8920 = vmatpush1.msra.mxu0 0.0
      %8921 = vmatprep.subr.mxu0 0.0
      %8922 = vmatpush1.msra.mxu0 0.0
      %8923 = vmatprep.subr.mxu0 0.0
      %8924 = vmatpush1.msra.mxu0 0.0
      %8925 = vmatprep.subr.mxu0 0.0
      %8926 = vmatpush1.msra.mxu0 0.0
      %8927 = vmatprep.subr.mxu0 0.0
      %8928 = vmatpush1.msra.mxu0 0.0
      %8929 = vmatprep.subr.mxu0 0.0
      %8930 = vmatpush1.msra.mxu0 0.0
      %8931 = vmatprep.subr.mxu0 0.0
      %8932 = vmatpush1.msra.mxu0 0.0
      %8933 = vmatprep.subr.mxu0 0.0
      %8934 = vmatpush1.msra.mxu0 0.0
      %8935 = vmatprep.subr.mxu0 0.0
      %8936 = vmatpush1.msra.mxu0 0.0
      %8937 = vmatprep.subr.mxu0 0.0
      %8938 = vmatpush1.msra.mxu0 0.0
      %8939 = vmatprep.subr.mxu0 0.0
      %8940 = vmatpush1.msra.mxu0 0.0
      %8941 = vmatprep.subr.mxu0 0.0
      %8942 = vmatpush1.msra.mxu0 0.0
      %8943 = vmatprep.subr.mxu0 0.0
      %8944 = vmatpush1.msra.mxu0 0.0
      %8945 = vmatprep.mubr.f32.mxu0 0.0
      %8946 = vmatmul.mubr.f32.gmra.mrb[0].mxu0 %v8737
      %v8947 = vpop.f32.mrb[0].mxu0
      %v8948 = vadd.f32 0.0, %v8947
      %v8949 = vpop.f32.mrb[0].mxu0
      %v8950 = vadd.f32 0.0, %v8949
      %8951 = vdwg.mxu0
      %8952 = vmatprep.subr.mxu0 %v7434
      %8953 = vmatpush1.msra.mxu0 %v7433
      %8954 = vmatprep.subr.mxu0 0.0
      %8955 = vmatpush1.msra.mxu0 0.0
      %8956 = vmatprep.subr.mxu0 0.0
      %8957 = vmatpush1.msra.mxu0 0.0
      %8958 = vmatprep.subr.mxu0 0.0
      %8959 = vmatpush1.msra.mxu0 0.0
      %8960 = vmatprep.subr.mxu0 0.0
      %8961 = vmatpush1.msra.mxu0 0.0
      %8962 = vmatprep.subr.mxu0 0.0
      %8963 = vmatpush1.msra.mxu0 0.0
      %8964 = vmatprep.subr.mxu0 0.0
      %8965 = vmatpush1.msra.mxu0 0.0
      %8966 = vmatprep.subr.mxu0 0.0
      %8967 = vmatpush1.msra.mxu0 0.0
      %8968 = vmatprep.subr.mxu0 0.0
      %8969 = vmatpush1.msra.mxu0 0.0
      %8970 = vmatprep.subr.mxu0 0.0
      %8971 = vmatpush1.msra.mxu0 0.0
      %8972 = vmatprep.subr.mxu0 0.0
      %8973 = vmatpush1.msra.mxu0 0.0
      %8974 = vmatprep.subr.mxu0 0.0
      %8975 = vmatpush1.msra.mxu0 0.0
      %8976 = vmatprep.subr.mxu0 0.0
      %8977 = vmatpush1.msra.mxu0 0.0
      %8978 = vmatprep.subr.mxu0 0.0
      %8979 = vmatpush1.msra.mxu0 0.0
      %8980 = vmatprep.subr.mxu0 0.0
      %8981 = vmatpush1.msra.mxu0 0.0
      %8982 = vmatprep.subr.mxu0 0.0
      %8983 = vmatpush1.msra.mxu0 0.0
      %8984 = vmatprep.subr.mxu0 0.0
      %8985 = vmatpush1.msra.mxu0 0.0
      %8986 = vmatprep.subr.mxu0 0.0
      %8987 = vmatpush1.msra.mxu0 0.0
      %8988 = vmatprep.subr.mxu0 0.0
      %8989 = vmatpush1.msra.mxu0 0.0
      %8990 = vmatprep.subr.mxu0 0.0
      %8991 = vmatpush1.msra.mxu0 0.0
      %8992 = vmatprep.subr.mxu0 0.0
      %8993 = vmatpush1.msra.mxu0 0.0
      %8994 = vmatprep.subr.mxu0 0.0
      %8995 = vmatpush1.msra.mxu0 0.0
      %8996 = vmatprep.subr.mxu0 0.0
      %8997 = vmatpush1.msra.mxu0 0.0
      %8998 = vmatprep.subr.mxu0 0.0
      %8999 = vmatpush1.msra.mxu0 0.0
      %9000 = vmatprep.subr.mxu0 0.0
      %9001 = vmatpush1.msra.mxu0 0.0
      %9002 = vmatprep.subr.mxu0 0.0
      %9003 = vmatpush1.msra.mxu0 0.0
      %9004 = vmatprep.subr.mxu0 0.0
      %9005 = vmatpush1.msra.mxu0 0.0
      %9006 = vmatprep.subr.mxu0 0.0
      %9007 = vmatpush1.msra.mxu0 0.0
      %9008 = vmatprep.subr.mxu0 0.0
      %9009 = vmatpush1.msra.mxu0 0.0
      %9010 = vmatprep.subr.mxu0 0.0
      %9011 = vmatpush1.msra.mxu0 0.0
      %9012 = vmatprep.subr.mxu0 0.0
      %9013 = vmatpush1.msra.mxu0 0.0
      %9014 = vmatprep.subr.mxu0 0.0
      %9015 = vmatpush1.msra.mxu0 0.0
      %9016 = vmatprep.mubr.f32.mxu0 0.0
      %9017 = vmatmul.mubr.f32.gmra.mrb[0].mxu0 %v8737
      %v9018 = vpop.f32.mrb[0].mxu0
      %v9019 = vadd.f32 0.0, %v9018
      %v9020 = vpop.f32.mrb[0].mxu0
      %v9021 = vadd.f32 0.0, %v9020
      %9022 = vdwg.mxu0
      %v9023 = vadd.f32 %v8726, %v8806
      %v9024 = vadd.f32 %v8727, %v8808
      %v9025 = vadd.f32 %v8728, %v8877
      %v9026 = vadd.f32 %v8729, %v8879
      %v9027 = vadd.f32 %v8730, %v8948
      %v9028 = vadd.f32 %v8731, %v8950
      %v9029 = vadd.f32 %v8732, %v9019
      %v9030 = vadd.f32 %v8733, %v9021
      %9031 = vrot.lane.b32.xlu0 %v7427, 127
      %v9032 = vpop.permute.xlu0 %9031
      %9033 = vrot.lane.b32.xlu0 %v7428, 127
      %v9034 = vpop.permute.xlu0 %9033
      %9035 = vrot.lane.b32.xlu0 %v7429, 127
      %v9036 = vpop.permute.xlu0 %9035
      %9037 = vrot.lane.b32.xlu0 %v7430, 127
      %v9038 = vpop.permute.xlu0 %9037
      %9039 = vrot.lane.b32.xlu0 %v7431, 127
      %v9040 = vpop.permute.xlu0 %9039
      %9041 = vrot.lane.b32.xlu0 %v7432, 127
      %v9042 = vpop.permute.xlu0 %9041
      %9043 = vrot.lane.b32.xlu0 %v7433, 127
      %v9044 = vpop.permute.xlu0 %9043
      %9045 = vrot.lane.b32.xlu0 %v7434, 127
      %v9046 = vpop.permute.xlu0 %9045
      %v9047 = vsel %vm2754, %v9044, %v9046
      %v9048 = vsel %vm2754, %v9042, %v9044
      %v9049 = vsel %vm2754, %v9040, %v9042
      %v9050 = vsel %vm2754, %v9038, %v9040
      %v9051 = vsel %vm2754, %v9036, %v9038
      %v9052 = vsel %vm2754, %v9034, %v9036
      %v9053 = vsel %vm2754, %v9032, %v9034
      %v9054 = vsel %vm2754, %v9046, %v9032
      %v9055 = vmul.f32 %v9053, %v2779
      %v9056 = vmul.f32 %v9052, %v2783
      %v9057 = vmul.f32 %v9051, %v2787
      %v9058 = vmul.f32 %v9050, %v2791
      %v9059 = vmul.f32 %v9049, %v2795
      %v9060 = vmul.f32 %v9048, %v2799
      %v9061 = vmul.f32 %v9047, %v2803
      %v9062 = vmul.f32 %v9054, %v2807
      %s9063 = scalar_lea.vmem %s7, 20
      %v9064 = vld [vmem:[%s9063] sm:$0xf]
      %v9066 = vsel %vm4551, %v9064, 0
      %9068 = vmatprep.subr.mxu0 %v9056
      %9069 = vmatpush1.msra.mxu0 %v9055
      %9070 = vmatprep.subr.mxu0 0.0
      %9071 = vmatpush1.msra.mxu0 0.0
      %9072 = vmatprep.subr.mxu0 0.0
      %9073 = vmatpush1.msra.mxu0 0.0
      %9074 = vmatprep.subr.mxu0 0.0
      %9075 = vmatpush1.msra.mxu0 0.0
      %9076 = vmatprep.subr.mxu0 0.0
      %9077 = vmatpush1.msra.mxu0 0.0
      %9078 = vmatprep.subr.mxu0 0.0
      %9079 = vmatpush1.msra.mxu0 0.0
      %9080 = vmatprep.subr.mxu0 0.0
      %9081 = vmatpush1.msra.mxu0 0.0
      %9082 = vmatprep.subr.mxu0 0.0
      %9083 = vmatpush1.msra.mxu0 0.0
      %9084 = vmatprep.subr.mxu0 0.0
      %9085 = vmatpush1.msra.mxu0 0.0
      %9086 = vmatprep.subr.mxu0 0.0
      %9087 = vmatpush1.msra.mxu0 0.0
      %9088 = vmatprep.subr.mxu0 0.0
      %9089 = vmatpush1.msra.mxu0 0.0
      %9090 = vmatprep.subr.mxu0 0.0
      %9091 = vmatpush1.msra.mxu0 0.0
      %9092 = vmatprep.subr.mxu0 0.0
      %9093 = vmatpush1.msra.mxu0 0.0
      %9094 = vmatprep.subr.mxu0 0.0
      %9095 = vmatpush1.msra.mxu0 0.0
      %9096 = vmatprep.subr.mxu0 0.0
      %9097 = vmatpush1.msra.mxu0 0.0
      %9098 = vmatprep.subr.mxu0 0.0
      %9099 = vmatpush1.msra.mxu0 0.0
      %9100 = vmatprep.subr.mxu0 0.0
      %9101 = vmatpush1.msra.mxu0 0.0
      %9102 = vmatprep.subr.mxu0 0.0
      %9103 = vmatpush1.msra.mxu0 0.0
      %9104 = vmatprep.subr.mxu0 0.0
      %9105 = vmatpush1.msra.mxu0 0.0
      %9106 = vmatprep.subr.mxu0 0.0
      %9107 = vmatpush1.msra.mxu0 0.0
      %9108 = vmatprep.subr.mxu0 0.0
      %9109 = vmatpush1.msra.mxu0 0.0
      %9110 = vmatprep.subr.mxu0 0.0
      %9111 = vmatpush1.msra.mxu0 0.0
      %9112 = vmatprep.subr.mxu0 0.0
      %9113 = vmatpush1.msra.mxu0 0.0
      %9114 = vmatprep.subr.mxu0 0.0
      %9115 = vmatpush1.msra.mxu0 0.0
      %9116 = vmatprep.subr.mxu0 0.0
      %9117 = vmatpush1.msra.mxu0 0.0
      %9118 = vmatprep.subr.mxu0 0.0
      %9119 = vmatpush1.msra.mxu0 0.0
      %9120 = vmatprep.subr.mxu0 0.0
      %9121 = vmatpush1.msra.mxu0 0.0
      %9122 = vmatprep.subr.mxu0 0.0
      %9123 = vmatpush1.msra.mxu0 0.0
      %9124 = vmatprep.subr.mxu0 0.0
      %9125 = vmatpush1.msra.mxu0 0.0
      %9126 = vmatprep.subr.mxu0 0.0
      %9127 = vmatpush1.msra.mxu0 0.0
      %9128 = vmatprep.subr.mxu0 0.0
      %9129 = vmatpush1.msra.mxu0 0.0
      %9130 = vmatprep.subr.mxu0 0.0
      %9131 = vmatpush1.msra.mxu0 0.0
      %9132 = vmatprep.mubr.f32.mxu0 0.0
      %9133 = vmatmul.mubr.f32.gmra.mrb[0].mxu0 %v9066
      %v9134 = vpop.f32.mrb[0].mxu0
      %v9135 = vadd.f32 0.0, %v9134
      %v9136 = vpop.f32.mrb[0].mxu0
      %v9137 = vadd.f32 0.0, %v9136
      %9138 = vdwg.mxu0
      %9139 = vmatprep.subr.mxu0 %v9058
      %9140 = vmatpush1.msra.mxu0 %v9057
      %9141 = vmatprep.subr.mxu0 0.0
      %9142 = vmatpush1.msra.mxu0 0.0
      %9143 = vmatprep.subr.mxu0 0.0
      %9144 = vmatpush1.msra.mxu0 0.0
      %9145 = vmatprep.subr.mxu0 0.0
      %9146 = vmatpush1.msra.mxu0 0.0
      %9147 = vmatprep.subr.mxu0 0.0
      %9148 = vmatpush1.msra.mxu0 0.0
      %9149 = vmatprep.subr.mxu0 0.0
      %9150 = vmatpush1.msra.mxu0 0.0
      %9151 = vmatprep.subr.mxu0 0.0
      %9152 = vmatpush1.msra.mxu0 0.0
      %9153 = vmatprep.subr.mxu0 0.0
      %9154 = vmatpush1.msra.mxu0 0.0
      %9155 = vmatprep.subr.mxu0 0.0
      %9156 = vmatpush1.msra.mxu0 0.0
      %9157 = vmatprep.subr.mxu0 0.0
      %9158 = vmatpush1.msra.mxu0 0.0
      %9159 = vmatprep.subr.mxu0 0.0
      %9160 = vmatpush1.msra.mxu0 0.0
      %9161 = vmatprep.subr.mxu0 0.0
      %9162 = vmatpush1.msra.mxu0 0.0
      %9163 = vmatprep.subr.mxu0 0.0
      %9164 = vmatpush1.msra.mxu0 0.0
      %9165 = vmatprep.subr.mxu0 0.0
      %9166 = vmatpush1.msra.mxu0 0.0
      %9167 = vmatprep.subr.mxu0 0.0
      %9168 = vmatpush1.msra.mxu0 0.0
      %9169 = vmatprep.subr.mxu0 0.0
      %9170 = vmatpush1.msra.mxu0 0.0
      %9171 = vmatprep.subr.mxu0 0.0
      %9172 = vmatpush1.msra.mxu0 0.0
      %9173 = vmatprep.subr.mxu0 0.0
      %9174 = vmatpush1.msra.mxu0 0.0
      %9175 = vmatprep.subr.mxu0 0.0
      %9176 = vmatpush1.msra.mxu0 0.0
      %9177 = vmatprep.subr.mxu0 0.0
      %9178 = vmatpush1.msra.mxu0 0.0
      %9179 = vmatprep.subr.mxu0 0.0
      %9180 = vmatpush1.msra.mxu0 0.0
      %9181 = vmatprep.subr.mxu0 0.0
      %9182 = vmatpush1.msra.mxu0 0.0
      %9183 = vmatprep.subr.mxu0 0.0
      %9184 = vmatpush1.msra.mxu0 0.0
      %9185 = vmatprep.subr.mxu0 0.0
      %9186 = vmatpush1.msra.mxu0 0.0
      %9187 = vmatprep.subr.mxu0 0.0
      %9188 = vmatpush1.msra.mxu0 0.0
      %9189 = vmatprep.subr.mxu0 0.0
      %9190 = vmatpush1.msra.mxu0 0.0
      %9191 = vmatprep.subr.mxu0 0.0
      %9192 = vmatpush1.msra.mxu0 0.0
      %9193 = vmatprep.subr.mxu0 0.0
      %9194 = vmatpush1.msra.mxu0 0.0
      %9195 = vmatprep.subr.mxu0 0.0
      %9196 = vmatpush1.msra.mxu0 0.0
      %9197 = vmatprep.subr.mxu0 0.0
      %9198 = vmatpush1.msra.mxu0 0.0
      %9199 = vmatprep.subr.mxu0 0.0
      %9200 = vmatpush1.msra.mxu0 0.0
      %9201 = vmatprep.subr.mxu0 0.0
      %9202 = vmatpush1.msra.mxu0 0.0
      %9203 = vmatprep.mubr.f32.mxu0 0.0
      %9204 = vmatmul.mubr.f32.gmra.mrb[0].mxu0 %v9066
      %v9205 = vpop.f32.mrb[0].mxu0
      %v9206 = vadd.f32 0.0, %v9205
      %v9207 = vpop.f32.mrb[0].mxu0
      %v9208 = vadd.f32 0.0, %v9207
      %9209 = vdwg.mxu0
      %9210 = vmatprep.subr.mxu0 %v9060
      %9211 = vmatpush1.msra.mxu0 %v9059
      %9212 = vmatprep.subr.mxu0 0.0
      %9213 = vmatpush1.msra.mxu0 0.0
      %9214 = vmatprep.subr.mxu0 0.0
      %9215 = vmatpush1.msra.mxu0 0.0
      %9216 = vmatprep.subr.mxu0 0.0
      %9217 = vmatpush1.msra.mxu0 0.0
      %9218 = vmatprep.subr.mxu0 0.0
      %9219 = vmatpush1.msra.mxu0 0.0
      %9220 = vmatprep.subr.mxu0 0.0
      %9221 = vmatpush1.msra.mxu0 0.0
      %9222 = vmatprep.subr.mxu0 0.0
      %9223 = vmatpush1.msra.mxu0 0.0
      %9224 = vmatprep.subr.mxu0 0.0
      %9225 = vmatpush1.msra.mxu0 0.0
      %9226 = vmatprep.subr.mxu0 0.0
      %9227 = vmatpush1.msra.mxu0 0.0
      %9228 = vmatprep.subr.mxu0 0.0
      %9229 = vmatpush1.msra.mxu0 0.0
      %9230 = vmatprep.subr.mxu0 0.0
      %9231 = vmatpush1.msra.mxu0 0.0
      %9232 = vmatprep.subr.mxu0 0.0
      %9233 = vmatpush1.msra.mxu0 0.0
      %9234 = vmatprep.subr.mxu0 0.0
      %9235 = vmatpush1.msra.mxu0 0.0
      %9236 = vmatprep.subr.mxu0 0.0
      %9237 = vmatpush1.msra.mxu0 0.0
      %9238 = vmatprep.subr.mxu0 0.0
      %9239 = vmatpush1.msra.mxu0 0.0
      %9240 = vmatprep.subr.mxu0 0.0
      %9241 = vmatpush1.msra.mxu0 0.0
      %9242 = vmatprep.subr.mxu0 0.0
      %9243 = vmatpush1.msra.mxu0 0.0
      %9244 = vmatprep.subr.mxu0 0.0
      %9245 = vmatpush1.msra.mxu0 0.0
      %9246 = vmatprep.subr.mxu0 0.0
      %9247 = vmatpush1.msra.mxu0 0.0
      %9248 = vmatprep.subr.mxu0 0.0
      %9249 = vmatpush1.msra.mxu0 0.0
      %9250 = vmatprep.subr.mxu0 0.0
      %9251 = vmatpush1.msra.mxu0 0.0
      %9252 = vmatprep.subr.mxu0 0.0
      %9253 = vmatpush1.msra.mxu0 0.0
      %9254 = vmatprep.subr.mxu0 0.0
      %9255 = vmatpush1.msra.mxu0 0.0
      %9256 = vmatprep.subr.mxu0 0.0
      %9257 = vmatpush1.msra.mxu0 0.0
      %9258 = vmatprep.subr.mxu0 0.0
      %9259 = vmatpush1.msra.mxu0 0.0
      %9260 = vmatprep.subr.mxu0 0.0
      %9261 = vmatpush1.msra.mxu0 0.0
      %9262 = vmatprep.subr.mxu0 0.0
      %9263 = vmatpush1.msra.mxu0 0.0
      %9264 = vmatprep.subr.mxu0 0.0
      %9265 = vmatpush1.msra.mxu0 0.0
      %9266 = vmatprep.subr.mxu0 0.0
      %9267 = vmatpush1.msra.mxu0 0.0
      %9268 = vmatprep.subr.mxu0 0.0
      %9269 = vmatpush1.msra.mxu0 0.0
      %9270 = vmatprep.subr.mxu0 0.0
      %9271 = vmatpush1.msra.mxu0 0.0
      %9272 = vmatprep.subr.mxu0 0.0
      %9273 = vmatpush1.msra.mxu0 0.0
      %9274 = vmatprep.mubr.f32.mxu0 0.0
      %9275 = vmatmul.mubr.f32.gmra.mrb[0].mxu0 %v9066
      %v9276 = vpop.f32.mrb[0].mxu0
      %v9277 = vadd.f32 0.0, %v9276
      %v9278 = vpop.f32.mrb[0].mxu0
      %v9279 = vadd.f32 0.0, %v9278
      %9280 = vdwg.mxu0
      %9281 = vmatprep.subr.mxu0 %v9062
      %9282 = vmatpush1.msra.mxu0 %v9061
      %9283 = vmatprep.subr.mxu0 0.0
      %9284 = vmatpush1.msra.mxu0 0.0
      %9285 = vmatprep.subr.mxu0 0.0
      %9286 = vmatpush1.msra.mxu0 0.0
      %9287 = vmatprep.subr.mxu0 0.0
      %9288 = vmatpush1.msra.mxu0 0.0
      %9289 = vmatprep.subr.mxu0 0.0
      %9290 = vmatpush1.msra.mxu0 0.0
      %9291 = vmatprep.subr.mxu0 0.0
      %9292 = vmatpush1.msra.mxu0 0.0
      %9293 = vmatprep.subr.mxu0 0.0
      %9294 = vmatpush1.msra.mxu0 0.0
      %9295 = vmatprep.subr.mxu0 0.0
      %9296 = vmatpush1.msra.mxu0 0.0
      %9297 = vmatprep.subr.mxu0 0.0
      %9298 = vmatpush1.msra.mxu0 0.0
      %9299 = vmatprep.subr.mxu0 0.0
      %9300 = vmatpush1.msra.mxu0 0.0
      %9301 = vmatprep.subr.mxu0 0.0
      %9302 = vmatpush1.msra.mxu0 0.0
      %9303 = vmatprep.subr.mxu0 0.0
      %9304 = vmatpush1.msra.mxu0 0.0
      %9305 = vmatprep.subr.mxu0 0.0
      %9306 = vmatpush1.msra.mxu0 0.0
      %9307 = vmatprep.subr.mxu0 0.0
      %9308 = vmatpush1.msra.mxu0 0.0
      %9309 = vmatprep.subr.mxu0 0.0
      %9310 = vmatpush1.msra.mxu0 0.0
      %9311 = vmatprep.subr.mxu0 0.0
      %9312 = vmatpush1.msra.mxu0 0.0
      %9313 = vmatprep.subr.mxu0 0.0
      %9314 = vmatpush1.msra.mxu0 0.0
      %9315 = vmatprep.subr.mxu0 0.0
      %9316 = vmatpush1.msra.mxu0 0.0
      %9317 = vmatprep.subr.mxu0 0.0
      %9318 = vmatpush1.msra.mxu0 0.0
      %9319 = vmatprep.subr.mxu0 0.0
      %9320 = vmatpush1.msra.mxu0 0.0
      %9321 = vmatprep.subr.mxu0 0.0
      %9322 = vmatpush1.msra.mxu0 0.0
      %9323 = vmatprep.subr.mxu0 0.0
      %9324 = vmatpush1.msra.mxu0 0.0
      %9325 = vmatprep.subr.mxu0 0.0
      %9326 = vmatpush1.msra.mxu0 0.0
      %9327 = vmatprep.subr.mxu0 0.0
      %9328 = vmatpush1.msra.mxu0 0.0
      %9329 = vmatprep.subr.mxu0 0.0
      %9330 = vmatpush1.msra.mxu0 0.0
      %9331 = vmatprep.subr.mxu0 0.0
      %9332 = vmatpush1.msra.mxu0 0.0
      %9333 = vmatprep.subr.mxu0 0.0
      %9334 = vmatpush1.msra.mxu0 0.0
      %9335 = vmatprep.subr.mxu0 0.0
      %9336 = vmatpush1.msra.mxu0 0.0
      %9337 = vmatprep.subr.mxu0 0.0
      %9338 = vmatpush1.msra.mxu0 0.0
      %9339 = vmatprep.subr.mxu0 0.0
      %9340 = vmatpush1.msra.mxu0 0.0
      %9341 = vmatprep.subr.mxu0 0.0
      %9342 = vmatpush1.msra.mxu0 0.0
      %9343 = vmatprep.subr.mxu0 0.0
      %9344 = vmatpush1.msra.mxu0 0.0
      %9345 = vmatprep.mubr.f32.mxu0 0.0
      %9346 = vmatmul.mubr.f32.gmra.mrb[0].mxu0 %v9066
      %v9347 = vpop.f32.mrb[0].mxu0
      %v9348 = vadd.f32 0.0, %v9347
      %v9349 = vpop.f32.mrb[0].mxu0
      %v9350 = vadd.f32 0.0, %v9349
      %9351 = vdwg.mxu0
      %v9352 = vadd.f32 %v9023, %v9135
      %v9353 = vadd.f32 %v9024, %v9137
      %v9354 = vadd.f32 %v9025, %v9206
      %v9355 = vadd.f32 %v9026, %v9208
      %v9356 = vadd.f32 %v9027, %v9277
      %v9357 = vadd.f32 %v9028, %v9279
      %v9358 = vadd.f32 %v9029, %v9348
      %v9359 = vadd.f32 %v9030, %v9350
      %9360 = vrot.lane.b32.xlu0 %v7427, 113
      %v9361 = vpop.permute.xlu0 %9360
      %9362 = vrot.lane.b32.xlu0 %v7428, 113
      %v9363 = vpop.permute.xlu0 %9362
      %9364 = vrot.lane.b32.xlu0 %v7429, 113
      %v9365 = vpop.permute.xlu0 %9364
      %9366 = vrot.lane.b32.xlu0 %v7430, 113
      %v9367 = vpop.permute.xlu0 %9366
      %9368 = vrot.lane.b32.xlu0 %v7431, 113
      %v9369 = vpop.permute.xlu0 %9368
      %9370 = vrot.lane.b32.xlu0 %v7432, 113
      %v9371 = vpop.permute.xlu0 %9370
      %9372 = vrot.lane.b32.xlu0 %v7433, 113
      %v9373 = vpop.permute.xlu0 %9372
      %9374 = vrot.lane.b32.xlu0 %v7434, 113
      %v9375 = vpop.permute.xlu0 %9374
      %v9376 = vsel %vm3185, %v9373, %v9375
      %v9377 = vsel %vm3185, %v9371, %v9373
      %v9378 = vsel %vm3185, %v9369, %v9371
      %v9379 = vsel %vm3185, %v9367, %v9369
      %v9380 = vsel %vm3185, %v9365, %v9367
      %v9381 = vsel %vm3185, %v9363, %v9365
      %v9382 = vsel %vm3185, %v9361, %v9363
      %v9383 = vsel %vm3185, %v9375, %v9361
      %v9384 = vmul.f32 %v9382, %v3210
      %v9385 = vmul.f32 %v9381, %v3214
      %v9386 = vmul.f32 %v9380, %v3218
      %v9387 = vmul.f32 %v9379, %v3222
      %v9388 = vmul.f32 %v9378, %v3226
      %v9389 = vmul.f32 %v9377, %v3230
      %v9390 = vmul.f32 %v9376, %v3234
      %v9391 = vmul.f32 %v9383, %v3238
      %s9392 = scalar_lea.vmem %s7, 24
      %v9393 = vld [vmem:[%s9392] sm:$0xf]
      %v9395 = vsel %vm4551, %v9393, 0
      %9397 = vmatprep.subr.mxu0 %v9385
      %9398 = vmatpush1.msra.mxu0 %v9384
      %9399 = vmatprep.subr.mxu0 0.0
      %9400 = vmatpush1.msra.mxu0 0.0
      %9401 = vmatprep.subr.mxu0 0.0
      %9402 = vmatpush1.msra.mxu0 0.0
      %9403 = vmatprep.subr.mxu0 0.0
      %9404 = vmatpush1.msra.mxu0 0.0
      %9405 = vmatprep.subr.mxu0 0.0
      %9406 = vmatpush1.msra.mxu0 0.0
      %9407 = vmatprep.subr.mxu0 0.0
      %9408 = vmatpush1.msra.mxu0 0.0
      %9409 = vmatprep.subr.mxu0 0.0
      %9410 = vmatpush1.msra.mxu0 0.0
      %9411 = vmatprep.subr.mxu0 0.0
      %9412 = vmatpush1.msra.mxu0 0.0
      %9413 = vmatprep.subr.mxu0 0.0
      %9414 = vmatpush1.msra.mxu0 0.0
      %9415 = vmatprep.subr.mxu0 0.0
      %9416 = vmatpush1.msra.mxu0 0.0
      %9417 = vmatprep.subr.mxu0 0.0
      %9418 = vmatpush1.msra.mxu0 0.0
      %9419 = vmatprep.subr.mxu0 0.0
      %9420 = vmatpush1.msra.mxu0 0.0
      %9421 = vmatprep.subr.mxu0 0.0
      %9422 = vmatpush1.msra.mxu0 0.0
      %9423 = vmatprep.subr.mxu0 0.0
      %9424 = vmatpush1.msra.mxu0 0.0
      %9425 = vmatprep.subr.mxu0 0.0
      %9426 = vmatpush1.msra.mxu0 0.0
      %9427 = vmatprep.subr.mxu0 0.0
      %9428 = vmatpush1.msra.mxu0 0.0
      %9429 = vmatprep.subr.mxu0 0.0
      %9430 = vmatpush1.msra.mxu0 0.0
      %9431 = vmatprep.subr.mxu0 0.0
      %9432 = vmatpush1.msra.mxu0 0.0
      %9433 = vmatprep.subr.mxu0 0.0
      %9434 = vmatpush1.msra.mxu0 0.0
      %9435 = vmatprep.subr.mxu0 0.0
      %9436 = vmatpush1.msra.mxu0 0.0
      %9437 = vmatprep.subr.mxu0 0.0
      %9438 = vmatpush1.msra.mxu0 0.0
      %9439 = vmatprep.subr.mxu0 0.0
      %9440 = vmatpush1.msra.mxu0 0.0
      %9441 = vmatprep.subr.mxu0 0.0
      %9442 = vmatpush1.msra.mxu0 0.0
      %9443 = vmatprep.subr.mxu0 0.0
      %9444 = vmatpush1.msra.mxu0 0.0
      %9445 = vmatprep.subr.mxu0 0.0
      %9446 = vmatpush1.msra.mxu0 0.0
      %9447 = vmatprep.subr.mxu0 0.0
      %9448 = vmatpush1.msra.mxu0 0.0
      %9449 = vmatprep.subr.mxu0 0.0
      %9450 = vmatpush1.msra.mxu0 0.0
      %9451 = vmatprep.subr.mxu0 0.0
      %9452 = vmatpush1.msra.mxu0 0.0
      %9453 = vmatprep.subr.mxu0 0.0
      %9454 = vmatpush1.msra.mxu0 0.0
      %9455 = vmatprep.subr.mxu0 0.0
      %9456 = vmatpush1.msra.mxu0 0.0
      %9457 = vmatprep.subr.mxu0 0.0
      %9458 = vmatpush1.msra.mxu0 0.0
      %9459 = vmatprep.subr.mxu0 0.0
      %9460 = vmatpush1.msra.mxu0 0.0
      %9461 = vmatprep.mubr.f32.mxu0 0.0
      %9462 = vmatmul.mubr.f32.gmra.mrb[0].mxu0 %v9395
      %v9463 = vpop.f32.mrb[0].mxu0
      %v9464 = vadd.f32 0.0, %v9463
      %v9465 = vpop.f32.mrb[0].mxu0
      %v9466 = vadd.f32 0.0, %v9465
      %9467 = vdwg.mxu0
      %9468 = vmatprep.subr.mxu0 %v9387
      %9469 = vmatpush1.msra.mxu0 %v9386
      %9470 = vmatprep.subr.mxu0 0.0
      %9471 = vmatpush1.msra.mxu0 0.0
      %9472 = vmatprep.subr.mxu0 0.0
      %9473 = vmatpush1.msra.mxu0 0.0
      %9474 = vmatprep.subr.mxu0 0.0
      %9475 = vmatpush1.msra.mxu0 0.0
      %9476 = vmatprep.subr.mxu0 0.0
      %9477 = vmatpush1.msra.mxu0 0.0
      %9478 = vmatprep.subr.mxu0 0.0
      %9479 = vmatpush1.msra.mxu0 0.0
      %9480 = vmatprep.subr.mxu0 0.0
      %9481 = vmatpush1.msra.mxu0 0.0
      %9482 = vmatprep.subr.mxu0 0.0
      %9483 = vmatpush1.msra.mxu0 0.0
      %9484 = vmatprep.subr.mxu0 0.0
      %9485 = vmatpush1.msra.mxu0 0.0
      %9486 = vmatprep.subr.mxu0 0.0
      %9487 = vmatpush1.msra.mxu0 0.0
      %9488 = vmatprep.subr.mxu0 0.0
      %9489 = vmatpush1.msra.mxu0 0.0
      %9490 = vmatprep.subr.mxu0 0.0
      %9491 = vmatpush1.msra.mxu0 0.0
      %9492 = vmatprep.subr.mxu0 0.0
      %9493 = vmatpush1.msra.mxu0 0.0
      %9494 = vmatprep.subr.mxu0 0.0
      %9495 = vmatpush1.msra.mxu0 0.0
      %9496 = vmatprep.subr.mxu0 0.0
      %9497 = vmatpush1.msra.mxu0 0.0
      %9498 = vmatprep.subr.mxu0 0.0
      %9499 = vmatpush1.msra.mxu0 0.0
      %9500 = vmatprep.subr.mxu0 0.0
      %9501 = vmatpush1.msra.mxu0 0.0
      %9502 = vmatprep.subr.mxu0 0.0
      %9503 = vmatpush1.msra.mxu0 0.0
      %9504 = vmatprep.subr.mxu0 0.0
      %9505 = vmatpush1.msra.mxu0 0.0
      %9506 = vmatprep.subr.mxu0 0.0
      %9507 = vmatpush1.msra.mxu0 0.0
      %9508 = vmatprep.subr.mxu0 0.0
      %9509 = vmatpush1.msra.mxu0 0.0
      %9510 = vmatprep.subr.mxu0 0.0
      %9511 = vmatpush1.msra.mxu0 0.0
      %9512 = vmatprep.subr.mxu0 0.0
      %9513 = vmatpush1.msra.mxu0 0.0
      %9514 = vmatprep.subr.mxu0 0.0
      %9515 = vmatpush1.msra.mxu0 0.0
      %9516 = vmatprep.subr.mxu0 0.0
      %9517 = vmatpush1.msra.mxu0 0.0
      %9518 = vmatprep.subr.mxu0 0.0
      %9519 = vmatpush1.msra.mxu0 0.0
      %9520 = vmatprep.subr.mxu0 0.0
      %9521 = vmatpush1.msra.mxu0 0.0
      %9522 = vmatprep.subr.mxu0 0.0
      %9523 = vmatpush1.msra.mxu0 0.0
      %9524 = vmatprep.subr.mxu0 0.0
      %9525 = vmatpush1.msra.mxu0 0.0
      %9526 = vmatprep.subr.mxu0 0.0
      %9527 = vmatpush1.msra.mxu0 0.0
      %9528 = vmatprep.subr.mxu0 0.0
      %9529 = vmatpush1.msra.mxu0 0.0
      %9530 = vmatprep.subr.mxu0 0.0
      %9531 = vmatpush1.msra.mxu0 0.0
      %9532 = vmatprep.mubr.f32.mxu0 0.0
      %9533 = vmatmul.mubr.f32.gmra.mrb[0].mxu0 %v9395
      %v9534 = vpop.f32.mrb[0].mxu0
      %v9535 = vadd.f32 0.0, %v9534
      %v9536 = vpop.f32.mrb[0].mxu0
      %v9537 = vadd.f32 0.0, %v9536
      %9538 = vdwg.mxu0
      %9539 = vmatprep.subr.mxu0 %v9389
      %9540 = vmatpush1.msra.mxu0 %v9388
      %9541 = vmatprep.subr.mxu0 0.0
      %9542 = vmatpush1.msra.mxu0 0.0
      %9543 = vmatprep.subr.mxu0 0.0
      %9544 = vmatpush1.msra.mxu0 0.0
      %9545 = vmatprep.subr.mxu0 0.0
      %9546 = vmatpush1.msra.mxu0 0.0
      %9547 = vmatprep.subr.mxu0 0.0
      %9548 = vmatpush1.msra.mxu0 0.0
      %9549 = vmatprep.subr.mxu0 0.0
      %9550 = vmatpush1.msra.mxu0 0.0
      %9551 = vmatprep.subr.mxu0 0.0
      %9552 = vmatpush1.msra.mxu0 0.0
      %9553 = vmatprep.subr.mxu0 0.0
      %9554 = vmatpush1.msra.mxu0 0.0
      %9555 = vmatprep.subr.mxu0 0.0
      %9556 = vmatpush1.msra.mxu0 0.0
      %9557 = vmatprep.subr.mxu0 0.0
      %9558 = vmatpush1.msra.mxu0 0.0
      %9559 = vmatprep.subr.mxu0 0.0
      %9560 = vmatpush1.msra.mxu0 0.0
      %9561 = vmatprep.subr.mxu0 0.0
      %9562 = vmatpush1.msra.mxu0 0.0
      %9563 = vmatprep.subr.mxu0 0.0
      %9564 = vmatpush1.msra.mxu0 0.0
      %9565 = vmatprep.subr.mxu0 0.0
      %9566 = vmatpush1.msra.mxu0 0.0
      %9567 = vmatprep.subr.mxu0 0.0
      %9568 = vmatpush1.msra.mxu0 0.0
      %9569 = vmatprep.subr.mxu0 0.0
      %9570 = vmatpush1.msra.mxu0 0.0
      %9571 = vmatprep.subr.mxu0 0.0
      %9572 = vmatpush1.msra.mxu0 0.0
      %9573 = vmatprep.subr.mxu0 0.0
      %9574 = vmatpush1.msra.mxu0 0.0
      %9575 = vmatprep.subr.mxu0 0.0
      %9576 = vmatpush1.msra.mxu0 0.0
      %9577 = vmatprep.subr.mxu0 0.0
      %9578 = vmatpush1.msra.mxu0 0.0
      %9579 = vmatprep.subr.mxu0 0.0
      %9580 = vmatpush1.msra.mxu0 0.0
      %9581 = vmatprep.subr.mxu0 0.0
      %9582 = vmatpush1.msra.mxu0 0.0
      %9583 = vmatprep.subr.mxu0 0.0
      %9584 = vmatpush1.msra.mxu0 0.0
      %9585 = vmatprep.subr.mxu0 0.0
      %9586 = vmatpush1.msra.mxu0 0.0
      %9587 = vmatprep.subr.mxu0 0.0
      %9588 = vmatpush1.msra.mxu0 0.0
      %9589 = vmatprep.subr.mxu0 0.0
      %9590 = vmatpush1.msra.mxu0 0.0
      %9591 = vmatprep.subr.mxu0 0.0
      %9592 = vmatpush1.msra.mxu0 0.0
      %9593 = vmatprep.subr.mxu0 0.0
      %9594 = vmatpush1.msra.mxu0 0.0
      %9595 = vmatprep.subr.mxu0 0.0
      %9596 = vmatpush1.msra.mxu0 0.0
      %9597 = vmatprep.subr.mxu0 0.0
      %9598 = vmatpush1.msra.mxu0 0.0
      %9599 = vmatprep.subr.mxu0 0.0
      %9600 = vmatpush1.msra.mxu0 0.0
      %9601 = vmatprep.subr.mxu0 0.0
      %9602 = vmatpush1.msra.mxu0 0.0
      %9603 = vmatprep.mubr.f32.mxu0 0.0
      %9604 = vmatmul.mubr.f32.gmra.mrb[0].mxu0 %v9395
      %v9605 = vpop.f32.mrb[0].mxu0
      %v9606 = vadd.f32 0.0, %v9605
      %v9607 = vpop.f32.mrb[0].mxu0
      %v9608 = vadd.f32 0.0, %v9607
      %9609 = vdwg.mxu0
      %9610 = vmatprep.subr.mxu0 %v9391
      %9611 = vmatpush1.msra.mxu0 %v9390
      %9612 = vmatprep.subr.mxu0 0.0
      %9613 = vmatpush1.msra.mxu0 0.0
      %9614 = vmatprep.subr.mxu0 0.0
      %9615 = vmatpush1.msra.mxu0 0.0
      %9616 = vmatprep.subr.mxu0 0.0
      %9617 = vmatpush1.msra.mxu0 0.0
      %9618 = vmatprep.subr.mxu0 0.0
      %9619 = vmatpush1.msra.mxu0 0.0
      %9620 = vmatprep.subr.mxu0 0.0
      %9621 = vmatpush1.msra.mxu0 0.0
      %9622 = vmatprep.subr.mxu0 0.0
      %9623 = vmatpush1.msra.mxu0 0.0
      %9624 = vmatprep.subr.mxu0 0.0
      %9625 = vmatpush1.msra.mxu0 0.0
      %9626 = vmatprep.subr.mxu0 0.0
      %9627 = vmatpush1.msra.mxu0 0.0
      %9628 = vmatprep.subr.mxu0 0.0
      %9629 = vmatpush1.msra.mxu0 0.0
      %9630 = vmatprep.subr.mxu0 0.0
      %9631 = vmatpush1.msra.mxu0 0.0
      %9632 = vmatprep.subr.mxu0 0.0
      %9633 = vmatpush1.msra.mxu0 0.0
      %9634 = vmatprep.subr.mxu0 0.0
      %9635 = vmatpush1.msra.mxu0 0.0
      %9636 = vmatprep.subr.mxu0 0.0
      %9637 = vmatpush1.msra.mxu0 0.0
      %9638 = vmatprep.subr.mxu0 0.0
      %9639 = vmatpush1.msra.mxu0 0.0
      %9640 = vmatprep.subr.mxu0 0.0
      %9641 = vmatpush1.msra.mxu0 0.0
      %9642 = vmatprep.subr.mxu0 0.0
      %9643 = vmatpush1.msra.mxu0 0.0
      %9644 = vmatprep.subr.mxu0 0.0
      %9645 = vmatpush1.msra.mxu0 0.0
      %9646 = vmatprep.subr.mxu0 0.0
      %9647 = vmatpush1.msra.mxu0 0.0
      %9648 = vmatprep.subr.mxu0 0.0
      %9649 = vmatpush1.msra.mxu0 0.0
      %9650 = vmatprep.subr.mxu0 0.0
      %9651 = vmatpush1.msra.mxu0 0.0
      %9652 = vmatprep.subr.mxu0 0.0
      %9653 = vmatpush1.msra.mxu0 0.0
      %9654 = vmatprep.subr.mxu0 0.0
      %9655 = vmatpush1.msra.mxu0 0.0
      %9656 = vmatprep.subr.mxu0 0.0
      %9657 = vmatpush1.msra.mxu0 0.0
      %9658 = vmatprep.subr.mxu0 0.0
      %9659 = vmatpush1.msra.mxu0 0.0
      %9660 = vmatprep.subr.mxu0 0.0
      %9661 = vmatpush1.msra.mxu0 0.0
      %9662 = vmatprep.subr.mxu0 0.0
      %9663 = vmatpush1.msra.mxu0 0.0
      %9664 = vmatprep.subr.mxu0 0.0
      %9665 = vmatpush1.msra.mxu0 0.0
      %9666 = vmatprep.subr.mxu0 0.0
      %9667 = vmatpush1.msra.mxu0 0.0
      %9668 = vmatprep.subr.mxu0 0.0
      %9669 = vmatpush1.msra.mxu0 0.0
      %9670 = vmatprep.subr.mxu0 0.0
      %9671 = vmatpush1.msra.mxu0 0.0
      %9672 = vmatprep.subr.mxu0 0.0
      %9673 = vmatpush1.msra.mxu0 0.0
      %9674 = vmatprep.mubr.f32.mxu0 0.0
      %9675 = vmatmul.mubr.f32.gmra.mrb[0].mxu0 %v9395
      %v9676 = vpop.f32.mrb[0].mxu0
      %v9677 = vadd.f32 0.0, %v9676
      %v9678 = vpop.f32.mrb[0].mxu0
      %v9679 = vadd.f32 0.0, %v9678
      %9680 = vdwg.mxu0
      %v9681 = vadd.f32 %v9352, %v9464
      %v9682 = vadd.f32 %v9353, %v9466
      %v9683 = vadd.f32 %v9354, %v9535
      %v9684 = vadd.f32 %v9355, %v9537
      %v9685 = vadd.f32 %v9356, %v9606
      %v9686 = vadd.f32 %v9357, %v9608
      %v9687 = vadd.f32 %v9358, %v9677
      %v9688 = vadd.f32 %v9359, %v9679
      %9689 = vrot.lane.b32.xlu0 %v7427, 112
      %v9690 = vpop.permute.xlu0 %9689
      %9691 = vrot.lane.b32.xlu0 %v7428, 112
      %v9692 = vpop.permute.xlu0 %9691
      %9693 = vrot.lane.b32.xlu0 %v7429, 112
      %v9694 = vpop.permute.xlu0 %9693
      %9695 = vrot.lane.b32.xlu0 %v7430, 112
      %v9696 = vpop.permute.xlu0 %9695
      %9697 = vrot.lane.b32.xlu0 %v7431, 112
      %v9698 = vpop.permute.xlu0 %9697
      %9699 = vrot.lane.b32.xlu0 %v7432, 112
      %v9700 = vpop.permute.xlu0 %9699
      %9701 = vrot.lane.b32.xlu0 %v7433, 112
      %v9702 = vpop.permute.xlu0 %9701
      %9703 = vrot.lane.b32.xlu0 %v7434, 112
      %v9704 = vpop.permute.xlu0 %9703
      %v9705 = vsel %vm3616, %v9702, %v9704
      %v9706 = vsel %vm3616, %v9700, %v9702
      %v9707 = vsel %vm3616, %v9698, %v9700
      %v9708 = vsel %vm3616, %v9696, %v9698
      %v9709 = vsel %vm3616, %v9694, %v9696
      %v9710 = vsel %vm3616, %v9692, %v9694
      %v9711 = vsel %vm3616, %v9690, %v9692
      %v9712 = vsel %vm3616, %v9704, %v9690
      %v9713 = vmul.f32 %v9711, %v3641
      %v9714 = vmul.f32 %v9710, %v3645
      %v9715 = vmul.f32 %v9709, %v3649
      %v9716 = vmul.f32 %v9708, %v3653
      %v9717 = vmul.f32 %v9707, %v3657
      %v9718 = vmul.f32 %v9706, %v3661
      %v9719 = vmul.f32 %v9705, %v3665
      %v9720 = vmul.f32 %v9712, %v3669
      %s9721 = scalar_lea.vmem %s7, 28
      %v9722 = vld [vmem:[%s9721] sm:$0xf]
      %v9724 = vsel %vm4551, %v9722, 0
      %9726 = vmatprep.subr.mxu0 %v9714
      %9727 = vmatpush1.msra.mxu0 %v9713
      %9728 = vmatprep.subr.mxu0 0.0
      %9729 = vmatpush1.msra.mxu0 0.0
      %9730 = vmatprep.subr.mxu0 0.0
      %9731 = vmatpush1.msra.mxu0 0.0
      %9732 = vmatprep.subr.mxu0 0.0
      %9733 = vmatpush1.msra.mxu0 0.0
      %9734 = vmatprep.subr.mxu0 0.0
      %9735 = vmatpush1.msra.mxu0 0.0
      %9736 = vmatprep.subr.mxu0 0.0
      %9737 = vmatpush1.msra.mxu0 0.0
      %9738 = vmatprep.subr.mxu0 0.0
      %9739 = vmatpush1.msra.mxu0 0.0
      %9740 = vmatprep.subr.mxu0 0.0
      %9741 = vmatpush1.msra.mxu0 0.0
      %9742 = vmatprep.subr.mxu0 0.0
      %9743 = vmatpush1.msra.mxu0 0.0
      %9744 = vmatprep.subr.mxu0 0.0
      %9745 = vmatpush1.msra.mxu0 0.0
      %9746 = vmatprep.subr.mxu0 0.0
      %9747 = vmatpush1.msra.mxu0 0.0
      %9748 = vmatprep.subr.mxu0 0.0
      %9749 = vmatpush1.msra.mxu0 0.0
      %9750 = vmatprep.subr.mxu0 0.0
      %9751 = vmatpush1.msra.mxu0 0.0
      %9752 = vmatprep.subr.mxu0 0.0
      %9753 = vmatpush1.msra.mxu0 0.0
      %9754 = vmatprep.subr.mxu0 0.0
      %9755 = vmatpush1.msra.mxu0 0.0
      %9756 = vmatprep.subr.mxu0 0.0
      %9757 = vmatpush1.msra.mxu0 0.0
      %9758 = vmatprep.subr.mxu0 0.0
      %9759 = vmatpush1.msra.mxu0 0.0
      %9760 = vmatprep.subr.mxu0 0.0
      %9761 = vmatpush1.msra.mxu0 0.0
      %9762 = vmatprep.subr.mxu0 0.0
      %9763 = vmatpush1.msra.mxu0 0.0
      %9764 = vmatprep.subr.mxu0 0.0
      %9765 = vmatpush1.msra.mxu0 0.0
      %9766 = vmatprep.subr.mxu0 0.0
      %9767 = vmatpush1.msra.mxu0 0.0
      %9768 = vmatprep.subr.mxu0 0.0
      %9769 = vmatpush1.msra.mxu0 0.0
      %9770 = vmatprep.subr.mxu0 0.0
      %9771 = vmatpush1.msra.mxu0 0.0
      %9772 = vmatprep.subr.mxu0 0.0
      %9773 = vmatpush1.msra.mxu0 0.0
      %9774 = vmatprep.subr.mxu0 0.0
      %9775 = vmatpush1.msra.mxu0 0.0
      %9776 = vmatprep.subr.mxu0 0.0
      %9777 = vmatpush1.msra.mxu0 0.0
      %9778 = vmatprep.subr.mxu0 0.0
      %9779 = vmatpush1.msra.mxu0 0.0
      %9780 = vmatprep.subr.mxu0 0.0
      %9781 = vmatpush1.msra.mxu0 0.0
      %9782 = vmatprep.subr.mxu0 0.0
      %9783 = vmatpush1.msra.mxu0 0.0
      %9784 = vmatprep.subr.mxu0 0.0
      %9785 = vmatpush1.msra.mxu0 0.0
      %9786 = vmatprep.subr.mxu0 0.0
      %9787 = vmatpush1.msra.mxu0 0.0
      %9788 = vmatprep.subr.mxu0 0.0
      %9789 = vmatpush1.msra.mxu0 0.0
      %9790 = vmatprep.mubr.f32.mxu0 0.0
      %9791 = vmatmul.mubr.f32.gmra.mrb[0].mxu0 %v9724
      %v9792 = vpop.f32.mrb[0].mxu0
      %v9793 = vadd.f32 0.0, %v9792
      %v9794 = vpop.f32.mrb[0].mxu0
      %v9795 = vadd.f32 0.0, %v9794
      %9796 = vdwg.mxu0
      %9797 = vmatprep.subr.mxu0 %v9716
      %9798 = vmatpush1.msra.mxu0 %v9715
      %9799 = vmatprep.subr.mxu0 0.0
      %9800 = vmatpush1.msra.mxu0 0.0
      %9801 = vmatprep.subr.mxu0 0.0
      %9802 = vmatpush1.msra.mxu0 0.0
      %9803 = vmatprep.subr.mxu0 0.0
      %9804 = vmatpush1.msra.mxu0 0.0
      %9805 = vmatprep.subr.mxu0 0.0
      %9806 = vmatpush1.msra.mxu0 0.0
      %9807 = vmatprep.subr.mxu0 0.0
      %9808 = vmatpush1.msra.mxu0 0.0
      %9809 = vmatprep.subr.mxu0 0.0
      %9810 = vmatpush1.msra.mxu0 0.0
      %9811 = vmatprep.subr.mxu0 0.0
      %9812 = vmatpush1.msra.mxu0 0.0
      %9813 = vmatprep.subr.mxu0 0.0
      %9814 = vmatpush1.msra.mxu0 0.0
      %9815 = vmatprep.subr.mxu0 0.0
      %9816 = vmatpush1.msra.mxu0 0.0
      %9817 = vmatprep.subr.mxu0 0.0
      %9818 = vmatpush1.msra.mxu0 0.0
      %9819 = vmatprep.subr.mxu0 0.0
      %9820 = vmatpush1.msra.mxu0 0.0
      %9821 = vmatprep.subr.mxu0 0.0
      %9822 = vmatpush1.msra.mxu0 0.0
      %9823 = vmatprep.subr.mxu0 0.0
      %9824 = vmatpush1.msra.mxu0 0.0
      %9825 = vmatprep.subr.mxu0 0.0
      %9826 = vmatpush1.msra.mxu0 0.0
      %9827 = vmatprep.subr.mxu0 0.0
      %9828 = vmatpush1.msra.mxu0 0.0
      %9829 = vmatprep.subr.mxu0 0.0
      %9830 = vmatpush1.msra.mxu0 0.0
      %9831 = vmatprep.subr.mxu0 0.0
      %9832 = vmatpush1.msra.mxu0 0.0
      %9833 = vmatprep.subr.mxu0 0.0
      %9834 = vmatpush1.msra.mxu0 0.0
      %9835 = vmatprep.subr.mxu0 0.0
      %9836 = vmatpush1.msra.mxu0 0.0
      %9837 = vmatprep.subr.mxu0 0.0
      %9838 = vmatpush1.msra.mxu0 0.0
      %9839 = vmatprep.subr.mxu0 0.0
      %9840 = vmatpush1.msra.mxu0 0.0
      %9841 = vmatprep.subr.mxu0 0.0
      %9842 = vmatpush1.msra.mxu0 0.0
      %9843 = vmatprep.subr.mxu0 0.0
      %9844 = vmatpush1.msra.mxu0 0.0
      %9845 = vmatprep.subr.mxu0 0.0
      %9846 = vmatpush1.msra.mxu0 0.0
      %9847 = vmatprep.subr.mxu0 0.0
      %9848 = vmatpush1.msra.mxu0 0.0
      %9849 = vmatprep.subr.mxu0 0.0
      %9850 = vmatpush1.msra.mxu0 0.0
      %9851 = vmatprep.subr.mxu0 0.0
      %9852 = vmatpush1.msra.mxu0 0.0
      %9853 = vmatprep.subr.mxu0 0.0
      %9854 = vmatpush1.msra.mxu0 0.0
      %9855 = vmatprep.subr.mxu0 0.0
      %9856 = vmatpush1.msra.mxu0 0.0
      %9857 = vmatprep.subr.mxu0 0.0
      %9858 = vmatpush1.msra.mxu0 0.0
      %9859 = vmatprep.subr.mxu0 0.0
      %9860 = vmatpush1.msra.mxu0 0.0
      %9861 = vmatprep.mubr.f32.mxu0 0.0
      %9862 = vmatmul.mubr.f32.gmra.mrb[0].mxu0 %v9724
      %v9863 = vpop.f32.mrb[0].mxu0
      %v9864 = vadd.f32 0.0, %v9863
      %v9865 = vpop.f32.mrb[0].mxu0
      %v9866 = vadd.f32 0.0, %v9865
      %9867 = vdwg.mxu0
      %9868 = vmatprep.subr.mxu0 %v9718
      %9869 = vmatpush1.msra.mxu0 %v9717
      %9870 = vmatprep.subr.mxu0 0.0
      %9871 = vmatpush1.msra.mxu0 0.0
      %9872 = vmatprep.subr.mxu0 0.0
      %9873 = vmatpush1.msra.mxu0 0.0
      %9874 = vmatprep.subr.mxu0 0.0
      %9875 = vmatpush1.msra.mxu0 0.0
      %9876 = vmatprep.subr.mxu0 0.0
      %9877 = vmatpush1.msra.mxu0 0.0
      %9878 = vmatprep.subr.mxu0 0.0
      %9879 = vmatpush1.msra.mxu0 0.0
      %9880 = vmatprep.subr.mxu0 0.0
      %9881 = vmatpush1.msra.mxu0 0.0
      %9882 = vmatprep.subr.mxu0 0.0
      %9883 = vmatpush1.msra.mxu0 0.0
      %9884 = vmatprep.subr.mxu0 0.0
      %9885 = vmatpush1.msra.mxu0 0.0
      %9886 = vmatprep.subr.mxu0 0.0
      %9887 = vmatpush1.msra.mxu0 0.0
      %9888 = vmatprep.subr.mxu0 0.0
      %9889 = vmatpush1.msra.mxu0 0.0
      %9890 = vmatprep.subr.mxu0 0.0
      %9891 = vmatpush1.msra.mxu0 0.0
      %9892 = vmatprep.subr.mxu0 0.0
      %9893 = vmatpush1.msra.mxu0 0.0
      %9894 = vmatprep.subr.mxu0 0.0
      %9895 = vmatpush1.msra.mxu0 0.0
      %9896 = vmatprep.subr.mxu0 0.0
      %9897 = vmatpush1.msra.mxu0 0.0
      %9898 = vmatprep.subr.mxu0 0.0
      %9899 = vmatpush1.msra.mxu0 0.0
      %9900 = vmatprep.subr.mxu0 0.0
      %9901 = vmatpush1.msra.mxu0 0.0
      %9902 = vmatprep.subr.mxu0 0.0
      %9903 = vmatpush1.msra.mxu0 0.0
      %9904 = vmatprep.subr.mxu0 0.0
      %9905 = vmatpush1.msra.mxu0 0.0
      %9906 = vmatprep.subr.mxu0 0.0
      %9907 = vmatpush1.msra.mxu0 0.0
      %9908 = vmatprep.subr.mxu0 0.0
      %9909 = vmatpush1.msra.mxu0 0.0
      %9910 = vmatprep.subr.mxu0 0.0
      %9911 = vmatpush1.msra.mxu0 0.0
      %9912 = vmatprep.subr.mxu0 0.0
      %9913 = vmatpush1.msra.mxu0 0.0
      %9914 = vmatprep.subr.mxu0 0.0
      %9915 = vmatpush1.msra.mxu0 0.0
      %9916 = vmatprep.subr.mxu0 0.0
      %9917 = vmatpush1.msra.mxu0 0.0
      %9918 = vmatprep.subr.mxu0 0.0
      %9919 = vmatpush1.msra.mxu0 0.0
      %9920 = vmatprep.subr.mxu0 0.0
      %9921 = vmatpush1.msra.mxu0 0.0
      %9922 = vmatprep.subr.mxu0 0.0
      %9923 = vmatpush1.msra.mxu0 0.0
      %9924 = vmatprep.subr.mxu0 0.0
      %9925 = vmatpush1.msra.mxu0 0.0
      %9926 = vmatprep.subr.mxu0 0.0
      %9927 = vmatpush1.msra.mxu0 0.0
      %9928 = vmatprep.subr.mxu0 0.0
      %9929 = vmatpush1.msra.mxu0 0.0
      %9930 = vmatprep.subr.mxu0 0.0
      %9931 = vmatpush1.msra.mxu0 0.0
      %9932 = vmatprep.mubr.f32.mxu0 0.0
      %9933 = vmatmul.mubr.f32.gmra.mrb[0].mxu0 %v9724
      %v9934 = vpop.f32.mrb[0].mxu0
      %v9935 = vadd.f32 0.0, %v9934
      %v9936 = vpop.f32.mrb[0].mxu0
      %v9937 = vadd.f32 0.0, %v9936
      %9938 = vdwg.mxu0
      %9939 = vmatprep.subr.mxu0 %v9720
      %9940 = vmatpush1.msra.mxu0 %v9719
      %9941 = vmatprep.subr.mxu0 0.0
      %9942 = vmatpush1.msra.mxu0 0.0
      %9943 = vmatprep.subr.mxu0 0.0
      %9944 = vmatpush1.msra.mxu0 0.0
      %9945 = vmatprep.subr.mxu0 0.0
      %9946 = vmatpush1.msra.mxu0 0.0
      %9947 = vmatprep.subr.mxu0 0.0
      %9948 = vmatpush1.msra.mxu0 0.0
      %9949 = vmatprep.subr.mxu0 0.0
      %9950 = vmatpush1.msra.mxu0 0.0
      %9951 = vmatprep.subr.mxu0 0.0
      %9952 = vmatpush1.msra.mxu0 0.0
      %9953 = vmatprep.subr.mxu0 0.0
      %9954 = vmatpush1.msra.mxu0 0.0
      %9955 = vmatprep.subr.mxu0 0.0
      %9956 = vmatpush1.msra.mxu0 0.0
      %9957 = vmatprep.subr.mxu0 0.0
      %9958 = vmatpush1.msra.mxu0 0.0
      %9959 = vmatprep.subr.mxu0 0.0
      %9960 = vmatpush1.msra.mxu0 0.0
      %9961 = vmatprep.subr.mxu0 0.0
      %9962 = vmatpush1.msra.mxu0 0.0
      %9963 = vmatprep.subr.mxu0 0.0
      %9964 = vmatpush1.msra.mxu0 0.0
      %9965 = vmatprep.subr.mxu0 0.0
      %9966 = vmatpush1.msra.mxu0 0.0
      %9967 = vmatprep.subr.mxu0 0.0
      %9968 = vmatpush1.msra.mxu0 0.0
      %9969 = vmatprep.subr.mxu0 0.0
      %9970 = vmatpush1.msra.mxu0 0.0
      %9971 = vmatprep.subr.mxu0 0.0
      %9972 = vmatpush1.msra.mxu0 0.0
      %9973 = vmatprep.subr.mxu0 0.0
      %9974 = vmatpush1.msra.mxu0 0.0
      %9975 = vmatprep.subr.mxu0 0.0
      %9976 = vmatpush1.msra.mxu0 0.0
      %9977 = vmatprep.subr.mxu0 0.0
      %9978 = vmatpush1.msra.mxu0 0.0
      %9979 = vmatprep.subr.mxu0 0.0
      %9980 = vmatpush1.msra.mxu0 0.0
      %9981 = vmatprep.subr.mxu0 0.0
      %9982 = vmatpush1.msra.mxu0 0.0
      %9983 = vmatprep.subr.mxu0 0.0
      %9984 = vmatpush1.msra.mxu0 0.0
      %9985 = vmatprep.subr.mxu0 0.0
      %9986 = vmatpush1.msra.mxu0 0.0
      %9987 = vmatprep.subr.mxu0 0.0
      %9988 = vmatpush1.msra.mxu0 0.0
      %9989 = vmatprep.subr.mxu0 0.0
      %9990 = vmatpush1.msra.mxu0 0.0
      %9991 = vmatprep.subr.mxu0 0.0
      %9992 = vmatpush1.msra.mxu0 0.0
      %9993 = vmatprep.subr.mxu0 0.0
      %9994 = vmatpush1.msra.mxu0 0.0
      %9995 = vmatprep.subr.mxu0 0.0
      %9996 = vmatpush1.msra.mxu0 0.0
      %9997 = vmatprep.subr.mxu0 0.0
      %9998 = vmatpush1.msra.mxu0 0.0
      %9999 = vmatprep.subr.mxu0 0.0
      %10000 = vmatpush1.msra.mxu0 0.0
      %10001 = vmatprep.subr.mxu0 0.0
      %10002 = vmatpush1.msra.mxu0 0.0
      %10003 = vmatprep.mubr.f32.mxu0 0.0
      %10004 = vmatmul.mubr.f32.gmra.mrb[0].mxu0 %v9724
      %v10005 = vpop.f32.mrb[0].mxu0
      %v10006 = vadd.f32 0.0, %v10005
      %v10007 = vpop.f32.mrb[0].mxu0
      %v10008 = vadd.f32 0.0, %v10007
      %10009 = vdwg.mxu0
      %v10010 = vadd.f32 %v9681, %v9793
      %v10011 = vadd.f32 %v9682, %v9795
      %v10012 = vadd.f32 %v9683, %v9864
      %v10013 = vadd.f32 %v9684, %v9866
      %v10014 = vadd.f32 %v9685, %v9935
      %v10015 = vadd.f32 %v9686, %v9937
      %v10016 = vadd.f32 %v9687, %v10006
      %v10017 = vadd.f32 %v9688, %v10008
      %10018 = vrot.lane.b32.xlu0 %v7427, 111
      %v10019 = vpop.permute.xlu0 %10018
      %10020 = vrot.lane.b32.xlu0 %v7428, 111
      %v10021 = vpop.permute.xlu0 %10020
      %10022 = vrot.lane.b32.xlu0 %v7429, 111
      %v10023 = vpop.permute.xlu0 %10022
      %10024 = vrot.lane.b32.xlu0 %v7430, 111
      %v10025 = vpop.permute.xlu0 %10024
      %10026 = vrot.lane.b32.xlu0 %v7431, 111
      %v10027 = vpop.permute.xlu0 %10026
      %10028 = vrot.lane.b32.xlu0 %v7432, 111
      %v10029 = vpop.permute.xlu0 %10028
      %10030 = vrot.lane.b32.xlu0 %v7433, 111
      %v10031 = vpop.permute.xlu0 %10030
      %10032 = vrot.lane.b32.xlu0 %v7434, 111
      %v10033 = vpop.permute.xlu0 %10032
      %v10034 = vsel %vm4047, %v10031, %v10033
      %v10035 = vsel %vm4047, %v10029, %v10031
      %v10036 = vsel %vm4047, %v10027, %v10029
      %v10037 = vsel %vm4047, %v10025, %v10027
      %v10038 = vsel %vm4047, %v10023, %v10025
      %v10039 = vsel %vm4047, %v10021, %v10023
      %v10040 = vsel %vm4047, %v10019, %v10021
      %v10041 = vsel %vm4047, %v10033, %v10019
      %v10042 = vmul.f32 %v10040, %v4072
      %v10043 = vmul.f32 %v10039, %v4076
      %v10044 = vmul.f32 %v10038, %v4080
      %v10045 = vmul.f32 %v10037, %v4084
      %v10046 = vmul.f32 %v10036, %v4088
      %v10047 = vmul.f32 %v10035, %v4092
      %v10048 = vmul.f32 %v10034, %v4096
      %v10049 = vmul.f32 %v10041, %v4100
      %s10050 = scalar_lea.vmem %s7, 32
      %v10051 = vld [vmem:[%s10050] sm:$0xf]
      %v10053 = vsel %vm4551, %v10051, 0
      %10055 = vmatprep.subr.mxu0 %v10043
      %10056 = vmatpush1.msra.mxu0 %v10042
      %10057 = vmatprep.subr.mxu0 0.0
      %10058 = vmatpush1.msra.mxu0 0.0
      %10059 = vmatprep.subr.mxu0 0.0
      %10060 = vmatpush1.msra.mxu0 0.0
      %10061 = vmatprep.subr.mxu0 0.0
      %10062 = vmatpush1.msra.mxu0 0.0
      %10063 = vmatprep.subr.mxu0 0.0
      %10064 = vmatpush1.msra.mxu0 0.0
      %10065 = vmatprep.subr.mxu0 0.0
      %10066 = vmatpush1.msra.mxu0 0.0
      %10067 = vmatprep.subr.mxu0 0.0
      %10068 = vmatpush1.msra.mxu0 0.0
      %10069 = vmatprep.subr.mxu0 0.0
      %10070 = vmatpush1.msra.mxu0 0.0
      %10071 = vmatprep.subr.mxu0 0.0
      %10072 = vmatpush1.msra.mxu0 0.0
      %10073 = vmatprep.subr.mxu0 0.0
      %10074 = vmatpush1.msra.mxu0 0.0
      %10075 = vmatprep.subr.mxu0 0.0
      %10076 = vmatpush1.msra.mxu0 0.0
      %10077 = vmatprep.subr.mxu0 0.0
      %10078 = vmatpush1.msra.mxu0 0.0
      %10079 = vmatprep.subr.mxu0 0.0
      %10080 = vmatpush1.msra.mxu0 0.0
      %10081 = vmatprep.subr.mxu0 0.0
      %10082 = vmatpush1.msra.mxu0 0.0
      %10083 = vmatprep.subr.mxu0 0.0
      %10084 = vmatpush1.msra.mxu0 0.0
      %10085 = vmatprep.subr.mxu0 0.0
      %10086 = vmatpush1.msra.mxu0 0.0
      %10087 = vmatprep.subr.mxu0 0.0
      %10088 = vmatpush1.msra.mxu0 0.0
      %10089 = vmatprep.subr.mxu0 0.0
      %10090 = vmatpush1.msra.mxu0 0.0
      %10091 = vmatprep.subr.mxu0 0.0
      %10092 = vmatpush1.msra.mxu0 0.0
      %10093 = vmatprep.subr.mxu0 0.0
      %10094 = vmatpush1.msra.mxu0 0.0
      %10095 = vmatprep.subr.mxu0 0.0
      %10096 = vmatpush1.msra.mxu0 0.0
      %10097 = vmatprep.subr.mxu0 0.0
      %10098 = vmatpush1.msra.mxu0 0.0
      %10099 = vmatprep.subr.mxu0 0.0
      %10100 = vmatpush1.msra.mxu0 0.0
      %10101 = vmatprep.subr.mxu0 0.0
      %10102 = vmatpush1.msra.mxu0 0.0
      %10103 = vmatprep.subr.mxu0 0.0
      %10104 = vmatpush1.msra.mxu0 0.0
      %10105 = vmatprep.subr.mxu0 0.0
      %10106 = vmatpush1.msra.mxu0 0.0
      %10107 = vmatprep.subr.mxu0 0.0
      %10108 = vmatpush1.msra.mxu0 0.0
      %10109 = vmatprep.subr.mxu0 0.0
      %10110 = vmatpush1.msra.mxu0 0.0
      %10111 = vmatprep.subr.mxu0 0.0
      %10112 = vmatpush1.msra.mxu0 0.0
      %10113 = vmatprep.subr.mxu0 0.0
      %10114 = vmatpush1.msra.mxu0 0.0
      %10115 = vmatprep.subr.mxu0 0.0
      %10116 = vmatpush1.msra.mxu0 0.0
      %10117 = vmatprep.subr.mxu0 0.0
      %10118 = vmatpush1.msra.mxu0 0.0
      %10119 = vmatprep.mubr.f32.mxu0 0.0
      %10120 = vmatmul.mubr.f32.gmra.mrb[0].mxu0 %v10053
      %v10121 = vpop.f32.mrb[0].mxu0
      %v10122 = vadd.f32 0.0, %v10121
      %v10123 = vpop.f32.mrb[0].mxu0
      %v10124 = vadd.f32 0.0, %v10123
      %10125 = vdwg.mxu0
      %10126 = vmatprep.subr.mxu0 %v10045
      %10127 = vmatpush1.msra.mxu0 %v10044
      %10128 = vmatprep.subr.mxu0 0.0
      %10129 = vmatpush1.msra.mxu0 0.0
      %10130 = vmatprep.subr.mxu0 0.0
      %10131 = vmatpush1.msra.mxu0 0.0
      %10132 = vmatprep.subr.mxu0 0.0
      %10133 = vmatpush1.msra.mxu0 0.0
      %10134 = vmatprep.subr.mxu0 0.0
      %10135 = vmatpush1.msra.mxu0 0.0
      %10136 = vmatprep.subr.mxu0 0.0
      %10137 = vmatpush1.msra.mxu0 0.0
      %10138 = vmatprep.subr.mxu0 0.0
      %10139 = vmatpush1.msra.mxu0 0.0
      %10140 = vmatprep.subr.mxu0 0.0
      %10141 = vmatpush1.msra.mxu0 0.0
      %10142 = vmatprep.subr.mxu0 0.0
      %10143 = vmatpush1.msra.mxu0 0.0
      %10144 = vmatprep.subr.mxu0 0.0
      %10145 = vmatpush1.msra.mxu0 0.0
      %10146 = vmatprep.subr.mxu0 0.0
      %10147 = vmatpush1.msra.mxu0 0.0
      %10148 = vmatprep.subr.mxu0 0.0
      %10149 = vmatpush1.msra.mxu0 0.0
      %10150 = vmatprep.subr.mxu0 0.0
      %10151 = vmatpush1.msra.mxu0 0.0
      %10152 = vmatprep.subr.mxu0 0.0
      %10153 = vmatpush1.msra.mxu0 0.0
      %10154 = vmatprep.subr.mxu0 0.0
      %10155 = vmatpush1.msra.mxu0 0.0
      %10156 = vmatprep.subr.mxu0 0.0
      %10157 = vmatpush1.msra.mxu0 0.0
      %10158 = vmatprep.subr.mxu0 0.0
      %10159 = vmatpush1.msra.mxu0 0.0
      %10160 = vmatprep.subr.mxu0 0.0
      %10161 = vmatpush1.msra.mxu0 0.0
      %10162 = vmatprep.subr.mxu0 0.0
      %10163 = vmatpush1.msra.mxu0 0.0
      %10164 = vmatprep.subr.mxu0 0.0
      %10165 = vmatpush1.msra.mxu0 0.0
      %10166 = vmatprep.subr.mxu0 0.0
      %10167 = vmatpush1.msra.mxu0 0.0
      %10168 = vmatprep.subr.mxu0 0.0
      %10169 = vmatpush1.msra.mxu0 0.0
      %10170 = vmatprep.subr.mxu0 0.0
      %10171 = vmatpush1.msra.mxu0 0.0
      %10172 = vmatprep.subr.mxu0 0.0
      %10173 = vmatpush1.msra.mxu0 0.0
      %10174 = vmatprep.subr.mxu0 0.0
      %10175 = vmatpush1.msra.mxu0 0.0
      %10176 = vmatprep.subr.mxu0 0.0
      %10177 = vmatpush1.msra.mxu0 0.0
      %10178 = vmatprep.subr.mxu0 0.0
      %10179 = vmatpush1.msra.mxu0 0.0
      %10180 = vmatprep.subr.mxu0 0.0
      %10181 = vmatpush1.msra.mxu0 0.0
      %10182 = vmatprep.subr.mxu0 0.0
      %10183 = vmatpush1.msra.mxu0 0.0
      %10184 = vmatprep.subr.mxu0 0.0
      %10185 = vmatpush1.msra.mxu0 0.0
      %10186 = vmatprep.subr.mxu0 0.0
      %10187 = vmatpush1.msra.mxu0 0.0
      %10188 = vmatprep.subr.mxu0 0.0
      %10189 = vmatpush1.msra.mxu0 0.0
      %10190 = vmatprep.mubr.f32.mxu0 0.0
      %10191 = vmatmul.mubr.f32.gmra.mrb[0].mxu0 %v10053
      %v10192 = vpop.f32.mrb[0].mxu0
      %v10193 = vadd.f32 0.0, %v10192
      %v10194 = vpop.f32.mrb[0].mxu0
      %v10195 = vadd.f32 0.0, %v10194
      %10196 = vdwg.mxu0
      %10197 = vmatprep.subr.mxu0 %v10047
      %10198 = vmatpush1.msra.mxu0 %v10046
      %10199 = vmatprep.subr.mxu0 0.0
      %10200 = vmatpush1.msra.mxu0 0.0
      %10201 = vmatprep.subr.mxu0 0.0
      %10202 = vmatpush1.msra.mxu0 0.0
      %10203 = vmatprep.subr.mxu0 0.0
      %10204 = vmatpush1.msra.mxu0 0.0
      %10205 = vmatprep.subr.mxu0 0.0
      %10206 = vmatpush1.msra.mxu0 0.0
      %10207 = vmatprep.subr.mxu0 0.0
      %10208 = vmatpush1.msra.mxu0 0.0
      %10209 = vmatprep.subr.mxu0 0.0
      %10210 = vmatpush1.msra.mxu0 0.0
      %10211 = vmatprep.subr.mxu0 0.0
      %10212 = vmatpush1.msra.mxu0 0.0
      %10213 = vmatprep.subr.mxu0 0.0
      %10214 = vmatpush1.msra.mxu0 0.0
      %10215 = vmatprep.subr.mxu0 0.0
      %10216 = vmatpush1.msra.mxu0 0.0
      %10217 = vmatprep.subr.mxu0 0.0
      %10218 = vmatpush1.msra.mxu0 0.0
      %10219 = vmatprep.subr.mxu0 0.0
      %10220 = vmatpush1.msra.mxu0 0.0
      %10221 = vmatprep.subr.mxu0 0.0
      %10222 = vmatpush1.msra.mxu0 0.0
      %10223 = vmatprep.subr.mxu0 0.0
      %10224 = vmatpush1.msra.mxu0 0.0
      %10225 = vmatprep.subr.mxu0 0.0
      %10226 = vmatpush1.msra.mxu0 0.0
      %10227 = vmatprep.subr.mxu0 0.0
      %10228 = vmatpush1.msra.mxu0 0.0
      %10229 = vmatprep.subr.mxu0 0.0
      %10230 = vmatpush1.msra.mxu0 0.0
      %10231 = vmatprep.subr.mxu0 0.0
      %10232 = vmatpush1.msra.mxu0 0.0
      %10233 = vmatprep.subr.mxu0 0.0
      %10234 = vmatpush1.msra.mxu0 0.0
      %10235 = vmatprep.subr.mxu0 0.0
      %10236 = vmatpush1.msra.mxu0 0.0
      %10237 = vmatprep.subr.mxu0 0.0
      %10238 = vmatpush1.msra.mxu0 0.0
      %10239 = vmatprep.subr.mxu0 0.0
      %10240 = vmatpush1.msra.mxu0 0.0
      %10241 = vmatprep.subr.mxu0 0.0
      %10242 = vmatpush1.msra.mxu0 0.0
      %10243 = vmatprep.subr.mxu0 0.0
      %10244 = vmatpush1.msra.mxu0 0.0
      %10245 = vmatprep.subr.mxu0 0.0
      %10246 = vmatpush1.msra.mxu0 0.0
      %10247 = vmatprep.subr.mxu0 0.0
      %10248 = vmatpush1.msra.mxu0 0.0
      %10249 = vmatprep.subr.mxu0 0.0
      %10250 = vmatpush1.msra.mxu0 0.0
      %10251 = vmatprep.subr.mxu0 0.0
      %10252 = vmatpush1.msra.mxu0 0.0
      %10253 = vmatprep.subr.mxu0 0.0
      %10254 = vmatpush1.msra.mxu0 0.0
      %10255 = vmatprep.subr.mxu0 0.0
      %10256 = vmatpush1.msra.mxu0 0.0
      %10257 = vmatprep.subr.mxu0 0.0
      %10258 = vmatpush1.msra.mxu0 0.0
      %10259 = vmatprep.subr.mxu0 0.0
      %10260 = vmatpush1.msra.mxu0 0.0
      %10261 = vmatprep.mubr.f32.mxu0 0.0
      %10262 = vmatmul.mubr.f32.gmra.mrb[0].mxu0 %v10053
      %v10263 = vpop.f32.mrb[0].mxu0
      %v10264 = vadd.f32 0.0, %v10263
      %v10265 = vpop.f32.mrb[0].mxu0
      %v10266 = vadd.f32 0.0, %v10265
      %10267 = vdwg.mxu0
      %10268 = vmatprep.subr.mxu0 %v10049
      %10269 = vmatpush1.msra.mxu0 %v10048
      %10270 = vmatprep.subr.mxu0 0.0
      %10271 = vmatpush1.msra.mxu0 0.0
      %10272 = vmatprep.subr.mxu0 0.0
      %10273 = vmatpush1.msra.mxu0 0.0
      %10274 = vmatprep.subr.mxu0 0.0
      %10275 = vmatpush1.msra.mxu0 0.0
      %10276 = vmatprep.subr.mxu0 0.0
      %10277 = vmatpush1.msra.mxu0 0.0
      %10278 = vmatprep.subr.mxu0 0.0
      %10279 = vmatpush1.msra.mxu0 0.0
      %10280 = vmatprep.subr.mxu0 0.0
      %10281 = vmatpush1.msra.mxu0 0.0
      %10282 = vmatprep.subr.mxu0 0.0
      %10283 = vmatpush1.msra.mxu0 0.0
      %10284 = vmatprep.subr.mxu0 0.0
      %10285 = vmatpush1.msra.mxu0 0.0
      %10286 = vmatprep.subr.mxu0 0.0
      %10287 = vmatpush1.msra.mxu0 0.0
      %10288 = vmatprep.subr.mxu0 0.0
      %10289 = vmatpush1.msra.mxu0 0.0
      %10290 = vmatprep.subr.mxu0 0.0
      %10291 = vmatpush1.msra.mxu0 0.0
      %10292 = vmatprep.subr.mxu0 0.0
      %10293 = vmatpush1.msra.mxu0 0.0
      %10294 = vmatprep.subr.mxu0 0.0
      %10295 = vmatpush1.msra.mxu0 0.0
      %10296 = vmatprep.subr.mxu0 0.0
      %10297 = vmatpush1.msra.mxu0 0.0
      %10298 = vmatprep.subr.mxu0 0.0
      %10299 = vmatpush1.msra.mxu0 0.0
      %10300 = vmatprep.subr.mxu0 0.0
      %10301 = vmatpush1.msra.mxu0 0.0
      %10302 = vmatprep.subr.mxu0 0.0
      %10303 = vmatpush1.msra.mxu0 0.0
      %10304 = vmatprep.subr.mxu0 0.0
      %10305 = vmatpush1.msra.mxu0 0.0
      %10306 = vmatprep.subr.mxu0 0.0
      %10307 = vmatpush1.msra.mxu0 0.0
      %10308 = vmatprep.subr.mxu0 0.0
      %10309 = vmatpush1.msra.mxu0 0.0
      %10310 = vmatprep.subr.mxu0 0.0
      %10311 = vmatpush1.msra.mxu0 0.0
      %10312 = vmatprep.subr.mxu0 0.0
      %10313 = vmatpush1.msra.mxu0 0.0
      %10314 = vmatprep.subr.mxu0 0.0
      %10315 = vmatpush1.msra.mxu0 0.0
      %10316 = vmatprep.subr.mxu0 0.0
      %10317 = vmatpush1.msra.mxu0 0.0
      %10318 = vmatprep.subr.mxu0 0.0
      %10319 = vmatpush1.msra.mxu0 0.0
      %10320 = vmatprep.subr.mxu0 0.0
      %10321 = vmatpush1.msra.mxu0 0.0
      %10322 = vmatprep.subr.mxu0 0.0
      %10323 = vmatpush1.msra.mxu0 0.0
      %10324 = vmatprep.subr.mxu0 0.0
      %10325 = vmatpush1.msra.mxu0 0.0
      %10326 = vmatprep.subr.mxu0 0.0
      %10327 = vmatpush1.msra.mxu0 0.0
      %10328 = vmatprep.subr.mxu0 0.0
      %10329 = vmatpush1.msra.mxu0 0.0
      %10330 = vmatprep.subr.mxu0 0.0
      %10331 = vmatpush1.msra.mxu0 0.0
      %10332 = vmatprep.mubr.f32.mxu0 0.0
      %10333 = vmatmul.mubr.f32.gmra.mrb[0].mxu0 %v10053
      %v10334 = vpop.f32.mrb[0].mxu0
      %v10335 = vadd.f32 0.0, %v10334
      %v10336 = vpop.f32.mrb[0].mxu0
      %v10337 = vadd.f32 0.0, %v10336
      %10338 = vdwg.mxu0
      %v10339 = vadd.f32 %v10010, %v10122
      %v10340 = vadd.f32 %v10011, %v10124
      %v10341 = vadd.f32 %v10012, %v10193
      %v10342 = vadd.f32 %v10013, %v10195
      %v10343 = vadd.f32 %v10014, %v10264
      %v10344 = vadd.f32 %v10015, %v10266
      %v10345 = vadd.f32 %v10016, %v10335
      %v10346 = vadd.f32 %v10017, %v10337
      %v10347 = vld [vmem:[%s8] sm:$0xf]
      %10349 = vset.pattern.permute.xlu0 0
      %10350 = vperm.xlu0 %10349, %v10347
      %v10351 = vpop.permute.xlu0 %10350
      %v10353 = vadd.f32 %v10339, %v10351
      %v10354 = vadd.f32 %v10340, %v10351
      %v10355 = vadd.f32 %v10341, %v10351
      %v10356 = vadd.f32 %v10342, %v10351
      %v10357 = vadd.f32 %v10343, %v10351
      %v10358 = vadd.f32 %v10344, %v10351
      %v10359 = vadd.f32 %v10345, %v10351
      %v10360 = vadd.f32 %v10346, %v10351
      %vm10361 = vcmp.ge.f32.partialorder %v10353, 0.0
      %vm10362 = vcmp.ge.f32.partialorder %v10354, 0.0
      %vm10363 = vcmp.ge.f32.partialorder %v10355, 0.0
      %vm10364 = vcmp.ge.f32.partialorder %v10356, 0.0
      %vm10365 = vcmp.ge.f32.partialorder %v10357, 0.0
      %vm10366 = vcmp.ge.f32.partialorder %v10358, 0.0
      %vm10367 = vcmp.ge.f32.partialorder %v10359, 0.0
      %vm10368 = vcmp.ge.f32.partialorder %v10360, 0.0
      %v10369 = vmul.f32 %v10353, 0.1
      %v10370 = vmul.f32 %v10354, 0.1
      %v10371 = vmul.f32 %v10355, 0.1
      %v10372 = vmul.f32 %v10356, 0.1
      %v10373 = vmul.f32 %v10357, 0.1
      %v10374 = vmul.f32 %v10358, 0.1
      %v10375 = vmul.f32 %v10359, 0.1
      %v10376 = vmul.f32 %v10360, 0.1
      %v10377 = vsel %vm10361, %v10353, %v10369
      %v10378 = vsel %vm10362, %v10354, %v10370
      %v10379 = vsel %vm10363, %v10355, %v10371
      %v10380 = vsel %vm10364, %v10356, %v10372
      %v10381 = vsel %vm10365, %v10357, %v10373
      %v10382 = vsel %vm10366, %v10358, %v10374
      %v10383 = vsel %vm10367, %v10359, %v10375
      %v10384 = vsel %vm10368, %v10360, %v10376
      %v10393 = vcombine.low %v10377, %v10378
      %v10394 = vcombine.low %v10379, %v10380
      %v10395 = vcombine.low %v10381, %v10382
      %v10396 = vcombine.low %v10383, %v10384
      %10401 = vst [vmem:[%s337] sm:$0xff] %v10393
      %10402 = vst [vmem:[%s337 + $0x8] sm:$0xff] %v10394
      %10403 = vst [vmem:[%s337 + $0x10] sm:$0xff] %v10395
      %10404 = vst [vmem:[%s337 + $0x18] sm:$0xff] %v10396
      %s10405 = smul.u32 8, %s20
      %p10406 = scmp.lt.s32.totalorder %s10405, 15
      %s10407 = scalar_select %p10406, %s10405, 15
      %s10408 = smul.addr %s10407, 4
      %s10409 = scalar_lea.vmem %s9, %s10408
      // Predicated region
      $region57: #{cmp_forward.1} parent=55 // pred_check
        %p10410 = pneg %p232
      $region58: #{cmp_forward.1} parent=55 // pred_check_branch
        %10412 = sbr.rel (%p10410) target = $region60
      $region59: #{cmp_forward.1} parent=55 // pred_region
        %s10413 = smul.u32 8, %s20
      $region60: #{cmp_forward.1} parent=55 // pred_fallthru
        _
    $region56: #{cmp_forward.1} parent=5 // pred_fallthru
      _
    %p10414 = scmp.le.s32.totalorder 2, %s15
    // Predicated region
    $region61: #{cmp_forward.1} parent=5 // pred_check
      %p10415 = pneg %p10414
    $region62: #{cmp_forward.1} parent=5 // pred_check_branch
      %10417 = sbr.rel (%p10415) target = $region64
    $region63: #{cmp_forward.1} parent=5 // pred_region
      %s10418 = ssub.s32 %s15, 2
      // Predicated region
      $region65: #{cmp_forward.1} parent=63 // pred_check
        %p10419 = pneg %p238
      $region66: #{cmp_forward.1} parent=63 // pred_check_branch
        %10421 = sbr.rel (%p10419) target = $region68
      $region67: #{cmp_forward.1} parent=63 // pred_region
        %s10422 = smul.u32 8, %s21
        %p10423 = scmp.lt.s32.totalorder %s10422, 15
        %s10424 = scalar_select %p10423, %s10422, 15
        %s10425 = smul.addr %s10424, 4
        %s10426 = scalar_lea.vmem %s9, %s10425
      $region68: #{cmp_forward.1} parent=63 // pred_fallthru
        _
    $region64: #{cmp_forward.1} parent=5 // pred_fallthru
      _
  $region6: #{cmp_forward.1} parent=0 // loop_footer
    %s19 = sadd.s32 1, %s15
  $region7: #{cmp_forward.1} parent=0 // loop_footer_branch
    %14 = sbr.rel target = $region3
  $region8: #{cmp_forward.1} parent=0 // loop_exit
    _

</llo_original>
